<compile_context>
chip_gen: v7x
topology: tpu7x:2x2x1
jax: 0.10.0
libtpu: 0.0.40
codegen_flags: <defaults>
</compile_context>

<pallas_src>
import math

import jax
import jax.numpy as jnp
from jax import lax
from jax.experimental import pallas as pl
from jax.experimental.pallas import tpu as pltpu

_HIGHEST = jax.lax.Precision.HIGHEST
# dot_general dimension numbers contracting the LAST dim of both operands
# ("NT" matmul) -- avoids materializing any transpose inside the kernel.
_NT = (((1,), (1,)), ((), ()))


def _leaky_relu(v):                       # negative_slope = 0.2
    return jnp.where(v > 0, v, 0.2 * v)


def _elu(v):                              # alpha = 1
    return jnp.where(v > 0, v, jnp.exp(jnp.minimum(v, 0.0)) - 1.0)


def make_batch_gat_kernel(layer_dims):
    """layer_dims: tuple of (n_head, f_out) per GAT layer."""
    n_layer = len(layer_dims)

    def kernel(*refs):
        x_ref, mask_ref = refs[0], refs[1]
        out_ref = refs[-1]
        param_refs = refs[2:-1]

        h = x_ref[0, 0, :, :]                      # (N, f_in)
        mask = mask_ref[0, :, :]                   # (N, N), 1.0 where masked

        for li, (n_head, f_out) in enumerate(layer_dims):
            w_ref, asrc_ref, adst_ref = param_refs[3 * li:3 * li + 3]
            last = li + 1 == n_layer

            # Fused input projection for all heads: one MXU matmul.
            hp_cat = jnp.dot(h, w_ref[0, :, :],
                             preferred_element_type=jnp.float32,
                             precision=_HIGHEST)             # (N, H*F)
            th_cat = jnp.tanh(hp_cat)                        # one EUP pass, full slab
            a_src = asrc_ref[0, :, :]                        # (H, F)
            a_dst = adst_ref[0, :, :]

            head_outs = []
            acc = None
            for hd in range(n_head):                         # static unroll
                lo = hd * f_out
                hp = hp_cat[:, lo:lo + f_out]                # (N, F)
                th = th_cat[:, lo:lo + f_out]
                a_s = a_src[hd:hd + 1, :]                    # (1, F)
                a_d = a_dst[hd:hd + 1, :]
                src = lax.dot_general(th, a_s, _NT,
                                      preferred_element_type=jnp.float32,
                                      precision=_HIGHEST)    # (N, 1)
                dst_t = lax.dot_general(a_d, th, _NT,
                                        preferred_element_type=jnp.float32,
                                        precision=_HIGHEST)  # (1, N)
                attn = _leaky_relu(src + dst_t)              # (N, N)
                attn = jnp.where(mask > 0.0, jnp.float32(-1e12), attn)
                attn = attn - jnp.max(attn, axis=-1, keepdims=True)
                e = jnp.exp(attn)
                p = e / jnp.sum(e, axis=-1, keepdims=True)   # softmax(dim=-1)
                # TODO(synk): nn.Dropout(attn_dropout) on the attention weights is a
                # training-time stochastic op; treated as identity (eval mode).
                o = jnp.dot(p, hp, preferred_element_type=jnp.float32,
                            precision=_HIGHEST)              # (N, F)
                if last:
                    acc = o if acc is None else acc + o
                else:
                    head_outs.append(o)

            if last:
                h = acc * (1.0 / n_head)                     # torch.mean(dim=2) over heads
            else:
                # permute(0,1,3,2,4).view(bs, chs, n, -1) == head-major concat.
                h = jnp.concatenate(head_outs, axis=-1)      # (N, H*F) lane-dense
                h = _elu(h)
                # TODO(synk): F.dropout(x, self.dropout) between layers is a
                # training-time stochastic op; treated as identity (eval mode).

        out_ref[0, 0, :, :] = h                              # single lane-dense store

    return kernel


def batch_gat_forward(x, adj, layers):
    """
    x:      (B, C, N, f_in) f32
    adj:    (B, N, N) f32 0/1 adjacency
    layers: list of (w, a_src, a_dst) with w:(C,H,f_in,f_out), a_*:(C,H,f_out,1)
    Returns (B, C, N, f_out_last).  bias=False (module default); eval-mode dropout.
    """
    B, C, N, f_in = x.shape
    eye = jnp.eye(N, dtype=adj.dtype)
    # (adj + I) == 0 -> masked attention entry; shared by all channels/heads/layers.
    mask = ((adj + eye[None, :, :]) == 0).astype(jnp.float32)   # (B, N, N)

    inputs = [x, mask]
    in_specs = [
        pl.BlockSpec((1, 1, N, f_in), lambda b, c: (b, c, 0, 0)),
        pl.BlockSpec((1, N, N), lambda b, c: (b, 0, 0)),
    ]
    layer_dims = []
    for (w, a_src, a_dst) in layers:
        Cw, H, fi, fo = w.shape
        assert Cw == C
        # (C, H, fi, fo) -> (C, fi, H*fo): all heads projected by one matmul.
        w_cat = jnp.transpose(w, (0, 2, 1, 3)).reshape(C, fi, H * fo)
        inputs += [w_cat, a_src.reshape(C, H, fo), a_dst.reshape(C, H, fo)]
        in_specs += [
            pl.BlockSpec((1, fi, H * fo), lambda b, c: (c, 0, 0)),
            pl.BlockSpec((1, H, fo), lambda b, c: (c, 0, 0)),
            pl.BlockSpec((1, H, fo), lambda b, c: (c, 0, 0)),
        ]
        layer_dims.append((H, fo))
    # TODO(synk): bias=True path (additive per-layer f_out bias) not wired; the
    # module default bias=False is what is implemented.

    f_out_last = layer_dims[-1][1]
    kernel = make_batch_gat_kernel(tuple(layer_dims))
    return pl.pallas_call(
        kernel,
        out_shape=jax.ShapeDtypeStruct((B, C, N, f_out_last), jnp.float32),
        grid=(B, C),
        in_specs=in_specs,
        out_specs=pl.BlockSpec((1, 1, N, f_out_last), lambda b, c: (b, c, 0, 0)),
        compiler_params=pltpu.CompilerParams(
            dimension_semantics=("parallel", "parallel")),
    )(*inputs)


def batch_gat_reference(x, adj, layers):
    """Pure-JAX mirror of the PyTorch BatchGAT forward (eval-mode dropout)."""
    B, C, N, _ = x.shape
    n_layer = len(layers)
    eye = jnp.eye(N, dtype=adj.dtype)
    mask = ((adj + eye[None, :, :]) == 0)[:, None, None, :, :]   # (B,1,1,N,N)
    h = x
    for i, (w, a_src, a_dst) in enumerate(layers):
        h_prime = jnp.einsum('bcnf,chfo->bchno', h, w, precision=_HIGHEST)
        t = jnp.tanh(h_prime)
        attn_src = jnp.einsum('bchno,choz->bchnz', t, a_src, precision=_HIGHEST)
        attn_dst = jnp.einsum('bchno,choz->bchnz', t, a_dst, precision=_HIGHEST)
        attn = attn_src + jnp.swapaxes(attn_dst, -1, -2)
        attn = _leaky_relu(attn)
        attn = jnp.where(mask, -1e12, attn)
        attn = attn - jnp.max(attn, axis=-1, keepdims=True)
        e = jnp.exp(attn)
        p = e / jnp.sum(e, axis=-1, keepdims=True)
        out = jnp.einsum('bchnm,bchmo->bchno', p, h_prime, precision=_HIGHEST)
        if i + 1 == n_layer:
            h = jnp.mean(out, axis=2)
        else:
            h = jnp.transpose(out, (0, 1, 3, 2, 4)).reshape(B, C, N, -1)
            h = _elu(h)
    return h


if __name__ == "__main__":
    # Small shapes consistent with the module.
    B, C, N = 2, 4, 16            # batch, channels, graph nodes
    f_in = 16
    n_heads = [4, 4]
    n_units = [32, 32]            # hidden = 32; layer-1 input = 4*32 = 128 (lane dense)

    key = jax.random.PRNGKey(0)
    keys = jax.random.split(key, 2 + 3 * len(n_units))

    x = jax.random.normal(keys[0], (B, C, N, f_in), jnp.float32)
    adj = (jax.random.uniform(keys[1], (B, N, N)) < 0.4).astype(jnp.float32)

    layers = []
    fi = f_in
    ki = 2
    for H, fo in zip(n_heads, n_units):
        bw = math.sqrt(6.0 / (fi + fo))          # xavier_uniform-style bounds
        w = jax.random.uniform(keys[ki], (C, H, fi, fo), jnp.float32, -bw, bw); ki += 1
        ba = math.sqrt(6.0 / (fo + 1))
        a_src = jax.random.uniform(keys[ki], (C, H, fo, 1), jnp.float32, -ba, ba); ki += 1
        a_dst = jax.random.uniform(keys[ki], (C, H, fo, 1), jnp.float32, -ba, ba); ki += 1
        layers.append((w, a_src, a_dst))
        fi = H * fo                              # n_units[i-1] * n_heads[i]

    out = jax.block_until_ready(batch_gat_forward(x, adj, layers))
    assert out.shape == (B, C, N, n_units[-1]), out.shape

    ref = batch_gat_reference(x, adj, layers)
    err = float(jnp.max(jnp.abs(out - ref)))
    assert jnp.allclose(out, ref, rtol=1e-4, atol=1e-4), f"max abs err = {err}"

    print("KERNEL_OK")
</pallas_src>

<mosaic_0001>
module attributes {stable_mosaic.version = 11 : i64} {
  func.func @kernel(%arg0: i32, %arg1: i32, %arg2: memref<1x1x16x16xf32, #tpu.memory_space<vmem>>, %arg3: memref<1x16x16xf32, #tpu.memory_space<vmem>>, %arg4: memref<1x16x128xf32, #tpu.memory_space<vmem>>, %arg5: memref<1x4x32xf32, #tpu.memory_space<vmem>>, %arg6: memref<1x4x32xf32, #tpu.memory_space<vmem>>, %arg7: memref<1x128x128xf32, #tpu.memory_space<vmem>>, %arg8: memref<1x4x32xf32, #tpu.memory_space<vmem>>, %arg9: memref<1x4x32xf32, #tpu.memory_space<vmem>>, %arg10: memref<1x1x16x32xf32, #tpu.memory_space<vmem>>) attributes {dimension_semantics = [#tpu.dimension_semantics<parallel>, #tpu.dimension_semantics<parallel>], iteration_bounds = array<i64: 2, 4>, scalar_prefetch = 0 : i64, scratch_operands = 0 : i64, tpu.core_type = #tpu.core_type<tc>, window_params = [{transform_indices = @transform_0, window_bounds = array<i64: 1, 1, 16, 16>}, {transform_indices = @transform_1, window_bounds = array<i64: 1, 16, 16>}, {transform_indices = @transform_2, window_bounds = array<i64: 1, 16, 128>}, {transform_indices = @transform_3, window_bounds = array<i64: 1, 4, 32>}, {transform_indices = @transform_4, window_bounds = array<i64: 1, 4, 32>}, {transform_indices = @transform_5, window_bounds = array<i64: 1, 128, 128>}, {transform_indices = @transform_6, window_bounds = array<i64: 1, 4, 32>}, {transform_indices = @transform_7, window_bounds = array<i64: 1, 4, 32>}, {transform_indices = @transform_8, window_bounds = array<i64: 1, 1, 16, 32>}]} {
    %c0 = arith.constant 0 : index
    %c0_0 = arith.constant 0 : index
    %c0_1 = arith.constant 0 : index
    %c0_2 = arith.constant 0 : index
    %0 = vector.load %arg2[%c0, %c0_0, %c0_1, %c0_2] : memref<1x1x16x16xf32, #tpu.memory_space<vmem>>, vector<1x1x16x16xf32>
    %1 = vector.shape_cast %0 : vector<1x1x16x16xf32> to vector<16x16xf32>
    %c0_3 = arith.constant 0 : index
    %c0_4 = arith.constant 0 : index
    %c0_5 = arith.constant 0 : index
    %2 = vector.load %arg3[%c0_3, %c0_4, %c0_5] : memref<1x16x16xf32, #tpu.memory_space<vmem>>, vector<1x16x16xf32>
    %3 = vector.shape_cast %2 : vector<1x16x16xf32> to vector<16x16xf32>
    %c0_6 = arith.constant 0 : index
    %c0_7 = arith.constant 0 : index
    %c0_8 = arith.constant 0 : index
    %4 = vector.load %arg4[%c0_6, %c0_7, %c0_8] : memref<1x16x128xf32, #tpu.memory_space<vmem>>, vector<1x16x128xf32>
    %5 = vector.shape_cast %4 : vector<1x16x128xf32> to vector<16x128xf32>
    %cst = arith.constant dense<0.000000e+00> : vector<16x128xf32>
    %6 = tpu.matmul %1, %5, %cst {dimension_numbers = #tpu.dot_dimension_numbers<[1], [0], [0], [1], [0, 0, 1, 1], [], []>, precision = #tpu.contract_precision<fp32>} : vector<16x16xf32>, vector<16x128xf32>, vector<16x128xf32> -> vector<16x128xf32>
    %7 = math.tanh %6 : vector<16x128xf32>
    %c0_9 = arith.constant 0 : index
    %c0_10 = arith.constant 0 : index
    %c0_11 = arith.constant 0 : index
    %8 = vector.load %arg5[%c0_9, %c0_10, %c0_11] : memref<1x4x32xf32, #tpu.memory_space<vmem>>, vector<1x4x32xf32>
    %9 = vector.shape_cast %8 : vector<1x4x32xf32> to vector<4x32xf32>
    %c0_12 = arith.constant 0 : index
    %c0_13 = arith.constant 0 : index
    %c0_14 = arith.constant 0 : index
    %10 = vector.load %arg6[%c0_12, %c0_13, %c0_14] : memref<1x4x32xf32, #tpu.memory_space<vmem>>, vector<1x4x32xf32>
    %11 = vector.shape_cast %10 : vector<1x4x32xf32> to vector<4x32xf32>
    %12 = vector.extract_strided_slice %6 {offsets = [0, 0], sizes = [16, 32], strides = [1, 1]} : vector<16x128xf32> to vector<16x32xf32>
    %13 = vector.extract_strided_slice %7 {offsets = [0, 0], sizes = [16, 32], strides = [1, 1]} : vector<16x128xf32> to vector<16x32xf32>
    %14 = vector.extract_strided_slice %9 {offsets = [0, 0], sizes = [1, 32], strides = [1, 1]} : vector<4x32xf32> to vector<1x32xf32>
    %15 = vector.extract_strided_slice %11 {offsets = [0, 0], sizes = [1, 32], strides = [1, 1]} : vector<4x32xf32> to vector<1x32xf32>
    %cst_15 = arith.constant dense<0.000000e+00> : vector<16x1xf32>
    %16 = tpu.matmul %13, %14, %cst_15 {dimension_numbers = #tpu.dot_dimension_numbers<[1], [1], [0], [0], [0, 0, 1, 0], [], []>, precision = #tpu.contract_precision<fp32>} : vector<16x32xf32>, vector<1x32xf32>, vector<16x1xf32> -> vector<16x1xf32>
    %cst_16 = arith.constant dense<0.000000e+00> : vector<1x16xf32>
    %17 = tpu.matmul %15, %13, %cst_16 {dimension_numbers = #tpu.dot_dimension_numbers<[1], [1], [0], [0], [0, 0, 1, 0], [], []>, precision = #tpu.contract_precision<fp32>} : vector<1x32xf32>, vector<16x32xf32>, vector<1x16xf32> -> vector<1x16xf32>
    %18 = vector.broadcast %16 : vector<16x1xf32> to vector<16x16xf32>
    %19 = vector.broadcast %17 : vector<1x16xf32> to vector<16x16xf32>
    %20 = arith.addf %18, %19 : vector<16x16xf32>
    %cst_17 = arith.constant 0.000000e+00 : f32
    %21 = vector.broadcast %cst_17 : f32 to vector<16x16xf32>
    %22 = arith.cmpf ogt, %20, %21 : vector<16x16xf32>
    %cst_18 = arith.constant 2.000000e-01 : f32
    %23 = vector.broadcast %cst_18 : f32 to vector<16x16xf32>
    %24 = arith.mulf %23, %20 : vector<16x16xf32>
    %25 = arith.select %22, %20, %24 : vector<16x16xi1>, vector<16x16xf32>
    %cst_19 = arith.constant 0.000000e+00 : f32
    %26 = vector.broadcast %cst_19 : f32 to vector<16x16xf32>
    %27 = arith.cmpf ogt, %3, %26 : vector<16x16xf32>
    %cst_20 = arith.constant -9.99999995E+11 : f32
    %28 = vector.broadcast %cst_20 : f32 to vector<16x16xf32>
    %29 = arith.select %27, %28, %25 : vector<16x16xi1>, vector<16x16xf32>
    %cst_21 = arith.constant dense<0xFF800000> : vector<16xf32>
    %30 = vector.multi_reduction <maximumf>, %29, %cst_21 [1] : vector<16x16xf32> to vector<16xf32>
    %31 = vector.shape_cast %30 : vector<16xf32> to vector<16x1xf32>
    %32 = vector.broadcast %31 : vector<16x1xf32> to vector<16x16xf32>
    %33 = arith.subf %29, %32 : vector<16x16xf32>
    %34 = math.exp %33 : vector<16x16xf32>
    %cst_22 = arith.constant dense<0.000000e+00> : vector<16xf32>
    %35 = vector.multi_reduction <add>, %34, %cst_22 [1] : vector<16x16xf32> to vector<16xf32>
    %36 = vector.shape_cast %35 : vector<16xf32> to vector<16x1xf32>
    %37 = vector.broadcast %36 : vector<16x1xf32> to vector<16x16xf32>
    %38 = arith.divf %34, %37 : vector<16x16xf32>
    %cst_23 = arith.constant dense<0.000000e+00> : vector<16x32xf32>
    %39 = tpu.matmul %38, %12, %cst_23 {dimension_numbers = #tpu.dot_dimension_numbers<[1], [0], [0], [1], [0, 0, 1, 1], [], []>, precision = #tpu.contract_precision<fp32>} : vector<16x16xf32>, vector<16x32xf32>, vector<16x32xf32> -> vector<16x32xf32>
    %40 = vector.extract_strided_slice %6 {offsets = [0, 32], sizes = [16, 32], strides = [1, 1]} : vector<16x128xf32> to vector<16x32xf32>
    %41 = vector.extract_strided_slice %7 {offsets = [0, 32], sizes = [16, 32], strides = [1, 1]} : vector<16x128xf32> to vector<16x32xf32>
    %42 = vector.extract_strided_slice %9 {offsets = [1, 0], sizes = [1, 32], strides = [1, 1]} : vector<4x32xf32> to vector<1x32xf32>
    %43 = vector.extract_strided_slice %11 {offsets = [1, 0], sizes = [1, 32], strides = [1, 1]} : vector<4x32xf32> to vector<1x32xf32>
    %cst_24 = arith.constant dense<0.000000e+00> : vector<16x1xf32>
    %44 = tpu.matmul %41, %42, %cst_24 {dimension_numbers = #tpu.dot_dimension_numbers<[1], [1], [0], [0], [0, 0, 1, 0], [], []>, precision = #tpu.contract_precision<fp32>} : vector<16x32xf32>, vector<1x32xf32>, vector<16x1xf32> -> vector<16x1xf32>
    %cst_25 = arith.constant dense<0.000000e+00> : vector<1x16xf32>
    %45 = tpu.matmul %43, %41, %cst_25 {dimension_numbers = #tpu.dot_dimension_numbers<[1], [1], [0], [0], [0, 0, 1, 0], [], []>, precision = #tpu.contract_precision<fp32>} : vector<1x32xf32>, vector<16x32xf32>, vector<1x16xf32> -> vector<1x16xf32>
    %46 = vector.broadcast %44 : vector<16x1xf32> to vector<16x16xf32>
    %47 = vector.broadcast %45 : vector<1x16xf32> to vector<16x16xf32>
    %48 = arith.addf %46, %47 : vector<16x16xf32>
    %cst_26 = arith.constant 0.000000e+00 : f32
    %49 = vector.broadcast %cst_26 : f32 to vector<16x16xf32>
    %50 = arith.cmpf ogt, %48, %49 : vector<16x16xf32>
    %cst_27 = arith.constant 2.000000e-01 : f32
    %51 = vector.broadcast %cst_27 : f32 to vector<16x16xf32>
    %52 = arith.mulf %51, %48 : vector<16x16xf32>
    %53 = arith.select %50, %48, %52 : vector<16x16xi1>, vector<16x16xf32>
    %cst_28 = arith.constant 0.000000e+00 : f32
    %54 = vector.broadcast %cst_28 : f32 to vector<16x16xf32>
    %55 = arith.cmpf ogt, %3, %54 : vector<16x16xf32>
    %cst_29 = arith.constant -9.99999995E+11 : f32
    %56 = vector.broadcast %cst_29 : f32 to vector<16x16xf32>
    %57 = arith.select %55, %56, %53 : vector<16x16xi1>, vector<16x16xf32>
    %cst_30 = arith.constant dense<0xFF800000> : vector<16xf32>
    %58 = vector.multi_reduction <maximumf>, %57, %cst_30 [1] : vector<16x16xf32> to vector<16xf32>
    %59 = vector.shape_cast %58 : vector<16xf32> to vector<16x1xf32>
    %60 = vector.broadcast %59 : vector<16x1xf32> to vector<16x16xf32>
    %61 = arith.subf %57, %60 : vector<16x16xf32>
    %62 = math.exp %61 : vector<16x16xf32>
    %cst_31 = arith.constant dense<0.000000e+00> : vector<16xf32>
    %63 = vector.multi_reduction <add>, %62, %cst_31 [1] : vector<16x16xf32> to vector<16xf32>
    %64 = vector.shape_cast %63 : vector<16xf32> to vector<16x1xf32>
    %65 = vector.broadcast %64 : vector<16x1xf32> to vector<16x16xf32>
    %66 = arith.divf %62, %65 : vector<16x16xf32>
    %cst_32 = arith.constant dense<0.000000e+00> : vector<16x32xf32>
    %67 = tpu.matmul %66, %40, %cst_32 {dimension_numbers = #tpu.dot_dimension_numbers<[1], [0], [0], [1], [0, 0, 1, 1], [], []>, precision = #tpu.contract_precision<fp32>} : vector<16x16xf32>, vector<16x32xf32>, vector<16x32xf32> -> vector<16x32xf32>
    %68 = vector.extract_strided_slice %6 {offsets = [0, 64], sizes = [16, 32], strides = [1, 1]} : vector<16x128xf32> to vector<16x32xf32>
    %69 = vector.extract_strided_slice %7 {offsets = [0, 64], sizes = [16, 32], strides = [1, 1]} : vector<16x128xf32> to vector<16x32xf32>
    %70 = vector.extract_strided_slice %9 {offsets = [2, 0], sizes = [1, 32], strides = [1, 1]} : vector<4x32xf32> to vector<1x32xf32>
    %71 = vector.extract_strided_slice %11 {offsets = [2, 0], sizes = [1, 32], strides = [1, 1]} : vector<4x32xf32> to vector<1x32xf32>
    %cst_33 = arith.constant dense<0.000000e+00> : vector<16x1xf32>
    %72 = tpu.matmul %69, %70, %cst_33 {dimension_numbers = #tpu.dot_dimension_numbers<[1], [1], [0], [0], [0, 0, 1, 0], [], []>, precision = #tpu.contract_precision<fp32>} : vector<16x32xf32>, vector<1x32xf32>, vector<16x1xf32> -> vector<16x1xf32>
    %cst_34 = arith.constant dense<0.000000e+00> : vector<1x16xf32>
    %73 = tpu.matmul %71, %69, %cst_34 {dimension_numbers = #tpu.dot_dimension_numbers<[1], [1], [0], [0], [0, 0, 1, 0], [], []>, precision = #tpu.contract_precision<fp32>} : vector<1x32xf32>, vector<16x32xf32>, vector<1x16xf32> -> vector<1x16xf32>
    %74 = vector.broadcast %72 : vector<16x1xf32> to vector<16x16xf32>
    %75 = vector.broadcast %73 : vector<1x16xf32> to vector<16x16xf32>
    %76 = arith.addf %74, %75 : vector<16x16xf32>
    %cst_35 = arith.constant 0.000000e+00 : f32
    %77 = vector.broadcast %cst_35 : f32 to vector<16x16xf32>
    %78 = arith.cmpf ogt, %76, %77 : vector<16x16xf32>
    %cst_36 = arith.constant 2.000000e-01 : f32
    %79 = vector.broadcast %cst_36 : f32 to vector<16x16xf32>
    %80 = arith.mulf %79, %76 : vector<16x16xf32>
    %81 = arith.select %78, %76, %80 : vector<16x16xi1>, vector<16x16xf32>
    %cst_37 = arith.constant 0.000000e+00 : f32
    %82 = vector.broadcast %cst_37 : f32 to vector<16x16xf32>
    %83 = arith.cmpf ogt, %3, %82 : vector<16x16xf32>
    %cst_38 = arith.constant -9.99999995E+11 : f32
    %84 = vector.broadcast %cst_38 : f32 to vector<16x16xf32>
    %85 = arith.select %83, %84, %81 : vector<16x16xi1>, vector<16x16xf32>
    %cst_39 = arith.constant dense<0xFF800000> : vector<16xf32>
    %86 = vector.multi_reduction <maximumf>, %85, %cst_39 [1] : vector<16x16xf32> to vector<16xf32>
    %87 = vector.shape_cast %86 : vector<16xf32> to vector<16x1xf32>
    %88 = vector.broadcast %87 : vector<16x1xf32> to vector<16x16xf32>
    %89 = arith.subf %85, %88 : vector<16x16xf32>
    %90 = math.exp %89 : vector<16x16xf32>
    %cst_40 = arith.constant dense<0.000000e+00> : vector<16xf32>
    %91 = vector.multi_reduction <add>, %90, %cst_40 [1] : vector<16x16xf32> to vector<16xf32>
    %92 = vector.shape_cast %91 : vector<16xf32> to vector<16x1xf32>
    %93 = vector.broadcast %92 : vector<16x1xf32> to vector<16x16xf32>
    %94 = arith.divf %90, %93 : vector<16x16xf32>
    %cst_41 = arith.constant dense<0.000000e+00> : vector<16x32xf32>
    %95 = tpu.matmul %94, %68, %cst_41 {dimension_numbers = #tpu.dot_dimension_numbers<[1], [0], [0], [1], [0, 0, 1, 1], [], []>, precision = #tpu.contract_precision<fp32>} : vector<16x16xf32>, vector<16x32xf32>, vector<16x32xf32> -> vector<16x32xf32>
    %96 = vector.extract_strided_slice %6 {offsets = [0, 96], sizes = [16, 32], strides = [1, 1]} : vector<16x128xf32> to vector<16x32xf32>
    %97 = vector.extract_strided_slice %7 {offsets = [0, 96], sizes = [16, 32], strides = [1, 1]} : vector<16x128xf32> to vector<16x32xf32>
    %98 = vector.extract_strided_slice %9 {offsets = [3, 0], sizes = [1, 32], strides = [1, 1]} : vector<4x32xf32> to vector<1x32xf32>
    %99 = vector.extract_strided_slice %11 {offsets = [3, 0], sizes = [1, 32], strides = [1, 1]} : vector<4x32xf32> to vector<1x32xf32>
    %cst_42 = arith.constant dense<0.000000e+00> : vector<16x1xf32>
    %100 = tpu.matmul %97, %98, %cst_42 {dimension_numbers = #tpu.dot_dimension_numbers<[1], [1], [0], [0], [0, 0, 1, 0], [], []>, precision = #tpu.contract_precision<fp32>} : vector<16x32xf32>, vector<1x32xf32>, vector<16x1xf32> -> vector<16x1xf32>
    %cst_43 = arith.constant dense<0.000000e+00> : vector<1x16xf32>
    %101 = tpu.matmul %99, %97, %cst_43 {dimension_numbers = #tpu.dot_dimension_numbers<[1], [1], [0], [0], [0, 0, 1, 0], [], []>, precision = #tpu.contract_precision<fp32>} : vector<1x32xf32>, vector<16x32xf32>, vector<1x16xf32> -> vector<1x16xf32>
    %102 = vector.broadcast %100 : vector<16x1xf32> to vector<16x16xf32>
    %103 = vector.broadcast %101 : vector<1x16xf32> to vector<16x16xf32>
    %104 = arith.addf %102, %103 : vector<16x16xf32>
    %cst_44 = arith.constant 0.000000e+00 : f32
    %105 = vector.broadcast %cst_44 : f32 to vector<16x16xf32>
    %106 = arith.cmpf ogt, %104, %105 : vector<16x16xf32>
    %cst_45 = arith.constant 2.000000e-01 : f32
    %107 = vector.broadcast %cst_45 : f32 to vector<16x16xf32>
    %108 = arith.mulf %107, %104 : vector<16x16xf32>
    %109 = arith.select %106, %104, %108 : vector<16x16xi1>, vector<16x16xf32>
    %cst_46 = arith.constant 0.000000e+00 : f32
    %110 = vector.broadcast %cst_46 : f32 to vector<16x16xf32>
    %111 = arith.cmpf ogt, %3, %110 : vector<16x16xf32>
    %cst_47 = arith.constant -9.99999995E+11 : f32
    %112 = vector.broadcast %cst_47 : f32 to vector<16x16xf32>
    %113 = arith.select %111, %112, %109 : vector<16x16xi1>, vector<16x16xf32>
    %cst_48 = arith.constant dense<0xFF800000> : vector<16xf32>
    %114 = vector.multi_reduction <maximumf>, %113, %cst_48 [1] : vector<16x16xf32> to vector<16xf32>
    %115 = vector.shape_cast %114 : vector<16xf32> to vector<16x1xf32>
    %116 = vector.broadcast %115 : vector<16x1xf32> to vector<16x16xf32>
    %117 = arith.subf %113, %116 : vector<16x16xf32>
    %118 = math.exp %117 : vector<16x16xf32>
    %cst_49 = arith.constant dense<0.000000e+00> : vector<16xf32>
    %119 = vector.multi_reduction <add>, %118, %cst_49 [1] : vector<16x16xf32> to vector<16xf32>
    %120 = vector.shape_cast %119 : vector<16xf32> to vector<16x1xf32>
    %121 = vector.broadcast %120 : vector<16x1xf32> to vector<16x16xf32>
    %122 = arith.divf %118, %121 : vector<16x16xf32>
    %cst_50 = arith.constant dense<0.000000e+00> : vector<16x32xf32>
    %123 = tpu.matmul %122, %96, %cst_50 {dimension_numbers = #tpu.dot_dimension_numbers<[1], [0], [0], [1], [0, 0, 1, 1], [], []>, precision = #tpu.contract_precision<fp32>} : vector<16x16xf32>, vector<16x32xf32>, vector<16x32xf32> -> vector<16x32xf32>
    %124 = tpu.concatenate %39, %67, %95, %123 in 1 : vector<16x32xf32>, vector<16x32xf32>, vector<16x32xf32>, vector<16x32xf32> -> vector<16x128xf32>
    %cst_51 = arith.constant 0.000000e+00 : f32
    %125 = vector.broadcast %cst_51 : f32 to vector<16x128xf32>
    %126 = arith.cmpf ogt, %124, %125 : vector<16x128xf32>
    %cst_52 = arith.constant 0.000000e+00 : f32
    %127 = vector.broadcast %cst_52 : f32 to vector<16x128xf32>
    %128 = arith.minimumf %124, %127 : vector<16x128xf32>
    %129 = math.exp %128 : vector<16x128xf32>
    %cst_53 = arith.constant 1.000000e+00 : f32
    %130 = vector.broadcast %cst_53 : f32 to vector<16x128xf32>
    %131 = arith.subf %129, %130 : vector<16x128xf32>
    %132 = arith.select %126, %124, %131 : vector<16x128xi1>, vector<16x128xf32>
    %c0_54 = arith.constant 0 : index
    %c0_55 = arith.constant 0 : index
    %c0_56 = arith.constant 0 : index
    %133 = vector.load %arg7[%c0_54, %c0_55, %c0_56] : memref<1x128x128xf32, #tpu.memory_space<vmem>>, vector<1x128x128xf32>
    %134 = vector.shape_cast %133 : vector<1x128x128xf32> to vector<128x128xf32>
    %cst_57 = arith.constant dense<0.000000e+00> : vector<16x128xf32>
    %135 = tpu.matmul %132, %134, %cst_57 {dimension_numbers = #tpu.dot_dimension_numbers<[1], [0], [0], [1], [0, 0, 1, 1], [], []>, precision = #tpu.contract_precision<fp32>} : vector<16x128xf32>, vector<128x128xf32>, vector<16x128xf32> -> vector<16x128xf32>
    %136 = math.tanh %135 : vector<16x128xf32>
    %c0_58 = arith.constant 0 : index
    %c0_59 = arith.constant 0 : index
    %c0_60 = arith.constant 0 : index
    %137 = vector.load %arg8[%c0_58, %c0_59, %c0_60] : memref<1x4x32xf32, #tpu.memory_space<vmem>>, vector<1x4x32xf32>
    %138 = vector.shape_cast %137 : vector<1x4x32xf32> to vector<4x32xf32>
    %c0_61 = arith.constant 0 : index
    %c0_62 = arith.constant 0 : index
    %c0_63 = arith.constant 0 : index
    %139 = vector.load %arg9[%c0_61, %c0_62, %c0_63] : memref<1x4x32xf32, #tpu.memory_space<vmem>>, vector<1x4x32xf32>
    %140 = vector.shape_cast %139 : vector<1x4x32xf32> to vector<4x32xf32>
    %141 = vector.extract_strided_slice %135 {offsets = [0, 0], sizes = [16, 32], strides = [1, 1]} : vector<16x128xf32> to vector<16x32xf32>
    %142 = vector.extract_strided_slice %136 {offsets = [0, 0], sizes = [16, 32], strides = [1, 1]} : vector<16x128xf32> to vector<16x32xf32>
    %143 = vector.extract_strided_slice %138 {offsets = [0, 0], sizes = [1, 32], strides = [1, 1]} : vector<4x32xf32> to vector<1x32xf32>
    %144 = vector.extract_strided_slice %140 {offsets = [0, 0], sizes = [1, 32], strides = [1, 1]} : vector<4x32xf32> to vector<1x32xf32>
    %cst_64 = arith.constant dense<0.000000e+00> : vector<16x1xf32>
    %145 = tpu.matmul %142, %143, %cst_64 {dimension_numbers = #tpu.dot_dimension_numbers<[1], [1], [0], [0], [0, 0, 1, 0], [], []>, precision = #tpu.contract_precision<fp32>} : vector<16x32xf32>, vector<1x32xf32>, vector<16x1xf32> -> vector<16x1xf32>
    %cst_65 = arith.constant dense<0.000000e+00> : vector<1x16xf32>
    %146 = tpu.matmul %144, %142, %cst_65 {dimension_numbers = #tpu.dot_dimension_numbers<[1], [1], [0], [0], [0, 0, 1, 0], [], []>, precision = #tpu.contract_precision<fp32>} : vector<1x32xf32>, vector<16x32xf32>, vector<1x16xf32> -> vector<1x16xf32>
    %147 = vector.broadcast %145 : vector<16x1xf32> to vector<16x16xf32>
    %148 = vector.broadcast %146 : vector<1x16xf32> to vector<16x16xf32>
    %149 = arith.addf %147, %148 : vector<16x16xf32>
    %cst_66 = arith.constant 0.000000e+00 : f32
    %150 = vector.broadcast %cst_66 : f32 to vector<16x16xf32>
    %151 = arith.cmpf ogt, %149, %150 : vector<16x16xf32>
    %cst_67 = arith.constant 2.000000e-01 : f32
    %152 = vector.broadcast %cst_67 : f32 to vector<16x16xf32>
    %153 = arith.mulf %152, %149 : vector<16x16xf32>
    %154 = arith.select %151, %149, %153 : vector<16x16xi1>, vector<16x16xf32>
    %cst_68 = arith.constant 0.000000e+00 : f32
    %155 = vector.broadcast %cst_68 : f32 to vector<16x16xf32>
    %156 = arith.cmpf ogt, %3, %155 : vector<16x16xf32>
    %cst_69 = arith.constant -9.99999995E+11 : f32
    %157 = vector.broadcast %cst_69 : f32 to vector<16x16xf32>
    %158 = arith.select %156, %157, %154 : vector<16x16xi1>, vector<16x16xf32>
    %cst_70 = arith.constant dense<0xFF800000> : vector<16xf32>
    %159 = vector.multi_reduction <maximumf>, %158, %cst_70 [1] : vector<16x16xf32> to vector<16xf32>
    %160 = vector.shape_cast %159 : vector<16xf32> to vector<16x1xf32>
    %161 = vector.broadcast %160 : vector<16x1xf32> to vector<16x16xf32>
    %162 = arith.subf %158, %161 : vector<16x16xf32>
    %163 = math.exp %162 : vector<16x16xf32>
    %cst_71 = arith.constant dense<0.000000e+00> : vector<16xf32>
    %164 = vector.multi_reduction <add>, %163, %cst_71 [1] : vector<16x16xf32> to vector<16xf32>
    %165 = vector.shape_cast %164 : vector<16xf32> to vector<16x1xf32>
    %166 = vector.broadcast %165 : vector<16x1xf32> to vector<16x16xf32>
    %167 = arith.divf %163, %166 : vector<16x16xf32>
    %cst_72 = arith.constant dense<0.000000e+00> : vector<16x32xf32>
    %168 = tpu.matmul %167, %141, %cst_72 {dimension_numbers = #tpu.dot_dimension_numbers<[1], [0], [0], [1], [0, 0, 1, 1], [], []>, precision = #tpu.contract_precision<fp32>} : vector<16x16xf32>, vector<16x32xf32>, vector<16x32xf32> -> vector<16x32xf32>
    %169 = vector.extract_strided_slice %135 {offsets = [0, 32], sizes = [16, 32], strides = [1, 1]} : vector<16x128xf32> to vector<16x32xf32>
    %170 = vector.extract_strided_slice %136 {offsets = [0, 32], sizes = [16, 32], strides = [1, 1]} : vector<16x128xf32> to vector<16x32xf32>
    %171 = vector.extract_strided_slice %138 {offsets = [1, 0], sizes = [1, 32], strides = [1, 1]} : vector<4x32xf32> to vector<1x32xf32>
    %172 = vector.extract_strided_slice %140 {offsets = [1, 0], sizes = [1, 32], strides = [1, 1]} : vector<4x32xf32> to vector<1x32xf32>
    %cst_73 = arith.constant dense<0.000000e+00> : vector<16x1xf32>
    %173 = tpu.matmul %170, %171, %cst_73 {dimension_numbers = #tpu.dot_dimension_numbers<[1], [1], [0], [0], [0, 0, 1, 0], [], []>, precision = #tpu.contract_precision<fp32>} : vector<16x32xf32>, vector<1x32xf32>, vector<16x1xf32> -> vector<16x1xf32>
    %cst_74 = arith.constant dense<0.000000e+00> : vector<1x16xf32>
    %174 = tpu.matmul %172, %170, %cst_74 {dimension_numbers = #tpu.dot_dimension_numbers<[1], [1], [0], [0], [0, 0, 1, 0], [], []>, precision = #tpu.contract_precision<fp32>} : vector<1x32xf32>, vector<16x32xf32>, vector<1x16xf32> -> vector<1x16xf32>
    %175 = vector.broadcast %173 : vector<16x1xf32> to vector<16x16xf32>
    %176 = vector.broadcast %174 : vector<1x16xf32> to vector<16x16xf32>
    %177 = arith.addf %175, %176 : vector<16x16xf32>
    %cst_75 = arith.constant 0.000000e+00 : f32
    %178 = vector.broadcast %cst_75 : f32 to vector<16x16xf32>
    %179 = arith.cmpf ogt, %177, %178 : vector<16x16xf32>
    %cst_76 = arith.constant 2.000000e-01 : f32
    %180 = vector.broadcast %cst_76 : f32 to vector<16x16xf32>
    %181 = arith.mulf %180, %177 : vector<16x16xf32>
    %182 = arith.select %179, %177, %181 : vector<16x16xi1>, vector<16x16xf32>
    %cst_77 = arith.constant 0.000000e+00 : f32
    %183 = vector.broadcast %cst_77 : f32 to vector<16x16xf32>
    %184 = arith.cmpf ogt, %3, %183 : vector<16x16xf32>
    %cst_78 = arith.constant -9.99999995E+11 : f32
    %185 = vector.broadcast %cst_78 : f32 to vector<16x16xf32>
    %186 = arith.select %184, %185, %182 : vector<16x16xi1>, vector<16x16xf32>
    %cst_79 = arith.constant dense<0xFF800000> : vector<16xf32>
    %187 = vector.multi_reduction <maximumf>, %186, %cst_79 [1] : vector<16x16xf32> to vector<16xf32>
    %188 = vector.shape_cast %187 : vector<16xf32> to vector<16x1xf32>
    %189 = vector.broadcast %188 : vector<16x1xf32> to vector<16x16xf32>
    %190 = arith.subf %186, %189 : vector<16x16xf32>
    %191 = math.exp %190 : vector<16x16xf32>
    %cst_80 = arith.constant dense<0.000000e+00> : vector<16xf32>
    %192 = vector.multi_reduction <add>, %191, %cst_80 [1] : vector<16x16xf32> to vector<16xf32>
    %193 = vector.shape_cast %192 : vector<16xf32> to vector<16x1xf32>
    %194 = vector.broadcast %193 : vector<16x1xf32> to vector<16x16xf32>
    %195 = arith.divf %191, %194 : vector<16x16xf32>
    %cst_81 = arith.constant dense<0.000000e+00> : vector<16x32xf32>
    %196 = tpu.matmul %195, %169, %cst_81 {dimension_numbers = #tpu.dot_dimension_numbers<[1], [0], [0], [1], [0, 0, 1, 1], [], []>, precision = #tpu.contract_precision<fp32>} : vector<16x16xf32>, vector<16x32xf32>, vector<16x32xf32> -> vector<16x32xf32>
    %197 = arith.addf %168, %196 : vector<16x32xf32>
    %198 = vector.extract_strided_slice %135 {offsets = [0, 64], sizes = [16, 32], strides = [1, 1]} : vector<16x128xf32> to vector<16x32xf32>
    %199 = vector.extract_strided_slice %136 {offsets = [0, 64], sizes = [16, 32], strides = [1, 1]} : vector<16x128xf32> to vector<16x32xf32>
    %200 = vector.extract_strided_slice %138 {offsets = [2, 0], sizes = [1, 32], strides = [1, 1]} : vector<4x32xf32> to vector<1x32xf32>
    %201 = vector.extract_strided_slice %140 {offsets = [2, 0], sizes = [1, 32], strides = [1, 1]} : vector<4x32xf32> to vector<1x32xf32>
    %cst_82 = arith.constant dense<0.000000e+00> : vector<16x1xf32>
    %202 = tpu.matmul %199, %200, %cst_82 {dimension_numbers = #tpu.dot_dimension_numbers<[1], [1], [0], [0], [0, 0, 1, 0], [], []>, precision = #tpu.contract_precision<fp32>} : vector<16x32xf32>, vector<1x32xf32>, vector<16x1xf32> -> vector<16x1xf32>
    %cst_83 = arith.constant dense<0.000000e+00> : vector<1x16xf32>
    %203 = tpu.matmul %201, %199, %cst_83 {dimension_numbers = #tpu.dot_dimension_numbers<[1], [1], [0], [0], [0, 0, 1, 0], [], []>, precision = #tpu.contract_precision<fp32>} : vector<1x32xf32>, vector<16x32xf32>, vector<1x16xf32> -> vector<1x16xf32>
    %204 = vector.broadcast %202 : vector<16x1xf32> to vector<16x16xf32>
    %205 = vector.broadcast %203 : vector<1x16xf32> to vector<16x16xf32>
    %206 = arith.addf %204, %205 : vector<16x16xf32>
    %cst_84 = arith.constant 0.000000e+00 : f32
    %207 = vector.broadcast %cst_84 : f32 to vector<16x16xf32>
    %208 = arith.cmpf ogt, %206, %207 : vector<16x16xf32>
    %cst_85 = arith.constant 2.000000e-01 : f32
    %209 = vector.broadcast %cst_85 : f32 to vector<16x16xf32>
    %210 = arith.mulf %209, %206 : vector<16x16xf32>
    %211 = arith.select %208, %206, %210 : vector<16x16xi1>, vector<16x16xf32>
    %cst_86 = arith.constant 0.000000e+00 : f32
    %212 = vector.broadcast %cst_86 : f32 to vector<16x16xf32>
    %213 = arith.cmpf ogt, %3, %212 : vector<16x16xf32>
    %cst_87 = arith.constant -9.99999995E+11 : f32
    %214 = vector.broadcast %cst_87 : f32 to vector<16x16xf32>
    %215 = arith.select %213, %214, %211 : vector<16x16xi1>, vector<16x16xf32>
    %cst_88 = arith.constant dense<0xFF800000> : vector<16xf32>
    %216 = vector.multi_reduction <maximumf>, %215, %cst_88 [1] : vector<16x16xf32> to vector<16xf32>
    %217 = vector.shape_cast %216 : vector<16xf32> to vector<16x1xf32>
    %218 = vector.broadcast %217 : vector<16x1xf32> to vector<16x16xf32>
    %219 = arith.subf %215, %218 : vector<16x16xf32>
    %220 = math.exp %219 : vector<16x16xf32>
    %cst_89 = arith.constant dense<0.000000e+00> : vector<16xf32>
    %221 = vector.multi_reduction <add>, %220, %cst_89 [1] : vector<16x16xf32> to vector<16xf32>
    %222 = vector.shape_cast %221 : vector<16xf32> to vector<16x1xf32>
    %223 = vector.broadcast %222 : vector<16x1xf32> to vector<16x16xf32>
    %224 = arith.divf %220, %223 : vector<16x16xf32>
    %cst_90 = arith.constant dense<0.000000e+00> : vector<16x32xf32>
    %225 = tpu.matmul %224, %198, %cst_90 {dimension_numbers = #tpu.dot_dimension_numbers<[1], [0], [0], [1], [0, 0, 1, 1], [], []>, precision = #tpu.contract_precision<fp32>} : vector<16x16xf32>, vector<16x32xf32>, vector<16x32xf32> -> vector<16x32xf32>
    %226 = arith.addf %197, %225 : vector<16x32xf32>
    %227 = vector.extract_strided_slice %135 {offsets = [0, 96], sizes = [16, 32], strides = [1, 1]} : vector<16x128xf32> to vector<16x32xf32>
    %228 = vector.extract_strided_slice %136 {offsets = [0, 96], sizes = [16, 32], strides = [1, 1]} : vector<16x128xf32> to vector<16x32xf32>
    %229 = vector.extract_strided_slice %138 {offsets = [3, 0], sizes = [1, 32], strides = [1, 1]} : vector<4x32xf32> to vector<1x32xf32>
    %230 = vector.extract_strided_slice %140 {offsets = [3, 0], sizes = [1, 32], strides = [1, 1]} : vector<4x32xf32> to vector<1x32xf32>
    %cst_91 = arith.constant dense<0.000000e+00> : vector<16x1xf32>
    %231 = tpu.matmul %228, %229, %cst_91 {dimension_numbers = #tpu.dot_dimension_numbers<[1], [1], [0], [0], [0, 0, 1, 0], [], []>, precision = #tpu.contract_precision<fp32>} : vector<16x32xf32>, vector<1x32xf32>, vector<16x1xf32> -> vector<16x1xf32>
    %cst_92 = arith.constant dense<0.000000e+00> : vector<1x16xf32>
    %232 = tpu.matmul %230, %228, %cst_92 {dimension_numbers = #tpu.dot_dimension_numbers<[1], [1], [0], [0], [0, 0, 1, 0], [], []>, precision = #tpu.contract_precision<fp32>} : vector<1x32xf32>, vector<16x32xf32>, vector<1x16xf32> -> vector<1x16xf32>
    %233 = vector.broadcast %231 : vector<16x1xf32> to vector<16x16xf32>
    %234 = vector.broadcast %232 : vector<1x16xf32> to vector<16x16xf32>
    %235 = arith.addf %233, %234 : vector<16x16xf32>
    %cst_93 = arith.constant 0.000000e+00 : f32
    %236 = vector.broadcast %cst_93 : f32 to vector<16x16xf32>
    %237 = arith.cmpf ogt, %235, %236 : vector<16x16xf32>
    %cst_94 = arith.constant 2.000000e-01 : f32
    %238 = vector.broadcast %cst_94 : f32 to vector<16x16xf32>
    %239 = arith.mulf %238, %235 : vector<16x16xf32>
    %240 = arith.select %237, %235, %239 : vector<16x16xi1>, vector<16x16xf32>
    %cst_95 = arith.constant 0.000000e+00 : f32
    %241 = vector.broadcast %cst_95 : f32 to vector<16x16xf32>
    %242 = arith.cmpf ogt, %3, %241 : vector<16x16xf32>
    %cst_96 = arith.constant -9.99999995E+11 : f32
    %243 = vector.broadcast %cst_96 : f32 to vector<16x16xf32>
    %244 = arith.select %242, %243, %240 : vector<16x16xi1>, vector<16x16xf32>
    %cst_97 = arith.constant dense<0xFF800000> : vector<16xf32>
    %245 = vector.multi_reduction <maximumf>, %244, %cst_97 [1] : vector<16x16xf32> to vector<16xf32>
    %246 = vector.shape_cast %245 : vector<16xf32> to vector<16x1xf32>
    %247 = vector.broadcast %246 : vector<16x1xf32> to vector<16x16xf32>
    %248 = arith.subf %244, %247 : vector<16x16xf32>
    %249 = math.exp %248 : vector<16x16xf32>
    %cst_98 = arith.constant dense<0.000000e+00> : vector<16xf32>
    %250 = vector.multi_reduction <add>, %249, %cst_98 [1] : vector<16x16xf32> to vector<16xf32>
    %251 = vector.shape_cast %250 : vector<16xf32> to vector<16x1xf32>
    %252 = vector.broadcast %251 : vector<16x1xf32> to vector<16x16xf32>
    %253 = arith.divf %249, %252 : vector<16x16xf32>
    %cst_99 = arith.constant dense<0.000000e+00> : vector<16x32xf32>
    %254 = tpu.matmul %253, %227, %cst_99 {dimension_numbers = #tpu.dot_dimension_numbers<[1], [0], [0], [1], [0, 0, 1, 1], [], []>, precision = #tpu.contract_precision<fp32>} : vector<16x16xf32>, vector<16x32xf32>, vector<16x32xf32> -> vector<16x32xf32>
    %255 = arith.addf %226, %254 : vector<16x32xf32>
    %cst_100 = arith.constant 2.500000e-01 : f32
    %256 = vector.broadcast %cst_100 : f32 to vector<16x32xf32>
    %257 = arith.mulf %255, %256 : vector<16x32xf32>
    %c0_101 = arith.constant 0 : index
    %c0_102 = arith.constant 0 : index
    %c0_103 = arith.constant 0 : index
    %c0_104 = arith.constant 0 : index
    %258 = vector.load %arg10[%c0_101, %c0_102, %c0_103, %c0_104] : memref<1x1x16x32xf32, #tpu.memory_space<vmem>>, vector<1x1x16x32xf32>
    %259 = vector.shape_cast %258 : vector<1x1x16x32xf32> to vector<16x32xf32>
    %260 = vector.shape_cast %257 : vector<16x32xf32> to vector<1x1x16x32xf32>
    tpu.vector_store %arg10[%c0_101, %c0_102, %c0_103, %c0_104], %260 {strides = array<i32>} : memref<1x1x16x32xf32, #tpu.memory_space<vmem>>, vector<1x1x16x32xf32>,
    return
  }
  func.func @transform_0(%arg0: i32, %arg1: i32) -> (i32, i32, i32, i32) {
    %c0_i32 = arith.constant 0 : i32
    %c0_i32_0 = arith.constant 0 : i32
    %c0_i32_1 = arith.constant 0 : i32
    return %arg0, %arg1, %c0_i32, %c0_i32_0 : i32, i32, i32, i32
  }
  func.func @transform_1(%arg0: i32, %arg1: i32) -> (i32, i32, i32) {
    %c0_i32 = arith.constant 0 : i32
    %c0_i32_0 = arith.constant 0 : i32
    %c0_i32_1 = arith.constant 0 : i32
    return %arg0, %c0_i32, %c0_i32_0 : i32, i32, i32
  }
  func.func @transform_2(%arg0: i32, %arg1: i32) -> (i32, i32, i32) {
    %c0_i32 = arith.constant 0 : i32
    %c0_i32_0 = arith.constant 0 : i32
    %c0_i32_1 = arith.constant 0 : i32
    return %arg1, %c0_i32, %c0_i32_0 : i32, i32, i32
  }
  func.func @transform_3(%arg0: i32, %arg1: i32) -> (i32, i32, i32) {
    %c0_i32 = arith.constant 0 : i32
    %c0_i32_0 = arith.constant 0 : i32
    %c0_i32_1 = arith.constant 0 : i32
    return %arg1, %c0_i32, %c0_i32_0 : i32, i32, i32
  }
  func.func @transform_4(%arg0: i32, %arg1: i32) -> (i32, i32, i32) {
    %c0_i32 = arith.constant 0 : i32
    %c0_i32_0 = arith.constant 0 : i32
    %c0_i32_1 = arith.constant 0 : i32
    return %arg1, %c0_i32, %c0_i32_0 : i32, i32, i32
  }
  func.func @transform_5(%arg0: i32, %arg1: i32) -> (i32, i32, i32) {
    %c0_i32 = arith.constant 0 : i32
    %c0_i32_0 = arith.constant 0 : i32
    %c0_i32_1 = arith.constant 0 : i32
    return %arg1, %c0_i32, %c0_i32_0 : i32, i32, i32
  }
  func.func @transform_6(%arg0: i32, %arg1: i32) -> (i32, i32, i32) {
    %c0_i32 = arith.constant 0 : i32
    %c0_i32_0 = arith.constant 0 : i32
    %c0_i32_1 = arith.constant 0 : i32
    return %arg1, %c0_i32, %c0_i32_0 : i32, i32, i32
  }
  func.func @transform_7(%arg0: i32, %arg1: i32) -> (i32, i32, i32) {
    %c0_i32 = arith.constant 0 : i32
    %c0_i32_0 = arith.constant 0 : i32
    %c0_i32_1 = arith.constant 0 : i32
    return %arg1, %c0_i32, %c0_i32_0 : i32, i32, i32
  }
  func.func @transform_8(%arg0: i32, %arg1: i32) -> (i32, i32, i32, i32) {
    %c0_i32 = arith.constant 0 : i32
    %c0_i32_0 = arith.constant 0 : i32
    %c0_i32_1 = arith.constant 0 : i32
    return %arg0, %arg1, %c0_i32, %c0_i32_0 : i32, i32, i32, i32
  }
}

</mosaic_0001>

<llo_original>
// kernel: tpu_custom_call.1
$region0: #{tpu_custom_call.1}
  #allocation0 [shape = 'u32[]', space=smem, size = 0x4, offset = 0x4, fixed_abs, tag = 'smem constant byte address 0x4 - core index']
  #allocation1 [shape = 'u32[144,128]{1,0:T(1,128)}', space=vmem, size = 0x12000, scoped, tag = 'internal scratch']
  %s0 = inlined_call_operand.hbm [shape: f32[2,4,16,16], index: 0, kind: input, shape index: {}]
  %s1 = inlined_call_operand.hbm [shape: f32[2,16,16], index: 1, kind: input, shape index: {}]
  %s2 = inlined_call_operand.hbm [shape: f32[4,16,128], index: 2, kind: input, shape index: {}]
  %s3 = inlined_call_operand.hbm [shape: f32[4,4,32], index: 3, kind: input, shape index: {}]
  %s4 = inlined_call_operand.hbm [shape: f32[4,4,32], index: 4, kind: input, shape index: {}]
  %s5 = inlined_call_operand.hbm [shape: f32[4,128,128], index: 5, kind: input, shape index: {}]
  %s6 = inlined_call_operand.vmem [shape: f32[4,4,32], index: 6, kind: input, shape index: {}]
  %s7 = inlined_call_operand.hbm [shape: f32[4,4,32], index: 7, kind: input, shape index: {}]
  %s8 = inlined_call_operand.hbm [shape: f32[2,4,16,32], index: 8, kind: output, shape index: {}]
  %s9 = sld [smem:[#allocation0]]
  $region93: #{tpu_custom_call.1} parent=0
    _
  %s11 = ssub.s32 1, %s9
  %s12 = scalar_select 0, %s11, %s9
  $region1: #{tpu_custom_call.1} parent=0
    #allocation2 [shape = 'u8[16384]{0}', space=vmem, size = 0x4000, scoped, tag = 'input window, operand 0']
    #allocation3 [shape = 's32[2]{0}', space=sflag, size = 0x8, scoped, tag = 'scoped memory for tpu_custom_call.1']
    #allocation4 [shape = 's32[2]{0}', space=sflag, size = 0x8, scoped, tag = 'scoped memory for tpu_custom_call.1']
    #allocation5 [shape = 'u8[16384]{0}', space=vmem, size = 0x4000, scoped, tag = 'input window, operand 1']
    #allocation6 [shape = 's32[2]{0}', space=sflag, size = 0x8, scoped, tag = 'scoped memory for tpu_custom_call.1']
    #allocation7 [shape = 'u8[16384]{0}', space=vmem, size = 0x4000, scoped, tag = 'input window, operand 2']
    #allocation8 [shape = 'u8[4096]{0}', space=vmem, size = 0x1000, scoped, tag = 'input window, operand 3']
    #allocation9 [shape = 's32[2]{0}', space=sflag, size = 0x8, scoped, tag = 'scoped memory for tpu_custom_call.1']
    #allocation10 [shape = 'u8[4096]{0}', space=vmem, size = 0x1000, scoped, tag = 'input window, operand 4']
    #allocation11 [shape = 'u8[131072]{0}', space=vmem, size = 0x20000, scoped, tag = 'input window, operand 5']
    #allocation12 [shape = 's32[2]{0}', space=sflag, size = 0x8, scoped, tag = 'scoped memory for tpu_custom_call.1']
    #allocation13 [shape = 'u8[4096]{0}', space=vmem, size = 0x1000, scoped, tag = 'input window, operand 7']
    #allocation14 [shape = 'u8[16384]{0}', space=vmem, size = 0x4000, scoped, tag = 'output window, operand 0']
    %13 = vsyncpa [#allocation3], 0
    %s14 = scalar_lea.sflag [#allocation3], 1
    %15 = vsyncpa %s14, 0
    %16 = vsyncpa [#allocation6], 0
    %s17 = scalar_lea.sflag [#allocation6], 1
    %18 = vsyncpa %s17, 0
    %19 = vsyncpa [#allocation9], 0
    %s20 = scalar_lea.sflag [#allocation9], 1
    %21 = vsyncpa %s20, 0
    %22 = vsyncpa [#allocation12], 0
    %s23 = scalar_lea.sflag [#allocation12], 1
    %24 = vsyncpa %s23, 0
    %25 = vsyncpa [#allocation4], 0
    %s26 = scalar_lea.sflag [#allocation4], 1
    %27 = vsyncpa %s26, 0
    loop: start=0, step=1, limit=10
    $region2: #{tpu_custom_call.1} parent=1 // loop_pre_header
      _
    $region3: #{tpu_custom_call.1} parent=1 // loop_header
      %s29 = sphi 0, %s33
      %p30 = scmp.ge.s32.totalorder %s29, 10
      %s36 = sphi 0, %s48
      %s37 = sphi 0, %s44
      %s38 = sphi 0, %s36
      %s39 = sphi 0, %s37
      %s40 = sphi 0, %s38
      %s41 = sphi 0, %s39
      %s53 = sphi 0, %s55
      %s56 = sphi 0, %s53
      %s57 = sphi 0, %s56
      %s73 = sphi 0, %s57
      %s79 = sphi 0, %s81
      %s82 = sphi 0, %s79
      %s83 = sphi 0, %s82
      %s99 = sphi 0, %s83
      %s105 = sphi 0, %s107
      %s108 = sphi 0, %s105
      %s109 = sphi 0, %s108
      %s125 = sphi 0, %s109
      %s131 = sphi 0, %s133
      %s134 = sphi 0, %s131
      %s135 = sphi 0, %s134
      %s151 = sphi 0, %s135
      %s157 = sphi 0, %s159
      %s160 = sphi 0, %s157
      %s161 = sphi 0, %s160
      %s177 = sphi 0, %s161
      %s183 = sphi 0, %s185
      %s186 = sphi 0, %s183
      %s187 = sphi 0, %s186
      %s203 = sphi 0, %s187
      %s209 = sphi 0, %s211
      %s212 = sphi 0, %s209
      %s213 = sphi 0, %s212
      %s229 = sphi 0, %s213
      %s235 = sphi 0, %s237
      %s238 = sphi 0, %s235
      %s239 = sphi 0, %s238
      %s255 = sphi 0, %s239
      %s263 = sphi 0, %s265
      %s266 = sphi 0, %s263
      %s267 = sphi 0, %s266
      %s283 = sphi 0, %s267
    $region4: #{tpu_custom_call.1} parent=1 // loop_header_branch
      %32 = sbr.rel (%p30) target = $region8
    $region5: #{tpu_custom_call.1} parent=1 // loop_body
      %s34 = ssub.s32 %s29, 1
      %s35 = ssub.s32 %s29, 2
      %s42 = sadd.s32 1, %s37
      %p43 = scmp.ge.s32.totalorder %s42, 4
      %s44 = scalar_select %p43, 0, %s42
      %s45 = sadd.s32 1, %s36
      %s46 = scalar_select %p43, %s45, %s36
      %p47 = scmp.ge.s32.totalorder %s46, 2
      %s48 = scalar_select %p47, 0, %s46
      %s49 = ssub.s32 %s36, %s48
      %s50 = ssub.s32 %s37, %s44
      %s51 = sor.u32 %s49, %s50
      %p52 = scmp.eq.s32.totalorder %s51, 0
      %s54 = sadd.s32 %s53, 1
      %s55 = scalar_select %p52, %s53, %s54
      %p58 = pneg %p52
      %p59 = scmp.eq.s32.totalorder %s29, 7
      %p60 = por %p58, %p59
      %p61 = scmp.ne.s32.totalorder %s53, %s56
      %p62 = scmp.eq.s32.totalorder %s29, 0
      %p63 = por %p61, %p62
      %p64 = scmp.ne.s32.totalorder %s53, %s56
      %p65 = scmp.eq.s32.totalorder %s34, 7
      %p66 = por %p64, %p65
      %p67 = scmp.ne.s32.totalorder %s56, %s57
      %p68 = scmp.eq.s32.totalorder %s34, 0
      %p69 = por %p67, %p68
      %p70 = scmp.ne.s32.totalorder %s56, %s57
      %p71 = scmp.eq.s32.totalorder %s35, 7
      %p72 = por %p70, %p71
      %p74 = scmp.ne.s32.totalorder %s57, %s73
      %p75 = scmp.eq.s32.totalorder %s35, 0
      %p76 = por %p74, %p75
      %s77 = ssub.s32 %s36, %s48
      %p78 = scmp.eq.s32.totalorder %s77, 0
      %s80 = sadd.s32 %s79, 1
      %s81 = scalar_select %p78, %s79, %s80
      %p84 = pneg %p78
      %p85 = scmp.eq.s32.totalorder %s29, 7
      %p86 = por %p84, %p85
      %p87 = scmp.ne.s32.totalorder %s79, %s82
      %p88 = scmp.eq.s32.totalorder %s29, 0
      %p89 = por %p87, %p88
      %p90 = scmp.ne.s32.totalorder %s79, %s82
      %p91 = scmp.eq.s32.totalorder %s34, 7
      %p92 = por %p90, %p91
      %p93 = scmp.ne.s32.totalorder %s82, %s83
      %p94 = scmp.eq.s32.totalorder %s34, 0
      %p95 = por %p93, %p94
      %p96 = scmp.ne.s32.totalorder %s82, %s83
      %p97 = scmp.eq.s32.totalorder %s35, 7
      %p98 = por %p96, %p97
      %p100 = scmp.ne.s32.totalorder %s83, %s99
      %p101 = scmp.eq.s32.totalorder %s35, 0
      %p102 = por %p100, %p101
      %s103 = ssub.s32 %s37, %s44
      %p104 = scmp.eq.s32.totalorder %s103, 0
      %s106 = sadd.s32 %s105, 1
      %s107 = scalar_select %p104, %s105, %s106
      %p110 = pneg %p104
      %p111 = scmp.eq.s32.totalorder %s29, 7
      %p112 = por %p110, %p111
      %p113 = scmp.ne.s32.totalorder %s105, %s108
      %p114 = scmp.eq.s32.totalorder %s29, 0
      %p115 = por %p113, %p114
      %p116 = scmp.ne.s32.totalorder %s105, %s108
      %p117 = scmp.eq.s32.totalorder %s34, 7
      %p118 = por %p116, %p117
      %p119 = scmp.ne.s32.totalorder %s108, %s109
      %p120 = scmp.eq.s32.totalorder %s34, 0
      %p121 = por %p119, %p120
      %p122 = scmp.ne.s32.totalorder %s108, %s109
      %p123 = scmp.eq.s32.totalorder %s35, 7
      %p124 = por %p122, %p123
      %p126 = scmp.ne.s32.totalorder %s109, %s125
      %p127 = scmp.eq.s32.totalorder %s35, 0
      %p128 = por %p126, %p127
      %s129 = ssub.s32 %s37, %s44
      %p130 = scmp.eq.s32.totalorder %s129, 0
      %s132 = sadd.s32 %s131, 1
      %s133 = scalar_select %p130, %s131, %s132
      %p136 = pneg %p130
      %p137 = scmp.eq.s32.totalorder %s29, 7
      %p138 = por %p136, %p137
      %p139 = scmp.ne.s32.totalorder %s131, %s134
      %p140 = scmp.eq.s32.totalorder %s29, 0
      %p141 = por %p139, %p140
      %p142 = scmp.ne.s32.totalorder %s131, %s134
      %p143 = scmp.eq.s32.totalorder %s34, 7
      %p144 = por %p142, %p143
      %p145 = scmp.ne.s32.totalorder %s134, %s135
      %p146 = scmp.eq.s32.totalorder %s34, 0
      %p147 = por %p145, %p146
      %p148 = scmp.ne.s32.totalorder %s134, %s135
      %p149 = scmp.eq.s32.totalorder %s35, 7
      %p150 = por %p148, %p149
      %p152 = scmp.ne.s32.totalorder %s135, %s151
      %p153 = scmp.eq.s32.totalorder %s35, 0
      %p154 = por %p152, %p153
      %s155 = ssub.s32 %s37, %s44
      %p156 = scmp.eq.s32.totalorder %s155, 0
      %s158 = sadd.s32 %s157, 1
      %s159 = scalar_select %p156, %s157, %s158
      %p162 = pneg %p156
      %p163 = scmp.eq.s32.totalorder %s29, 7
      %p164 = por %p162, %p163
      %p165 = scmp.ne.s32.totalorder %s157, %s160
      %p166 = scmp.eq.s32.totalorder %s29, 0
      %p167 = por %p165, %p166
      %p168 = scmp.ne.s32.totalorder %s157, %s160
      %p169 = scmp.eq.s32.totalorder %s34, 7
      %p170 = por %p168, %p169
      %p171 = scmp.ne.s32.totalorder %s160, %s161
      %p172 = scmp.eq.s32.totalorder %s34, 0
      %p173 = por %p171, %p172
      %p174 = scmp.ne.s32.totalorder %s160, %s161
      %p175 = scmp.eq.s32.totalorder %s35, 7
      %p176 = por %p174, %p175
      %p178 = scmp.ne.s32.totalorder %s161, %s177
      %p179 = scmp.eq.s32.totalorder %s35, 0
      %p180 = por %p178, %p179
      %s181 = ssub.s32 %s37, %s44
      %p182 = scmp.eq.s32.totalorder %s181, 0
      %s184 = sadd.s32 %s183, 1
      %s185 = scalar_select %p182, %s183, %s184
      %p188 = pneg %p182
      %p189 = scmp.eq.s32.totalorder %s29, 7
      %p190 = por %p188, %p189
      %p191 = scmp.ne.s32.totalorder %s183, %s186
      %p192 = scmp.eq.s32.totalorder %s29, 0
      %p193 = por %p191, %p192
      %p194 = scmp.ne.s32.totalorder %s183, %s186
      %p195 = scmp.eq.s32.totalorder %s34, 7
      %p196 = por %p194, %p195
      %p197 = scmp.ne.s32.totalorder %s186, %s187
      %p198 = scmp.eq.s32.totalorder %s34, 0
      %p199 = por %p197, %p198
      %p200 = scmp.ne.s32.totalorder %s186, %s187
      %p201 = scmp.eq.s32.totalorder %s35, 7
      %p202 = por %p200, %p201
      %p204 = scmp.ne.s32.totalorder %s187, %s203
      %p205 = scmp.eq.s32.totalorder %s35, 0
      %p206 = por %p204, %p205
      %s207 = ssub.s32 %s37, %s44
      %p208 = scmp.eq.s32.totalorder %s207, 0
      %s210 = sadd.s32 %s209, 1
      %s211 = scalar_select %p208, %s209, %s210
      %p214 = pneg %p208
      %p215 = scmp.eq.s32.totalorder %s29, 7
      %p216 = por %p214, %p215
      %p217 = scmp.ne.s32.totalorder %s209, %s212
      %p218 = scmp.eq.s32.totalorder %s29, 0
      %p219 = por %p217, %p218
      %p220 = scmp.ne.s32.totalorder %s209, %s212
      %p221 = scmp.eq.s32.totalorder %s34, 7
      %p222 = por %p220, %p221
      %p223 = scmp.ne.s32.totalorder %s212, %s213
      %p224 = scmp.eq.s32.totalorder %s34, 0
      %p225 = por %p223, %p224
      %p226 = scmp.ne.s32.totalorder %s212, %s213
      %p227 = scmp.eq.s32.totalorder %s35, 7
      %p228 = por %p226, %p227
      %p230 = scmp.ne.s32.totalorder %s213, %s229
      %p231 = scmp.eq.s32.totalorder %s35, 0
      %p232 = por %p230, %p231
      %s233 = ssub.s32 %s37, %s44
      %p234 = scmp.eq.s32.totalorder %s233, 0
      %s236 = sadd.s32 %s235, 1
      %s237 = scalar_select %p234, %s235, %s236
      %p240 = pneg %p234
      %p241 = scmp.eq.s32.totalorder %s29, 7
      %p242 = por %p240, %p241
      %p243 = scmp.ne.s32.totalorder %s235, %s238
      %p244 = scmp.eq.s32.totalorder %s29, 0
      %p245 = por %p243, %p244
      %p246 = scmp.ne.s32.totalorder %s235, %s238
      %p247 = scmp.eq.s32.totalorder %s34, 7
      %p248 = por %p246, %p247
      %p249 = scmp.ne.s32.totalorder %s238, %s239
      %p250 = scmp.eq.s32.totalorder %s34, 0
      %p251 = por %p249, %p250
      %p252 = scmp.ne.s32.totalorder %s238, %s239
      %p253 = scmp.eq.s32.totalorder %s35, 7
      %p254 = por %p252, %p253
      %p256 = scmp.ne.s32.totalorder %s239, %s255
      %p257 = scmp.eq.s32.totalorder %s35, 0
      %p258 = por %p256, %p257
      %s259 = ssub.s32 %s36, %s48
      %s260 = ssub.s32 %s37, %s44
      %s261 = sor.u32 %s259, %s260
      %p262 = scmp.eq.s32.totalorder %s261, 0
      %s264 = sadd.s32 %s263, 1
      %s265 = scalar_select %p262, %s263, %s264
      %p268 = pneg %p262
      %p269 = scmp.eq.s32.totalorder %s29, 7
      %p270 = por %p268, %p269
      %p271 = scmp.ne.s32.totalorder %s263, %s266
      %p272 = scmp.eq.s32.totalorder %s29, 0
      %p273 = por %p271, %p272
      %p274 = scmp.ne.s32.totalorder %s263, %s266
      %p275 = scmp.eq.s32.totalorder %s34, 7
      %p276 = por %p274, %p275
      %p277 = scmp.ne.s32.totalorder %s266, %s267
      %p278 = scmp.eq.s32.totalorder %s34, 0
      %p279 = por %p277, %p278
      %p280 = scmp.ne.s32.totalorder %s266, %s267
      %p281 = scmp.eq.s32.totalorder %s35, 7
      %p282 = por %p280, %p281
      %p284 = scmp.ne.s32.totalorder %s267, %s283
      %p285 = scmp.eq.s32.totalorder %s35, 0
      %p286 = por %p284, %p285
      %p287 = scmp.le.s32.totalorder 1, %s29
      %p288 = scmp.lt.s32.totalorder %s29, 9
      %p289 = pnand %p287, %p288
      %p290 = pneg %p289
      // Predicated region
      $region9: #{tpu_custom_call.1} parent=5 // pred_check
        _
      $region10: #{tpu_custom_call.1} parent=5 // pred_check_branch
        %292 = sbr.rel (%p289) target = $region12
      $region11: #{tpu_custom_call.1} parent=5 // pred_region
        %s293 = ssub.s32 %s29, 1
      $region12: #{tpu_custom_call.1} parent=5 // pred_fallthru
        _
      %p294 = scmp.lt.s32.totalorder %s29, 8
      // Predicated region
      $region13: #{tpu_custom_call.1} parent=5 // pred_check
        %p295 = pneg %p294
      $region14: #{tpu_custom_call.1} parent=5 // pred_check_branch
        %297 = sbr.rel (%p295) target = $region16
      $region15: #{tpu_custom_call.1} parent=5 // pred_region
        // Predicated region
        $region17: #{tpu_custom_call.1} parent=15 // pred_check
          %p298 = pneg %p63
        $region18: #{tpu_custom_call.1} parent=15 // pred_check_branch
          %300 = sbr.rel (%p298) target = $region20
        $region19: #{tpu_custom_call.1} parent=15 // pred_region
          %s301 = sand.u32 %s53, 1
          %s302 = scalar_lea.sflag [#allocation3], %s301
          %s303 = sand.u32 %s53, 1
          %s304 = smul.addr %s303, 16
          %s305 = scalar_lea.vmem [#allocation2], %s304
          %s307 = ssub.s32 256, 256
          %308 = vsyncadd %s302, %s307
          %s309 = smul.addr %s37, 2
          %s310 = smul.addr %s36, 8
          %s311 = sadd.s32 %s309, %s310
          %s312 = smul.addr %s311, 128
          %s313 = scalar_lea.hbm %s0, %s312
          %s314 = sshll.u32 %s305, 4
          %s315 = int_to_ptr.vmem [resolvable:$true] %s314
          %320 = dma.hbm_to_vmem [thread:$0]  %s313, 256, %s315, %s302, 128, 128, 8
        $region20: #{tpu_custom_call.1} parent=15 // pred_fallthru
          _
        // Predicated region
        $region21: #{tpu_custom_call.1} parent=15 // pred_check
          %p321 = pneg %p89
        $region22: #{tpu_custom_call.1} parent=15 // pred_check_branch
          %323 = sbr.rel (%p321) target = $region24
        $region23: #{tpu_custom_call.1} parent=15 // pred_region
          %s324 = sand.u32 %s29, 1
          %s325 = scalar_lea.sflag [#allocation6], %s324
          %s326 = sand.u32 %s79, 1
          %s327 = smul.addr %s326, 16
          %s328 = scalar_lea.vmem [#allocation5], %s327
          %s330 = ssub.s32 256, 256
          %331 = vsyncadd %s325, %s330
          %s332 = smul.addr %s36, 2
          %s333 = smul.addr %s332, 128
          %s334 = scalar_lea.hbm %s1, %s333
          %s335 = sshll.u32 %s328, 4
          %s336 = int_to_ptr.vmem [resolvable:$true] %s335
          %341 = dma.hbm_to_vmem [thread:$0]  %s334, 256, %s336, %s325, 128, 128, 8
        $region24: #{tpu_custom_call.1} parent=15 // pred_fallthru
          _
        // Predicated region
        $region25: #{tpu_custom_call.1} parent=15 // pred_check
          %p342 = pneg %p115
        $region26: #{tpu_custom_call.1} parent=15 // pred_check_branch
          %344 = sbr.rel (%p342) target = $region28
        $region27: #{tpu_custom_call.1} parent=15 // pred_region
          %s345 = sand.u32 %s29, 1
          %s346 = scalar_lea.sflag [#allocation6], %s345
          %s347 = sand.u32 %s105, 1
          %s348 = smul.addr %s347, 16
          %s349 = scalar_lea.vmem [#allocation7], %s348
          %s351 = ssub.s32 256, 256
          %352 = vsyncadd %s346, %s351
          %s353 = smul.addr %s37, 2
          %s354 = smul.addr %s353, 128
          %s355 = scalar_lea.hbm %s2, %s354
          %s356 = sshll.u32 %s349, 4
          %s357 = int_to_ptr.vmem [resolvable:$true] %s356
          %362 = dma.hbm_to_vmem [thread:$0]  %s355, 256, %s357, %s346, 128, 128, 8
        $region28: #{tpu_custom_call.1} parent=15 // pred_fallthru
          _
        // Predicated region
        $region29: #{tpu_custom_call.1} parent=15 // pred_check
          %p363 = pneg %p141
        $region30: #{tpu_custom_call.1} parent=15 // pred_check_branch
          %365 = sbr.rel (%p363) target = $region32
        $region31: #{tpu_custom_call.1} parent=15 // pred_region
          %s366 = sand.u32 %s29, 1
          %s367 = scalar_lea.sflag [#allocation9], %s366
          %s368 = sand.u32 %s131, 1
          %s369 = smul.addr %s368, 4
          %s370 = scalar_lea.vmem [#allocation8], %s369
          %s372 = ssub.s32 64, 64
          %373 = vsyncadd %s367, %s372
          %s374 = smul.addr %s37, 64
          %s375 = scalar_lea.hbm %s3, %s374
          %s377 = sshll.u32 %s370, 4
          %s378 = int_to_ptr.vmem [resolvable:$true] %s377
          %380 = dma.hbm_to_vmem [thread:$0]  %s375, 64, %s378, %s367
        $region32: #{tpu_custom_call.1} parent=15 // pred_fallthru
          _
        // Predicated region
        $region33: #{tpu_custom_call.1} parent=15 // pred_check
          %p381 = pneg %p167
        $region34: #{tpu_custom_call.1} parent=15 // pred_check_branch
          %383 = sbr.rel (%p381) target = $region36
        $region35: #{tpu_custom_call.1} parent=15 // pred_region
          %s384 = sand.u32 %s29, 1
          %s385 = scalar_lea.sflag [#allocation9], %s384
          %s386 = sand.u32 %s157, 1
          %s387 = smul.addr %s386, 4
          %s388 = scalar_lea.vmem [#allocation10], %s387
          %s390 = ssub.s32 64, 64
          %391 = vsyncadd %s385, %s390
          %s392 = smul.addr %s37, 64
          %s393 = scalar_lea.hbm %s4, %s392
          %s395 = sshll.u32 %s388, 4
          %s396 = int_to_ptr.vmem [resolvable:$true] %s395
          %398 = dma.hbm_to_vmem [thread:$0]  %s393, 64, %s396, %s385
        $region36: #{tpu_custom_call.1} parent=15 // pred_fallthru
          _
        // Predicated region
        $region37: #{tpu_custom_call.1} parent=15 // pred_check
          %p399 = pneg %p193
        $region38: #{tpu_custom_call.1} parent=15 // pred_check_branch
          %401 = sbr.rel (%p399) target = $region40
        $region39: #{tpu_custom_call.1} parent=15 // pred_region
          %s402 = sand.u32 %s29, 1
          %s403 = scalar_lea.sflag [#allocation12], %s402
          %s404 = sand.u32 %s183, 1
          %s405 = smul.addr %s404, 128
          %s406 = scalar_lea.vmem [#allocation11], %s405
          %s408 = ssub.s32 2048, 2048
          %409 = vsyncadd %s403, %s408
          %s410 = smul.addr %s37, 16
          %s411 = smul.addr %s410, 128
          %s412 = scalar_lea.hbm %s5, %s411
          %s413 = sshll.u32 %s406, 4
          %s414 = int_to_ptr.vmem [resolvable:$true] %s413
          %419 = dma.hbm_to_vmem [thread:$0]  %s412, 2048, %s414, %s403, 128, 128, 8
        $region40: #{tpu_custom_call.1} parent=15 // pred_fallthru
          _
        // Predicated region
        $region41: #{tpu_custom_call.1} parent=15 // pred_check
          %p420 = pneg %p219
        $region42: #{tpu_custom_call.1} parent=15 // pred_check_branch
          %422 = sbr.rel (%p420) target = $region44
        $region43: #{tpu_custom_call.1} parent=15 // pred_region
          %p423 = scmp.lt.s32.totalorder %s37, 3
          %s424 = scalar_select %p423, %s37, 3
          %s425 = smul.addr %s424, 4
          %s426 = scalar_lea.vmem %s6, %s425
        $region44: #{tpu_custom_call.1} parent=15 // pred_fallthru
          _
        // Predicated region
        $region45: #{tpu_custom_call.1} parent=15 // pred_check
          %p427 = pneg %p245
        $region46: #{tpu_custom_call.1} parent=15 // pred_check_branch
          %429 = sbr.rel (%p427) target = $region48
        $region47: #{tpu_custom_call.1} parent=15 // pred_region
          %s430 = sand.u32 %s29, 1
          %s431 = scalar_lea.sflag [#allocation12], %s430
          %s432 = sand.u32 %s235, 1
          %s433 = smul.addr %s432, 4
          %s434 = scalar_lea.vmem [#allocation13], %s433
          %s436 = ssub.s32 64, 64
          %437 = vsyncadd %s431, %s436
          %s438 = smul.addr %s37, 64
          %s439 = scalar_lea.hbm %s7, %s438
          %s441 = sshll.u32 %s434, 4
          %s442 = int_to_ptr.vmem [resolvable:$true] %s441
          %444 = dma.hbm_to_vmem [thread:$0]  %s439, 64, %s442, %s431
        $region48: #{tpu_custom_call.1} parent=15 // pred_fallthru
          _
      $region16: #{tpu_custom_call.1} parent=5 // pred_fallthru
        _
      %p445 = scmp.le.s32.totalorder 1, %s29
      %p446 = scmp.lt.s32.totalorder %s29, 9
      %p447 = pnand %p445, %p446
      %p448 = pneg %p447
      // Predicated region
      $region49: #{tpu_custom_call.1} parent=5 // pred_check
        _
      $region50: #{tpu_custom_call.1} parent=5 // pred_check_branch
        %450 = sbr.rel (%p447) target = $region52
      $region51: #{tpu_custom_call.1} parent=5 // pred_region
        %s451 = ssub.s32 %s29, 1
        %s452 = sand.u32 %s56, 1
        %s453 = scalar_lea.sflag [#allocation3], %s452
        %s454 = sand.u32 %s56, 1
        %s455 = smul.addr %s454, 16
        %s456 = scalar_lea.vmem [#allocation2], %s455
        // Predicated region
        $region53: #{tpu_custom_call.1} parent=51 // pred_check
          %p457 = pneg %p69
        $region54: #{tpu_custom_call.1} parent=51 // pred_check_branch
          %459 = sbr.rel (%p457) target = $region56
        $region55: #{tpu_custom_call.1} parent=51 // pred_region
          %460 = dma.done %s453, 256
        $region56: #{tpu_custom_call.1} parent=51 // pred_fallthru
          _
        %s461 = sand.u32 %s34, 1
        %s462 = scalar_lea.sflag [#allocation6], %s461
        %s463 = sand.u32 %s82, 1
        %s464 = smul.addr %s463, 16
        %s465 = scalar_lea.vmem [#allocation5], %s464
        // Predicated region
        $region57: #{tpu_custom_call.1} parent=51 // pred_check
          %p466 = pneg %p95
        $region58: #{tpu_custom_call.1} parent=51 // pred_check_branch
          %468 = sbr.rel (%p466) target = $region60
        $region59: #{tpu_custom_call.1} parent=51 // pred_region
          %469 = dma.done %s462, 256
        $region60: #{tpu_custom_call.1} parent=51 // pred_fallthru
          _
        %s470 = sand.u32 %s34, 1
        %s471 = scalar_lea.sflag [#allocation6], %s470
        %s472 = sand.u32 %s108, 1
        %s473 = smul.addr %s472, 16
        %s474 = scalar_lea.vmem [#allocation7], %s473
        // Predicated region
        $region61: #{tpu_custom_call.1} parent=51 // pred_check
          %p475 = pneg %p121
        $region62: #{tpu_custom_call.1} parent=51 // pred_check_branch
          %477 = sbr.rel (%p475) target = $region64
        $region63: #{tpu_custom_call.1} parent=51 // pred_region
          %478 = dma.done %s471, 256
        $region64: #{tpu_custom_call.1} parent=51 // pred_fallthru
          _
        %s479 = sand.u32 %s34, 1
        %s480 = scalar_lea.sflag [#allocation9], %s479
        %s481 = sand.u32 %s134, 1
        %s482 = smul.addr %s481, 4
        %s483 = scalar_lea.vmem [#allocation8], %s482
        // Predicated region
        $region65: #{tpu_custom_call.1} parent=51 // pred_check
          %p484 = pneg %p147
        $region66: #{tpu_custom_call.1} parent=51 // pred_check_branch
          %486 = sbr.rel (%p484) target = $region68
        $region67: #{tpu_custom_call.1} parent=51 // pred_region
          %487 = dma.done %s480, 64
        $region68: #{tpu_custom_call.1} parent=51 // pred_fallthru
          _
        %s488 = sand.u32 %s34, 1
        %s489 = scalar_lea.sflag [#allocation9], %s488
        %s490 = sand.u32 %s160, 1
        %s491 = smul.addr %s490, 4
        %s492 = scalar_lea.vmem [#allocation10], %s491
        // Predicated region
        $region69: #{tpu_custom_call.1} parent=51 // pred_check
          %p493 = pneg %p173
        $region70: #{tpu_custom_call.1} parent=51 // pred_check_branch
          %495 = sbr.rel (%p493) target = $region72
        $region71: #{tpu_custom_call.1} parent=51 // pred_region
          %496 = dma.done %s489, 64
        $region72: #{tpu_custom_call.1} parent=51 // pred_fallthru
          _
        %s497 = sand.u32 %s34, 1
        %s498 = scalar_lea.sflag [#allocation12], %s497
        %s499 = sand.u32 %s186, 1
        %s500 = smul.addr %s499, 128
        %s501 = scalar_lea.vmem [#allocation11], %s500
        // Predicated region
        $region73: #{tpu_custom_call.1} parent=51 // pred_check
          %p502 = pneg %p199
        $region74: #{tpu_custom_call.1} parent=51 // pred_check_branch
          %504 = sbr.rel (%p502) target = $region76
        $region75: #{tpu_custom_call.1} parent=51 // pred_region
          %505 = dma.done %s498, 2048
        $region76: #{tpu_custom_call.1} parent=51 // pred_fallthru
          _
        %s506 = sand.u32 %s34, 1
        %s507 = scalar_lea.sflag [#allocation12], %s506
        %s508 = sand.u32 %s238, 1
        %s509 = smul.addr %s508, 4
        %s510 = scalar_lea.vmem [#allocation13], %s509
        // Predicated region
        $region77: #{tpu_custom_call.1} parent=51 // pred_check
          %p511 = pneg %p251
        $region78: #{tpu_custom_call.1} parent=51 // pred_check_branch
          %513 = sbr.rel (%p511) target = $region80
        $region79: #{tpu_custom_call.1} parent=51 // pred_region
          %514 = dma.done %s507, 64
        $region80: #{tpu_custom_call.1} parent=51 // pred_fallthru
          _
        %s515 = sand.u32 %s56, 1
        %s516 = scalar_lea.sflag [#allocation3], %s515
        %s517 = sand.u32 %s56, 1
        %s518 = smul.addr %s517, 16
        %s519 = scalar_lea.vmem [#allocation2], %s518
        %p520 = pneg %p69
        %p521 = pneg %p66
        %s522 = sand.u32 %s34, 1
        %s523 = scalar_lea.sflag [#allocation6], %s522
        %s524 = sand.u32 %s82, 1
        %s525 = smul.addr %s524, 16
        %s526 = scalar_lea.vmem [#allocation5], %s525
        %p527 = pneg %p95
        %p528 = pneg %p92
        %s529 = sand.u32 %s34, 1
        %s530 = scalar_lea.sflag [#allocation6], %s529
        %s531 = sand.u32 %s108, 1
        %s532 = smul.addr %s531, 16
        %s533 = scalar_lea.vmem [#allocation7], %s532
        %p534 = pneg %p121
        %p535 = pneg %p118
        %s536 = sand.u32 %s34, 1
        %s537 = scalar_lea.sflag [#allocation9], %s536
        %s538 = sand.u32 %s134, 1
        %s539 = smul.addr %s538, 4
        %s540 = scalar_lea.vmem [#allocation8], %s539
        %p541 = pneg %p147
        %p542 = pneg %p144
        %s543 = sand.u32 %s34, 1
        %s544 = scalar_lea.sflag [#allocation9], %s543
        %s545 = sand.u32 %s160, 1
        %s546 = smul.addr %s545, 4
        %s547 = scalar_lea.vmem [#allocation10], %s546
        %p548 = pneg %p173
        %p549 = pneg %p170
        %s550 = sand.u32 %s34, 1
        %s551 = scalar_lea.sflag [#allocation12], %s550
        %s552 = sand.u32 %s186, 1
        %s553 = smul.addr %s552, 128
        %s554 = scalar_lea.vmem [#allocation11], %s553
        %p555 = pneg %p199
        %p556 = pneg %p196
        %p557 = scmp.lt.s32.totalorder %s39, 3
        %s558 = scalar_select %p557, %s39, 3
        %s559 = smul.addr %s558, 4
        %s560 = scalar_lea.vmem %s6, %s559
        %p561 = pneg %p225
        %p562 = pneg %p222
        %s563 = sand.u32 %s34, 1
        %s564 = scalar_lea.sflag [#allocation12], %s563
        %s565 = sand.u32 %s238, 1
        %s566 = smul.addr %s565, 4
        %s567 = scalar_lea.vmem [#allocation13], %s566
        %p568 = pneg %p251
        %p569 = pneg %p248
        %p570 = pneg %p279
        %p571 = pneg %p276
        %s572 = sand.u32 %s266, 1
        %s573 = scalar_lea.sflag [#allocation4], %s572
        %s574 = sand.u32 %s266, 1
        %s575 = smul.addr %s574, 16
        %s576 = scalar_lea.vmem [#allocation14], %s575
        %p577 = scmp.lt.s32.totalorder %s39, 3
        %s578 = scalar_select %p577, %s39, 3
        %s579 = smul.addr %s578, 4
        %s580 = scalar_lea.vmem %s6, %s579
        %v581 = vld [vmem:[%s456] sm:$0xff]
        %v582 = vld [vmem:[%s456 + $0x8] sm:$0xff]
        %v583 = vld [vmem:[%s465] sm:$0xff]
        %v584 = vld [vmem:[%s465 + $0x8] sm:$0xff]
        %v585 = vld [vmem:[%s474] sm:$0xff]
        %v586 = vld [vmem:[%s474 + $0x8] sm:$0xff]
        %vm587 = vcmask 130048
        %v589 = vsel %vm587, %v581, 0
        %v592 = vsel %vm587, %v582, 0
        %594 = vmatprep.subr.mxu0 0.0
        %v595 = vand.u32 %v585, 4294901760
        %596 = vmatpush1.msra.mxu0 %v595
        %597 = vmatprep.subr.mxu0 0.0
        %v598 = vand.u32 %v586, 4294901760
        %599 = vmatpush1.msra.mxu0 %v598
        %600 = vmatprep.subr.mxu0 0.0
        %601 = vmatpush1.msra.mxu0 0.0
        %602 = vmatprep.subr.mxu0 0.0
        %603 = vmatpush1.msra.mxu0 0.0
        %604 = vmatprep.subr.mxu0 0.0
        %605 = vmatpush1.msra.mxu0 0.0
        %606 = vmatprep.subr.mxu0 0.0
        %607 = vmatpush1.msra.mxu0 0.0
        %608 = vmatprep.subr.mxu0 0.0
        %609 = vmatpush1.msra.mxu0 0.0
        %610 = vmatprep.subr.mxu0 0.0
        %611 = vmatpush1.msra.mxu0 0.0
        %612 = vmatprep.subr.mxu0 0.0
        %613 = vmatpush1.msra.mxu0 0.0
        %614 = vmatprep.subr.mxu0 0.0
        %615 = vmatpush1.msra.mxu0 0.0
        %616 = vmatprep.subr.mxu0 0.0
        %617 = vmatpush1.msra.mxu0 0.0
        %618 = vmatprep.subr.mxu0 0.0
        %619 = vmatpush1.msra.mxu0 0.0
        %620 = vmatprep.subr.mxu0 0.0
        %621 = vmatpush1.msra.mxu0 0.0
        %622 = vmatprep.subr.mxu0 0.0
        %623 = vmatpush1.msra.mxu0 0.0
        %624 = vmatprep.subr.mxu0 0.0
        %625 = vmatpush1.msra.mxu0 0.0
        %626 = vmatprep.subr.mxu0 0.0
        %627 = vmatpush1.msra.mxu0 0.0
        %628 = vmatprep.subr.mxu0 0.0
        %629 = vmatpush1.msra.mxu0 0.0
        %630 = vmatprep.subr.mxu0 0.0
        %631 = vmatpush1.msra.mxu0 0.0
        %632 = vmatprep.subr.mxu0 0.0
        %633 = vmatpush1.msra.mxu0 0.0
        %634 = vmatprep.subr.mxu0 0.0
        %635 = vmatpush1.msra.mxu0 0.0
        %636 = vmatprep.subr.mxu0 0.0
        %637 = vmatpush1.msra.mxu0 0.0
        %638 = vmatprep.subr.mxu0 0.0
        %639 = vmatpush1.msra.mxu0 0.0
        %640 = vmatprep.subr.mxu0 0.0
        %641 = vmatpush1.msra.mxu0 0.0
        %642 = vmatprep.subr.mxu0 0.0
        %643 = vmatpush1.msra.mxu0 0.0
        %644 = vmatprep.subr.mxu0 0.0
        %645 = vmatpush1.msra.mxu0 0.0
        %646 = vmatprep.subr.mxu0 0.0
        %647 = vmatpush1.msra.mxu0 0.0
        %648 = vmatprep.subr.mxu0 0.0
        %649 = vmatpush1.msra.mxu0 0.0
        %650 = vmatprep.subr.mxu0 0.0
        %651 = vmatpush1.msra.mxu0 0.0
        %652 = vmatprep.subr.mxu0 0.0
        %653 = vmatpush1.msra.mxu0 0.0
        %654 = vmatprep.subr.mxu0 0.0
        %655 = vmatpush1.msra.mxu0 0.0
        %656 = vmatprep.subr.mxu0 0.0
        %657 = vmatpush1.msra.mxu0 0.0
        %658 = vmatprep.subr.mxu0 0.0
        %659 = vmatpush1.msra.mxu0 0.0
        %660 = vmatprep.mubr.f32.mxu0 0.0
        %v661 = vand.u32 %v589, 4294901760
        %v662 = vsub.f32 %v589, %v661
        %v663 = vand.u32 %v662, 4294901760
        %v664 = vsub.f32 %v662, %v663
        %v665 = vand.u32 %v664, 4294901760
        %666 = vmatmul.mubr.f32.gmra.mrb[0].mxu0 %v665
        %v667 = vpop.f32.mrb[0].mxu0
        %v668 = vadd.f32 0.0, %v667
        %v669 = vpop.f32.mrb[0].mxu0
        %670 = vmatprep.mubr.f32.mxu0 0.0
        %v671 = vand.u32 %v592, 4294901760
        %v672 = vsub.f32 %v592, %v671
        %v673 = vand.u32 %v672, 4294901760
        %v674 = vsub.f32 %v672, %v673
        %v675 = vand.u32 %v674, 4294901760
        %676 = vmatmul.mubr.f32.gmra.mrb[0].mxu0 %v675
        %v677 = vpop.f32.mrb[0].mxu0
        %v678 = vadd.f32 0.0, %v677
        %v679 = vpop.f32.mrb[0].mxu0
        %680 = vdwg.mxu0
        %681 = vmatprep.subr.mxu0 0.0
        %v682 = vand.u32 %v585, 4294901760
        %v683 = vsub.f32 %v585, %v682
        %v684 = vand.u32 %v683, 4294901760
        %v685 = vsub.f32 %v683, %v684
        %v686 = vand.u32 %v685, 4294901760
        %687 = vmatpush1.msra.mxu0 %v686
        %688 = vmatprep.subr.mxu0 0.0
        %v689 = vand.u32 %v586, 4294901760
        %v690 = vsub.f32 %v586, %v689
        %v691 = vand.u32 %v690, 4294901760
        %v692 = vsub.f32 %v690, %v691
        %v693 = vand.u32 %v692, 4294901760
        %694 = vmatpush1.msra.mxu0 %v693
        %695 = vmatprep.subr.mxu0 0.0
        %696 = vmatpush1.msra.mxu0 0.0
        %697 = vmatprep.subr.mxu0 0.0
        %698 = vmatpush1.msra.mxu0 0.0
        %699 = vmatprep.subr.mxu0 0.0
        %700 = vmatpush1.msra.mxu0 0.0
        %701 = vmatprep.subr.mxu0 0.0
        %702 = vmatpush1.msra.mxu0 0.0
        %703 = vmatprep.subr.mxu0 0.0
        %704 = vmatpush1.msra.mxu0 0.0
        %705 = vmatprep.subr.mxu0 0.0
        %706 = vmatpush1.msra.mxu0 0.0
        %707 = vmatprep.subr.mxu0 0.0
        %708 = vmatpush1.msra.mxu0 0.0
        %709 = vmatprep.subr.mxu0 0.0
        %710 = vmatpush1.msra.mxu0 0.0
        %711 = vmatprep.subr.mxu0 0.0
        %712 = vmatpush1.msra.mxu0 0.0
        %713 = vmatprep.subr.mxu0 0.0
        %714 = vmatpush1.msra.mxu0 0.0
        %715 = vmatprep.subr.mxu0 0.0
        %716 = vmatpush1.msra.mxu0 0.0
        %717 = vmatprep.subr.mxu0 0.0
        %718 = vmatpush1.msra.mxu0 0.0
        %719 = vmatprep.subr.mxu0 0.0
        %720 = vmatpush1.msra.mxu0 0.0
        %721 = vmatprep.subr.mxu0 0.0
        %722 = vmatpush1.msra.mxu0 0.0
        %723 = vmatprep.subr.mxu0 0.0
        %724 = vmatpush1.msra.mxu0 0.0
        %725 = vmatprep.subr.mxu0 0.0
        %726 = vmatpush1.msra.mxu0 0.0
        %727 = vmatprep.subr.mxu0 0.0
        %728 = vmatpush1.msra.mxu0 0.0
        %729 = vmatprep.subr.mxu0 0.0
        %730 = vmatpush1.msra.mxu0 0.0
        %731 = vmatprep.subr.mxu0 0.0
        %732 = vmatpush1.msra.mxu0 0.0
        %733 = vmatprep.subr.mxu0 0.0
        %734 = vmatpush1.msra.mxu0 0.0
        %735 = vmatprep.subr.mxu0 0.0
        %736 = vmatpush1.msra.mxu0 0.0
        %737 = vmatprep.subr.mxu0 0.0
        %738 = vmatpush1.msra.mxu0 0.0
        %739 = vmatprep.subr.mxu0 0.0
        %740 = vmatpush1.msra.mxu0 0.0
        %741 = vmatprep.subr.mxu0 0.0
        %742 = vmatpush1.msra.mxu0 0.0
        %743 = vmatprep.subr.mxu0 0.0
        %744 = vmatpush1.msra.mxu0 0.0
        %745 = vmatprep.subr.mxu0 0.0
        %746 = vmatpush1.msra.mxu0 0.0
        %747 = vmatprep.subr.mxu0 0.0
        %748 = vmatpush1.msra.mxu0 0.0
        %749 = vmatprep.subr.mxu0 0.0
        %750 = vmatpush1.msra.mxu0 0.0
        %751 = vmatprep.subr.mxu0 0.0
        %752 = vmatpush1.msra.mxu0 0.0
        %753 = vmatprep.subr.mxu0 0.0
        %754 = vmatpush1.msra.mxu0 0.0
        %755 = vmatprep.mubr.f32.mxu0 0.0
        %v756 = vand.u32 %v589, 4294901760
        %757 = vmatmul.mubr.f32.gmra.mrb[0].mxu0 %v756
        %v758 = vpop.f32.mrb[0].mxu0
        %v759 = vadd.f32 %v668, %v758
        %v760 = vpop.f32.mrb[0].mxu0
        %761 = vmatprep.mubr.f32.mxu0 0.0
        %v762 = vand.u32 %v592, 4294901760
        %763 = vmatmul.mubr.f32.gmra.mrb[0].mxu0 %v762
        %v764 = vpop.f32.mrb[0].mxu0
        %v765 = vadd.f32 %v678, %v764
        %v766 = vpop.f32.mrb[0].mxu0
        %767 = vdwg.mxu0
        %768 = vmatprep.subr.mxu0 0.0
        %v769 = vand.u32 %v585, 4294901760
        %v770 = vsub.f32 %v585, %v769
        %771 = vmatpush1.msra.mxu0 %v770
        %772 = vmatprep.subr.mxu0 0.0
        %v773 = vand.u32 %v586, 4294901760
        %v774 = vsub.f32 %v586, %v773
        %775 = vmatpush1.msra.mxu0 %v774
        %776 = vmatprep.subr.mxu0 0.0
        %777 = vmatpush1.msra.mxu0 0.0
        %778 = vmatprep.subr.mxu0 0.0
        %779 = vmatpush1.msra.mxu0 0.0
        %780 = vmatprep.subr.mxu0 0.0
        %781 = vmatpush1.msra.mxu0 0.0
        %782 = vmatprep.subr.mxu0 0.0
        %783 = vmatpush1.msra.mxu0 0.0
        %784 = vmatprep.subr.mxu0 0.0
        %785 = vmatpush1.msra.mxu0 0.0
        %786 = vmatprep.subr.mxu0 0.0
        %787 = vmatpush1.msra.mxu0 0.0
        %788 = vmatprep.subr.mxu0 0.0
        %789 = vmatpush1.msra.mxu0 0.0
        %790 = vmatprep.subr.mxu0 0.0
        %791 = vmatpush1.msra.mxu0 0.0
        %792 = vmatprep.subr.mxu0 0.0
        %793 = vmatpush1.msra.mxu0 0.0
        %794 = vmatprep.subr.mxu0 0.0
        %795 = vmatpush1.msra.mxu0 0.0
        %796 = vmatprep.subr.mxu0 0.0
        %797 = vmatpush1.msra.mxu0 0.0
        %798 = vmatprep.subr.mxu0 0.0
        %799 = vmatpush1.msra.mxu0 0.0
        %800 = vmatprep.subr.mxu0 0.0
        %801 = vmatpush1.msra.mxu0 0.0
        %802 = vmatprep.subr.mxu0 0.0
        %803 = vmatpush1.msra.mxu0 0.0
        %804 = vmatprep.subr.mxu0 0.0
        %805 = vmatpush1.msra.mxu0 0.0
        %806 = vmatprep.subr.mxu0 0.0
        %807 = vmatpush1.msra.mxu0 0.0
        %808 = vmatprep.subr.mxu0 0.0
        %809 = vmatpush1.msra.mxu0 0.0
        %810 = vmatprep.subr.mxu0 0.0
        %811 = vmatpush1.msra.mxu0 0.0
        %812 = vmatprep.subr.mxu0 0.0
        %813 = vmatpush1.msra.mxu0 0.0
        %814 = vmatprep.subr.mxu0 0.0
        %815 = vmatpush1.msra.mxu0 0.0
        %816 = vmatprep.subr.mxu0 0.0
        %817 = vmatpush1.msra.mxu0 0.0
        %818 = vmatprep.subr.mxu0 0.0
        %819 = vmatpush1.msra.mxu0 0.0
        %820 = vmatprep.subr.mxu0 0.0
        %821 = vmatpush1.msra.mxu0 0.0
        %822 = vmatprep.subr.mxu0 0.0
        %823 = vmatpush1.msra.mxu0 0.0
        %824 = vmatprep.subr.mxu0 0.0
        %825 = vmatpush1.msra.mxu0 0.0
        %826 = vmatprep.subr.mxu0 0.0
        %827 = vmatpush1.msra.mxu0 0.0
        %828 = vmatprep.subr.mxu0 0.0
        %829 = vmatpush1.msra.mxu0 0.0
        %830 = vmatprep.subr.mxu0 0.0
        %831 = vmatpush1.msra.mxu0 0.0
        %832 = vmatprep.subr.mxu0 0.0
        %833 = vmatpush1.msra.mxu0 0.0
        %834 = vmatprep.subr.mxu0 0.0
        %835 = vmatpush1.msra.mxu0 0.0
        %836 = vmatprep.mubr.f32.mxu0 0.0
        %v837 = vand.u32 %v589, 4294901760
        %v838 = vsub.f32 %v589, %v837
        %839 = vmatmul.mubr.f32.gmra.mrb[0].mxu0 %v838
        %v840 = vpop.f32.mrb[0].mxu0
        %v841 = vadd.f32 %v759, %v840
        %v842 = vpop.f32.mrb[0].mxu0
        %843 = vmatprep.mubr.f32.mxu0 0.0
        %v844 = vand.u32 %v592, 4294901760
        %v845 = vsub.f32 %v592, %v844
        %846 = vmatmul.mubr.f32.gmra.mrb[0].mxu0 %v845
        %v847 = vpop.f32.mrb[0].mxu0
        %v848 = vadd.f32 %v765, %v847
        %v849 = vpop.f32.mrb[0].mxu0
        %850 = vdwg.mxu0
        %851 = vmatprep.subr.mxu0 0.0
        %v852 = vand.u32 %v585, 4294901760
        %853 = vmatpush1.msra.mxu0 %v852
        %854 = vmatprep.subr.mxu0 0.0
        %v855 = vand.u32 %v586, 4294901760
        %856 = vmatpush1.msra.mxu0 %v855
        %857 = vmatprep.subr.mxu0 0.0
        %858 = vmatpush1.msra.mxu0 0.0
        %859 = vmatprep.subr.mxu0 0.0
        %860 = vmatpush1.msra.mxu0 0.0
        %861 = vmatprep.subr.mxu0 0.0
        %862 = vmatpush1.msra.mxu0 0.0
        %863 = vmatprep.subr.mxu0 0.0
        %864 = vmatpush1.msra.mxu0 0.0
        %865 = vmatprep.subr.mxu0 0.0
        %866 = vmatpush1.msra.mxu0 0.0
        %867 = vmatprep.subr.mxu0 0.0
        %868 = vmatpush1.msra.mxu0 0.0
        %869 = vmatprep.subr.mxu0 0.0
        %870 = vmatpush1.msra.mxu0 0.0
        %871 = vmatprep.subr.mxu0 0.0
        %872 = vmatpush1.msra.mxu0 0.0
        %873 = vmatprep.subr.mxu0 0.0
        %874 = vmatpush1.msra.mxu0 0.0
        %875 = vmatprep.subr.mxu0 0.0
        %876 = vmatpush1.msra.mxu0 0.0
        %877 = vmatprep.subr.mxu0 0.0
        %878 = vmatpush1.msra.mxu0 0.0
        %879 = vmatprep.subr.mxu0 0.0
        %880 = vmatpush1.msra.mxu0 0.0
        %881 = vmatprep.subr.mxu0 0.0
        %882 = vmatpush1.msra.mxu0 0.0
        %883 = vmatprep.subr.mxu0 0.0
        %884 = vmatpush1.msra.mxu0 0.0
        %885 = vmatprep.subr.mxu0 0.0
        %886 = vmatpush1.msra.mxu0 0.0
        %887 = vmatprep.subr.mxu0 0.0
        %888 = vmatpush1.msra.mxu0 0.0
        %889 = vmatprep.subr.mxu0 0.0
        %890 = vmatpush1.msra.mxu0 0.0
        %891 = vmatprep.subr.mxu0 0.0
        %892 = vmatpush1.msra.mxu0 0.0
        %893 = vmatprep.subr.mxu0 0.0
        %894 = vmatpush1.msra.mxu0 0.0
        %895 = vmatprep.subr.mxu0 0.0
        %896 = vmatpush1.msra.mxu0 0.0
        %897 = vmatprep.subr.mxu0 0.0
        %898 = vmatpush1.msra.mxu0 0.0
        %899 = vmatprep.subr.mxu0 0.0
        %900 = vmatpush1.msra.mxu0 0.0
        %901 = vmatprep.subr.mxu0 0.0
        %902 = vmatpush1.msra.mxu0 0.0
        %903 = vmatprep.subr.mxu0 0.0
        %904 = vmatpush1.msra.mxu0 0.0
        %905 = vmatprep.subr.mxu0 0.0
        %906 = vmatpush1.msra.mxu0 0.0
        %907 = vmatprep.subr.mxu0 0.0
        %908 = vmatpush1.msra.mxu0 0.0
        %909 = vmatprep.subr.mxu0 0.0
        %910 = vmatpush1.msra.mxu0 0.0
        %911 = vmatprep.subr.mxu0 0.0
        %912 = vmatpush1.msra.mxu0 0.0
        %913 = vmatprep.subr.mxu0 0.0
        %914 = vmatpush1.msra.mxu0 0.0
        %915 = vmatprep.subr.mxu0 0.0
        %916 = vmatpush1.msra.mxu0 0.0
        %917 = vmatprep.mubr.f32.mxu0 0.0
        %v918 = vand.u32 %v589, 4294901760
        %v919 = vsub.f32 %v589, %v918
        %v920 = vand.u32 %v919, 4294901760
        %921 = vmatmul.mubr.f32.gmra.mrb[0].mxu0 %v920
        %v922 = vpop.f32.mrb[0].mxu0
        %v923 = vadd.f32 %v841, %v922
        %v924 = vpop.f32.mrb[0].mxu0
        %925 = vmatprep.mubr.f32.mxu0 0.0
        %v926 = vand.u32 %v592, 4294901760
        %v927 = vsub.f32 %v592, %v926
        %v928 = vand.u32 %v927, 4294901760
        %929 = vmatmul.mubr.f32.gmra.mrb[0].mxu0 %v928
        %v930 = vpop.f32.mrb[0].mxu0
        %v931 = vadd.f32 %v848, %v930
        %v932 = vpop.f32.mrb[0].mxu0
        %933 = vdwg.mxu0
        %934 = vmatprep.subr.mxu0 0.0
        %v935 = vand.u32 %v585, 4294901760
        %v936 = vsub.f32 %v585, %v935
        %v937 = vand.u32 %v936, 4294901760
        %938 = vmatpush1.msra.mxu0 %v937
        %939 = vmatprep.subr.mxu0 0.0
        %v940 = vand.u32 %v586, 4294901760
        %v941 = vsub.f32 %v586, %v940
        %v942 = vand.u32 %v941, 4294901760
        %943 = vmatpush1.msra.mxu0 %v942
        %944 = vmatprep.subr.mxu0 0.0
        %945 = vmatpush1.msra.mxu0 0.0
        %946 = vmatprep.subr.mxu0 0.0
        %947 = vmatpush1.msra.mxu0 0.0
        %948 = vmatprep.subr.mxu0 0.0
        %949 = vmatpush1.msra.mxu0 0.0
        %950 = vmatprep.subr.mxu0 0.0
        %951 = vmatpush1.msra.mxu0 0.0
        %952 = vmatprep.subr.mxu0 0.0
        %953 = vmatpush1.msra.mxu0 0.0
        %954 = vmatprep.subr.mxu0 0.0
        %955 = vmatpush1.msra.mxu0 0.0
        %956 = vmatprep.subr.mxu0 0.0
        %957 = vmatpush1.msra.mxu0 0.0
        %958 = vmatprep.subr.mxu0 0.0
        %959 = vmatpush1.msra.mxu0 0.0
        %960 = vmatprep.subr.mxu0 0.0
        %961 = vmatpush1.msra.mxu0 0.0
        %962 = vmatprep.subr.mxu0 0.0
        %963 = vmatpush1.msra.mxu0 0.0
        %964 = vmatprep.subr.mxu0 0.0
        %965 = vmatpush1.msra.mxu0 0.0
        %966 = vmatprep.subr.mxu0 0.0
        %967 = vmatpush1.msra.mxu0 0.0
        %968 = vmatprep.subr.mxu0 0.0
        %969 = vmatpush1.msra.mxu0 0.0
        %970 = vmatprep.subr.mxu0 0.0
        %971 = vmatpush1.msra.mxu0 0.0
        %972 = vmatprep.subr.mxu0 0.0
        %973 = vmatpush1.msra.mxu0 0.0
        %974 = vmatprep.subr.mxu0 0.0
        %975 = vmatpush1.msra.mxu0 0.0
        %976 = vmatprep.subr.mxu0 0.0
        %977 = vmatpush1.msra.mxu0 0.0
        %978 = vmatprep.subr.mxu0 0.0
        %979 = vmatpush1.msra.mxu0 0.0
        %980 = vmatprep.subr.mxu0 0.0
        %981 = vmatpush1.msra.mxu0 0.0
        %982 = vmatprep.subr.mxu0 0.0
        %983 = vmatpush1.msra.mxu0 0.0
        %984 = vmatprep.subr.mxu0 0.0
        %985 = vmatpush1.msra.mxu0 0.0
        %986 = vmatprep.subr.mxu0 0.0
        %987 = vmatpush1.msra.mxu0 0.0
        %988 = vmatprep.subr.mxu0 0.0
        %989 = vmatpush1.msra.mxu0 0.0
        %990 = vmatprep.subr.mxu0 0.0
        %991 = vmatpush1.msra.mxu0 0.0
        %992 = vmatprep.subr.mxu0 0.0
        %993 = vmatpush1.msra.mxu0 0.0
        %994 = vmatprep.subr.mxu0 0.0
        %995 = vmatpush1.msra.mxu0 0.0
        %996 = vmatprep.subr.mxu0 0.0
        %997 = vmatpush1.msra.mxu0 0.0
        %998 = vmatprep.subr.mxu0 0.0
        %999 = vmatpush1.msra.mxu0 0.0
        %1000 = vmatprep.subr.mxu0 0.0
        %1001 = vmatpush1.msra.mxu0 0.0
        %1002 = vmatprep.subr.mxu0 0.0
        %1003 = vmatpush1.msra.mxu0 0.0
        %1004 = vmatprep.mubr.f32.mxu0 0.0
        %v1005 = vand.u32 %v589, 4294901760
        %1006 = vmatmul.mubr.f32.gmra.mrb[0].mxu0 %v1005
        %v1007 = vpop.f32.mrb[0].mxu0
        %v1008 = vadd.f32 %v923, %v1007
        %v1009 = vpop.f32.mrb[0].mxu0
        %1010 = vmatprep.mubr.f32.mxu0 0.0
        %v1011 = vand.u32 %v592, 4294901760
        %1012 = vmatmul.mubr.f32.gmra.mrb[0].mxu0 %v1011
        %v1013 = vpop.f32.mrb[0].mxu0
        %v1014 = vadd.f32 %v931, %v1013
        %v1015 = vpop.f32.mrb[0].mxu0
        %1016 = vdwg.mxu0
        %1017 = vmatprep.subr.mxu0 0.0
        %v1018 = vand.u32 %v585, 4294901760
        %1019 = vmatpush1.msra.mxu0 %v1018
        %1020 = vmatprep.subr.mxu0 0.0
        %v1021 = vand.u32 %v586, 4294901760
        %1022 = vmatpush1.msra.mxu0 %v1021
        %1023 = vmatprep.subr.mxu0 0.0
        %1024 = vmatpush1.msra.mxu0 0.0
        %1025 = vmatprep.subr.mxu0 0.0
        %1026 = vmatpush1.msra.mxu0 0.0
        %1027 = vmatprep.subr.mxu0 0.0
        %1028 = vmatpush1.msra.mxu0 0.0
        %1029 = vmatprep.subr.mxu0 0.0
        %1030 = vmatpush1.msra.mxu0 0.0
        %1031 = vmatprep.subr.mxu0 0.0
        %1032 = vmatpush1.msra.mxu0 0.0
        %1033 = vmatprep.subr.mxu0 0.0
        %1034 = vmatpush1.msra.mxu0 0.0
        %1035 = vmatprep.subr.mxu0 0.0
        %1036 = vmatpush1.msra.mxu0 0.0
        %1037 = vmatprep.subr.mxu0 0.0
        %1038 = vmatpush1.msra.mxu0 0.0
        %1039 = vmatprep.subr.mxu0 0.0
        %1040 = vmatpush1.msra.mxu0 0.0
        %1041 = vmatprep.subr.mxu0 0.0
        %1042 = vmatpush1.msra.mxu0 0.0
        %1043 = vmatprep.subr.mxu0 0.0
        %1044 = vmatpush1.msra.mxu0 0.0
        %1045 = vmatprep.subr.mxu0 0.0
        %1046 = vmatpush1.msra.mxu0 0.0
        %1047 = vmatprep.subr.mxu0 0.0
        %1048 = vmatpush1.msra.mxu0 0.0
        %1049 = vmatprep.subr.mxu0 0.0
        %1050 = vmatpush1.msra.mxu0 0.0
        %1051 = vmatprep.subr.mxu0 0.0
        %1052 = vmatpush1.msra.mxu0 0.0
        %1053 = vmatprep.subr.mxu0 0.0
        %1054 = vmatpush1.msra.mxu0 0.0
        %1055 = vmatprep.subr.mxu0 0.0
        %1056 = vmatpush1.msra.mxu0 0.0
        %1057 = vmatprep.subr.mxu0 0.0
        %1058 = vmatpush1.msra.mxu0 0.0
        %1059 = vmatprep.subr.mxu0 0.0
        %1060 = vmatpush1.msra.mxu0 0.0
        %1061 = vmatprep.subr.mxu0 0.0
        %1062 = vmatpush1.msra.mxu0 0.0
        %1063 = vmatprep.subr.mxu0 0.0
        %1064 = vmatpush1.msra.mxu0 0.0
        %1065 = vmatprep.subr.mxu0 0.0
        %1066 = vmatpush1.msra.mxu0 0.0
        %1067 = vmatprep.subr.mxu0 0.0
        %1068 = vmatpush1.msra.mxu0 0.0
        %1069 = vmatprep.subr.mxu0 0.0
        %1070 = vmatpush1.msra.mxu0 0.0
        %1071 = vmatprep.subr.mxu0 0.0
        %1072 = vmatpush1.msra.mxu0 0.0
        %1073 = vmatprep.subr.mxu0 0.0
        %1074 = vmatpush1.msra.mxu0 0.0
        %1075 = vmatprep.subr.mxu0 0.0
        %1076 = vmatpush1.msra.mxu0 0.0
        %1077 = vmatprep.subr.mxu0 0.0
        %1078 = vmatpush1.msra.mxu0 0.0
        %1079 = vmatprep.subr.mxu0 0.0
        %1080 = vmatpush1.msra.mxu0 0.0
        %1081 = vmatprep.subr.mxu0 0.0
        %1082 = vmatpush1.msra.mxu0 0.0
        %1083 = vmatprep.mubr.f32.mxu0 0.0
        %v1084 = vand.u32 %v589, 4294901760
        %1085 = vmatmul.mubr.f32.gmra.mrb[0].mxu0 %v1084
        %v1086 = vpop.f32.mrb[0].mxu0
        %v1087 = vadd.f32 %v1008, %v1086
        %v1088 = vpop.f32.mrb[0].mxu0
        %1089 = vmatprep.mubr.f32.mxu0 0.0
        %v1090 = vand.u32 %v592, 4294901760
        %1091 = vmatmul.mubr.f32.gmra.mrb[0].mxu0 %v1090
        %v1092 = vpop.f32.mrb[0].mxu0
        %v1093 = vadd.f32 %v1014, %v1092
        %v1094 = vpop.f32.mrb[0].mxu0
        %1095 = vdwg.mxu0
        %v1096 = vtanh.pop %v1087
        %v1097 = vtanh.pop %v1093
        %v1098 = vld [vmem:[%s483] sm:$0xf]
        %v1099 = vld [vmem:[%s492] sm:$0xf]
        %v1100 = vlaneseq
        %v1101 = vshrl.u32 %v1100, 7
        %v1102 = vsub.s32 0, %v1101
        %v1103 = vrot.slane %v1098, %v1102
        %v1104 = vmul.f32 %v1096, %v1103
        %v1105 = vmul.f32 %v1097, %v1103
        %vm1106 = vcmask 261120
        %v1107 = vsel %vm1106, %v1104, 0.0
        %1108 = vadd.xlane.f32.xlu0 %v1107
        %v1109 = vpop.xlane.xlu0 %1108
        %v1110 = vsel %vm1106, %v1105, 0.0
        %1111 = vadd.xlane.f32.xlu0 %v1110
        %v1112 = vpop.xlane.xlu0 %1111
        %v1114 = vsel %vm1106, %v1099, 0
        %v1117 = vsel %vm1106, %v1096, 0
        %v1120 = vsel %vm1106, %v1097, 0
        %1122 = vmatprep.subr.mxu0 0.0
        %v1123 = vand.u32 %v1117, 4294901760
        %1124 = vmatpush1.xpose.msra.mxu0 %v1123
        %1125 = vmatprep.subr.mxu0 0.0
        %v1126 = vand.u32 %v1120, 4294901760
        %1127 = vmatpush1.xpose.msra.mxu0 %v1126
        %1128 = vmatprep.subr.mxu0 0.0
        %1129 = vmatpush1.xpose.msra.mxu0 0.0
        %1130 = vmatprep.subr.mxu0 0.0
        %1131 = vmatpush1.xpose.msra.mxu0 0.0
        %1132 = vmatprep.subr.mxu0 0.0
        %1133 = vmatpush1.xpose.msra.mxu0 0.0
        %1134 = vmatprep.subr.mxu0 0.0
        %1135 = vmatpush1.xpose.msra.mxu0 0.0
        %1136 = vmatprep.subr.mxu0 0.0
        %1137 = vmatpush1.xpose.msra.mxu0 0.0
        %1138 = vmatprep.subr.mxu0 0.0
        %1139 = vmatpush1.xpose.msra.mxu0 0.0
        %1140 = vmatprep.subr.mxu0 0.0
        %1141 = vmatpush1.xpose.msra.mxu0 0.0
        %1142 = vmatprep.subr.mxu0 0.0
        %1143 = vmatpush1.xpose.msra.mxu0 0.0
        %1144 = vmatprep.subr.mxu0 0.0
        %1145 = vmatpush1.xpose.msra.mxu0 0.0
        %1146 = vmatprep.subr.mxu0 0.0
        %1147 = vmatpush1.xpose.msra.mxu0 0.0
        %1148 = vmatprep.subr.mxu0 0.0
        %1149 = vmatpush1.xpose.msra.mxu0 0.0
        %1150 = vmatprep.subr.mxu0 0.0
        %1151 = vmatpush1.xpose.msra.mxu0 0.0
        %1152 = vmatprep.subr.mxu0 0.0
        %1153 = vmatpush1.xpose.msra.mxu0 0.0
        %1154 = vmatprep.subr.mxu0 0.0
        %1155 = vmatpush1.xpose.msra.mxu0 0.0
        %1156 = vmatprep.subr.mxu0 0.0
        %1157 = vmatpush1.xpose.msra.mxu0 0.0
        %1158 = vmatprep.subr.mxu0 0.0
        %1159 = vmatpush1.xpose.msra.mxu0 0.0
        %1160 = vmatprep.subr.mxu0 0.0
        %1161 = vmatpush1.xpose.msra.mxu0 0.0
        %1162 = vmatprep.subr.mxu0 0.0
        %1163 = vmatpush1.xpose.msra.mxu0 0.0
        %1164 = vmatprep.subr.mxu0 0.0
        %1165 = vmatpush1.xpose.msra.mxu0 0.0
        %1166 = vmatprep.subr.mxu0 0.0
        %1167 = vmatpush1.xpose.msra.mxu0 0.0
        %1168 = vmatprep.subr.mxu0 0.0
        %1169 = vmatpush1.xpose.msra.mxu0 0.0
        %1170 = vmatprep.subr.mxu0 0.0
        %1171 = vmatpush1.xpose.msra.mxu0 0.0
        %1172 = vmatprep.subr.mxu0 0.0
        %1173 = vmatpush1.xpose.msra.mxu0 0.0
        %1174 = vmatprep.subr.mxu0 0.0
        %1175 = vmatpush1.xpose.msra.mxu0 0.0
        %1176 = vmatprep.subr.mxu0 0.0
        %1177 = vmatpush1.xpose.msra.mxu0 0.0
        %1178 = vmatprep.subr.mxu0 0.0
        %1179 = vmatpush1.xpose.msra.mxu0 0.0
        %1180 = vmatprep.subr.mxu0 0.0
        %1181 = vmatpush1.xpose.msra.mxu0 0.0
        %1182 = vmatprep.subr.mxu0 0.0
        %1183 = vmatpush1.xpose.msra.mxu0 0.0
        %1184 = vmatprep.subr.mxu0 0.0
        %1185 = vmatpush1.xpose.msra.mxu0 0.0
        %1186 = vmatprep.subr.mxu0 0.0
        %1187 = vmatpush1.xpose.msra.mxu0 0.0
        %1188 = vmatprep.mubr.f32.mxu0 0.0
        %v1189 = vand.u32 %v1114, 4294901760
        %v1190 = vsub.f32 %v1114, %v1189
        %v1191 = vand.u32 %v1190, 4294901760
        %v1192 = vsub.f32 %v1190, %v1191
        %v1193 = vand.u32 %v1192, 4294901760
        %1194 = vmatmul.mubr.f32.gmra.mrb[0].mxu0 %v1193
        %v1195 = vpop.f32.mrb[0].mxu0
        %v1196 = vadd.f32 0.0, %v1195
        %v1197 = vpop.f32.mrb[0].mxu0
        %1198 = vdwg.mxu0
        %1199 = vmatprep.subr.mxu0 0.0
        %v1200 = vand.u32 %v1117, 4294901760
        %v1201 = vsub.f32 %v1117, %v1200
        %v1202 = vand.u32 %v1201, 4294901760
        %v1203 = vsub.f32 %v1201, %v1202
        %v1204 = vand.u32 %v1203, 4294901760
        %1205 = vmatpush1.xpose.msra.mxu0 %v1204
        %1206 = vmatprep.subr.mxu0 0.0
        %v1207 = vand.u32 %v1120, 4294901760
        %v1208 = vsub.f32 %v1120, %v1207
        %v1209 = vand.u32 %v1208, 4294901760
        %v1210 = vsub.f32 %v1208, %v1209
        %v1211 = vand.u32 %v1210, 4294901760
        %1212 = vmatpush1.xpose.msra.mxu0 %v1211
        %1213 = vmatprep.subr.mxu0 0.0
        %1214 = vmatpush1.xpose.msra.mxu0 0.0
        %1215 = vmatprep.subr.mxu0 0.0
        %1216 = vmatpush1.xpose.msra.mxu0 0.0
        %1217 = vmatprep.subr.mxu0 0.0
        %1218 = vmatpush1.xpose.msra.mxu0 0.0
        %1219 = vmatprep.subr.mxu0 0.0
        %1220 = vmatpush1.xpose.msra.mxu0 0.0
        %1221 = vmatprep.subr.mxu0 0.0
        %1222 = vmatpush1.xpose.msra.mxu0 0.0
        %1223 = vmatprep.subr.mxu0 0.0
        %1224 = vmatpush1.xpose.msra.mxu0 0.0
        %1225 = vmatprep.subr.mxu0 0.0
        %1226 = vmatpush1.xpose.msra.mxu0 0.0
        %1227 = vmatprep.subr.mxu0 0.0
        %1228 = vmatpush1.xpose.msra.mxu0 0.0
        %1229 = vmatprep.subr.mxu0 0.0
        %1230 = vmatpush1.xpose.msra.mxu0 0.0
        %1231 = vmatprep.subr.mxu0 0.0
        %1232 = vmatpush1.xpose.msra.mxu0 0.0
        %1233 = vmatprep.subr.mxu0 0.0
        %1234 = vmatpush1.xpose.msra.mxu0 0.0
        %1235 = vmatprep.subr.mxu0 0.0
        %1236 = vmatpush1.xpose.msra.mxu0 0.0
        %1237 = vmatprep.subr.mxu0 0.0
        %1238 = vmatpush1.xpose.msra.mxu0 0.0
        %1239 = vmatprep.subr.mxu0 0.0
        %1240 = vmatpush1.xpose.msra.mxu0 0.0
        %1241 = vmatprep.subr.mxu0 0.0
        %1242 = vmatpush1.xpose.msra.mxu0 0.0
        %1243 = vmatprep.subr.mxu0 0.0
        %1244 = vmatpush1.xpose.msra.mxu0 0.0
        %1245 = vmatprep.subr.mxu0 0.0
        %1246 = vmatpush1.xpose.msra.mxu0 0.0
        %1247 = vmatprep.subr.mxu0 0.0
        %1248 = vmatpush1.xpose.msra.mxu0 0.0
        %1249 = vmatprep.subr.mxu0 0.0
        %1250 = vmatpush1.xpose.msra.mxu0 0.0
        %1251 = vmatprep.subr.mxu0 0.0
        %1252 = vmatpush1.xpose.msra.mxu0 0.0
        %1253 = vmatprep.subr.mxu0 0.0
        %1254 = vmatpush1.xpose.msra.mxu0 0.0
        %1255 = vmatprep.subr.mxu0 0.0
        %1256 = vmatpush1.xpose.msra.mxu0 0.0
        %1257 = vmatprep.subr.mxu0 0.0
        %1258 = vmatpush1.xpose.msra.mxu0 0.0
        %1259 = vmatprep.subr.mxu0 0.0
        %1260 = vmatpush1.xpose.msra.mxu0 0.0
        %1261 = vmatprep.subr.mxu0 0.0
        %1262 = vmatpush1.xpose.msra.mxu0 0.0
        %1263 = vmatprep.subr.mxu0 0.0
        %1264 = vmatpush1.xpose.msra.mxu0 0.0
        %1265 = vmatprep.subr.mxu0 0.0
        %1266 = vmatpush1.xpose.msra.mxu0 0.0
        %1267 = vmatprep.subr.mxu0 0.0
        %1268 = vmatpush1.xpose.msra.mxu0 0.0
        %1269 = vmatprep.subr.mxu0 0.0
        %1270 = vmatpush1.xpose.msra.mxu0 0.0
        %1271 = vmatprep.subr.mxu0 0.0
        %1272 = vmatpush1.xpose.msra.mxu0 0.0
        %1273 = vmatprep.mubr.f32.mxu0 0.0
        %v1274 = vand.u32 %v1114, 4294901760
        %1275 = vmatmul.mubr.f32.gmra.mrb[0].mxu0 %v1274
        %v1276 = vpop.f32.mrb[0].mxu0
        %v1277 = vadd.f32 %v1196, %v1276
        %v1278 = vpop.f32.mrb[0].mxu0
        %1279 = vdwg.mxu0
        %1280 = vmatprep.subr.mxu0 0.0
        %v1281 = vand.u32 %v1117, 4294901760
        %v1282 = vsub.f32 %v1117, %v1281
        %1283 = vmatpush1.xpose.msra.mxu0 %v1282
        %1284 = vmatprep.subr.mxu0 0.0
        %v1285 = vand.u32 %v1120, 4294901760
        %v1286 = vsub.f32 %v1120, %v1285
        %1287 = vmatpush1.xpose.msra.mxu0 %v1286
        %1288 = vmatprep.subr.mxu0 0.0
        %1289 = vmatpush1.xpose.msra.mxu0 0.0
        %1290 = vmatprep.subr.mxu0 0.0
        %1291 = vmatpush1.xpose.msra.mxu0 0.0
        %1292 = vmatprep.subr.mxu0 0.0
        %1293 = vmatpush1.xpose.msra.mxu0 0.0
        %1294 = vmatprep.subr.mxu0 0.0
        %1295 = vmatpush1.xpose.msra.mxu0 0.0
        %1296 = vmatprep.subr.mxu0 0.0
        %1297 = vmatpush1.xpose.msra.mxu0 0.0
        %1298 = vmatprep.subr.mxu0 0.0
        %1299 = vmatpush1.xpose.msra.mxu0 0.0
        %1300 = vmatprep.subr.mxu0 0.0
        %1301 = vmatpush1.xpose.msra.mxu0 0.0
        %1302 = vmatprep.subr.mxu0 0.0
        %1303 = vmatpush1.xpose.msra.mxu0 0.0
        %1304 = vmatprep.subr.mxu0 0.0
        %1305 = vmatpush1.xpose.msra.mxu0 0.0
        %1306 = vmatprep.subr.mxu0 0.0
        %1307 = vmatpush1.xpose.msra.mxu0 0.0
        %1308 = vmatprep.subr.mxu0 0.0
        %1309 = vmatpush1.xpose.msra.mxu0 0.0
        %1310 = vmatprep.subr.mxu0 0.0
        %1311 = vmatpush1.xpose.msra.mxu0 0.0
        %1312 = vmatprep.subr.mxu0 0.0
        %1313 = vmatpush1.xpose.msra.mxu0 0.0
        %1314 = vmatprep.subr.mxu0 0.0
        %1315 = vmatpush1.xpose.msra.mxu0 0.0
        %1316 = vmatprep.subr.mxu0 0.0
        %1317 = vmatpush1.xpose.msra.mxu0 0.0
        %1318 = vmatprep.subr.mxu0 0.0
        %1319 = vmatpush1.xpose.msra.mxu0 0.0
        %1320 = vmatprep.subr.mxu0 0.0
        %1321 = vmatpush1.xpose.msra.mxu0 0.0
        %1322 = vmatprep.subr.mxu0 0.0
        %1323 = vmatpush1.xpose.msra.mxu0 0.0
        %1324 = vmatprep.subr.mxu0 0.0
        %1325 = vmatpush1.xpose.msra.mxu0 0.0
        %1326 = vmatprep.subr.mxu0 0.0
        %1327 = vmatpush1.xpose.msra.mxu0 0.0
        %1328 = vmatprep.subr.mxu0 0.0
        %1329 = vmatpush1.xpose.msra.mxu0 0.0
        %1330 = vmatprep.subr.mxu0 0.0
        %1331 = vmatpush1.xpose.msra.mxu0 0.0
        %1332 = vmatprep.subr.mxu0 0.0
        %1333 = vmatpush1.xpose.msra.mxu0 0.0
        %1334 = vmatprep.subr.mxu0 0.0
        %1335 = vmatpush1.xpose.msra.mxu0 0.0
        %1336 = vmatprep.subr.mxu0 0.0
        %1337 = vmatpush1.xpose.msra.mxu0 0.0
        %1338 = vmatprep.subr.mxu0 0.0
        %1339 = vmatpush1.xpose.msra.mxu0 0.0
        %1340 = vmatprep.subr.mxu0 0.0
        %1341 = vmatpush1.xpose.msra.mxu0 0.0
        %1342 = vmatprep.subr.mxu0 0.0
        %1343 = vmatpush1.xpose.msra.mxu0 0.0
        %1344 = vmatprep.subr.mxu0 0.0
        %1345 = vmatpush1.xpose.msra.mxu0 0.0
        %1346 = vmatprep.subr.mxu0 0.0
        %1347 = vmatpush1.xpose.msra.mxu0 0.0
        %1348 = vmatprep.mubr.f32.mxu0 0.0
        %v1349 = vand.u32 %v1114, 4294901760
        %v1350 = vsub.f32 %v1114, %v1349
        %1351 = vmatmul.mubr.f32.gmra.mrb[0].mxu0 %v1350
        %v1352 = vpop.f32.mrb[0].mxu0
        %v1353 = vadd.f32 %v1277, %v1352
        %v1354 = vpop.f32.mrb[0].mxu0
        %1355 = vdwg.mxu0
        %1356 = vmatprep.subr.mxu0 0.0
        %v1357 = vand.u32 %v1117, 4294901760
        %1358 = vmatpush1.xpose.msra.mxu0 %v1357
        %1359 = vmatprep.subr.mxu0 0.0
        %v1360 = vand.u32 %v1120, 4294901760
        %1361 = vmatpush1.xpose.msra.mxu0 %v1360
        %1362 = vmatprep.subr.mxu0 0.0
        %1363 = vmatpush1.xpose.msra.mxu0 0.0
        %1364 = vmatprep.subr.mxu0 0.0
        %1365 = vmatpush1.xpose.msra.mxu0 0.0
        %1366 = vmatprep.subr.mxu0 0.0
        %1367 = vmatpush1.xpose.msra.mxu0 0.0
        %1368 = vmatprep.subr.mxu0 0.0
        %1369 = vmatpush1.xpose.msra.mxu0 0.0
        %1370 = vmatprep.subr.mxu0 0.0
        %1371 = vmatpush1.xpose.msra.mxu0 0.0
        %1372 = vmatprep.subr.mxu0 0.0
        %1373 = vmatpush1.xpose.msra.mxu0 0.0
        %1374 = vmatprep.subr.mxu0 0.0
        %1375 = vmatpush1.xpose.msra.mxu0 0.0
        %1376 = vmatprep.subr.mxu0 0.0
        %1377 = vmatpush1.xpose.msra.mxu0 0.0
        %1378 = vmatprep.subr.mxu0 0.0
        %1379 = vmatpush1.xpose.msra.mxu0 0.0
        %1380 = vmatprep.subr.mxu0 0.0
        %1381 = vmatpush1.xpose.msra.mxu0 0.0
        %1382 = vmatprep.subr.mxu0 0.0
        %1383 = vmatpush1.xpose.msra.mxu0 0.0
        %1384 = vmatprep.subr.mxu0 0.0
        %1385 = vmatpush1.xpose.msra.mxu0 0.0
        %1386 = vmatprep.subr.mxu0 0.0
        %1387 = vmatpush1.xpose.msra.mxu0 0.0
        %1388 = vmatprep.subr.mxu0 0.0
        %1389 = vmatpush1.xpose.msra.mxu0 0.0
        %1390 = vmatprep.subr.mxu0 0.0
        %1391 = vmatpush1.xpose.msra.mxu0 0.0
        %1392 = vmatprep.subr.mxu0 0.0
        %1393 = vmatpush1.xpose.msra.mxu0 0.0
        %1394 = vmatprep.subr.mxu0 0.0
        %1395 = vmatpush1.xpose.msra.mxu0 0.0
        %1396 = vmatprep.subr.mxu0 0.0
        %1397 = vmatpush1.xpose.msra.mxu0 0.0
        %1398 = vmatprep.subr.mxu0 0.0
        %1399 = vmatpush1.xpose.msra.mxu0 0.0
        %1400 = vmatprep.subr.mxu0 0.0
        %1401 = vmatpush1.xpose.msra.mxu0 0.0
        %1402 = vmatprep.subr.mxu0 0.0
        %1403 = vmatpush1.xpose.msra.mxu0 0.0
        %1404 = vmatprep.subr.mxu0 0.0
        %1405 = vmatpush1.xpose.msra.mxu0 0.0
        %1406 = vmatprep.subr.mxu0 0.0
        %1407 = vmatpush1.xpose.msra.mxu0 0.0
        %1408 = vmatprep.subr.mxu0 0.0
        %1409 = vmatpush1.xpose.msra.mxu0 0.0
        %1410 = vmatprep.subr.mxu0 0.0
        %1411 = vmatpush1.xpose.msra.mxu0 0.0
        %1412 = vmatprep.subr.mxu0 0.0
        %1413 = vmatpush1.xpose.msra.mxu0 0.0
        %1414 = vmatprep.subr.mxu0 0.0
        %1415 = vmatpush1.xpose.msra.mxu0 0.0
        %1416 = vmatprep.subr.mxu0 0.0
        %1417 = vmatpush1.xpose.msra.mxu0 0.0
        %1418 = vmatprep.subr.mxu0 0.0
        %1419 = vmatpush1.xpose.msra.mxu0 0.0
        %1420 = vmatprep.subr.mxu0 0.0
        %1421 = vmatpush1.xpose.msra.mxu0 0.0
        %1422 = vmatprep.mubr.f32.mxu0 0.0
        %v1423 = vand.u32 %v1114, 4294901760
        %v1424 = vsub.f32 %v1114, %v1423
        %v1425 = vand.u32 %v1424, 4294901760
        %1426 = vmatmul.mubr.f32.gmra.mrb[0].mxu0 %v1425
        %v1427 = vpop.f32.mrb[0].mxu0
        %v1428 = vadd.f32 %v1353, %v1427
        %v1429 = vpop.f32.mrb[0].mxu0
        %1430 = vdwg.mxu0
        %1431 = vmatprep.subr.mxu0 0.0
        %v1432 = vand.u32 %v1117, 4294901760
        %v1433 = vsub.f32 %v1117, %v1432
        %v1434 = vand.u32 %v1433, 4294901760
        %1435 = vmatpush1.xpose.msra.mxu0 %v1434
        %1436 = vmatprep.subr.mxu0 0.0
        %v1437 = vand.u32 %v1120, 4294901760
        %v1438 = vsub.f32 %v1120, %v1437
        %v1439 = vand.u32 %v1438, 4294901760
        %1440 = vmatpush1.xpose.msra.mxu0 %v1439
        %1441 = vmatprep.subr.mxu0 0.0
        %1442 = vmatpush1.xpose.msra.mxu0 0.0
        %1443 = vmatprep.subr.mxu0 0.0
        %1444 = vmatpush1.xpose.msra.mxu0 0.0
        %1445 = vmatprep.subr.mxu0 0.0
        %1446 = vmatpush1.xpose.msra.mxu0 0.0
        %1447 = vmatprep.subr.mxu0 0.0
        %1448 = vmatpush1.xpose.msra.mxu0 0.0
        %1449 = vmatprep.subr.mxu0 0.0
        %1450 = vmatpush1.xpose.msra.mxu0 0.0
        %1451 = vmatprep.subr.mxu0 0.0
        %1452 = vmatpush1.xpose.msra.mxu0 0.0
        %1453 = vmatprep.subr.mxu0 0.0
        %1454 = vmatpush1.xpose.msra.mxu0 0.0
        %1455 = vmatprep.subr.mxu0 0.0
        %1456 = vmatpush1.xpose.msra.mxu0 0.0
        %1457 = vmatprep.subr.mxu0 0.0
        %1458 = vmatpush1.xpose.msra.mxu0 0.0
        %1459 = vmatprep.subr.mxu0 0.0
        %1460 = vmatpush1.xpose.msra.mxu0 0.0
        %1461 = vmatprep.subr.mxu0 0.0
        %1462 = vmatpush1.xpose.msra.mxu0 0.0
        %1463 = vmatprep.subr.mxu0 0.0
        %1464 = vmatpush1.xpose.msra.mxu0 0.0
        %1465 = vmatprep.subr.mxu0 0.0
        %1466 = vmatpush1.xpose.msra.mxu0 0.0
        %1467 = vmatprep.subr.mxu0 0.0
        %1468 = vmatpush1.xpose.msra.mxu0 0.0
        %1469 = vmatprep.subr.mxu0 0.0
        %1470 = vmatpush1.xpose.msra.mxu0 0.0
        %1471 = vmatprep.subr.mxu0 0.0
        %1472 = vmatpush1.xpose.msra.mxu0 0.0
        %1473 = vmatprep.subr.mxu0 0.0
        %1474 = vmatpush1.xpose.msra.mxu0 0.0
        %1475 = vmatprep.subr.mxu0 0.0
        %1476 = vmatpush1.xpose.msra.mxu0 0.0
        %1477 = vmatprep.subr.mxu0 0.0
        %1478 = vmatpush1.xpose.msra.mxu0 0.0
        %1479 = vmatprep.subr.mxu0 0.0
        %1480 = vmatpush1.xpose.msra.mxu0 0.0
        %1481 = vmatprep.subr.mxu0 0.0
        %1482 = vmatpush1.xpose.msra.mxu0 0.0
        %1483 = vmatprep.subr.mxu0 0.0
        %1484 = vmatpush1.xpose.msra.mxu0 0.0
        %1485 = vmatprep.subr.mxu0 0.0
        %1486 = vmatpush1.xpose.msra.mxu0 0.0
        %1487 = vmatprep.subr.mxu0 0.0
        %1488 = vmatpush1.xpose.msra.mxu0 0.0
        %1489 = vmatprep.subr.mxu0 0.0
        %1490 = vmatpush1.xpose.msra.mxu0 0.0
        %1491 = vmatprep.subr.mxu0 0.0
        %1492 = vmatpush1.xpose.msra.mxu0 0.0
        %1493 = vmatprep.subr.mxu0 0.0
        %1494 = vmatpush1.xpose.msra.mxu0 0.0
        %1495 = vmatprep.subr.mxu0 0.0
        %1496 = vmatpush1.xpose.msra.mxu0 0.0
        %1497 = vmatprep.subr.mxu0 0.0
        %1498 = vmatpush1.xpose.msra.mxu0 0.0
        %1499 = vmatprep.subr.mxu0 0.0
        %1500 = vmatpush1.xpose.msra.mxu0 0.0
        %1501 = vmatprep.mubr.f32.mxu0 0.0
        %v1502 = vand.u32 %v1114, 4294901760
        %1503 = vmatmul.mubr.f32.gmra.mrb[0].mxu0 %v1502
        %v1504 = vpop.f32.mrb[0].mxu0
        %v1505 = vadd.f32 %v1428, %v1504
        %v1506 = vpop.f32.mrb[0].mxu0
        %1507 = vdwg.mxu0
        %1508 = vmatprep.subr.mxu0 0.0
        %v1509 = vand.u32 %v1117, 4294901760
        %1510 = vmatpush1.xpose.msra.mxu0 %v1509
        %1511 = vmatprep.subr.mxu0 0.0
        %v1512 = vand.u32 %v1120, 4294901760
        %1513 = vmatpush1.xpose.msra.mxu0 %v1512
        %1514 = vmatprep.subr.mxu0 0.0
        %1515 = vmatpush1.xpose.msra.mxu0 0.0
        %1516 = vmatprep.subr.mxu0 0.0
        %1517 = vmatpush1.xpose.msra.mxu0 0.0
        %1518 = vmatprep.subr.mxu0 0.0
        %1519 = vmatpush1.xpose.msra.mxu0 0.0
        %1520 = vmatprep.subr.mxu0 0.0
        %1521 = vmatpush1.xpose.msra.mxu0 0.0
        %1522 = vmatprep.subr.mxu0 0.0
        %1523 = vmatpush1.xpose.msra.mxu0 0.0
        %1524 = vmatprep.subr.mxu0 0.0
        %1525 = vmatpush1.xpose.msra.mxu0 0.0
        %1526 = vmatprep.subr.mxu0 0.0
        %1527 = vmatpush1.xpose.msra.mxu0 0.0
        %1528 = vmatprep.subr.mxu0 0.0
        %1529 = vmatpush1.xpose.msra.mxu0 0.0
        %1530 = vmatprep.subr.mxu0 0.0
        %1531 = vmatpush1.xpose.msra.mxu0 0.0
        %1532 = vmatprep.subr.mxu0 0.0
        %1533 = vmatpush1.xpose.msra.mxu0 0.0
        %1534 = vmatprep.subr.mxu0 0.0
        %1535 = vmatpush1.xpose.msra.mxu0 0.0
        %1536 = vmatprep.subr.mxu0 0.0
        %1537 = vmatpush1.xpose.msra.mxu0 0.0
        %1538 = vmatprep.subr.mxu0 0.0
        %1539 = vmatpush1.xpose.msra.mxu0 0.0
        %1540 = vmatprep.subr.mxu0 0.0
        %1541 = vmatpush1.xpose.msra.mxu0 0.0
        %1542 = vmatprep.subr.mxu0 0.0
        %1543 = vmatpush1.xpose.msra.mxu0 0.0
        %1544 = vmatprep.subr.mxu0 0.0
        %1545 = vmatpush1.xpose.msra.mxu0 0.0
        %1546 = vmatprep.subr.mxu0 0.0
        %1547 = vmatpush1.xpose.msra.mxu0 0.0
        %1548 = vmatprep.subr.mxu0 0.0
        %1549 = vmatpush1.xpose.msra.mxu0 0.0
        %1550 = vmatprep.subr.mxu0 0.0
        %1551 = vmatpush1.xpose.msra.mxu0 0.0
        %1552 = vmatprep.subr.mxu0 0.0
        %1553 = vmatpush1.xpose.msra.mxu0 0.0
        %1554 = vmatprep.subr.mxu0 0.0
        %1555 = vmatpush1.xpose.msra.mxu0 0.0
        %1556 = vmatprep.subr.mxu0 0.0
        %1557 = vmatpush1.xpose.msra.mxu0 0.0
        %1558 = vmatprep.subr.mxu0 0.0
        %1559 = vmatpush1.xpose.msra.mxu0 0.0
        %1560 = vmatprep.subr.mxu0 0.0
        %1561 = vmatpush1.xpose.msra.mxu0 0.0
        %1562 = vmatprep.subr.mxu0 0.0
        %1563 = vmatpush1.xpose.msra.mxu0 0.0
        %1564 = vmatprep.subr.mxu0 0.0
        %1565 = vmatpush1.xpose.msra.mxu0 0.0
        %1566 = vmatprep.subr.mxu0 0.0
        %1567 = vmatpush1.xpose.msra.mxu0 0.0
        %1568 = vmatprep.subr.mxu0 0.0
        %1569 = vmatpush1.xpose.msra.mxu0 0.0
        %1570 = vmatprep.subr.mxu0 0.0
        %1571 = vmatpush1.xpose.msra.mxu0 0.0
        %1572 = vmatprep.subr.mxu0 0.0
        %1573 = vmatpush1.xpose.msra.mxu0 0.0
        %1574 = vmatprep.mubr.f32.mxu0 0.0
        %v1575 = vand.u32 %v1114, 4294901760
        %1576 = vmatmul.mubr.f32.gmra.mrb[0].mxu0 %v1575
        %v1577 = vpop.f32.mrb[0].mxu0
        %v1578 = vadd.f32 %v1505, %v1577
        %v1579 = vpop.f32.mrb[0].mxu0
        %1580 = vdwg.mxu0
        %v1581 = vlaneseq
        %v1582 = vshrl.u32 %v1581, 7
        %v1583 = vsub.s32 0, %v1582
        %v1584 = vrot.slane %v1578, %v1583
        %v1585 = vadd.f32 %v1109, %v1584
        %v1586 = vadd.f32 %v1112, %v1584
        %vm1587 = vcmp.gt.f32.partialorder %v1585, 0.0
        %vm1588 = vcmp.gt.f32.partialorder %v1586, 0.0
        %v1589 = vmul.f32 %v1585, 0.2
        %v1590 = vmul.f32 %v1586, 0.2
        %v1591 = vsel %vm1587, %v1585, %v1589
        %v1592 = vsel %vm1588, %v1586, %v1590
        %vm1593 = vcmp.gt.f32.partialorder %v583, 0.0
        %vm1594 = vcmp.gt.f32.partialorder %v584, 0.0
        %v1595 = vsel %vm1593, -1e+12, %v1591
        %v1596 = vsel %vm1594, -1e+12, %v1592
        %v1597 = vsel %vm587, %v1595, -inf
        %1598 = vmax.xlane.f32.xlu0 %v1597
        %v1599 = vpop.xlane.xlu0 %1598
        %v1600 = vsel %vm587, %v1596, -inf
        %1601 = vmax.xlane.f32.xlu0 %v1600
        %v1602 = vpop.xlane.xlu0 %1601
        %v1603 = vsub.f32 %v1595, %v1599
        %v1604 = vsub.f32 %v1596, %v1602
        %v1605 = vmul.f32 %v1603, 1.442695
        %v1606 = vpow.pop %v1605
        %v1607 = vmul.f32 %v1604, 1.442695
        %v1608 = vpow.pop %v1607
        %v1609 = vsel %vm587, %v1606, 0.0
        %1610 = vadd.xlane.f32.xlu0 %v1609
        %v1611 = vpop.xlane.xlu0 %1610
        %v1612 = vsel %vm587, %v1608, 0.0
        %1613 = vadd.xlane.f32.xlu0 %v1612
        %v1614 = vpop.xlane.xlu0 %1613
        %v1615 = vrcp.pop %v1611
        %v1616 = vmul.f32 %v1606, %v1615
        %v1617 = vrcp.pop %v1614
        %v1618 = vmul.f32 %v1608, %v1617
        %v1620 = vsel %vm587, %v1616, 0
        %v1623 = vsel %vm587, %v1618, 0
        %1625 = vmatprep.subr.mxu0 0.0
        %v1626 = vand.u32 %v1087, 4294901760
        %1627 = vmatpush1.msra.mxu0 %v1626
        %1628 = vmatprep.subr.mxu0 0.0
        %v1629 = vand.u32 %v1093, 4294901760
        %1630 = vmatpush1.msra.mxu0 %v1629
        %1631 = vmatprep.subr.mxu0 0.0
        %1632 = vmatpush1.msra.mxu0 0.0
        %1633 = vmatprep.subr.mxu0 0.0
        %1634 = vmatpush1.msra.mxu0 0.0
        %1635 = vmatprep.subr.mxu0 0.0
        %1636 = vmatpush1.msra.mxu0 0.0
        %1637 = vmatprep.subr.mxu0 0.0
        %1638 = vmatpush1.msra.mxu0 0.0
        %1639 = vmatprep.subr.mxu0 0.0
        %1640 = vmatpush1.msra.mxu0 0.0
        %1641 = vmatprep.subr.mxu0 0.0
        %1642 = vmatpush1.msra.mxu0 0.0
        %1643 = vmatprep.subr.mxu0 0.0
        %1644 = vmatpush1.msra.mxu0 0.0
        %1645 = vmatprep.subr.mxu0 0.0
        %1646 = vmatpush1.msra.mxu0 0.0
        %1647 = vmatprep.subr.mxu0 0.0
        %1648 = vmatpush1.msra.mxu0 0.0
        %1649 = vmatprep.subr.mxu0 0.0
        %1650 = vmatpush1.msra.mxu0 0.0
        %1651 = vmatprep.subr.mxu0 0.0
        %1652 = vmatpush1.msra.mxu0 0.0
        %1653 = vmatprep.subr.mxu0 0.0
        %1654 = vmatpush1.msra.mxu0 0.0
        %1655 = vmatprep.subr.mxu0 0.0
        %1656 = vmatpush1.msra.mxu0 0.0
        %1657 = vmatprep.subr.mxu0 0.0
        %1658 = vmatpush1.msra.mxu0 0.0
        %1659 = vmatprep.subr.mxu0 0.0
        %1660 = vmatpush1.msra.mxu0 0.0
        %1661 = vmatprep.subr.mxu0 0.0
        %1662 = vmatpush1.msra.mxu0 0.0
        %1663 = vmatprep.subr.mxu0 0.0
        %1664 = vmatpush1.msra.mxu0 0.0
        %1665 = vmatprep.subr.mxu0 0.0
        %1666 = vmatpush1.msra.mxu0 0.0
        %1667 = vmatprep.subr.mxu0 0.0
        %1668 = vmatpush1.msra.mxu0 0.0
        %1669 = vmatprep.subr.mxu0 0.0
        %1670 = vmatpush1.msra.mxu0 0.0
        %1671 = vmatprep.subr.mxu0 0.0
        %1672 = vmatpush1.msra.mxu0 0.0
        %1673 = vmatprep.subr.mxu0 0.0
        %1674 = vmatpush1.msra.mxu0 0.0
        %1675 = vmatprep.subr.mxu0 0.0
        %1676 = vmatpush1.msra.mxu0 0.0
        %1677 = vmatprep.subr.mxu0 0.0
        %1678 = vmatpush1.msra.mxu0 0.0
        %1679 = vmatprep.subr.mxu0 0.0
        %1680 = vmatpush1.msra.mxu0 0.0
        %1681 = vmatprep.subr.mxu0 0.0
        %1682 = vmatpush1.msra.mxu0 0.0
        %1683 = vmatprep.subr.mxu0 0.0
        %1684 = vmatpush1.msra.mxu0 0.0
        %1685 = vmatprep.subr.mxu0 0.0
        %1686 = vmatpush1.msra.mxu0 0.0
        %1687 = vmatprep.subr.mxu0 0.0
        %1688 = vmatpush1.msra.mxu0 0.0
        %1689 = vmatprep.subr.mxu0 0.0
        %1690 = vmatpush1.msra.mxu0 0.0
        %1691 = vmatprep.mubr.f32.mxu0 0.0
        %v1692 = vand.u32 %v1620, 4294901760
        %v1693 = vsub.f32 %v1620, %v1692
        %v1694 = vand.u32 %v1693, 4294901760
        %v1695 = vsub.f32 %v1693, %v1694
        %v1696 = vand.u32 %v1695, 4294901760
        %1697 = vmatmul.mubr.f32.gmra.mrb[0].mxu0 %v1696
        %v1698 = vpop.f32.mrb[0].mxu0
        %v1699 = vadd.f32 0.0, %v1698
        %v1700 = vpop.f32.mrb[0].mxu0
        %1701 = vmatprep.mubr.f32.mxu0 0.0
        %v1702 = vand.u32 %v1623, 4294901760
        %v1703 = vsub.f32 %v1623, %v1702
        %v1704 = vand.u32 %v1703, 4294901760
        %v1705 = vsub.f32 %v1703, %v1704
        %v1706 = vand.u32 %v1705, 4294901760
        %1707 = vmatmul.mubr.f32.gmra.mrb[0].mxu0 %v1706
        %v1708 = vpop.f32.mrb[0].mxu0
        %v1709 = vadd.f32 0.0, %v1708
        %v1710 = vpop.f32.mrb[0].mxu0
        %1711 = vdwg.mxu0
        %1712 = vmatprep.subr.mxu0 0.0
        %v1713 = vand.u32 %v1087, 4294901760
        %v1714 = vsub.f32 %v1087, %v1713
        %v1715 = vand.u32 %v1714, 4294901760
        %v1716 = vsub.f32 %v1714, %v1715
        %v1717 = vand.u32 %v1716, 4294901760
        %1718 = vmatpush1.msra.mxu0 %v1717
        %1719 = vmatprep.subr.mxu0 0.0
        %v1720 = vand.u32 %v1093, 4294901760
        %v1721 = vsub.f32 %v1093, %v1720
        %v1722 = vand.u32 %v1721, 4294901760
        %v1723 = vsub.f32 %v1721, %v1722
        %v1724 = vand.u32 %v1723, 4294901760
        %1725 = vmatpush1.msra.mxu0 %v1724
        %1726 = vmatprep.subr.mxu0 0.0
        %1727 = vmatpush1.msra.mxu0 0.0
        %1728 = vmatprep.subr.mxu0 0.0
        %1729 = vmatpush1.msra.mxu0 0.0
        %1730 = vmatprep.subr.mxu0 0.0
        %1731 = vmatpush1.msra.mxu0 0.0
        %1732 = vmatprep.subr.mxu0 0.0
        %1733 = vmatpush1.msra.mxu0 0.0
        %1734 = vmatprep.subr.mxu0 0.0
        %1735 = vmatpush1.msra.mxu0 0.0
        %1736 = vmatprep.subr.mxu0 0.0
        %1737 = vmatpush1.msra.mxu0 0.0
        %1738 = vmatprep.subr.mxu0 0.0
        %1739 = vmatpush1.msra.mxu0 0.0
        %1740 = vmatprep.subr.mxu0 0.0
        %1741 = vmatpush1.msra.mxu0 0.0
        %1742 = vmatprep.subr.mxu0 0.0
        %1743 = vmatpush1.msra.mxu0 0.0
        %1744 = vmatprep.subr.mxu0 0.0
        %1745 = vmatpush1.msra.mxu0 0.0
        %1746 = vmatprep.subr.mxu0 0.0
        %1747 = vmatpush1.msra.mxu0 0.0
        %1748 = vmatprep.subr.mxu0 0.0
        %1749 = vmatpush1.msra.mxu0 0.0
        %1750 = vmatprep.subr.mxu0 0.0
        %1751 = vmatpush1.msra.mxu0 0.0
        %1752 = vmatprep.subr.mxu0 0.0
        %1753 = vmatpush1.msra.mxu0 0.0
        %1754 = vmatprep.subr.mxu0 0.0
        %1755 = vmatpush1.msra.mxu0 0.0
        %1756 = vmatprep.subr.mxu0 0.0
        %1757 = vmatpush1.msra.mxu0 0.0
        %1758 = vmatprep.subr.mxu0 0.0
        %1759 = vmatpush1.msra.mxu0 0.0
        %1760 = vmatprep.subr.mxu0 0.0
        %1761 = vmatpush1.msra.mxu0 0.0
        %1762 = vmatprep.subr.mxu0 0.0
        %1763 = vmatpush1.msra.mxu0 0.0
        %1764 = vmatprep.subr.mxu0 0.0
        %1765 = vmatpush1.msra.mxu0 0.0
        %1766 = vmatprep.subr.mxu0 0.0
        %1767 = vmatpush1.msra.mxu0 0.0
        %1768 = vmatprep.subr.mxu0 0.0
        %1769 = vmatpush1.msra.mxu0 0.0
        %1770 = vmatprep.subr.mxu0 0.0
        %1771 = vmatpush1.msra.mxu0 0.0
        %1772 = vmatprep.subr.mxu0 0.0
        %1773 = vmatpush1.msra.mxu0 0.0
        %1774 = vmatprep.subr.mxu0 0.0
        %1775 = vmatpush1.msra.mxu0 0.0
        %1776 = vmatprep.subr.mxu0 0.0
        %1777 = vmatpush1.msra.mxu0 0.0
        %1778 = vmatprep.subr.mxu0 0.0
        %1779 = vmatpush1.msra.mxu0 0.0
        %1780 = vmatprep.subr.mxu0 0.0
        %1781 = vmatpush1.msra.mxu0 0.0
        %1782 = vmatprep.subr.mxu0 0.0
        %1783 = vmatpush1.msra.mxu0 0.0
        %1784 = vmatprep.subr.mxu0 0.0
        %1785 = vmatpush1.msra.mxu0 0.0
        %1786 = vmatprep.mubr.f32.mxu0 0.0
        %v1787 = vand.u32 %v1620, 4294901760
        %1788 = vmatmul.mubr.f32.gmra.mrb[0].mxu0 %v1787
        %v1789 = vpop.f32.mrb[0].mxu0
        %v1790 = vadd.f32 %v1699, %v1789
        %v1791 = vpop.f32.mrb[0].mxu0
        %1792 = vmatprep.mubr.f32.mxu0 0.0
        %v1793 = vand.u32 %v1623, 4294901760
        %1794 = vmatmul.mubr.f32.gmra.mrb[0].mxu0 %v1793
        %v1795 = vpop.f32.mrb[0].mxu0
        %v1796 = vadd.f32 %v1709, %v1795
        %v1797 = vpop.f32.mrb[0].mxu0
        %1798 = vdwg.mxu0
        %1799 = vmatprep.subr.mxu0 0.0
        %v1800 = vand.u32 %v1087, 4294901760
        %v1801 = vsub.f32 %v1087, %v1800
        %1802 = vmatpush1.msra.mxu0 %v1801
        %1803 = vmatprep.subr.mxu0 0.0
        %v1804 = vand.u32 %v1093, 4294901760
        %v1805 = vsub.f32 %v1093, %v1804
        %1806 = vmatpush1.msra.mxu0 %v1805
        %1807 = vmatprep.subr.mxu0 0.0
        %1808 = vmatpush1.msra.mxu0 0.0
        %1809 = vmatprep.subr.mxu0 0.0
        %1810 = vmatpush1.msra.mxu0 0.0
        %1811 = vmatprep.subr.mxu0 0.0
        %1812 = vmatpush1.msra.mxu0 0.0
        %1813 = vmatprep.subr.mxu0 0.0
        %1814 = vmatpush1.msra.mxu0 0.0
        %1815 = vmatprep.subr.mxu0 0.0
        %1816 = vmatpush1.msra.mxu0 0.0
        %1817 = vmatprep.subr.mxu0 0.0
        %1818 = vmatpush1.msra.mxu0 0.0
        %1819 = vmatprep.subr.mxu0 0.0
        %1820 = vmatpush1.msra.mxu0 0.0
        %1821 = vmatprep.subr.mxu0 0.0
        %1822 = vmatpush1.msra.mxu0 0.0
        %1823 = vmatprep.subr.mxu0 0.0
        %1824 = vmatpush1.msra.mxu0 0.0
        %1825 = vmatprep.subr.mxu0 0.0
        %1826 = vmatpush1.msra.mxu0 0.0
        %1827 = vmatprep.subr.mxu0 0.0
        %1828 = vmatpush1.msra.mxu0 0.0
        %1829 = vmatprep.subr.mxu0 0.0
        %1830 = vmatpush1.msra.mxu0 0.0
        %1831 = vmatprep.subr.mxu0 0.0
        %1832 = vmatpush1.msra.mxu0 0.0
        %1833 = vmatprep.subr.mxu0 0.0
        %1834 = vmatpush1.msra.mxu0 0.0
        %1835 = vmatprep.subr.mxu0 0.0
        %1836 = vmatpush1.msra.mxu0 0.0
        %1837 = vmatprep.subr.mxu0 0.0
        %1838 = vmatpush1.msra.mxu0 0.0
        %1839 = vmatprep.subr.mxu0 0.0
        %1840 = vmatpush1.msra.mxu0 0.0
        %1841 = vmatprep.subr.mxu0 0.0
        %1842 = vmatpush1.msra.mxu0 0.0
        %1843 = vmatprep.subr.mxu0 0.0
        %1844 = vmatpush1.msra.mxu0 0.0
        %1845 = vmatprep.subr.mxu0 0.0
        %1846 = vmatpush1.msra.mxu0 0.0
        %1847 = vmatprep.subr.mxu0 0.0
        %1848 = vmatpush1.msra.mxu0 0.0
        %1849 = vmatprep.subr.mxu0 0.0
        %1850 = vmatpush1.msra.mxu0 0.0
        %1851 = vmatprep.subr.mxu0 0.0
        %1852 = vmatpush1.msra.mxu0 0.0
        %1853 = vmatprep.subr.mxu0 0.0
        %1854 = vmatpush1.msra.mxu0 0.0
        %1855 = vmatprep.subr.mxu0 0.0
        %1856 = vmatpush1.msra.mxu0 0.0
        %1857 = vmatprep.subr.mxu0 0.0
        %1858 = vmatpush1.msra.mxu0 0.0
        %1859 = vmatprep.subr.mxu0 0.0
        %1860 = vmatpush1.msra.mxu0 0.0
        %1861 = vmatprep.subr.mxu0 0.0
        %1862 = vmatpush1.msra.mxu0 0.0
        %1863 = vmatprep.subr.mxu0 0.0
        %1864 = vmatpush1.msra.mxu0 0.0
        %1865 = vmatprep.subr.mxu0 0.0
        %1866 = vmatpush1.msra.mxu0 0.0
        %1867 = vmatprep.mubr.f32.mxu0 0.0
        %v1868 = vand.u32 %v1620, 4294901760
        %v1869 = vsub.f32 %v1620, %v1868
        %1870 = vmatmul.mubr.f32.gmra.mrb[0].mxu0 %v1869
        %v1871 = vpop.f32.mrb[0].mxu0
        %v1872 = vadd.f32 %v1790, %v1871
        %v1873 = vpop.f32.mrb[0].mxu0
        %1874 = vmatprep.mubr.f32.mxu0 0.0
        %v1875 = vand.u32 %v1623, 4294901760
        %v1876 = vsub.f32 %v1623, %v1875
        %1877 = vmatmul.mubr.f32.gmra.mrb[0].mxu0 %v1876
        %v1878 = vpop.f32.mrb[0].mxu0
        %v1879 = vadd.f32 %v1796, %v1878
        %v1880 = vpop.f32.mrb[0].mxu0
        %1881 = vdwg.mxu0
        %1882 = vmatprep.subr.mxu0 0.0
        %v1883 = vand.u32 %v1087, 4294901760
        %1884 = vmatpush1.msra.mxu0 %v1883
        %1885 = vmatprep.subr.mxu0 0.0
        %v1886 = vand.u32 %v1093, 4294901760
        %1887 = vmatpush1.msra.mxu0 %v1886
        %1888 = vmatprep.subr.mxu0 0.0
        %1889 = vmatpush1.msra.mxu0 0.0
        %1890 = vmatprep.subr.mxu0 0.0
        %1891 = vmatpush1.msra.mxu0 0.0
        %1892 = vmatprep.subr.mxu0 0.0
        %1893 = vmatpush1.msra.mxu0 0.0
        %1894 = vmatprep.subr.mxu0 0.0
        %1895 = vmatpush1.msra.mxu0 0.0
        %1896 = vmatprep.subr.mxu0 0.0
        %1897 = vmatpush1.msra.mxu0 0.0
        %1898 = vmatprep.subr.mxu0 0.0
        %1899 = vmatpush1.msra.mxu0 0.0
        %1900 = vmatprep.subr.mxu0 0.0
        %1901 = vmatpush1.msra.mxu0 0.0
        %1902 = vmatprep.subr.mxu0 0.0
        %1903 = vmatpush1.msra.mxu0 0.0
        %1904 = vmatprep.subr.mxu0 0.0
        %1905 = vmatpush1.msra.mxu0 0.0
        %1906 = vmatprep.subr.mxu0 0.0
        %1907 = vmatpush1.msra.mxu0 0.0
        %1908 = vmatprep.subr.mxu0 0.0
        %1909 = vmatpush1.msra.mxu0 0.0
        %1910 = vmatprep.subr.mxu0 0.0
        %1911 = vmatpush1.msra.mxu0 0.0
        %1912 = vmatprep.subr.mxu0 0.0
        %1913 = vmatpush1.msra.mxu0 0.0
        %1914 = vmatprep.subr.mxu0 0.0
        %1915 = vmatpush1.msra.mxu0 0.0
        %1916 = vmatprep.subr.mxu0 0.0
        %1917 = vmatpush1.msra.mxu0 0.0
        %1918 = vmatprep.subr.mxu0 0.0
        %1919 = vmatpush1.msra.mxu0 0.0
        %1920 = vmatprep.subr.mxu0 0.0
        %1921 = vmatpush1.msra.mxu0 0.0
        %1922 = vmatprep.subr.mxu0 0.0
        %1923 = vmatpush1.msra.mxu0 0.0
        %1924 = vmatprep.subr.mxu0 0.0
        %1925 = vmatpush1.msra.mxu0 0.0
        %1926 = vmatprep.subr.mxu0 0.0
        %1927 = vmatpush1.msra.mxu0 0.0
        %1928 = vmatprep.subr.mxu0 0.0
        %1929 = vmatpush1.msra.mxu0 0.0
        %1930 = vmatprep.subr.mxu0 0.0
        %1931 = vmatpush1.msra.mxu0 0.0
        %1932 = vmatprep.subr.mxu0 0.0
        %1933 = vmatpush1.msra.mxu0 0.0
        %1934 = vmatprep.subr.mxu0 0.0
        %1935 = vmatpush1.msra.mxu0 0.0
        %1936 = vmatprep.subr.mxu0 0.0
        %1937 = vmatpush1.msra.mxu0 0.0
        %1938 = vmatprep.subr.mxu0 0.0
        %1939 = vmatpush1.msra.mxu0 0.0
        %1940 = vmatprep.subr.mxu0 0.0
        %1941 = vmatpush1.msra.mxu0 0.0
        %1942 = vmatprep.subr.mxu0 0.0
        %1943 = vmatpush1.msra.mxu0 0.0
        %1944 = vmatprep.subr.mxu0 0.0
        %1945 = vmatpush1.msra.mxu0 0.0
        %1946 = vmatprep.subr.mxu0 0.0
        %1947 = vmatpush1.msra.mxu0 0.0
        %1948 = vmatprep.mubr.f32.mxu0 0.0
        %v1949 = vand.u32 %v1620, 4294901760
        %v1950 = vsub.f32 %v1620, %v1949
        %v1951 = vand.u32 %v1950, 4294901760
        %1952 = vmatmul.mubr.f32.gmra.mrb[0].mxu0 %v1951
        %v1953 = vpop.f32.mrb[0].mxu0
        %v1954 = vadd.f32 %v1872, %v1953
        %v1955 = vpop.f32.mrb[0].mxu0
        %1956 = vmatprep.mubr.f32.mxu0 0.0
        %v1957 = vand.u32 %v1623, 4294901760
        %v1958 = vsub.f32 %v1623, %v1957
        %v1959 = vand.u32 %v1958, 4294901760
        %1960 = vmatmul.mubr.f32.gmra.mrb[0].mxu0 %v1959
        %v1961 = vpop.f32.mrb[0].mxu0
        %v1962 = vadd.f32 %v1879, %v1961
        %v1963 = vpop.f32.mrb[0].mxu0
        %1964 = vdwg.mxu0
        %1965 = vmatprep.subr.mxu0 0.0
        %v1966 = vand.u32 %v1087, 4294901760
        %v1967 = vsub.f32 %v1087, %v1966
        %v1968 = vand.u32 %v1967, 4294901760
        %1969 = vmatpush1.msra.mxu0 %v1968
        %1970 = vmatprep.subr.mxu0 0.0
        %v1971 = vand.u32 %v1093, 4294901760
        %v1972 = vsub.f32 %v1093, %v1971
        %v1973 = vand.u32 %v1972, 4294901760
        %1974 = vmatpush1.msra.mxu0 %v1973
        %1975 = vmatprep.subr.mxu0 0.0
        %1976 = vmatpush1.msra.mxu0 0.0
        %1977 = vmatprep.subr.mxu0 0.0
        %1978 = vmatpush1.msra.mxu0 0.0
        %1979 = vmatprep.subr.mxu0 0.0
        %1980 = vmatpush1.msra.mxu0 0.0
        %1981 = vmatprep.subr.mxu0 0.0
        %1982 = vmatpush1.msra.mxu0 0.0
        %1983 = vmatprep.subr.mxu0 0.0
        %1984 = vmatpush1.msra.mxu0 0.0
        %1985 = vmatprep.subr.mxu0 0.0
        %1986 = vmatpush1.msra.mxu0 0.0
        %1987 = vmatprep.subr.mxu0 0.0
        %1988 = vmatpush1.msra.mxu0 0.0
        %1989 = vmatprep.subr.mxu0 0.0
        %1990 = vmatpush1.msra.mxu0 0.0
        %1991 = vmatprep.subr.mxu0 0.0
        %1992 = vmatpush1.msra.mxu0 0.0
        %1993 = vmatprep.subr.mxu0 0.0
        %1994 = vmatpush1.msra.mxu0 0.0
        %1995 = vmatprep.subr.mxu0 0.0
        %1996 = vmatpush1.msra.mxu0 0.0
        %1997 = vmatprep.subr.mxu0 0.0
        %1998 = vmatpush1.msra.mxu0 0.0
        %1999 = vmatprep.subr.mxu0 0.0
        %2000 = vmatpush1.msra.mxu0 0.0
        %2001 = vmatprep.subr.mxu0 0.0
        %2002 = vmatpush1.msra.mxu0 0.0
        %2003 = vmatprep.subr.mxu0 0.0
        %2004 = vmatpush1.msra.mxu0 0.0
        %2005 = vmatprep.subr.mxu0 0.0
        %2006 = vmatpush1.msra.mxu0 0.0
        %2007 = vmatprep.subr.mxu0 0.0
        %2008 = vmatpush1.msra.mxu0 0.0
        %2009 = vmatprep.subr.mxu0 0.0
        %2010 = vmatpush1.msra.mxu0 0.0
        %2011 = vmatprep.subr.mxu0 0.0
        %2012 = vmatpush1.msra.mxu0 0.0
        %2013 = vmatprep.subr.mxu0 0.0
        %2014 = vmatpush1.msra.mxu0 0.0
        %2015 = vmatprep.subr.mxu0 0.0
        %2016 = vmatpush1.msra.mxu0 0.0
        %2017 = vmatprep.subr.mxu0 0.0
        %2018 = vmatpush1.msra.mxu0 0.0
        %2019 = vmatprep.subr.mxu0 0.0
        %2020 = vmatpush1.msra.mxu0 0.0
        %2021 = vmatprep.subr.mxu0 0.0
        %2022 = vmatpush1.msra.mxu0 0.0
        %2023 = vmatprep.subr.mxu0 0.0
        %2024 = vmatpush1.msra.mxu0 0.0
        %2025 = vmatprep.subr.mxu0 0.0
        %2026 = vmatpush1.msra.mxu0 0.0
        %2027 = vmatprep.subr.mxu0 0.0
        %2028 = vmatpush1.msra.mxu0 0.0
        %2029 = vmatprep.subr.mxu0 0.0
        %2030 = vmatpush1.msra.mxu0 0.0
        %2031 = vmatprep.subr.mxu0 0.0
        %2032 = vmatpush1.msra.mxu0 0.0
        %2033 = vmatprep.subr.mxu0 0.0
        %2034 = vmatpush1.msra.mxu0 0.0
        %2035 = vmatprep.mubr.f32.mxu0 0.0
        %v2036 = vand.u32 %v1620, 4294901760
        %2037 = vmatmul.mubr.f32.gmra.mrb[0].mxu0 %v2036
        %v2038 = vpop.f32.mrb[0].mxu0
        %v2039 = vadd.f32 %v1954, %v2038
        %v2040 = vpop.f32.mrb[0].mxu0
        %2041 = vmatprep.mubr.f32.mxu0 0.0
        %v2042 = vand.u32 %v1623, 4294901760
        %2043 = vmatmul.mubr.f32.gmra.mrb[0].mxu0 %v2042
        %v2044 = vpop.f32.mrb[0].mxu0
        %v2045 = vadd.f32 %v1962, %v2044
        %v2046 = vpop.f32.mrb[0].mxu0
        %2047 = vdwg.mxu0
        %2048 = vmatprep.subr.mxu0 0.0
        %v2049 = vand.u32 %v1087, 4294901760
        %2050 = vmatpush1.msra.mxu0 %v2049
        %2051 = vmatprep.subr.mxu0 0.0
        %v2052 = vand.u32 %v1093, 4294901760
        %2053 = vmatpush1.msra.mxu0 %v2052
        %2054 = vmatprep.subr.mxu0 0.0
        %2055 = vmatpush1.msra.mxu0 0.0
        %2056 = vmatprep.subr.mxu0 0.0
        %2057 = vmatpush1.msra.mxu0 0.0
        %2058 = vmatprep.subr.mxu0 0.0
        %2059 = vmatpush1.msra.mxu0 0.0
        %2060 = vmatprep.subr.mxu0 0.0
        %2061 = vmatpush1.msra.mxu0 0.0
        %2062 = vmatprep.subr.mxu0 0.0
        %2063 = vmatpush1.msra.mxu0 0.0
        %2064 = vmatprep.subr.mxu0 0.0
        %2065 = vmatpush1.msra.mxu0 0.0
        %2066 = vmatprep.subr.mxu0 0.0
        %2067 = vmatpush1.msra.mxu0 0.0
        %2068 = vmatprep.subr.mxu0 0.0
        %2069 = vmatpush1.msra.mxu0 0.0
        %2070 = vmatprep.subr.mxu0 0.0
        %2071 = vmatpush1.msra.mxu0 0.0
        %2072 = vmatprep.subr.mxu0 0.0
        %2073 = vmatpush1.msra.mxu0 0.0
        %2074 = vmatprep.subr.mxu0 0.0
        %2075 = vmatpush1.msra.mxu0 0.0
        %2076 = vmatprep.subr.mxu0 0.0
        %2077 = vmatpush1.msra.mxu0 0.0
        %2078 = vmatprep.subr.mxu0 0.0
        %2079 = vmatpush1.msra.mxu0 0.0
        %2080 = vmatprep.subr.mxu0 0.0
        %2081 = vmatpush1.msra.mxu0 0.0
        %2082 = vmatprep.subr.mxu0 0.0
        %2083 = vmatpush1.msra.mxu0 0.0
        %2084 = vmatprep.subr.mxu0 0.0
        %2085 = vmatpush1.msra.mxu0 0.0
        %2086 = vmatprep.subr.mxu0 0.0
        %2087 = vmatpush1.msra.mxu0 0.0
        %2088 = vmatprep.subr.mxu0 0.0
        %2089 = vmatpush1.msra.mxu0 0.0
        %2090 = vmatprep.subr.mxu0 0.0
        %2091 = vmatpush1.msra.mxu0 0.0
        %2092 = vmatprep.subr.mxu0 0.0
        %2093 = vmatpush1.msra.mxu0 0.0
        %2094 = vmatprep.subr.mxu0 0.0
        %2095 = vmatpush1.msra.mxu0 0.0
        %2096 = vmatprep.subr.mxu0 0.0
        %2097 = vmatpush1.msra.mxu0 0.0
        %2098 = vmatprep.subr.mxu0 0.0
        %2099 = vmatpush1.msra.mxu0 0.0
        %2100 = vmatprep.subr.mxu0 0.0
        %2101 = vmatpush1.msra.mxu0 0.0
        %2102 = vmatprep.subr.mxu0 0.0
        %2103 = vmatpush1.msra.mxu0 0.0
        %2104 = vmatprep.subr.mxu0 0.0
        %2105 = vmatpush1.msra.mxu0 0.0
        %2106 = vmatprep.subr.mxu0 0.0
        %2107 = vmatpush1.msra.mxu0 0.0
        %2108 = vmatprep.subr.mxu0 0.0
        %2109 = vmatpush1.msra.mxu0 0.0
        %2110 = vmatprep.subr.mxu0 0.0
        %2111 = vmatpush1.msra.mxu0 0.0
        %2112 = vmatprep.subr.mxu0 0.0
        %2113 = vmatpush1.msra.mxu0 0.0
        %2114 = vmatprep.mubr.f32.mxu0 0.0
        %v2115 = vand.u32 %v1620, 4294901760
        %2116 = vmatmul.mubr.f32.gmra.mrb[0].mxu0 %v2115
        %v2117 = vpop.f32.mrb[0].mxu0
        %v2118 = vadd.f32 %v2039, %v2117
        %v2119 = vpop.f32.mrb[0].mxu0
        %2120 = vmatprep.mubr.f32.mxu0 0.0
        %v2121 = vand.u32 %v1623, 4294901760
        %2122 = vmatmul.mubr.f32.gmra.mrb[0].mxu0 %v2121
        %v2123 = vpop.f32.mrb[0].mxu0
        %v2124 = vadd.f32 %v2045, %v2123
        %v2125 = vpop.f32.mrb[0].mxu0
        %2126 = vdwg.mxu0
        %v2127 = vlaneseq
        %v2128 = vshrl.u32 %v2127, 7
        %v2129 = vsub.s32 1, %v2128
        %v2130 = vrot.slane %v1098, %v2129
        %2132 = vrot.lane.b32.xlu0 %v2130, 32
        %v2133 = vpop.permute.xlu0 %2132
        %v2135 = vmul.f32 %v1096, %v2133
        %v2136 = vmul.f32 %v1097, %v2133
        %2139 = vrot.lane.b32.xlu0 %v2135, 96
        %v2140 = vpop.permute.xlu0 %2139
        %2141 = vrot.lane.b32.xlu0 %v2136, 96
        %v2142 = vpop.permute.xlu0 %2141
        %v2145 = vsel %vm1106, %v2140, 0.0
        %2146 = vadd.xlane.f32.xlu0 %v2145
        %v2147 = vpop.xlane.xlu0 %2146
        %v2148 = vsel %vm1106, %v2142, 0.0
        %2149 = vadd.xlane.f32.xlu0 %v2148
        %v2150 = vpop.xlane.xlu0 %2149
        %v2151 = vrot.slane %v1099, 1
        %2152 = vrot.lane.b32.xlu0 %v1096, 96
        %v2153 = vpop.permute.xlu0 %2152
        %2154 = vrot.lane.b32.xlu0 %v1097, 96
        %v2155 = vpop.permute.xlu0 %2154
        %v2156 = vsel %vm1106, %v2151, 0
        %v2158 = vsel %vm1106, %v2153, 0
        %v2160 = vsel %vm1106, %v2155, 0
        %2162 = vmatprep.subr.mxu0 0.0
        %v2163 = vand.u32 %v2158, 4294901760
        %2164 = vmatpush1.xpose.msra.mxu0 %v2163
        %2165 = vmatprep.subr.mxu0 0.0
        %v2166 = vand.u32 %v2160, 4294901760
        %2167 = vmatpush1.xpose.msra.mxu0 %v2166
        %2168 = vmatprep.subr.mxu0 0.0
        %2169 = vmatpush1.xpose.msra.mxu0 0.0
        %2170 = vmatprep.subr.mxu0 0.0
        %2171 = vmatpush1.xpose.msra.mxu0 0.0
        %2172 = vmatprep.subr.mxu0 0.0
        %2173 = vmatpush1.xpose.msra.mxu0 0.0
        %2174 = vmatprep.subr.mxu0 0.0
        %2175 = vmatpush1.xpose.msra.mxu0 0.0
        %2176 = vmatprep.subr.mxu0 0.0
        %2177 = vmatpush1.xpose.msra.mxu0 0.0
        %2178 = vmatprep.subr.mxu0 0.0
        %2179 = vmatpush1.xpose.msra.mxu0 0.0
        %2180 = vmatprep.subr.mxu0 0.0
        %2181 = vmatpush1.xpose.msra.mxu0 0.0
        %2182 = vmatprep.subr.mxu0 0.0
        %2183 = vmatpush1.xpose.msra.mxu0 0.0
        %2184 = vmatprep.subr.mxu0 0.0
        %2185 = vmatpush1.xpose.msra.mxu0 0.0
        %2186 = vmatprep.subr.mxu0 0.0
        %2187 = vmatpush1.xpose.msra.mxu0 0.0
        %2188 = vmatprep.subr.mxu0 0.0
        %2189 = vmatpush1.xpose.msra.mxu0 0.0
        %2190 = vmatprep.subr.mxu0 0.0
        %2191 = vmatpush1.xpose.msra.mxu0 0.0
        %2192 = vmatprep.subr.mxu0 0.0
        %2193 = vmatpush1.xpose.msra.mxu0 0.0
        %2194 = vmatprep.subr.mxu0 0.0
        %2195 = vmatpush1.xpose.msra.mxu0 0.0
        %2196 = vmatprep.subr.mxu0 0.0
        %2197 = vmatpush1.xpose.msra.mxu0 0.0
        %2198 = vmatprep.subr.mxu0 0.0
        %2199 = vmatpush1.xpose.msra.mxu0 0.0
        %2200 = vmatprep.subr.mxu0 0.0
        %2201 = vmatpush1.xpose.msra.mxu0 0.0
        %2202 = vmatprep.subr.mxu0 0.0
        %2203 = vmatpush1.xpose.msra.mxu0 0.0
        %2204 = vmatprep.subr.mxu0 0.0
        %2205 = vmatpush1.xpose.msra.mxu0 0.0
        %2206 = vmatprep.subr.mxu0 0.0
        %2207 = vmatpush1.xpose.msra.mxu0 0.0
        %2208 = vmatprep.subr.mxu0 0.0
        %2209 = vmatpush1.xpose.msra.mxu0 0.0
        %2210 = vmatprep.subr.mxu0 0.0
        %2211 = vmatpush1.xpose.msra.mxu0 0.0
        %2212 = vmatprep.subr.mxu0 0.0
        %2213 = vmatpush1.xpose.msra.mxu0 0.0
        %2214 = vmatprep.subr.mxu0 0.0
        %2215 = vmatpush1.xpose.msra.mxu0 0.0
        %2216 = vmatprep.subr.mxu0 0.0
        %2217 = vmatpush1.xpose.msra.mxu0 0.0
        %2218 = vmatprep.subr.mxu0 0.0
        %2219 = vmatpush1.xpose.msra.mxu0 0.0
        %2220 = vmatprep.subr.mxu0 0.0
        %2221 = vmatpush1.xpose.msra.mxu0 0.0
        %2222 = vmatprep.subr.mxu0 0.0
        %2223 = vmatpush1.xpose.msra.mxu0 0.0
        %2224 = vmatprep.subr.mxu0 0.0
        %2225 = vmatpush1.xpose.msra.mxu0 0.0
        %2226 = vmatprep.subr.mxu0 0.0
        %2227 = vmatpush1.xpose.msra.mxu0 0.0
        %2228 = vmatprep.mubr.f32.mxu0 0.0
        %v2229 = vand.u32 %v2156, 4294901760
        %v2230 = vsub.f32 %v2156, %v2229
        %v2231 = vand.u32 %v2230, 4294901760
        %v2232 = vsub.f32 %v2230, %v2231
        %v2233 = vand.u32 %v2232, 4294901760
        %2234 = vmatmul.mubr.f32.gmra.mrb[0].mxu0 %v2233
        %v2235 = vpop.f32.mrb[0].mxu0
        %v2236 = vadd.f32 0.0, %v2235
        %v2237 = vpop.f32.mrb[0].mxu0
        %2238 = vdwg.mxu0
        %2239 = vmatprep.subr.mxu0 0.0
        %v2240 = vand.u32 %v2158, 4294901760
        %v2241 = vsub.f32 %v2158, %v2240
        %v2242 = vand.u32 %v2241, 4294901760
        %v2243 = vsub.f32 %v2241, %v2242
        %v2244 = vand.u32 %v2243, 4294901760
        %2245 = vmatpush1.xpose.msra.mxu0 %v2244
        %2246 = vmatprep.subr.mxu0 0.0
        %v2247 = vand.u32 %v2160, 4294901760
        %v2248 = vsub.f32 %v2160, %v2247
        %v2249 = vand.u32 %v2248, 4294901760
        %v2250 = vsub.f32 %v2248, %v2249
        %v2251 = vand.u32 %v2250, 4294901760
        %2252 = vmatpush1.xpose.msra.mxu0 %v2251
        %2253 = vmatprep.subr.mxu0 0.0
        %2254 = vmatpush1.xpose.msra.mxu0 0.0
        %2255 = vmatprep.subr.mxu0 0.0
        %2256 = vmatpush1.xpose.msra.mxu0 0.0
        %2257 = vmatprep.subr.mxu0 0.0
        %2258 = vmatpush1.xpose.msra.mxu0 0.0
        %2259 = vmatprep.subr.mxu0 0.0
        %2260 = vmatpush1.xpose.msra.mxu0 0.0
        %2261 = vmatprep.subr.mxu0 0.0
        %2262 = vmatpush1.xpose.msra.mxu0 0.0
        %2263 = vmatprep.subr.mxu0 0.0
        %2264 = vmatpush1.xpose.msra.mxu0 0.0
        %2265 = vmatprep.subr.mxu0 0.0
        %2266 = vmatpush1.xpose.msra.mxu0 0.0
        %2267 = vmatprep.subr.mxu0 0.0
        %2268 = vmatpush1.xpose.msra.mxu0 0.0
        %2269 = vmatprep.subr.mxu0 0.0
        %2270 = vmatpush1.xpose.msra.mxu0 0.0
        %2271 = vmatprep.subr.mxu0 0.0
        %2272 = vmatpush1.xpose.msra.mxu0 0.0
        %2273 = vmatprep.subr.mxu0 0.0
        %2274 = vmatpush1.xpose.msra.mxu0 0.0
        %2275 = vmatprep.subr.mxu0 0.0
        %2276 = vmatpush1.xpose.msra.mxu0 0.0
        %2277 = vmatprep.subr.mxu0 0.0
        %2278 = vmatpush1.xpose.msra.mxu0 0.0
        %2279 = vmatprep.subr.mxu0 0.0
        %2280 = vmatpush1.xpose.msra.mxu0 0.0
        %2281 = vmatprep.subr.mxu0 0.0
        %2282 = vmatpush1.xpose.msra.mxu0 0.0
        %2283 = vmatprep.subr.mxu0 0.0
        %2284 = vmatpush1.xpose.msra.mxu0 0.0
        %2285 = vmatprep.subr.mxu0 0.0
        %2286 = vmatpush1.xpose.msra.mxu0 0.0
        %2287 = vmatprep.subr.mxu0 0.0
        %2288 = vmatpush1.xpose.msra.mxu0 0.0
        %2289 = vmatprep.subr.mxu0 0.0
        %2290 = vmatpush1.xpose.msra.mxu0 0.0
        %2291 = vmatprep.subr.mxu0 0.0
        %2292 = vmatpush1.xpose.msra.mxu0 0.0
        %2293 = vmatprep.subr.mxu0 0.0
        %2294 = vmatpush1.xpose.msra.mxu0 0.0
        %2295 = vmatprep.subr.mxu0 0.0
        %2296 = vmatpush1.xpose.msra.mxu0 0.0
        %2297 = vmatprep.subr.mxu0 0.0
        %2298 = vmatpush1.xpose.msra.mxu0 0.0
        %2299 = vmatprep.subr.mxu0 0.0
        %2300 = vmatpush1.xpose.msra.mxu0 0.0
        %2301 = vmatprep.subr.mxu0 0.0
        %2302 = vmatpush1.xpose.msra.mxu0 0.0
        %2303 = vmatprep.subr.mxu0 0.0
        %2304 = vmatpush1.xpose.msra.mxu0 0.0
        %2305 = vmatprep.subr.mxu0 0.0
        %2306 = vmatpush1.xpose.msra.mxu0 0.0
        %2307 = vmatprep.subr.mxu0 0.0
        %2308 = vmatpush1.xpose.msra.mxu0 0.0
        %2309 = vmatprep.subr.mxu0 0.0
        %2310 = vmatpush1.xpose.msra.mxu0 0.0
        %2311 = vmatprep.subr.mxu0 0.0
        %2312 = vmatpush1.xpose.msra.mxu0 0.0
        %2313 = vmatprep.mubr.f32.mxu0 0.0
        %v2314 = vand.u32 %v2156, 4294901760
        %2315 = vmatmul.mubr.f32.gmra.mrb[0].mxu0 %v2314
        %v2316 = vpop.f32.mrb[0].mxu0
        %v2317 = vadd.f32 %v2236, %v2316
        %v2318 = vpop.f32.mrb[0].mxu0
        %2319 = vdwg.mxu0
        %2320 = vmatprep.subr.mxu0 0.0
        %v2321 = vand.u32 %v2158, 4294901760
        %v2322 = vsub.f32 %v2158, %v2321
        %2323 = vmatpush1.xpose.msra.mxu0 %v2322
        %2324 = vmatprep.subr.mxu0 0.0
        %v2325 = vand.u32 %v2160, 4294901760
        %v2326 = vsub.f32 %v2160, %v2325
        %2327 = vmatpush1.xpose.msra.mxu0 %v2326
        %2328 = vmatprep.subr.mxu0 0.0
        %2329 = vmatpush1.xpose.msra.mxu0 0.0
        %2330 = vmatprep.subr.mxu0 0.0
        %2331 = vmatpush1.xpose.msra.mxu0 0.0
        %2332 = vmatprep.subr.mxu0 0.0
        %2333 = vmatpush1.xpose.msra.mxu0 0.0
        %2334 = vmatprep.subr.mxu0 0.0
        %2335 = vmatpush1.xpose.msra.mxu0 0.0
        %2336 = vmatprep.subr.mxu0 0.0
        %2337 = vmatpush1.xpose.msra.mxu0 0.0
        %2338 = vmatprep.subr.mxu0 0.0
        %2339 = vmatpush1.xpose.msra.mxu0 0.0
        %2340 = vmatprep.subr.mxu0 0.0
        %2341 = vmatpush1.xpose.msra.mxu0 0.0
        %2342 = vmatprep.subr.mxu0 0.0
        %2343 = vmatpush1.xpose.msra.mxu0 0.0
        %2344 = vmatprep.subr.mxu0 0.0
        %2345 = vmatpush1.xpose.msra.mxu0 0.0
        %2346 = vmatprep.subr.mxu0 0.0
        %2347 = vmatpush1.xpose.msra.mxu0 0.0
        %2348 = vmatprep.subr.mxu0 0.0
        %2349 = vmatpush1.xpose.msra.mxu0 0.0
        %2350 = vmatprep.subr.mxu0 0.0
        %2351 = vmatpush1.xpose.msra.mxu0 0.0
        %2352 = vmatprep.subr.mxu0 0.0
        %2353 = vmatpush1.xpose.msra.mxu0 0.0
        %2354 = vmatprep.subr.mxu0 0.0
        %2355 = vmatpush1.xpose.msra.mxu0 0.0
        %2356 = vmatprep.subr.mxu0 0.0
        %2357 = vmatpush1.xpose.msra.mxu0 0.0
        %2358 = vmatprep.subr.mxu0 0.0
        %2359 = vmatpush1.xpose.msra.mxu0 0.0
        %2360 = vmatprep.subr.mxu0 0.0
        %2361 = vmatpush1.xpose.msra.mxu0 0.0
        %2362 = vmatprep.subr.mxu0 0.0
        %2363 = vmatpush1.xpose.msra.mxu0 0.0
        %2364 = vmatprep.subr.mxu0 0.0
        %2365 = vmatpush1.xpose.msra.mxu0 0.0
        %2366 = vmatprep.subr.mxu0 0.0
        %2367 = vmatpush1.xpose.msra.mxu0 0.0
        %2368 = vmatprep.subr.mxu0 0.0
        %2369 = vmatpush1.xpose.msra.mxu0 0.0
        %2370 = vmatprep.subr.mxu0 0.0
        %2371 = vmatpush1.xpose.msra.mxu0 0.0
        %2372 = vmatprep.subr.mxu0 0.0
        %2373 = vmatpush1.xpose.msra.mxu0 0.0
        %2374 = vmatprep.subr.mxu0 0.0
        %2375 = vmatpush1.xpose.msra.mxu0 0.0
        %2376 = vmatprep.subr.mxu0 0.0
        %2377 = vmatpush1.xpose.msra.mxu0 0.0
        %2378 = vmatprep.subr.mxu0 0.0
        %2379 = vmatpush1.xpose.msra.mxu0 0.0
        %2380 = vmatprep.subr.mxu0 0.0
        %2381 = vmatpush1.xpose.msra.mxu0 0.0
        %2382 = vmatprep.subr.mxu0 0.0
        %2383 = vmatpush1.xpose.msra.mxu0 0.0
        %2384 = vmatprep.subr.mxu0 0.0
        %2385 = vmatpush1.xpose.msra.mxu0 0.0
        %2386 = vmatprep.subr.mxu0 0.0
        %2387 = vmatpush1.xpose.msra.mxu0 0.0
        %2388 = vmatprep.mubr.f32.mxu0 0.0
        %v2389 = vand.u32 %v2156, 4294901760
        %v2390 = vsub.f32 %v2156, %v2389
        %2391 = vmatmul.mubr.f32.gmra.mrb[0].mxu0 %v2390
        %v2392 = vpop.f32.mrb[0].mxu0
        %v2393 = vadd.f32 %v2317, %v2392
        %v2394 = vpop.f32.mrb[0].mxu0
        %2395 = vdwg.mxu0
        %2396 = vmatprep.subr.mxu0 0.0
        %v2397 = vand.u32 %v2158, 4294901760
        %2398 = vmatpush1.xpose.msra.mxu0 %v2397
        %2399 = vmatprep.subr.mxu0 0.0
        %v2400 = vand.u32 %v2160, 4294901760
        %2401 = vmatpush1.xpose.msra.mxu0 %v2400
        %2402 = vmatprep.subr.mxu0 0.0
        %2403 = vmatpush1.xpose.msra.mxu0 0.0
        %2404 = vmatprep.subr.mxu0 0.0
        %2405 = vmatpush1.xpose.msra.mxu0 0.0
        %2406 = vmatprep.subr.mxu0 0.0
        %2407 = vmatpush1.xpose.msra.mxu0 0.0
        %2408 = vmatprep.subr.mxu0 0.0
        %2409 = vmatpush1.xpose.msra.mxu0 0.0
        %2410 = vmatprep.subr.mxu0 0.0
        %2411 = vmatpush1.xpose.msra.mxu0 0.0
        %2412 = vmatprep.subr.mxu0 0.0
        %2413 = vmatpush1.xpose.msra.mxu0 0.0
        %2414 = vmatprep.subr.mxu0 0.0
        %2415 = vmatpush1.xpose.msra.mxu0 0.0
        %2416 = vmatprep.subr.mxu0 0.0
        %2417 = vmatpush1.xpose.msra.mxu0 0.0
        %2418 = vmatprep.subr.mxu0 0.0
        %2419 = vmatpush1.xpose.msra.mxu0 0.0
        %2420 = vmatprep.subr.mxu0 0.0
        %2421 = vmatpush1.xpose.msra.mxu0 0.0
        %2422 = vmatprep.subr.mxu0 0.0
        %2423 = vmatpush1.xpose.msra.mxu0 0.0
        %2424 = vmatprep.subr.mxu0 0.0
        %2425 = vmatpush1.xpose.msra.mxu0 0.0
        %2426 = vmatprep.subr.mxu0 0.0
        %2427 = vmatpush1.xpose.msra.mxu0 0.0
        %2428 = vmatprep.subr.mxu0 0.0
        %2429 = vmatpush1.xpose.msra.mxu0 0.0
        %2430 = vmatprep.subr.mxu0 0.0
        %2431 = vmatpush1.xpose.msra.mxu0 0.0
        %2432 = vmatprep.subr.mxu0 0.0
        %2433 = vmatpush1.xpose.msra.mxu0 0.0
        %2434 = vmatprep.subr.mxu0 0.0
        %2435 = vmatpush1.xpose.msra.mxu0 0.0
        %2436 = vmatprep.subr.mxu0 0.0
        %2437 = vmatpush1.xpose.msra.mxu0 0.0
        %2438 = vmatprep.subr.mxu0 0.0
        %2439 = vmatpush1.xpose.msra.mxu0 0.0
        %2440 = vmatprep.subr.mxu0 0.0
        %2441 = vmatpush1.xpose.msra.mxu0 0.0
        %2442 = vmatprep.subr.mxu0 0.0
        %2443 = vmatpush1.xpose.msra.mxu0 0.0
        %2444 = vmatprep.subr.mxu0 0.0
        %2445 = vmatpush1.xpose.msra.mxu0 0.0
        %2446 = vmatprep.subr.mxu0 0.0
        %2447 = vmatpush1.xpose.msra.mxu0 0.0
        %2448 = vmatprep.subr.mxu0 0.0
        %2449 = vmatpush1.xpose.msra.mxu0 0.0
        %2450 = vmatprep.subr.mxu0 0.0
        %2451 = vmatpush1.xpose.msra.mxu0 0.0
        %2452 = vmatprep.subr.mxu0 0.0
        %2453 = vmatpush1.xpose.msra.mxu0 0.0
        %2454 = vmatprep.subr.mxu0 0.0
        %2455 = vmatpush1.xpose.msra.mxu0 0.0
        %2456 = vmatprep.subr.mxu0 0.0
        %2457 = vmatpush1.xpose.msra.mxu0 0.0
        %2458 = vmatprep.subr.mxu0 0.0
        %2459 = vmatpush1.xpose.msra.mxu0 0.0
        %2460 = vmatprep.subr.mxu0 0.0
        %2461 = vmatpush1.xpose.msra.mxu0 0.0
        %2462 = vmatprep.mubr.f32.mxu0 0.0
        %v2463 = vand.u32 %v2156, 4294901760
        %v2464 = vsub.f32 %v2156, %v2463
        %v2465 = vand.u32 %v2464, 4294901760
        %2466 = vmatmul.mubr.f32.gmra.mrb[0].mxu0 %v2465
        %v2467 = vpop.f32.mrb[0].mxu0
        %v2468 = vadd.f32 %v2393, %v2467
        %v2469 = vpop.f32.mrb[0].mxu0
        %2470 = vdwg.mxu0
        %2471 = vmatprep.subr.mxu0 0.0
        %v2472 = vand.u32 %v2158, 4294901760
        %v2473 = vsub.f32 %v2158, %v2472
        %v2474 = vand.u32 %v2473, 4294901760
        %2475 = vmatpush1.xpose.msra.mxu0 %v2474
        %2476 = vmatprep.subr.mxu0 0.0
        %v2477 = vand.u32 %v2160, 4294901760
        %v2478 = vsub.f32 %v2160, %v2477
        %v2479 = vand.u32 %v2478, 4294901760
        %2480 = vmatpush1.xpose.msra.mxu0 %v2479
        %2481 = vmatprep.subr.mxu0 0.0
        %2482 = vmatpush1.xpose.msra.mxu0 0.0
        %2483 = vmatprep.subr.mxu0 0.0
        %2484 = vmatpush1.xpose.msra.mxu0 0.0
        %2485 = vmatprep.subr.mxu0 0.0
        %2486 = vmatpush1.xpose.msra.mxu0 0.0
        %2487 = vmatprep.subr.mxu0 0.0
        %2488 = vmatpush1.xpose.msra.mxu0 0.0
        %2489 = vmatprep.subr.mxu0 0.0
        %2490 = vmatpush1.xpose.msra.mxu0 0.0
        %2491 = vmatprep.subr.mxu0 0.0
        %2492 = vmatpush1.xpose.msra.mxu0 0.0
        %2493 = vmatprep.subr.mxu0 0.0
        %2494 = vmatpush1.xpose.msra.mxu0 0.0
        %2495 = vmatprep.subr.mxu0 0.0
        %2496 = vmatpush1.xpose.msra.mxu0 0.0
        %2497 = vmatprep.subr.mxu0 0.0
        %2498 = vmatpush1.xpose.msra.mxu0 0.0
        %2499 = vmatprep.subr.mxu0 0.0
        %2500 = vmatpush1.xpose.msra.mxu0 0.0
        %2501 = vmatprep.subr.mxu0 0.0
        %2502 = vmatpush1.xpose.msra.mxu0 0.0
        %2503 = vmatprep.subr.mxu0 0.0
        %2504 = vmatpush1.xpose.msra.mxu0 0.0
        %2505 = vmatprep.subr.mxu0 0.0
        %2506 = vmatpush1.xpose.msra.mxu0 0.0
        %2507 = vmatprep.subr.mxu0 0.0
        %2508 = vmatpush1.xpose.msra.mxu0 0.0
        %2509 = vmatprep.subr.mxu0 0.0
        %2510 = vmatpush1.xpose.msra.mxu0 0.0
        %2511 = vmatprep.subr.mxu0 0.0
        %2512 = vmatpush1.xpose.msra.mxu0 0.0
        %2513 = vmatprep.subr.mxu0 0.0
        %2514 = vmatpush1.xpose.msra.mxu0 0.0
        %2515 = vmatprep.subr.mxu0 0.0
        %2516 = vmatpush1.xpose.msra.mxu0 0.0
        %2517 = vmatprep.subr.mxu0 0.0
        %2518 = vmatpush1.xpose.msra.mxu0 0.0
        %2519 = vmatprep.subr.mxu0 0.0
        %2520 = vmatpush1.xpose.msra.mxu0 0.0
        %2521 = vmatprep.subr.mxu0 0.0
        %2522 = vmatpush1.xpose.msra.mxu0 0.0
        %2523 = vmatprep.subr.mxu0 0.0
        %2524 = vmatpush1.xpose.msra.mxu0 0.0
        %2525 = vmatprep.subr.mxu0 0.0
        %2526 = vmatpush1.xpose.msra.mxu0 0.0
        %2527 = vmatprep.subr.mxu0 0.0
        %2528 = vmatpush1.xpose.msra.mxu0 0.0
        %2529 = vmatprep.subr.mxu0 0.0
        %2530 = vmatpush1.xpose.msra.mxu0 0.0
        %2531 = vmatprep.subr.mxu0 0.0
        %2532 = vmatpush1.xpose.msra.mxu0 0.0
        %2533 = vmatprep.subr.mxu0 0.0
        %2534 = vmatpush1.xpose.msra.mxu0 0.0
        %2535 = vmatprep.subr.mxu0 0.0
        %2536 = vmatpush1.xpose.msra.mxu0 0.0
        %2537 = vmatprep.subr.mxu0 0.0
        %2538 = vmatpush1.xpose.msra.mxu0 0.0
        %2539 = vmatprep.subr.mxu0 0.0
        %2540 = vmatpush1.xpose.msra.mxu0 0.0
        %2541 = vmatprep.mubr.f32.mxu0 0.0
        %v2542 = vand.u32 %v2156, 4294901760
        %2543 = vmatmul.mubr.f32.gmra.mrb[0].mxu0 %v2542
        %v2544 = vpop.f32.mrb[0].mxu0
        %v2545 = vadd.f32 %v2468, %v2544
        %v2546 = vpop.f32.mrb[0].mxu0
        %2547 = vdwg.mxu0
        %2548 = vmatprep.subr.mxu0 0.0
        %v2549 = vand.u32 %v2158, 4294901760
        %2550 = vmatpush1.xpose.msra.mxu0 %v2549
        %2551 = vmatprep.subr.mxu0 0.0
        %v2552 = vand.u32 %v2160, 4294901760
        %2553 = vmatpush1.xpose.msra.mxu0 %v2552
        %2554 = vmatprep.subr.mxu0 0.0
        %2555 = vmatpush1.xpose.msra.mxu0 0.0
        %2556 = vmatprep.subr.mxu0 0.0
        %2557 = vmatpush1.xpose.msra.mxu0 0.0
        %2558 = vmatprep.subr.mxu0 0.0
        %2559 = vmatpush1.xpose.msra.mxu0 0.0
        %2560 = vmatprep.subr.mxu0 0.0
        %2561 = vmatpush1.xpose.msra.mxu0 0.0
        %2562 = vmatprep.subr.mxu0 0.0
        %2563 = vmatpush1.xpose.msra.mxu0 0.0
        %2564 = vmatprep.subr.mxu0 0.0
        %2565 = vmatpush1.xpose.msra.mxu0 0.0
        %2566 = vmatprep.subr.mxu0 0.0
        %2567 = vmatpush1.xpose.msra.mxu0 0.0
        %2568 = vmatprep.subr.mxu0 0.0
        %2569 = vmatpush1.xpose.msra.mxu0 0.0
        %2570 = vmatprep.subr.mxu0 0.0
        %2571 = vmatpush1.xpose.msra.mxu0 0.0
        %2572 = vmatprep.subr.mxu0 0.0
        %2573 = vmatpush1.xpose.msra.mxu0 0.0
        %2574 = vmatprep.subr.mxu0 0.0
        %2575 = vmatpush1.xpose.msra.mxu0 0.0
        %2576 = vmatprep.subr.mxu0 0.0
        %2577 = vmatpush1.xpose.msra.mxu0 0.0
        %2578 = vmatprep.subr.mxu0 0.0
        %2579 = vmatpush1.xpose.msra.mxu0 0.0
        %2580 = vmatprep.subr.mxu0 0.0
        %2581 = vmatpush1.xpose.msra.mxu0 0.0
        %2582 = vmatprep.subr.mxu0 0.0
        %2583 = vmatpush1.xpose.msra.mxu0 0.0
        %2584 = vmatprep.subr.mxu0 0.0
        %2585 = vmatpush1.xpose.msra.mxu0 0.0
        %2586 = vmatprep.subr.mxu0 0.0
        %2587 = vmatpush1.xpose.msra.mxu0 0.0
        %2588 = vmatprep.subr.mxu0 0.0
        %2589 = vmatpush1.xpose.msra.mxu0 0.0
        %2590 = vmatprep.subr.mxu0 0.0
        %2591 = vmatpush1.xpose.msra.mxu0 0.0
        %2592 = vmatprep.subr.mxu0 0.0
        %2593 = vmatpush1.xpose.msra.mxu0 0.0
        %2594 = vmatprep.subr.mxu0 0.0
        %2595 = vmatpush1.xpose.msra.mxu0 0.0
        %2596 = vmatprep.subr.mxu0 0.0
        %2597 = vmatpush1.xpose.msra.mxu0 0.0
        %2598 = vmatprep.subr.mxu0 0.0
        %2599 = vmatpush1.xpose.msra.mxu0 0.0
        %2600 = vmatprep.subr.mxu0 0.0
        %2601 = vmatpush1.xpose.msra.mxu0 0.0
        %2602 = vmatprep.subr.mxu0 0.0
        %2603 = vmatpush1.xpose.msra.mxu0 0.0
        %2604 = vmatprep.subr.mxu0 0.0
        %2605 = vmatpush1.xpose.msra.mxu0 0.0
        %2606 = vmatprep.subr.mxu0 0.0
        %2607 = vmatpush1.xpose.msra.mxu0 0.0
        %2608 = vmatprep.subr.mxu0 0.0
        %2609 = vmatpush1.xpose.msra.mxu0 0.0
        %2610 = vmatprep.subr.mxu0 0.0
        %2611 = vmatpush1.xpose.msra.mxu0 0.0
        %2612 = vmatprep.subr.mxu0 0.0
        %2613 = vmatpush1.xpose.msra.mxu0 0.0
        %2614 = vmatprep.mubr.f32.mxu0 0.0
        %v2615 = vand.u32 %v2156, 4294901760
        %2616 = vmatmul.mubr.f32.gmra.mrb[0].mxu0 %v2615
        %v2617 = vpop.f32.mrb[0].mxu0
        %v2618 = vadd.f32 %v2545, %v2617
        %v2619 = vpop.f32.mrb[0].mxu0
        %2620 = vdwg.mxu0
        %v2621 = vlaneseq
        %v2622 = vshrl.u32 %v2621, 7
        %v2623 = vsub.s32 0, %v2622
        %v2624 = vrot.slane %v2618, %v2623
        %v2625 = vadd.f32 %v2147, %v2624
        %v2626 = vadd.f32 %v2150, %v2624
        %vm2627 = vcmp.gt.f32.partialorder %v2625, 0.0
        %vm2628 = vcmp.gt.f32.partialorder %v2626, 0.0
        %v2629 = vmul.f32 %v2625, 0.2
        %v2630 = vmul.f32 %v2626, 0.2
        %v2631 = vsel %vm2627, %v2625, %v2629
        %v2632 = vsel %vm2628, %v2626, %v2630
        %v2633 = vsel %vm1593, -1e+12, %v2631
        %v2634 = vsel %vm1594, -1e+12, %v2632
        %v2635 = vsel %vm587, %v2633, -inf
        %2636 = vmax.xlane.f32.xlu0 %v2635
        %v2637 = vpop.xlane.xlu0 %2636
        %v2638 = vsel %vm587, %v2634, -inf
        %2639 = vmax.xlane.f32.xlu0 %v2638
        %v2640 = vpop.xlane.xlu0 %2639
        %v2641 = vsub.f32 %v2633, %v2637
        %v2642 = vsub.f32 %v2634, %v2640
        %v2643 = vmul.f32 %v2641, 1.442695
        %v2644 = vpow.pop %v2643
        %v2645 = vmul.f32 %v2642, 1.442695
        %v2646 = vpow.pop %v2645
        %v2647 = vsel %vm587, %v2644, 0.0
        %2648 = vadd.xlane.f32.xlu0 %v2647
        %v2649 = vpop.xlane.xlu0 %2648
        %v2650 = vsel %vm587, %v2646, 0.0
        %2651 = vadd.xlane.f32.xlu0 %v2650
        %v2652 = vpop.xlane.xlu0 %2651
        %v2653 = vrcp.pop %v2649
        %v2654 = vmul.f32 %v2644, %v2653
        %v2655 = vrcp.pop %v2652
        %v2656 = vmul.f32 %v2646, %v2655
        %2659 = vrot.lane.b32.xlu0 %v1087, 96
        %v2660 = vpop.permute.xlu0 %2659
        %2661 = vrot.lane.b32.xlu0 %v1093, 96
        %v2662 = vpop.permute.xlu0 %2661
        %v2666 = vsel %vm587, %v2654, 0
        %v2669 = vsel %vm587, %v2656, 0
        %2671 = vmatprep.subr.mxu0 0.0
        %v2672 = vand.u32 %v2660, 4294901760
        %2673 = vmatpush1.msra.mxu0 %v2672
        %2674 = vmatprep.subr.mxu0 0.0
        %v2675 = vand.u32 %v2662, 4294901760
        %2676 = vmatpush1.msra.mxu0 %v2675
        %2677 = vmatprep.subr.mxu0 0.0
        %2678 = vmatpush1.msra.mxu0 0.0
        %2679 = vmatprep.subr.mxu0 0.0
        %2680 = vmatpush1.msra.mxu0 0.0
        %2681 = vmatprep.subr.mxu0 0.0
        %2682 = vmatpush1.msra.mxu0 0.0
        %2683 = vmatprep.subr.mxu0 0.0
        %2684 = vmatpush1.msra.mxu0 0.0
        %2685 = vmatprep.subr.mxu0 0.0
        %2686 = vmatpush1.msra.mxu0 0.0
        %2687 = vmatprep.subr.mxu0 0.0
        %2688 = vmatpush1.msra.mxu0 0.0
        %2689 = vmatprep.subr.mxu0 0.0
        %2690 = vmatpush1.msra.mxu0 0.0
        %2691 = vmatprep.subr.mxu0 0.0
        %2692 = vmatpush1.msra.mxu0 0.0
        %2693 = vmatprep.subr.mxu0 0.0
        %2694 = vmatpush1.msra.mxu0 0.0
        %2695 = vmatprep.subr.mxu0 0.0
        %2696 = vmatpush1.msra.mxu0 0.0
        %2697 = vmatprep.subr.mxu0 0.0
        %2698 = vmatpush1.msra.mxu0 0.0
        %2699 = vmatprep.subr.mxu0 0.0
        %2700 = vmatpush1.msra.mxu0 0.0
        %2701 = vmatprep.subr.mxu0 0.0
        %2702 = vmatpush1.msra.mxu0 0.0
        %2703 = vmatprep.subr.mxu0 0.0
        %2704 = vmatpush1.msra.mxu0 0.0
        %2705 = vmatprep.subr.mxu0 0.0
        %2706 = vmatpush1.msra.mxu0 0.0
        %2707 = vmatprep.subr.mxu0 0.0
        %2708 = vmatpush1.msra.mxu0 0.0
        %2709 = vmatprep.subr.mxu0 0.0
        %2710 = vmatpush1.msra.mxu0 0.0
        %2711 = vmatprep.subr.mxu0 0.0
        %2712 = vmatpush1.msra.mxu0 0.0
        %2713 = vmatprep.subr.mxu0 0.0
        %2714 = vmatpush1.msra.mxu0 0.0
        %2715 = vmatprep.subr.mxu0 0.0
        %2716 = vmatpush1.msra.mxu0 0.0
        %2717 = vmatprep.subr.mxu0 0.0
        %2718 = vmatpush1.msra.mxu0 0.0
        %2719 = vmatprep.subr.mxu0 0.0
        %2720 = vmatpush1.msra.mxu0 0.0
        %2721 = vmatprep.subr.mxu0 0.0
        %2722 = vmatpush1.msra.mxu0 0.0
        %2723 = vmatprep.subr.mxu0 0.0
        %2724 = vmatpush1.msra.mxu0 0.0
        %2725 = vmatprep.subr.mxu0 0.0
        %2726 = vmatpush1.msra.mxu0 0.0
        %2727 = vmatprep.subr.mxu0 0.0
        %2728 = vmatpush1.msra.mxu0 0.0
        %2729 = vmatprep.subr.mxu0 0.0
        %2730 = vmatpush1.msra.mxu0 0.0
        %2731 = vmatprep.subr.mxu0 0.0
        %2732 = vmatpush1.msra.mxu0 0.0
        %2733 = vmatprep.subr.mxu0 0.0
        %2734 = vmatpush1.msra.mxu0 0.0
        %2735 = vmatprep.subr.mxu0 0.0
        %2736 = vmatpush1.msra.mxu0 0.0
        %2737 = vmatprep.mubr.f32.mxu0 0.0
        %v2738 = vand.u32 %v2666, 4294901760
        %v2739 = vsub.f32 %v2666, %v2738
        %v2740 = vand.u32 %v2739, 4294901760
        %v2741 = vsub.f32 %v2739, %v2740
        %v2742 = vand.u32 %v2741, 4294901760
        %2743 = vmatmul.mubr.f32.gmra.mrb[0].mxu0 %v2742
        %v2744 = vpop.f32.mrb[0].mxu0
        %v2745 = vadd.f32 0.0, %v2744
        %v2746 = vpop.f32.mrb[0].mxu0
        %2747 = vmatprep.mubr.f32.mxu0 0.0
        %v2748 = vand.u32 %v2669, 4294901760
        %v2749 = vsub.f32 %v2669, %v2748
        %v2750 = vand.u32 %v2749, 4294901760
        %v2751 = vsub.f32 %v2749, %v2750
        %v2752 = vand.u32 %v2751, 4294901760
        %2753 = vmatmul.mubr.f32.gmra.mrb[0].mxu0 %v2752
        %v2754 = vpop.f32.mrb[0].mxu0
        %v2755 = vadd.f32 0.0, %v2754
        %v2756 = vpop.f32.mrb[0].mxu0
        %2757 = vdwg.mxu0
        %2758 = vmatprep.subr.mxu0 0.0
        %v2759 = vand.u32 %v2660, 4294901760
        %v2760 = vsub.f32 %v2660, %v2759
        %v2761 = vand.u32 %v2760, 4294901760
        %v2762 = vsub.f32 %v2760, %v2761
        %v2763 = vand.u32 %v2762, 4294901760
        %2764 = vmatpush1.msra.mxu0 %v2763
        %2765 = vmatprep.subr.mxu0 0.0
        %v2766 = vand.u32 %v2662, 4294901760
        %v2767 = vsub.f32 %v2662, %v2766
        %v2768 = vand.u32 %v2767, 4294901760
        %v2769 = vsub.f32 %v2767, %v2768
        %v2770 = vand.u32 %v2769, 4294901760
        %2771 = vmatpush1.msra.mxu0 %v2770
        %2772 = vmatprep.subr.mxu0 0.0
        %2773 = vmatpush1.msra.mxu0 0.0
        %2774 = vmatprep.subr.mxu0 0.0
        %2775 = vmatpush1.msra.mxu0 0.0
        %2776 = vmatprep.subr.mxu0 0.0
        %2777 = vmatpush1.msra.mxu0 0.0
        %2778 = vmatprep.subr.mxu0 0.0
        %2779 = vmatpush1.msra.mxu0 0.0
        %2780 = vmatprep.subr.mxu0 0.0
        %2781 = vmatpush1.msra.mxu0 0.0
        %2782 = vmatprep.subr.mxu0 0.0
        %2783 = vmatpush1.msra.mxu0 0.0
        %2784 = vmatprep.subr.mxu0 0.0
        %2785 = vmatpush1.msra.mxu0 0.0
        %2786 = vmatprep.subr.mxu0 0.0
        %2787 = vmatpush1.msra.mxu0 0.0
        %2788 = vmatprep.subr.mxu0 0.0
        %2789 = vmatpush1.msra.mxu0 0.0
        %2790 = vmatprep.subr.mxu0 0.0
        %2791 = vmatpush1.msra.mxu0 0.0
        %2792 = vmatprep.subr.mxu0 0.0
        %2793 = vmatpush1.msra.mxu0 0.0
        %2794 = vmatprep.subr.mxu0 0.0
        %2795 = vmatpush1.msra.mxu0 0.0
        %2796 = vmatprep.subr.mxu0 0.0
        %2797 = vmatpush1.msra.mxu0 0.0
        %2798 = vmatprep.subr.mxu0 0.0
        %2799 = vmatpush1.msra.mxu0 0.0
        %2800 = vmatprep.subr.mxu0 0.0
        %2801 = vmatpush1.msra.mxu0 0.0
        %2802 = vmatprep.subr.mxu0 0.0
        %2803 = vmatpush1.msra.mxu0 0.0
        %2804 = vmatprep.subr.mxu0 0.0
        %2805 = vmatpush1.msra.mxu0 0.0
        %2806 = vmatprep.subr.mxu0 0.0
        %2807 = vmatpush1.msra.mxu0 0.0
        %2808 = vmatprep.subr.mxu0 0.0
        %2809 = vmatpush1.msra.mxu0 0.0
        %2810 = vmatprep.subr.mxu0 0.0
        %2811 = vmatpush1.msra.mxu0 0.0
        %2812 = vmatprep.subr.mxu0 0.0
        %2813 = vmatpush1.msra.mxu0 0.0
        %2814 = vmatprep.subr.mxu0 0.0
        %2815 = vmatpush1.msra.mxu0 0.0
        %2816 = vmatprep.subr.mxu0 0.0
        %2817 = vmatpush1.msra.mxu0 0.0
        %2818 = vmatprep.subr.mxu0 0.0
        %2819 = vmatpush1.msra.mxu0 0.0
        %2820 = vmatprep.subr.mxu0 0.0
        %2821 = vmatpush1.msra.mxu0 0.0
        %2822 = vmatprep.subr.mxu0 0.0
        %2823 = vmatpush1.msra.mxu0 0.0
        %2824 = vmatprep.subr.mxu0 0.0
        %2825 = vmatpush1.msra.mxu0 0.0
        %2826 = vmatprep.subr.mxu0 0.0
        %2827 = vmatpush1.msra.mxu0 0.0
        %2828 = vmatprep.subr.mxu0 0.0
        %2829 = vmatpush1.msra.mxu0 0.0
        %2830 = vmatprep.subr.mxu0 0.0
        %2831 = vmatpush1.msra.mxu0 0.0
        %2832 = vmatprep.mubr.f32.mxu0 0.0
        %v2833 = vand.u32 %v2666, 4294901760
        %2834 = vmatmul.mubr.f32.gmra.mrb[0].mxu0 %v2833
        %v2835 = vpop.f32.mrb[0].mxu0
        %v2836 = vadd.f32 %v2745, %v2835
        %v2837 = vpop.f32.mrb[0].mxu0
        %2838 = vmatprep.mubr.f32.mxu0 0.0
        %v2839 = vand.u32 %v2669, 4294901760
        %2840 = vmatmul.mubr.f32.gmra.mrb[0].mxu0 %v2839
        %v2841 = vpop.f32.mrb[0].mxu0
        %v2842 = vadd.f32 %v2755, %v2841
        %v2843 = vpop.f32.mrb[0].mxu0
        %2844 = vdwg.mxu0
        %2845 = vmatprep.subr.mxu0 0.0
        %v2846 = vand.u32 %v2660, 4294901760
        %v2847 = vsub.f32 %v2660, %v2846
        %2848 = vmatpush1.msra.mxu0 %v2847
        %2849 = vmatprep.subr.mxu0 0.0
        %v2850 = vand.u32 %v2662, 4294901760
        %v2851 = vsub.f32 %v2662, %v2850
        %2852 = vmatpush1.msra.mxu0 %v2851
        %2853 = vmatprep.subr.mxu0 0.0
        %2854 = vmatpush1.msra.mxu0 0.0
        %2855 = vmatprep.subr.mxu0 0.0
        %2856 = vmatpush1.msra.mxu0 0.0
        %2857 = vmatprep.subr.mxu0 0.0
        %2858 = vmatpush1.msra.mxu0 0.0
        %2859 = vmatprep.subr.mxu0 0.0
        %2860 = vmatpush1.msra.mxu0 0.0
        %2861 = vmatprep.subr.mxu0 0.0
        %2862 = vmatpush1.msra.mxu0 0.0
        %2863 = vmatprep.subr.mxu0 0.0
        %2864 = vmatpush1.msra.mxu0 0.0
        %2865 = vmatprep.subr.mxu0 0.0
        %2866 = vmatpush1.msra.mxu0 0.0
        %2867 = vmatprep.subr.mxu0 0.0
        %2868 = vmatpush1.msra.mxu0 0.0
        %2869 = vmatprep.subr.mxu0 0.0
        %2870 = vmatpush1.msra.mxu0 0.0
        %2871 = vmatprep.subr.mxu0 0.0
        %2872 = vmatpush1.msra.mxu0 0.0
        %2873 = vmatprep.subr.mxu0 0.0
        %2874 = vmatpush1.msra.mxu0 0.0
        %2875 = vmatprep.subr.mxu0 0.0
        %2876 = vmatpush1.msra.mxu0 0.0
        %2877 = vmatprep.subr.mxu0 0.0
        %2878 = vmatpush1.msra.mxu0 0.0
        %2879 = vmatprep.subr.mxu0 0.0
        %2880 = vmatpush1.msra.mxu0 0.0
        %2881 = vmatprep.subr.mxu0 0.0
        %2882 = vmatpush1.msra.mxu0 0.0
        %2883 = vmatprep.subr.mxu0 0.0
        %2884 = vmatpush1.msra.mxu0 0.0
        %2885 = vmatprep.subr.mxu0 0.0
        %2886 = vmatpush1.msra.mxu0 0.0
        %2887 = vmatprep.subr.mxu0 0.0
        %2888 = vmatpush1.msra.mxu0 0.0
        %2889 = vmatprep.subr.mxu0 0.0
        %2890 = vmatpush1.msra.mxu0 0.0
        %2891 = vmatprep.subr.mxu0 0.0
        %2892 = vmatpush1.msra.mxu0 0.0
        %2893 = vmatprep.subr.mxu0 0.0
        %2894 = vmatpush1.msra.mxu0 0.0
        %2895 = vmatprep.subr.mxu0 0.0
        %2896 = vmatpush1.msra.mxu0 0.0
        %2897 = vmatprep.subr.mxu0 0.0
        %2898 = vmatpush1.msra.mxu0 0.0
        %2899 = vmatprep.subr.mxu0 0.0
        %2900 = vmatpush1.msra.mxu0 0.0
        %2901 = vmatprep.subr.mxu0 0.0
        %2902 = vmatpush1.msra.mxu0 0.0
        %2903 = vmatprep.subr.mxu0 0.0
        %2904 = vmatpush1.msra.mxu0 0.0
        %2905 = vmatprep.subr.mxu0 0.0
        %2906 = vmatpush1.msra.mxu0 0.0
        %2907 = vmatprep.subr.mxu0 0.0
        %2908 = vmatpush1.msra.mxu0 0.0
        %2909 = vmatprep.subr.mxu0 0.0
        %2910 = vmatpush1.msra.mxu0 0.0
        %2911 = vmatprep.subr.mxu0 0.0
        %2912 = vmatpush1.msra.mxu0 0.0
        %2913 = vmatprep.mubr.f32.mxu0 0.0
        %v2914 = vand.u32 %v2666, 4294901760
        %v2915 = vsub.f32 %v2666, %v2914
        %2916 = vmatmul.mubr.f32.gmra.mrb[0].mxu0 %v2915
        %v2917 = vpop.f32.mrb[0].mxu0
        %v2918 = vadd.f32 %v2836, %v2917
        %v2919 = vpop.f32.mrb[0].mxu0
        %2920 = vmatprep.mubr.f32.mxu0 0.0
        %v2921 = vand.u32 %v2669, 4294901760
        %v2922 = vsub.f32 %v2669, %v2921
        %2923 = vmatmul.mubr.f32.gmra.mrb[0].mxu0 %v2922
        %v2924 = vpop.f32.mrb[0].mxu0
        %v2925 = vadd.f32 %v2842, %v2924
        %v2926 = vpop.f32.mrb[0].mxu0
        %2927 = vdwg.mxu0
        %2928 = vmatprep.subr.mxu0 0.0
        %v2929 = vand.u32 %v2660, 4294901760
        %2930 = vmatpush1.msra.mxu0 %v2929
        %2931 = vmatprep.subr.mxu0 0.0
        %v2932 = vand.u32 %v2662, 4294901760
        %2933 = vmatpush1.msra.mxu0 %v2932
        %2934 = vmatprep.subr.mxu0 0.0
        %2935 = vmatpush1.msra.mxu0 0.0
        %2936 = vmatprep.subr.mxu0 0.0
        %2937 = vmatpush1.msra.mxu0 0.0
        %2938 = vmatprep.subr.mxu0 0.0
        %2939 = vmatpush1.msra.mxu0 0.0
        %2940 = vmatprep.subr.mxu0 0.0
        %2941 = vmatpush1.msra.mxu0 0.0
        %2942 = vmatprep.subr.mxu0 0.0
        %2943 = vmatpush1.msra.mxu0 0.0
        %2944 = vmatprep.subr.mxu0 0.0
        %2945 = vmatpush1.msra.mxu0 0.0
        %2946 = vmatprep.subr.mxu0 0.0
        %2947 = vmatpush1.msra.mxu0 0.0
        %2948 = vmatprep.subr.mxu0 0.0
        %2949 = vmatpush1.msra.mxu0 0.0
        %2950 = vmatprep.subr.mxu0 0.0
        %2951 = vmatpush1.msra.mxu0 0.0
        %2952 = vmatprep.subr.mxu0 0.0
        %2953 = vmatpush1.msra.mxu0 0.0
        %2954 = vmatprep.subr.mxu0 0.0
        %2955 = vmatpush1.msra.mxu0 0.0
        %2956 = vmatprep.subr.mxu0 0.0
        %2957 = vmatpush1.msra.mxu0 0.0
        %2958 = vmatprep.subr.mxu0 0.0
        %2959 = vmatpush1.msra.mxu0 0.0
        %2960 = vmatprep.subr.mxu0 0.0
        %2961 = vmatpush1.msra.mxu0 0.0
        %2962 = vmatprep.subr.mxu0 0.0
        %2963 = vmatpush1.msra.mxu0 0.0
        %2964 = vmatprep.subr.mxu0 0.0
        %2965 = vmatpush1.msra.mxu0 0.0
        %2966 = vmatprep.subr.mxu0 0.0
        %2967 = vmatpush1.msra.mxu0 0.0
        %2968 = vmatprep.subr.mxu0 0.0
        %2969 = vmatpush1.msra.mxu0 0.0
        %2970 = vmatprep.subr.mxu0 0.0
        %2971 = vmatpush1.msra.mxu0 0.0
        %2972 = vmatprep.subr.mxu0 0.0
        %2973 = vmatpush1.msra.mxu0 0.0
        %2974 = vmatprep.subr.mxu0 0.0
        %2975 = vmatpush1.msra.mxu0 0.0
        %2976 = vmatprep.subr.mxu0 0.0
        %2977 = vmatpush1.msra.mxu0 0.0
        %2978 = vmatprep.subr.mxu0 0.0
        %2979 = vmatpush1.msra.mxu0 0.0
        %2980 = vmatprep.subr.mxu0 0.0
        %2981 = vmatpush1.msra.mxu0 0.0
        %2982 = vmatprep.subr.mxu0 0.0
        %2983 = vmatpush1.msra.mxu0 0.0
        %2984 = vmatprep.subr.mxu0 0.0
        %2985 = vmatpush1.msra.mxu0 0.0
        %2986 = vmatprep.subr.mxu0 0.0
        %2987 = vmatpush1.msra.mxu0 0.0
        %2988 = vmatprep.subr.mxu0 0.0
        %2989 = vmatpush1.msra.mxu0 0.0
        %2990 = vmatprep.subr.mxu0 0.0
        %2991 = vmatpush1.msra.mxu0 0.0
        %2992 = vmatprep.subr.mxu0 0.0
        %2993 = vmatpush1.msra.mxu0 0.0
        %2994 = vmatprep.mubr.f32.mxu0 0.0
        %v2995 = vand.u32 %v2666, 4294901760
        %v2996 = vsub.f32 %v2666, %v2995
        %v2997 = vand.u32 %v2996, 4294901760
        %2998 = vmatmul.mubr.f32.gmra.mrb[0].mxu0 %v2997
        %v2999 = vpop.f32.mrb[0].mxu0
        %v3000 = vadd.f32 %v2918, %v2999
        %v3001 = vpop.f32.mrb[0].mxu0
        %3002 = vmatprep.mubr.f32.mxu0 0.0
        %v3003 = vand.u32 %v2669, 4294901760
        %v3004 = vsub.f32 %v2669, %v3003
        %v3005 = vand.u32 %v3004, 4294901760
        %3006 = vmatmul.mubr.f32.gmra.mrb[0].mxu0 %v3005
        %v3007 = vpop.f32.mrb[0].mxu0
        %v3008 = vadd.f32 %v2925, %v3007
        %v3009 = vpop.f32.mrb[0].mxu0
        %3010 = vdwg.mxu0
        %3011 = vmatprep.subr.mxu0 0.0
        %v3012 = vand.u32 %v2660, 4294901760
        %v3013 = vsub.f32 %v2660, %v3012
        %v3014 = vand.u32 %v3013, 4294901760
        %3015 = vmatpush1.msra.mxu0 %v3014
        %3016 = vmatprep.subr.mxu0 0.0
        %v3017 = vand.u32 %v2662, 4294901760
        %v3018 = vsub.f32 %v2662, %v3017
        %v3019 = vand.u32 %v3018, 4294901760
        %3020 = vmatpush1.msra.mxu0 %v3019
        %3021 = vmatprep.subr.mxu0 0.0
        %3022 = vmatpush1.msra.mxu0 0.0
        %3023 = vmatprep.subr.mxu0 0.0
        %3024 = vmatpush1.msra.mxu0 0.0
        %3025 = vmatprep.subr.mxu0 0.0
        %3026 = vmatpush1.msra.mxu0 0.0
        %3027 = vmatprep.subr.mxu0 0.0
        %3028 = vmatpush1.msra.mxu0 0.0
        %3029 = vmatprep.subr.mxu0 0.0
        %3030 = vmatpush1.msra.mxu0 0.0
        %3031 = vmatprep.subr.mxu0 0.0
        %3032 = vmatpush1.msra.mxu0 0.0
        %3033 = vmatprep.subr.mxu0 0.0
        %3034 = vmatpush1.msra.mxu0 0.0
        %3035 = vmatprep.subr.mxu0 0.0
        %3036 = vmatpush1.msra.mxu0 0.0
        %3037 = vmatprep.subr.mxu0 0.0
        %3038 = vmatpush1.msra.mxu0 0.0
        %3039 = vmatprep.subr.mxu0 0.0
        %3040 = vmatpush1.msra.mxu0 0.0
        %3041 = vmatprep.subr.mxu0 0.0
        %3042 = vmatpush1.msra.mxu0 0.0
        %3043 = vmatprep.subr.mxu0 0.0
        %3044 = vmatpush1.msra.mxu0 0.0
        %3045 = vmatprep.subr.mxu0 0.0
        %3046 = vmatpush1.msra.mxu0 0.0
        %3047 = vmatprep.subr.mxu0 0.0
        %3048 = vmatpush1.msra.mxu0 0.0
        %3049 = vmatprep.subr.mxu0 0.0
        %3050 = vmatpush1.msra.mxu0 0.0
        %3051 = vmatprep.subr.mxu0 0.0
        %3052 = vmatpush1.msra.mxu0 0.0
        %3053 = vmatprep.subr.mxu0 0.0
        %3054 = vmatpush1.msra.mxu0 0.0
        %3055 = vmatprep.subr.mxu0 0.0
        %3056 = vmatpush1.msra.mxu0 0.0
        %3057 = vmatprep.subr.mxu0 0.0
        %3058 = vmatpush1.msra.mxu0 0.0
        %3059 = vmatprep.subr.mxu0 0.0
        %3060 = vmatpush1.msra.mxu0 0.0
        %3061 = vmatprep.subr.mxu0 0.0
        %3062 = vmatpush1.msra.mxu0 0.0
        %3063 = vmatprep.subr.mxu0 0.0
        %3064 = vmatpush1.msra.mxu0 0.0
        %3065 = vmatprep.subr.mxu0 0.0
        %3066 = vmatpush1.msra.mxu0 0.0
        %3067 = vmatprep.subr.mxu0 0.0
        %3068 = vmatpush1.msra.mxu0 0.0
        %3069 = vmatprep.subr.mxu0 0.0
        %3070 = vmatpush1.msra.mxu0 0.0
        %3071 = vmatprep.subr.mxu0 0.0
        %3072 = vmatpush1.msra.mxu0 0.0
        %3073 = vmatprep.subr.mxu0 0.0
        %3074 = vmatpush1.msra.mxu0 0.0
        %3075 = vmatprep.subr.mxu0 0.0
        %3076 = vmatpush1.msra.mxu0 0.0
        %3077 = vmatprep.subr.mxu0 0.0
        %3078 = vmatpush1.msra.mxu0 0.0
        %3079 = vmatprep.subr.mxu0 0.0
        %3080 = vmatpush1.msra.mxu0 0.0
        %3081 = vmatprep.mubr.f32.mxu0 0.0
        %v3082 = vand.u32 %v2666, 4294901760
        %3083 = vmatmul.mubr.f32.gmra.mrb[0].mxu0 %v3082
        %v3084 = vpop.f32.mrb[0].mxu0
        %v3085 = vadd.f32 %v3000, %v3084
        %v3086 = vpop.f32.mrb[0].mxu0
        %3087 = vmatprep.mubr.f32.mxu0 0.0
        %v3088 = vand.u32 %v2669, 4294901760
        %3089 = vmatmul.mubr.f32.gmra.mrb[0].mxu0 %v3088
        %v3090 = vpop.f32.mrb[0].mxu0
        %v3091 = vadd.f32 %v3008, %v3090
        %v3092 = vpop.f32.mrb[0].mxu0
        %3093 = vdwg.mxu0
        %3094 = vmatprep.subr.mxu0 0.0
        %v3095 = vand.u32 %v2660, 4294901760
        %3096 = vmatpush1.msra.mxu0 %v3095
        %3097 = vmatprep.subr.mxu0 0.0
        %v3098 = vand.u32 %v2662, 4294901760
        %3099 = vmatpush1.msra.mxu0 %v3098
        %3100 = vmatprep.subr.mxu0 0.0
        %3101 = vmatpush1.msra.mxu0 0.0
        %3102 = vmatprep.subr.mxu0 0.0
        %3103 = vmatpush1.msra.mxu0 0.0
        %3104 = vmatprep.subr.mxu0 0.0
        %3105 = vmatpush1.msra.mxu0 0.0
        %3106 = vmatprep.subr.mxu0 0.0
        %3107 = vmatpush1.msra.mxu0 0.0
        %3108 = vmatprep.subr.mxu0 0.0
        %3109 = vmatpush1.msra.mxu0 0.0
        %3110 = vmatprep.subr.mxu0 0.0
        %3111 = vmatpush1.msra.mxu0 0.0
        %3112 = vmatprep.subr.mxu0 0.0
        %3113 = vmatpush1.msra.mxu0 0.0
        %3114 = vmatprep.subr.mxu0 0.0
        %3115 = vmatpush1.msra.mxu0 0.0
        %3116 = vmatprep.subr.mxu0 0.0
        %3117 = vmatpush1.msra.mxu0 0.0
        %3118 = vmatprep.subr.mxu0 0.0
        %3119 = vmatpush1.msra.mxu0 0.0
        %3120 = vmatprep.subr.mxu0 0.0
        %3121 = vmatpush1.msra.mxu0 0.0
        %3122 = vmatprep.subr.mxu0 0.0
        %3123 = vmatpush1.msra.mxu0 0.0
        %3124 = vmatprep.subr.mxu0 0.0
        %3125 = vmatpush1.msra.mxu0 0.0
        %3126 = vmatprep.subr.mxu0 0.0
        %3127 = vmatpush1.msra.mxu0 0.0
        %3128 = vmatprep.subr.mxu0 0.0
        %3129 = vmatpush1.msra.mxu0 0.0
        %3130 = vmatprep.subr.mxu0 0.0
        %3131 = vmatpush1.msra.mxu0 0.0
        %3132 = vmatprep.subr.mxu0 0.0
        %3133 = vmatpush1.msra.mxu0 0.0
        %3134 = vmatprep.subr.mxu0 0.0
        %3135 = vmatpush1.msra.mxu0 0.0
        %3136 = vmatprep.subr.mxu0 0.0
        %3137 = vmatpush1.msra.mxu0 0.0
        %3138 = vmatprep.subr.mxu0 0.0
        %3139 = vmatpush1.msra.mxu0 0.0
        %3140 = vmatprep.subr.mxu0 0.0
        %3141 = vmatpush1.msra.mxu0 0.0
        %3142 = vmatprep.subr.mxu0 0.0
        %3143 = vmatpush1.msra.mxu0 0.0
        %3144 = vmatprep.subr.mxu0 0.0
        %3145 = vmatpush1.msra.mxu0 0.0
        %3146 = vmatprep.subr.mxu0 0.0
        %3147 = vmatpush1.msra.mxu0 0.0
        %3148 = vmatprep.subr.mxu0 0.0
        %3149 = vmatpush1.msra.mxu0 0.0
        %3150 = vmatprep.subr.mxu0 0.0
        %3151 = vmatpush1.msra.mxu0 0.0
        %3152 = vmatprep.subr.mxu0 0.0
        %3153 = vmatpush1.msra.mxu0 0.0
        %3154 = vmatprep.subr.mxu0 0.0
        %3155 = vmatpush1.msra.mxu0 0.0
        %3156 = vmatprep.subr.mxu0 0.0
        %3157 = vmatpush1.msra.mxu0 0.0
        %3158 = vmatprep.subr.mxu0 0.0
        %3159 = vmatpush1.msra.mxu0 0.0
        %3160 = vmatprep.mubr.f32.mxu0 0.0
        %v3161 = vand.u32 %v2666, 4294901760
        %3162 = vmatmul.mubr.f32.gmra.mrb[0].mxu0 %v3161
        %v3163 = vpop.f32.mrb[0].mxu0
        %v3164 = vadd.f32 %v3085, %v3163
        %v3165 = vpop.f32.mrb[0].mxu0
        %3166 = vmatprep.mubr.f32.mxu0 0.0
        %v3167 = vand.u32 %v2669, 4294901760
        %3168 = vmatmul.mubr.f32.gmra.mrb[0].mxu0 %v3167
        %v3169 = vpop.f32.mrb[0].mxu0
        %v3170 = vadd.f32 %v3091, %v3169
        %v3171 = vpop.f32.mrb[0].mxu0
        %3172 = vdwg.mxu0
        %v3173 = vlaneseq
        %v3174 = vshrl.u32 %v3173, 7
        %v3175 = vsub.s32 2, %v3174
        %v3176 = vrot.slane %v1098, %v3175
        %3178 = vrot.lane.b32.xlu0 %v3176, 64
        %v3179 = vpop.permute.xlu0 %3178
        %v3181 = vmul.f32 %v1096, %v3179
        %v3182 = vmul.f32 %v1097, %v3179
        %3185 = vrot.lane.b32.xlu0 %v3181, 64
        %v3186 = vpop.permute.xlu0 %3185
        %3187 = vrot.lane.b32.xlu0 %v3182, 64
        %v3188 = vpop.permute.xlu0 %3187
        %v3191 = vsel %vm1106, %v3186, 0.0
        %3192 = vadd.xlane.f32.xlu0 %v3191
        %v3193 = vpop.xlane.xlu0 %3192
        %v3194 = vsel %vm1106, %v3188, 0.0
        %3195 = vadd.xlane.f32.xlu0 %v3194
        %v3196 = vpop.xlane.xlu0 %3195
        %v3197 = vrot.slane %v1099, 2
        %3198 = vrot.lane.b32.xlu0 %v1096, 64
        %v3199 = vpop.permute.xlu0 %3198
        %3200 = vrot.lane.b32.xlu0 %v1097, 64
        %v3201 = vpop.permute.xlu0 %3200
        %v3202 = vsel %vm1106, %v3197, 0
        %v3204 = vsel %vm1106, %v3199, 0
        %v3206 = vsel %vm1106, %v3201, 0
        %3208 = vmatprep.subr.mxu0 0.0
        %v3209 = vand.u32 %v3204, 4294901760
        %3210 = vmatpush1.xpose.msra.mxu0 %v3209
        %3211 = vmatprep.subr.mxu0 0.0
        %v3212 = vand.u32 %v3206, 4294901760
        %3213 = vmatpush1.xpose.msra.mxu0 %v3212
        %3214 = vmatprep.subr.mxu0 0.0
        %3215 = vmatpush1.xpose.msra.mxu0 0.0
        %3216 = vmatprep.subr.mxu0 0.0
        %3217 = vmatpush1.xpose.msra.mxu0 0.0
        %3218 = vmatprep.subr.mxu0 0.0
        %3219 = vmatpush1.xpose.msra.mxu0 0.0
        %3220 = vmatprep.subr.mxu0 0.0
        %3221 = vmatpush1.xpose.msra.mxu0 0.0
        %3222 = vmatprep.subr.mxu0 0.0
        %3223 = vmatpush1.xpose.msra.mxu0 0.0
        %3224 = vmatprep.subr.mxu0 0.0
        %3225 = vmatpush1.xpose.msra.mxu0 0.0
        %3226 = vmatprep.subr.mxu0 0.0
        %3227 = vmatpush1.xpose.msra.mxu0 0.0
        %3228 = vmatprep.subr.mxu0 0.0
        %3229 = vmatpush1.xpose.msra.mxu0 0.0
        %3230 = vmatprep.subr.mxu0 0.0
        %3231 = vmatpush1.xpose.msra.mxu0 0.0
        %3232 = vmatprep.subr.mxu0 0.0
        %3233 = vmatpush1.xpose.msra.mxu0 0.0
        %3234 = vmatprep.subr.mxu0 0.0
        %3235 = vmatpush1.xpose.msra.mxu0 0.0
        %3236 = vmatprep.subr.mxu0 0.0
        %3237 = vmatpush1.xpose.msra.mxu0 0.0
        %3238 = vmatprep.subr.mxu0 0.0
        %3239 = vmatpush1.xpose.msra.mxu0 0.0
        %3240 = vmatprep.subr.mxu0 0.0
        %3241 = vmatpush1.xpose.msra.mxu0 0.0
        %3242 = vmatprep.subr.mxu0 0.0
        %3243 = vmatpush1.xpose.msra.mxu0 0.0
        %3244 = vmatprep.subr.mxu0 0.0
        %3245 = vmatpush1.xpose.msra.mxu0 0.0
        %3246 = vmatprep.subr.mxu0 0.0
        %3247 = vmatpush1.xpose.msra.mxu0 0.0
        %3248 = vmatprep.subr.mxu0 0.0
        %3249 = vmatpush1.xpose.msra.mxu0 0.0
        %3250 = vmatprep.subr.mxu0 0.0
        %3251 = vmatpush1.xpose.msra.mxu0 0.0
        %3252 = vmatprep.subr.mxu0 0.0
        %3253 = vmatpush1.xpose.msra.mxu0 0.0
        %3254 = vmatprep.subr.mxu0 0.0
        %3255 = vmatpush1.xpose.msra.mxu0 0.0
        %3256 = vmatprep.subr.mxu0 0.0
        %3257 = vmatpush1.xpose.msra.mxu0 0.0
        %3258 = vmatprep.subr.mxu0 0.0
        %3259 = vmatpush1.xpose.msra.mxu0 0.0
        %3260 = vmatprep.subr.mxu0 0.0
        %3261 = vmatpush1.xpose.msra.mxu0 0.0
        %3262 = vmatprep.subr.mxu0 0.0
        %3263 = vmatpush1.xpose.msra.mxu0 0.0
        %3264 = vmatprep.subr.mxu0 0.0
        %3265 = vmatpush1.xpose.msra.mxu0 0.0
        %3266 = vmatprep.subr.mxu0 0.0
        %3267 = vmatpush1.xpose.msra.mxu0 0.0
        %3268 = vmatprep.subr.mxu0 0.0
        %3269 = vmatpush1.xpose.msra.mxu0 0.0
        %3270 = vmatprep.subr.mxu0 0.0
        %3271 = vmatpush1.xpose.msra.mxu0 0.0
        %3272 = vmatprep.subr.mxu0 0.0
        %3273 = vmatpush1.xpose.msra.mxu0 0.0
        %3274 = vmatprep.mubr.f32.mxu0 0.0
        %v3275 = vand.u32 %v3202, 4294901760
        %v3276 = vsub.f32 %v3202, %v3275
        %v3277 = vand.u32 %v3276, 4294901760
        %v3278 = vsub.f32 %v3276, %v3277
        %v3279 = vand.u32 %v3278, 4294901760
        %3280 = vmatmul.mubr.f32.gmra.mrb[0].mxu0 %v3279
        %v3281 = vpop.f32.mrb[0].mxu0
        %v3282 = vadd.f32 0.0, %v3281
        %v3283 = vpop.f32.mrb[0].mxu0
        %3284 = vdwg.mxu0
        %3285 = vmatprep.subr.mxu0 0.0
        %v3286 = vand.u32 %v3204, 4294901760
        %v3287 = vsub.f32 %v3204, %v3286
        %v3288 = vand.u32 %v3287, 4294901760
        %v3289 = vsub.f32 %v3287, %v3288
        %v3290 = vand.u32 %v3289, 4294901760
        %3291 = vmatpush1.xpose.msra.mxu0 %v3290
        %3292 = vmatprep.subr.mxu0 0.0
        %v3293 = vand.u32 %v3206, 4294901760
        %v3294 = vsub.f32 %v3206, %v3293
        %v3295 = vand.u32 %v3294, 4294901760
        %v3296 = vsub.f32 %v3294, %v3295
        %v3297 = vand.u32 %v3296, 4294901760
        %3298 = vmatpush1.xpose.msra.mxu0 %v3297
        %3299 = vmatprep.subr.mxu0 0.0
        %3300 = vmatpush1.xpose.msra.mxu0 0.0
        %3301 = vmatprep.subr.mxu0 0.0
        %3302 = vmatpush1.xpose.msra.mxu0 0.0
        %3303 = vmatprep.subr.mxu0 0.0
        %3304 = vmatpush1.xpose.msra.mxu0 0.0
        %3305 = vmatprep.subr.mxu0 0.0
        %3306 = vmatpush1.xpose.msra.mxu0 0.0
        %3307 = vmatprep.subr.mxu0 0.0
        %3308 = vmatpush1.xpose.msra.mxu0 0.0
        %3309 = vmatprep.subr.mxu0 0.0
        %3310 = vmatpush1.xpose.msra.mxu0 0.0
        %3311 = vmatprep.subr.mxu0 0.0
        %3312 = vmatpush1.xpose.msra.mxu0 0.0
        %3313 = vmatprep.subr.mxu0 0.0
        %3314 = vmatpush1.xpose.msra.mxu0 0.0
        %3315 = vmatprep.subr.mxu0 0.0
        %3316 = vmatpush1.xpose.msra.mxu0 0.0
        %3317 = vmatprep.subr.mxu0 0.0
        %3318 = vmatpush1.xpose.msra.mxu0 0.0
        %3319 = vmatprep.subr.mxu0 0.0
        %3320 = vmatpush1.xpose.msra.mxu0 0.0
        %3321 = vmatprep.subr.mxu0 0.0
        %3322 = vmatpush1.xpose.msra.mxu0 0.0
        %3323 = vmatprep.subr.mxu0 0.0
        %3324 = vmatpush1.xpose.msra.mxu0 0.0
        %3325 = vmatprep.subr.mxu0 0.0
        %3326 = vmatpush1.xpose.msra.mxu0 0.0
        %3327 = vmatprep.subr.mxu0 0.0
        %3328 = vmatpush1.xpose.msra.mxu0 0.0
        %3329 = vmatprep.subr.mxu0 0.0
        %3330 = vmatpush1.xpose.msra.mxu0 0.0
        %3331 = vmatprep.subr.mxu0 0.0
        %3332 = vmatpush1.xpose.msra.mxu0 0.0
        %3333 = vmatprep.subr.mxu0 0.0
        %3334 = vmatpush1.xpose.msra.mxu0 0.0
        %3335 = vmatprep.subr.mxu0 0.0
        %3336 = vmatpush1.xpose.msra.mxu0 0.0
        %3337 = vmatprep.subr.mxu0 0.0
        %3338 = vmatpush1.xpose.msra.mxu0 0.0
        %3339 = vmatprep.subr.mxu0 0.0
        %3340 = vmatpush1.xpose.msra.mxu0 0.0
        %3341 = vmatprep.subr.mxu0 0.0
        %3342 = vmatpush1.xpose.msra.mxu0 0.0
        %3343 = vmatprep.subr.mxu0 0.0
        %3344 = vmatpush1.xpose.msra.mxu0 0.0
        %3345 = vmatprep.subr.mxu0 0.0
        %3346 = vmatpush1.xpose.msra.mxu0 0.0
        %3347 = vmatprep.subr.mxu0 0.0
        %3348 = vmatpush1.xpose.msra.mxu0 0.0
        %3349 = vmatprep.subr.mxu0 0.0
        %3350 = vmatpush1.xpose.msra.mxu0 0.0
        %3351 = vmatprep.subr.mxu0 0.0
        %3352 = vmatpush1.xpose.msra.mxu0 0.0
        %3353 = vmatprep.subr.mxu0 0.0
        %3354 = vmatpush1.xpose.msra.mxu0 0.0
        %3355 = vmatprep.subr.mxu0 0.0
        %3356 = vmatpush1.xpose.msra.mxu0 0.0
        %3357 = vmatprep.subr.mxu0 0.0
        %3358 = vmatpush1.xpose.msra.mxu0 0.0
        %3359 = vmatprep.mubr.f32.mxu0 0.0
        %v3360 = vand.u32 %v3202, 4294901760
        %3361 = vmatmul.mubr.f32.gmra.mrb[0].mxu0 %v3360
        %v3362 = vpop.f32.mrb[0].mxu0
        %v3363 = vadd.f32 %v3282, %v3362
        %v3364 = vpop.f32.mrb[0].mxu0
        %3365 = vdwg.mxu0
        %3366 = vmatprep.subr.mxu0 0.0
        %v3367 = vand.u32 %v3204, 4294901760
        %v3368 = vsub.f32 %v3204, %v3367
        %3369 = vmatpush1.xpose.msra.mxu0 %v3368
        %3370 = vmatprep.subr.mxu0 0.0
        %v3371 = vand.u32 %v3206, 4294901760
        %v3372 = vsub.f32 %v3206, %v3371
        %3373 = vmatpush1.xpose.msra.mxu0 %v3372
        %3374 = vmatprep.subr.mxu0 0.0
        %3375 = vmatpush1.xpose.msra.mxu0 0.0
        %3376 = vmatprep.subr.mxu0 0.0
        %3377 = vmatpush1.xpose.msra.mxu0 0.0
        %3378 = vmatprep.subr.mxu0 0.0
        %3379 = vmatpush1.xpose.msra.mxu0 0.0
        %3380 = vmatprep.subr.mxu0 0.0
        %3381 = vmatpush1.xpose.msra.mxu0 0.0
        %3382 = vmatprep.subr.mxu0 0.0
        %3383 = vmatpush1.xpose.msra.mxu0 0.0
        %3384 = vmatprep.subr.mxu0 0.0
        %3385 = vmatpush1.xpose.msra.mxu0 0.0
        %3386 = vmatprep.subr.mxu0 0.0
        %3387 = vmatpush1.xpose.msra.mxu0 0.0
        %3388 = vmatprep.subr.mxu0 0.0
        %3389 = vmatpush1.xpose.msra.mxu0 0.0
        %3390 = vmatprep.subr.mxu0 0.0
        %3391 = vmatpush1.xpose.msra.mxu0 0.0
        %3392 = vmatprep.subr.mxu0 0.0
        %3393 = vmatpush1.xpose.msra.mxu0 0.0
        %3394 = vmatprep.subr.mxu0 0.0
        %3395 = vmatpush1.xpose.msra.mxu0 0.0
        %3396 = vmatprep.subr.mxu0 0.0
        %3397 = vmatpush1.xpose.msra.mxu0 0.0
        %3398 = vmatprep.subr.mxu0 0.0
        %3399 = vmatpush1.xpose.msra.mxu0 0.0
        %3400 = vmatprep.subr.mxu0 0.0
        %3401 = vmatpush1.xpose.msra.mxu0 0.0
        %3402 = vmatprep.subr.mxu0 0.0
        %3403 = vmatpush1.xpose.msra.mxu0 0.0
        %3404 = vmatprep.subr.mxu0 0.0
        %3405 = vmatpush1.xpose.msra.mxu0 0.0
        %3406 = vmatprep.subr.mxu0 0.0
        %3407 = vmatpush1.xpose.msra.mxu0 0.0
        %3408 = vmatprep.subr.mxu0 0.0
        %3409 = vmatpush1.xpose.msra.mxu0 0.0
        %3410 = vmatprep.subr.mxu0 0.0
        %3411 = vmatpush1.xpose.msra.mxu0 0.0
        %3412 = vmatprep.subr.mxu0 0.0
        %3413 = vmatpush1.xpose.msra.mxu0 0.0
        %3414 = vmatprep.subr.mxu0 0.0
        %3415 = vmatpush1.xpose.msra.mxu0 0.0
        %3416 = vmatprep.subr.mxu0 0.0
        %3417 = vmatpush1.xpose.msra.mxu0 0.0
        %3418 = vmatprep.subr.mxu0 0.0
        %3419 = vmatpush1.xpose.msra.mxu0 0.0
        %3420 = vmatprep.subr.mxu0 0.0
        %3421 = vmatpush1.xpose.msra.mxu0 0.0
        %3422 = vmatprep.subr.mxu0 0.0
        %3423 = vmatpush1.xpose.msra.mxu0 0.0
        %3424 = vmatprep.subr.mxu0 0.0
        %3425 = vmatpush1.xpose.msra.mxu0 0.0
        %3426 = vmatprep.subr.mxu0 0.0
        %3427 = vmatpush1.xpose.msra.mxu0 0.0
        %3428 = vmatprep.subr.mxu0 0.0
        %3429 = vmatpush1.xpose.msra.mxu0 0.0
        %3430 = vmatprep.subr.mxu0 0.0
        %3431 = vmatpush1.xpose.msra.mxu0 0.0
        %3432 = vmatprep.subr.mxu0 0.0
        %3433 = vmatpush1.xpose.msra.mxu0 0.0
        %3434 = vmatprep.mubr.f32.mxu0 0.0
        %v3435 = vand.u32 %v3202, 4294901760
        %v3436 = vsub.f32 %v3202, %v3435
        %3437 = vmatmul.mubr.f32.gmra.mrb[0].mxu0 %v3436
        %v3438 = vpop.f32.mrb[0].mxu0
        %v3439 = vadd.f32 %v3363, %v3438
        %v3440 = vpop.f32.mrb[0].mxu0
        %3441 = vdwg.mxu0
        %3442 = vmatprep.subr.mxu0 0.0
        %v3443 = vand.u32 %v3204, 4294901760
        %3444 = vmatpush1.xpose.msra.mxu0 %v3443
        %3445 = vmatprep.subr.mxu0 0.0
        %v3446 = vand.u32 %v3206, 4294901760
        %3447 = vmatpush1.xpose.msra.mxu0 %v3446
        %3448 = vmatprep.subr.mxu0 0.0
        %3449 = vmatpush1.xpose.msra.mxu0 0.0
        %3450 = vmatprep.subr.mxu0 0.0
        %3451 = vmatpush1.xpose.msra.mxu0 0.0
        %3452 = vmatprep.subr.mxu0 0.0
        %3453 = vmatpush1.xpose.msra.mxu0 0.0
        %3454 = vmatprep.subr.mxu0 0.0
        %3455 = vmatpush1.xpose.msra.mxu0 0.0
        %3456 = vmatprep.subr.mxu0 0.0
        %3457 = vmatpush1.xpose.msra.mxu0 0.0
        %3458 = vmatprep.subr.mxu0 0.0
        %3459 = vmatpush1.xpose.msra.mxu0 0.0
        %3460 = vmatprep.subr.mxu0 0.0
        %3461 = vmatpush1.xpose.msra.mxu0 0.0
        %3462 = vmatprep.subr.mxu0 0.0
        %3463 = vmatpush1.xpose.msra.mxu0 0.0
        %3464 = vmatprep.subr.mxu0 0.0
        %3465 = vmatpush1.xpose.msra.mxu0 0.0
        %3466 = vmatprep.subr.mxu0 0.0
        %3467 = vmatpush1.xpose.msra.mxu0 0.0
        %3468 = vmatprep.subr.mxu0 0.0
        %3469 = vmatpush1.xpose.msra.mxu0 0.0
        %3470 = vmatprep.subr.mxu0 0.0
        %3471 = vmatpush1.xpose.msra.mxu0 0.0
        %3472 = vmatprep.subr.mxu0 0.0
        %3473 = vmatpush1.xpose.msra.mxu0 0.0
        %3474 = vmatprep.subr.mxu0 0.0
        %3475 = vmatpush1.xpose.msra.mxu0 0.0
        %3476 = vmatprep.subr.mxu0 0.0
        %3477 = vmatpush1.xpose.msra.mxu0 0.0
        %3478 = vmatprep.subr.mxu0 0.0
        %3479 = vmatpush1.xpose.msra.mxu0 0.0
        %3480 = vmatprep.subr.mxu0 0.0
        %3481 = vmatpush1.xpose.msra.mxu0 0.0
        %3482 = vmatprep.subr.mxu0 0.0
        %3483 = vmatpush1.xpose.msra.mxu0 0.0
        %3484 = vmatprep.subr.mxu0 0.0
        %3485 = vmatpush1.xpose.msra.mxu0 0.0
        %3486 = vmatprep.subr.mxu0 0.0
        %3487 = vmatpush1.xpose.msra.mxu0 0.0
        %3488 = vmatprep.subr.mxu0 0.0
        %3489 = vmatpush1.xpose.msra.mxu0 0.0
        %3490 = vmatprep.subr.mxu0 0.0
        %3491 = vmatpush1.xpose.msra.mxu0 0.0
        %3492 = vmatprep.subr.mxu0 0.0
        %3493 = vmatpush1.xpose.msra.mxu0 0.0
        %3494 = vmatprep.subr.mxu0 0.0
        %3495 = vmatpush1.xpose.msra.mxu0 0.0
        %3496 = vmatprep.subr.mxu0 0.0
        %3497 = vmatpush1.xpose.msra.mxu0 0.0
        %3498 = vmatprep.subr.mxu0 0.0
        %3499 = vmatpush1.xpose.msra.mxu0 0.0
        %3500 = vmatprep.subr.mxu0 0.0
        %3501 = vmatpush1.xpose.msra.mxu0 0.0
        %3502 = vmatprep.subr.mxu0 0.0
        %3503 = vmatpush1.xpose.msra.mxu0 0.0
        %3504 = vmatprep.subr.mxu0 0.0
        %3505 = vmatpush1.xpose.msra.mxu0 0.0
        %3506 = vmatprep.subr.mxu0 0.0
        %3507 = vmatpush1.xpose.msra.mxu0 0.0
        %3508 = vmatprep.mubr.f32.mxu0 0.0
        %v3509 = vand.u32 %v3202, 4294901760
        %v3510 = vsub.f32 %v3202, %v3509
        %v3511 = vand.u32 %v3510, 4294901760
        %3512 = vmatmul.mubr.f32.gmra.mrb[0].mxu0 %v3511
        %v3513 = vpop.f32.mrb[0].mxu0
        %v3514 = vadd.f32 %v3439, %v3513
        %v3515 = vpop.f32.mrb[0].mxu0
        %3516 = vdwg.mxu0
        %3517 = vmatprep.subr.mxu0 0.0
        %v3518 = vand.u32 %v3204, 4294901760
        %v3519 = vsub.f32 %v3204, %v3518
        %v3520 = vand.u32 %v3519, 4294901760
        %3521 = vmatpush1.xpose.msra.mxu0 %v3520
        %3522 = vmatprep.subr.mxu0 0.0
        %v3523 = vand.u32 %v3206, 4294901760
        %v3524 = vsub.f32 %v3206, %v3523
        %v3525 = vand.u32 %v3524, 4294901760
        %3526 = vmatpush1.xpose.msra.mxu0 %v3525
        %3527 = vmatprep.subr.mxu0 0.0
        %3528 = vmatpush1.xpose.msra.mxu0 0.0
        %3529 = vmatprep.subr.mxu0 0.0
        %3530 = vmatpush1.xpose.msra.mxu0 0.0
        %3531 = vmatprep.subr.mxu0 0.0
        %3532 = vmatpush1.xpose.msra.mxu0 0.0
        %3533 = vmatprep.subr.mxu0 0.0
        %3534 = vmatpush1.xpose.msra.mxu0 0.0
        %3535 = vmatprep.subr.mxu0 0.0
        %3536 = vmatpush1.xpose.msra.mxu0 0.0
        %3537 = vmatprep.subr.mxu0 0.0
        %3538 = vmatpush1.xpose.msra.mxu0 0.0
        %3539 = vmatprep.subr.mxu0 0.0
        %3540 = vmatpush1.xpose.msra.mxu0 0.0
        %3541 = vmatprep.subr.mxu0 0.0
        %3542 = vmatpush1.xpose.msra.mxu0 0.0
        %3543 = vmatprep.subr.mxu0 0.0
        %3544 = vmatpush1.xpose.msra.mxu0 0.0
        %3545 = vmatprep.subr.mxu0 0.0
        %3546 = vmatpush1.xpose.msra.mxu0 0.0
        %3547 = vmatprep.subr.mxu0 0.0
        %3548 = vmatpush1.xpose.msra.mxu0 0.0
        %3549 = vmatprep.subr.mxu0 0.0
        %3550 = vmatpush1.xpose.msra.mxu0 0.0
        %3551 = vmatprep.subr.mxu0 0.0
        %3552 = vmatpush1.xpose.msra.mxu0 0.0
        %3553 = vmatprep.subr.mxu0 0.0
        %3554 = vmatpush1.xpose.msra.mxu0 0.0
        %3555 = vmatprep.subr.mxu0 0.0
        %3556 = vmatpush1.xpose.msra.mxu0 0.0
        %3557 = vmatprep.subr.mxu0 0.0
        %3558 = vmatpush1.xpose.msra.mxu0 0.0
        %3559 = vmatprep.subr.mxu0 0.0
        %3560 = vmatpush1.xpose.msra.mxu0 0.0
        %3561 = vmatprep.subr.mxu0 0.0
        %3562 = vmatpush1.xpose.msra.mxu0 0.0
        %3563 = vmatprep.subr.mxu0 0.0
        %3564 = vmatpush1.xpose.msra.mxu0 0.0
        %3565 = vmatprep.subr.mxu0 0.0
        %3566 = vmatpush1.xpose.msra.mxu0 0.0
        %3567 = vmatprep.subr.mxu0 0.0
        %3568 = vmatpush1.xpose.msra.mxu0 0.0
        %3569 = vmatprep.subr.mxu0 0.0
        %3570 = vmatpush1.xpose.msra.mxu0 0.0
        %3571 = vmatprep.subr.mxu0 0.0
        %3572 = vmatpush1.xpose.msra.mxu0 0.0
        %3573 = vmatprep.subr.mxu0 0.0
        %3574 = vmatpush1.xpose.msra.mxu0 0.0
        %3575 = vmatprep.subr.mxu0 0.0
        %3576 = vmatpush1.xpose.msra.mxu0 0.0
        %3577 = vmatprep.subr.mxu0 0.0
        %3578 = vmatpush1.xpose.msra.mxu0 0.0
        %3579 = vmatprep.subr.mxu0 0.0
        %3580 = vmatpush1.xpose.msra.mxu0 0.0
        %3581 = vmatprep.subr.mxu0 0.0
        %3582 = vmatpush1.xpose.msra.mxu0 0.0
        %3583 = vmatprep.subr.mxu0 0.0
        %3584 = vmatpush1.xpose.msra.mxu0 0.0
        %3585 = vmatprep.subr.mxu0 0.0
        %3586 = vmatpush1.xpose.msra.mxu0 0.0
        %3587 = vmatprep.mubr.f32.mxu0 0.0
        %v3588 = vand.u32 %v3202, 4294901760
        %3589 = vmatmul.mubr.f32.gmra.mrb[0].mxu0 %v3588
        %v3590 = vpop.f32.mrb[0].mxu0
        %v3591 = vadd.f32 %v3514, %v3590
        %v3592 = vpop.f32.mrb[0].mxu0
        %3593 = vdwg.mxu0
        %3594 = vmatprep.subr.mxu0 0.0
        %v3595 = vand.u32 %v3204, 4294901760
        %3596 = vmatpush1.xpose.msra.mxu0 %v3595
        %3597 = vmatprep.subr.mxu0 0.0
        %v3598 = vand.u32 %v3206, 4294901760
        %3599 = vmatpush1.xpose.msra.mxu0 %v3598
        %3600 = vmatprep.subr.mxu0 0.0
        %3601 = vmatpush1.xpose.msra.mxu0 0.0
        %3602 = vmatprep.subr.mxu0 0.0
        %3603 = vmatpush1.xpose.msra.mxu0 0.0
        %3604 = vmatprep.subr.mxu0 0.0
        %3605 = vmatpush1.xpose.msra.mxu0 0.0
        %3606 = vmatprep.subr.mxu0 0.0
        %3607 = vmatpush1.xpose.msra.mxu0 0.0
        %3608 = vmatprep.subr.mxu0 0.0
        %3609 = vmatpush1.xpose.msra.mxu0 0.0
        %3610 = vmatprep.subr.mxu0 0.0
        %3611 = vmatpush1.xpose.msra.mxu0 0.0
        %3612 = vmatprep.subr.mxu0 0.0
        %3613 = vmatpush1.xpose.msra.mxu0 0.0
        %3614 = vmatprep.subr.mxu0 0.0
        %3615 = vmatpush1.xpose.msra.mxu0 0.0
        %3616 = vmatprep.subr.mxu0 0.0
        %3617 = vmatpush1.xpose.msra.mxu0 0.0
        %3618 = vmatprep.subr.mxu0 0.0
        %3619 = vmatpush1.xpose.msra.mxu0 0.0
        %3620 = vmatprep.subr.mxu0 0.0
        %3621 = vmatpush1.xpose.msra.mxu0 0.0
        %3622 = vmatprep.subr.mxu0 0.0
        %3623 = vmatpush1.xpose.msra.mxu0 0.0
        %3624 = vmatprep.subr.mxu0 0.0
        %3625 = vmatpush1.xpose.msra.mxu0 0.0
        %3626 = vmatprep.subr.mxu0 0.0
        %3627 = vmatpush1.xpose.msra.mxu0 0.0
        %3628 = vmatprep.subr.mxu0 0.0
        %3629 = vmatpush1.xpose.msra.mxu0 0.0
        %3630 = vmatprep.subr.mxu0 0.0
        %3631 = vmatpush1.xpose.msra.mxu0 0.0
        %3632 = vmatprep.subr.mxu0 0.0
        %3633 = vmatpush1.xpose.msra.mxu0 0.0
        %3634 = vmatprep.subr.mxu0 0.0
        %3635 = vmatpush1.xpose.msra.mxu0 0.0
        %3636 = vmatprep.subr.mxu0 0.0
        %3637 = vmatpush1.xpose.msra.mxu0 0.0
        %3638 = vmatprep.subr.mxu0 0.0
        %3639 = vmatpush1.xpose.msra.mxu0 0.0
        %3640 = vmatprep.subr.mxu0 0.0
        %3641 = vmatpush1.xpose.msra.mxu0 0.0
        %3642 = vmatprep.subr.mxu0 0.0
        %3643 = vmatpush1.xpose.msra.mxu0 0.0
        %3644 = vmatprep.subr.mxu0 0.0
        %3645 = vmatpush1.xpose.msra.mxu0 0.0
        %3646 = vmatprep.subr.mxu0 0.0
        %3647 = vmatpush1.xpose.msra.mxu0 0.0
        %3648 = vmatprep.subr.mxu0 0.0
        %3649 = vmatpush1.xpose.msra.mxu0 0.0
        %3650 = vmatprep.subr.mxu0 0.0
        %3651 = vmatpush1.xpose.msra.mxu0 0.0
        %3652 = vmatprep.subr.mxu0 0.0
        %3653 = vmatpush1.xpose.msra.mxu0 0.0
        %3654 = vmatprep.subr.mxu0 0.0
        %3655 = vmatpush1.xpose.msra.mxu0 0.0
        %3656 = vmatprep.subr.mxu0 0.0
        %3657 = vmatpush1.xpose.msra.mxu0 0.0
        %3658 = vmatprep.subr.mxu0 0.0
        %3659 = vmatpush1.xpose.msra.mxu0 0.0
        %3660 = vmatprep.mubr.f32.mxu0 0.0
        %v3661 = vand.u32 %v3202, 4294901760
        %3662 = vmatmul.mubr.f32.gmra.mrb[0].mxu0 %v3661
        %v3663 = vpop.f32.mrb[0].mxu0
        %v3664 = vadd.f32 %v3591, %v3663
        %v3665 = vpop.f32.mrb[0].mxu0
        %3666 = vdwg.mxu0
        %v3667 = vlaneseq
        %v3668 = vshrl.u32 %v3667, 7
        %v3669 = vsub.s32 0, %v3668
        %v3670 = vrot.slane %v3664, %v3669
        %v3671 = vadd.f32 %v3193, %v3670
        %v3672 = vadd.f32 %v3196, %v3670
        %vm3673 = vcmp.gt.f32.partialorder %v3671, 0.0
        %vm3674 = vcmp.gt.f32.partialorder %v3672, 0.0
        %v3675 = vmul.f32 %v3671, 0.2
        %v3676 = vmul.f32 %v3672, 0.2
        %v3677 = vsel %vm3673, %v3671, %v3675
        %v3678 = vsel %vm3674, %v3672, %v3676
        %v3679 = vsel %vm1593, -1e+12, %v3677
        %v3680 = vsel %vm1594, -1e+12, %v3678
        %v3681 = vsel %vm587, %v3679, -inf
        %3682 = vmax.xlane.f32.xlu0 %v3681
        %v3683 = vpop.xlane.xlu0 %3682
        %v3684 = vsel %vm587, %v3680, -inf
        %3685 = vmax.xlane.f32.xlu0 %v3684
        %v3686 = vpop.xlane.xlu0 %3685
        %v3687 = vsub.f32 %v3679, %v3683
        %v3688 = vsub.f32 %v3680, %v3686
        %v3689 = vmul.f32 %v3687, 1.442695
        %v3690 = vpow.pop %v3689
        %v3691 = vmul.f32 %v3688, 1.442695
        %v3692 = vpow.pop %v3691
        %v3693 = vsel %vm587, %v3690, 0.0
        %3694 = vadd.xlane.f32.xlu0 %v3693
        %v3695 = vpop.xlane.xlu0 %3694
        %v3696 = vsel %vm587, %v3692, 0.0
        %3697 = vadd.xlane.f32.xlu0 %v3696
        %v3698 = vpop.xlane.xlu0 %3697
        %v3699 = vrcp.pop %v3695
        %v3700 = vmul.f32 %v3690, %v3699
        %v3701 = vrcp.pop %v3698
        %v3702 = vmul.f32 %v3692, %v3701
        %3703 = vrot.lane.b32.xlu0 %v1087, 64
        %v3704 = vpop.permute.xlu0 %3703
        %3705 = vrot.lane.b32.xlu0 %v1093, 64
        %v3706 = vpop.permute.xlu0 %3705
        %v3710 = vsel %vm587, %v3700, 0
        %v3713 = vsel %vm587, %v3702, 0
        %3715 = vmatprep.subr.mxu0 0.0
        %v3716 = vand.u32 %v3704, 4294901760
        %3717 = vmatpush1.msra.mxu0 %v3716
        %3718 = vmatprep.subr.mxu0 0.0
        %v3719 = vand.u32 %v3706, 4294901760
        %3720 = vmatpush1.msra.mxu0 %v3719
        %3721 = vmatprep.subr.mxu0 0.0
        %3722 = vmatpush1.msra.mxu0 0.0
        %3723 = vmatprep.subr.mxu0 0.0
        %3724 = vmatpush1.msra.mxu0 0.0
        %3725 = vmatprep.subr.mxu0 0.0
        %3726 = vmatpush1.msra.mxu0 0.0
        %3727 = vmatprep.subr.mxu0 0.0
        %3728 = vmatpush1.msra.mxu0 0.0
        %3729 = vmatprep.subr.mxu0 0.0
        %3730 = vmatpush1.msra.mxu0 0.0
        %3731 = vmatprep.subr.mxu0 0.0
        %3732 = vmatpush1.msra.mxu0 0.0
        %3733 = vmatprep.subr.mxu0 0.0
        %3734 = vmatpush1.msra.mxu0 0.0
        %3735 = vmatprep.subr.mxu0 0.0
        %3736 = vmatpush1.msra.mxu0 0.0
        %3737 = vmatprep.subr.mxu0 0.0
        %3738 = vmatpush1.msra.mxu0 0.0
        %3739 = vmatprep.subr.mxu0 0.0
        %3740 = vmatpush1.msra.mxu0 0.0
        %3741 = vmatprep.subr.mxu0 0.0
        %3742 = vmatpush1.msra.mxu0 0.0
        %3743 = vmatprep.subr.mxu0 0.0
        %3744 = vmatpush1.msra.mxu0 0.0
        %3745 = vmatprep.subr.mxu0 0.0
        %3746 = vmatpush1.msra.mxu0 0.0
        %3747 = vmatprep.subr.mxu0 0.0
        %3748 = vmatpush1.msra.mxu0 0.0
        %3749 = vmatprep.subr.mxu0 0.0
        %3750 = vmatpush1.msra.mxu0 0.0
        %3751 = vmatprep.subr.mxu0 0.0
        %3752 = vmatpush1.msra.mxu0 0.0
        %3753 = vmatprep.subr.mxu0 0.0
        %3754 = vmatpush1.msra.mxu0 0.0
        %3755 = vmatprep.subr.mxu0 0.0
        %3756 = vmatpush1.msra.mxu0 0.0
        %3757 = vmatprep.subr.mxu0 0.0
        %3758 = vmatpush1.msra.mxu0 0.0
        %3759 = vmatprep.subr.mxu0 0.0
        %3760 = vmatpush1.msra.mxu0 0.0
        %3761 = vmatprep.subr.mxu0 0.0
        %3762 = vmatpush1.msra.mxu0 0.0
        %3763 = vmatprep.subr.mxu0 0.0
        %3764 = vmatpush1.msra.mxu0 0.0
        %3765 = vmatprep.subr.mxu0 0.0
        %3766 = vmatpush1.msra.mxu0 0.0
        %3767 = vmatprep.subr.mxu0 0.0
        %3768 = vmatpush1.msra.mxu0 0.0
        %3769 = vmatprep.subr.mxu0 0.0
        %3770 = vmatpush1.msra.mxu0 0.0
        %3771 = vmatprep.subr.mxu0 0.0
        %3772 = vmatpush1.msra.mxu0 0.0
        %3773 = vmatprep.subr.mxu0 0.0
        %3774 = vmatpush1.msra.mxu0 0.0
        %3775 = vmatprep.subr.mxu0 0.0
        %3776 = vmatpush1.msra.mxu0 0.0
        %3777 = vmatprep.subr.mxu0 0.0
        %3778 = vmatpush1.msra.mxu0 0.0
        %3779 = vmatprep.subr.mxu0 0.0
        %3780 = vmatpush1.msra.mxu0 0.0
        %3781 = vmatprep.mubr.f32.mxu0 0.0
        %v3782 = vand.u32 %v3710, 4294901760
        %v3783 = vsub.f32 %v3710, %v3782
        %v3784 = vand.u32 %v3783, 4294901760
        %v3785 = vsub.f32 %v3783, %v3784
        %v3786 = vand.u32 %v3785, 4294901760
        %3787 = vmatmul.mubr.f32.gmra.mrb[0].mxu0 %v3786
        %v3788 = vpop.f32.mrb[0].mxu0
        %v3789 = vadd.f32 0.0, %v3788
        %v3790 = vpop.f32.mrb[0].mxu0
        %3791 = vmatprep.mubr.f32.mxu0 0.0
        %v3792 = vand.u32 %v3713, 4294901760
        %v3793 = vsub.f32 %v3713, %v3792
        %v3794 = vand.u32 %v3793, 4294901760
        %v3795 = vsub.f32 %v3793, %v3794
        %v3796 = vand.u32 %v3795, 4294901760
        %3797 = vmatmul.mubr.f32.gmra.mrb[0].mxu0 %v3796
        %v3798 = vpop.f32.mrb[0].mxu0
        %v3799 = vadd.f32 0.0, %v3798
        %v3800 = vpop.f32.mrb[0].mxu0
        %3801 = vdwg.mxu0
        %3802 = vmatprep.subr.mxu0 0.0
        %v3803 = vand.u32 %v3704, 4294901760
        %v3804 = vsub.f32 %v3704, %v3803
        %v3805 = vand.u32 %v3804, 4294901760
        %v3806 = vsub.f32 %v3804, %v3805
        %v3807 = vand.u32 %v3806, 4294901760
        %3808 = vmatpush1.msra.mxu0 %v3807
        %3809 = vmatprep.subr.mxu0 0.0
        %v3810 = vand.u32 %v3706, 4294901760
        %v3811 = vsub.f32 %v3706, %v3810
        %v3812 = vand.u32 %v3811, 4294901760
        %v3813 = vsub.f32 %v3811, %v3812
        %v3814 = vand.u32 %v3813, 4294901760
        %3815 = vmatpush1.msra.mxu0 %v3814
        %3816 = vmatprep.subr.mxu0 0.0
        %3817 = vmatpush1.msra.mxu0 0.0
        %3818 = vmatprep.subr.mxu0 0.0
        %3819 = vmatpush1.msra.mxu0 0.0
        %3820 = vmatprep.subr.mxu0 0.0
        %3821 = vmatpush1.msra.mxu0 0.0
        %3822 = vmatprep.subr.mxu0 0.0
        %3823 = vmatpush1.msra.mxu0 0.0
        %3824 = vmatprep.subr.mxu0 0.0
        %3825 = vmatpush1.msra.mxu0 0.0
        %3826 = vmatprep.subr.mxu0 0.0
        %3827 = vmatpush1.msra.mxu0 0.0
        %3828 = vmatprep.subr.mxu0 0.0
        %3829 = vmatpush1.msra.mxu0 0.0
        %3830 = vmatprep.subr.mxu0 0.0
        %3831 = vmatpush1.msra.mxu0 0.0
        %3832 = vmatprep.subr.mxu0 0.0
        %3833 = vmatpush1.msra.mxu0 0.0
        %3834 = vmatprep.subr.mxu0 0.0
        %3835 = vmatpush1.msra.mxu0 0.0
        %3836 = vmatprep.subr.mxu0 0.0
        %3837 = vmatpush1.msra.mxu0 0.0
        %3838 = vmatprep.subr.mxu0 0.0
        %3839 = vmatpush1.msra.mxu0 0.0
        %3840 = vmatprep.subr.mxu0 0.0
        %3841 = vmatpush1.msra.mxu0 0.0
        %3842 = vmatprep.subr.mxu0 0.0
        %3843 = vmatpush1.msra.mxu0 0.0
        %3844 = vmatprep.subr.mxu0 0.0
        %3845 = vmatpush1.msra.mxu0 0.0
        %3846 = vmatprep.subr.mxu0 0.0
        %3847 = vmatpush1.msra.mxu0 0.0
        %3848 = vmatprep.subr.mxu0 0.0
        %3849 = vmatpush1.msra.mxu0 0.0
        %3850 = vmatprep.subr.mxu0 0.0
        %3851 = vmatpush1.msra.mxu0 0.0
        %3852 = vmatprep.subr.mxu0 0.0
        %3853 = vmatpush1.msra.mxu0 0.0
        %3854 = vmatprep.subr.mxu0 0.0
        %3855 = vmatpush1.msra.mxu0 0.0
        %3856 = vmatprep.subr.mxu0 0.0
        %3857 = vmatpush1.msra.mxu0 0.0
        %3858 = vmatprep.subr.mxu0 0.0
        %3859 = vmatpush1.msra.mxu0 0.0
        %3860 = vmatprep.subr.mxu0 0.0
        %3861 = vmatpush1.msra.mxu0 0.0
        %3862 = vmatprep.subr.mxu0 0.0
        %3863 = vmatpush1.msra.mxu0 0.0
        %3864 = vmatprep.subr.mxu0 0.0
        %3865 = vmatpush1.msra.mxu0 0.0
        %3866 = vmatprep.subr.mxu0 0.0
        %3867 = vmatpush1.msra.mxu0 0.0
        %3868 = vmatprep.subr.mxu0 0.0
        %3869 = vmatpush1.msra.mxu0 0.0
        %3870 = vmatprep.subr.mxu0 0.0
        %3871 = vmatpush1.msra.mxu0 0.0
        %3872 = vmatprep.subr.mxu0 0.0
        %3873 = vmatpush1.msra.mxu0 0.0
        %3874 = vmatprep.subr.mxu0 0.0
        %3875 = vmatpush1.msra.mxu0 0.0
        %3876 = vmatprep.mubr.f32.mxu0 0.0
        %v3877 = vand.u32 %v3710, 4294901760
        %3878 = vmatmul.mubr.f32.gmra.mrb[0].mxu0 %v3877
        %v3879 = vpop.f32.mrb[0].mxu0
        %v3880 = vadd.f32 %v3789, %v3879
        %v3881 = vpop.f32.mrb[0].mxu0
        %3882 = vmatprep.mubr.f32.mxu0 0.0
        %v3883 = vand.u32 %v3713, 4294901760
        %3884 = vmatmul.mubr.f32.gmra.mrb[0].mxu0 %v3883
        %v3885 = vpop.f32.mrb[0].mxu0
        %v3886 = vadd.f32 %v3799, %v3885
        %v3887 = vpop.f32.mrb[0].mxu0
        %3888 = vdwg.mxu0
        %3889 = vmatprep.subr.mxu0 0.0
        %v3890 = vand.u32 %v3704, 4294901760
        %v3891 = vsub.f32 %v3704, %v3890
        %3892 = vmatpush1.msra.mxu0 %v3891
        %3893 = vmatprep.subr.mxu0 0.0
        %v3894 = vand.u32 %v3706, 4294901760
        %v3895 = vsub.f32 %v3706, %v3894
        %3896 = vmatpush1.msra.mxu0 %v3895
        %3897 = vmatprep.subr.mxu0 0.0
        %3898 = vmatpush1.msra.mxu0 0.0
        %3899 = vmatprep.subr.mxu0 0.0
        %3900 = vmatpush1.msra.mxu0 0.0
        %3901 = vmatprep.subr.mxu0 0.0
        %3902 = vmatpush1.msra.mxu0 0.0
        %3903 = vmatprep.subr.mxu0 0.0
        %3904 = vmatpush1.msra.mxu0 0.0
        %3905 = vmatprep.subr.mxu0 0.0
        %3906 = vmatpush1.msra.mxu0 0.0
        %3907 = vmatprep.subr.mxu0 0.0
        %3908 = vmatpush1.msra.mxu0 0.0
        %3909 = vmatprep.subr.mxu0 0.0
        %3910 = vmatpush1.msra.mxu0 0.0
        %3911 = vmatprep.subr.mxu0 0.0
        %3912 = vmatpush1.msra.mxu0 0.0
        %3913 = vmatprep.subr.mxu0 0.0
        %3914 = vmatpush1.msra.mxu0 0.0
        %3915 = vmatprep.subr.mxu0 0.0
        %3916 = vmatpush1.msra.mxu0 0.0
        %3917 = vmatprep.subr.mxu0 0.0
        %3918 = vmatpush1.msra.mxu0 0.0
        %3919 = vmatprep.subr.mxu0 0.0
        %3920 = vmatpush1.msra.mxu0 0.0
        %3921 = vmatprep.subr.mxu0 0.0
        %3922 = vmatpush1.msra.mxu0 0.0
        %3923 = vmatprep.subr.mxu0 0.0
        %3924 = vmatpush1.msra.mxu0 0.0
        %3925 = vmatprep.subr.mxu0 0.0
        %3926 = vmatpush1.msra.mxu0 0.0
        %3927 = vmatprep.subr.mxu0 0.0
        %3928 = vmatpush1.msra.mxu0 0.0
        %3929 = vmatprep.subr.mxu0 0.0
        %3930 = vmatpush1.msra.mxu0 0.0
        %3931 = vmatprep.subr.mxu0 0.0
        %3932 = vmatpush1.msra.mxu0 0.0
        %3933 = vmatprep.subr.mxu0 0.0
        %3934 = vmatpush1.msra.mxu0 0.0
        %3935 = vmatprep.subr.mxu0 0.0
        %3936 = vmatpush1.msra.mxu0 0.0
        %3937 = vmatprep.subr.mxu0 0.0
        %3938 = vmatpush1.msra.mxu0 0.0
        %3939 = vmatprep.subr.mxu0 0.0
        %3940 = vmatpush1.msra.mxu0 0.0
        %3941 = vmatprep.subr.mxu0 0.0
        %3942 = vmatpush1.msra.mxu0 0.0
        %3943 = vmatprep.subr.mxu0 0.0
        %3944 = vmatpush1.msra.mxu0 0.0
        %3945 = vmatprep.subr.mxu0 0.0
        %3946 = vmatpush1.msra.mxu0 0.0
        %3947 = vmatprep.subr.mxu0 0.0
        %3948 = vmatpush1.msra.mxu0 0.0
        %3949 = vmatprep.subr.mxu0 0.0
        %3950 = vmatpush1.msra.mxu0 0.0
        %3951 = vmatprep.subr.mxu0 0.0
        %3952 = vmatpush1.msra.mxu0 0.0
        %3953 = vmatprep.subr.mxu0 0.0
        %3954 = vmatpush1.msra.mxu0 0.0
        %3955 = vmatprep.subr.mxu0 0.0
        %3956 = vmatpush1.msra.mxu0 0.0
        %3957 = vmatprep.mubr.f32.mxu0 0.0
        %v3958 = vand.u32 %v3710, 4294901760
        %v3959 = vsub.f32 %v3710, %v3958
        %3960 = vmatmul.mubr.f32.gmra.mrb[0].mxu0 %v3959
        %v3961 = vpop.f32.mrb[0].mxu0
        %v3962 = vadd.f32 %v3880, %v3961
        %v3963 = vpop.f32.mrb[0].mxu0
        %3964 = vmatprep.mubr.f32.mxu0 0.0
        %v3965 = vand.u32 %v3713, 4294901760
        %v3966 = vsub.f32 %v3713, %v3965
        %3967 = vmatmul.mubr.f32.gmra.mrb[0].mxu0 %v3966
        %v3968 = vpop.f32.mrb[0].mxu0
        %v3969 = vadd.f32 %v3886, %v3968
        %v3970 = vpop.f32.mrb[0].mxu0
        %3971 = vdwg.mxu0
        %3972 = vmatprep.subr.mxu0 0.0
        %v3973 = vand.u32 %v3704, 4294901760
        %3974 = vmatpush1.msra.mxu0 %v3973
        %3975 = vmatprep.subr.mxu0 0.0
        %v3976 = vand.u32 %v3706, 4294901760
        %3977 = vmatpush1.msra.mxu0 %v3976
        %3978 = vmatprep.subr.mxu0 0.0
        %3979 = vmatpush1.msra.mxu0 0.0
        %3980 = vmatprep.subr.mxu0 0.0
        %3981 = vmatpush1.msra.mxu0 0.0
        %3982 = vmatprep.subr.mxu0 0.0
        %3983 = vmatpush1.msra.mxu0 0.0
        %3984 = vmatprep.subr.mxu0 0.0
        %3985 = vmatpush1.msra.mxu0 0.0
        %3986 = vmatprep.subr.mxu0 0.0
        %3987 = vmatpush1.msra.mxu0 0.0
        %3988 = vmatprep.subr.mxu0 0.0
        %3989 = vmatpush1.msra.mxu0 0.0
        %3990 = vmatprep.subr.mxu0 0.0
        %3991 = vmatpush1.msra.mxu0 0.0
        %3992 = vmatprep.subr.mxu0 0.0
        %3993 = vmatpush1.msra.mxu0 0.0
        %3994 = vmatprep.subr.mxu0 0.0
        %3995 = vmatpush1.msra.mxu0 0.0
        %3996 = vmatprep.subr.mxu0 0.0
        %3997 = vmatpush1.msra.mxu0 0.0
        %3998 = vmatprep.subr.mxu0 0.0
        %3999 = vmatpush1.msra.mxu0 0.0
        %4000 = vmatprep.subr.mxu0 0.0
        %4001 = vmatpush1.msra.mxu0 0.0
        %4002 = vmatprep.subr.mxu0 0.0
        %4003 = vmatpush1.msra.mxu0 0.0
        %4004 = vmatprep.subr.mxu0 0.0
        %4005 = vmatpush1.msra.mxu0 0.0
        %4006 = vmatprep.subr.mxu0 0.0
        %4007 = vmatpush1.msra.mxu0 0.0
        %4008 = vmatprep.subr.mxu0 0.0
        %4009 = vmatpush1.msra.mxu0 0.0
        %4010 = vmatprep.subr.mxu0 0.0
        %4011 = vmatpush1.msra.mxu0 0.0
        %4012 = vmatprep.subr.mxu0 0.0
        %4013 = vmatpush1.msra.mxu0 0.0
        %4014 = vmatprep.subr.mxu0 0.0
        %4015 = vmatpush1.msra.mxu0 0.0
        %4016 = vmatprep.subr.mxu0 0.0
        %4017 = vmatpush1.msra.mxu0 0.0
        %4018 = vmatprep.subr.mxu0 0.0
        %4019 = vmatpush1.msra.mxu0 0.0
        %4020 = vmatprep.subr.mxu0 0.0
        %4021 = vmatpush1.msra.mxu0 0.0
        %4022 = vmatprep.subr.mxu0 0.0
        %4023 = vmatpush1.msra.mxu0 0.0
        %4024 = vmatprep.subr.mxu0 0.0
        %4025 = vmatpush1.msra.mxu0 0.0
        %4026 = vmatprep.subr.mxu0 0.0
        %4027 = vmatpush1.msra.mxu0 0.0
        %4028 = vmatprep.subr.mxu0 0.0
        %4029 = vmatpush1.msra.mxu0 0.0
        %4030 = vmatprep.subr.mxu0 0.0
        %4031 = vmatpush1.msra.mxu0 0.0
        %4032 = vmatprep.subr.mxu0 0.0
        %4033 = vmatpush1.msra.mxu0 0.0
        %4034 = vmatprep.subr.mxu0 0.0
        %4035 = vmatpush1.msra.mxu0 0.0
        %4036 = vmatprep.subr.mxu0 0.0
        %4037 = vmatpush1.msra.mxu0 0.0
        %4038 = vmatprep.mubr.f32.mxu0 0.0
        %v4039 = vand.u32 %v3710, 4294901760
        %v4040 = vsub.f32 %v3710, %v4039
        %v4041 = vand.u32 %v4040, 4294901760
        %4042 = vmatmul.mubr.f32.gmra.mrb[0].mxu0 %v4041
        %v4043 = vpop.f32.mrb[0].mxu0
        %v4044 = vadd.f32 %v3962, %v4043
        %v4045 = vpop.f32.mrb[0].mxu0
        %4046 = vmatprep.mubr.f32.mxu0 0.0
        %v4047 = vand.u32 %v3713, 4294901760
        %v4048 = vsub.f32 %v3713, %v4047
        %v4049 = vand.u32 %v4048, 4294901760
        %4050 = vmatmul.mubr.f32.gmra.mrb[0].mxu0 %v4049
        %v4051 = vpop.f32.mrb[0].mxu0
        %v4052 = vadd.f32 %v3969, %v4051
        %v4053 = vpop.f32.mrb[0].mxu0
        %4054 = vdwg.mxu0
        %4055 = vmatprep.subr.mxu0 0.0
        %v4056 = vand.u32 %v3704, 4294901760
        %v4057 = vsub.f32 %v3704, %v4056
        %v4058 = vand.u32 %v4057, 4294901760
        %4059 = vmatpush1.msra.mxu0 %v4058
        %4060 = vmatprep.subr.mxu0 0.0
        %v4061 = vand.u32 %v3706, 4294901760
        %v4062 = vsub.f32 %v3706, %v4061
        %v4063 = vand.u32 %v4062, 4294901760
        %4064 = vmatpush1.msra.mxu0 %v4063
        %4065 = vmatprep.subr.mxu0 0.0
        %4066 = vmatpush1.msra.mxu0 0.0
        %4067 = vmatprep.subr.mxu0 0.0
        %4068 = vmatpush1.msra.mxu0 0.0
        %4069 = vmatprep.subr.mxu0 0.0
        %4070 = vmatpush1.msra.mxu0 0.0
        %4071 = vmatprep.subr.mxu0 0.0
        %4072 = vmatpush1.msra.mxu0 0.0
        %4073 = vmatprep.subr.mxu0 0.0
        %4074 = vmatpush1.msra.mxu0 0.0
        %4075 = vmatprep.subr.mxu0 0.0
        %4076 = vmatpush1.msra.mxu0 0.0
        %4077 = vmatprep.subr.mxu0 0.0
        %4078 = vmatpush1.msra.mxu0 0.0
        %4079 = vmatprep.subr.mxu0 0.0
        %4080 = vmatpush1.msra.mxu0 0.0
        %4081 = vmatprep.subr.mxu0 0.0
        %4082 = vmatpush1.msra.mxu0 0.0
        %4083 = vmatprep.subr.mxu0 0.0
        %4084 = vmatpush1.msra.mxu0 0.0
        %4085 = vmatprep.subr.mxu0 0.0
        %4086 = vmatpush1.msra.mxu0 0.0
        %4087 = vmatprep.subr.mxu0 0.0
        %4088 = vmatpush1.msra.mxu0 0.0
        %4089 = vmatprep.subr.mxu0 0.0
        %4090 = vmatpush1.msra.mxu0 0.0
        %4091 = vmatprep.subr.mxu0 0.0
        %4092 = vmatpush1.msra.mxu0 0.0
        %4093 = vmatprep.subr.mxu0 0.0
        %4094 = vmatpush1.msra.mxu0 0.0
        %4095 = vmatprep.subr.mxu0 0.0
        %4096 = vmatpush1.msra.mxu0 0.0
        %4097 = vmatprep.subr.mxu0 0.0
        %4098 = vmatpush1.msra.mxu0 0.0
        %4099 = vmatprep.subr.mxu0 0.0
        %4100 = vmatpush1.msra.mxu0 0.0
        %4101 = vmatprep.subr.mxu0 0.0
        %4102 = vmatpush1.msra.mxu0 0.0
        %4103 = vmatprep.subr.mxu0 0.0
        %4104 = vmatpush1.msra.mxu0 0.0
        %4105 = vmatprep.subr.mxu0 0.0
        %4106 = vmatpush1.msra.mxu0 0.0
        %4107 = vmatprep.subr.mxu0 0.0
        %4108 = vmatpush1.msra.mxu0 0.0
        %4109 = vmatprep.subr.mxu0 0.0
        %4110 = vmatpush1.msra.mxu0 0.0
        %4111 = vmatprep.subr.mxu0 0.0
        %4112 = vmatpush1.msra.mxu0 0.0
        %4113 = vmatprep.subr.mxu0 0.0
        %4114 = vmatpush1.msra.mxu0 0.0
        %4115 = vmatprep.subr.mxu0 0.0
        %4116 = vmatpush1.msra.mxu0 0.0
        %4117 = vmatprep.subr.mxu0 0.0
        %4118 = vmatpush1.msra.mxu0 0.0
        %4119 = vmatprep.subr.mxu0 0.0
        %4120 = vmatpush1.msra.mxu0 0.0
        %4121 = vmatprep.subr.mxu0 0.0
        %4122 = vmatpush1.msra.mxu0 0.0
        %4123 = vmatprep.subr.mxu0 0.0
        %4124 = vmatpush1.msra.mxu0 0.0
        %4125 = vmatprep.mubr.f32.mxu0 0.0
        %v4126 = vand.u32 %v3710, 4294901760
        %4127 = vmatmul.mubr.f32.gmra.mrb[0].mxu0 %v4126
        %v4128 = vpop.f32.mrb[0].mxu0
        %v4129 = vadd.f32 %v4044, %v4128
        %v4130 = vpop.f32.mrb[0].mxu0
        %4131 = vmatprep.mubr.f32.mxu0 0.0
        %v4132 = vand.u32 %v3713, 4294901760
        %4133 = vmatmul.mubr.f32.gmra.mrb[0].mxu0 %v4132
        %v4134 = vpop.f32.mrb[0].mxu0
        %v4135 = vadd.f32 %v4052, %v4134
        %v4136 = vpop.f32.mrb[0].mxu0
        %4137 = vdwg.mxu0
        %4138 = vmatprep.subr.mxu0 0.0
        %v4139 = vand.u32 %v3704, 4294901760
        %4140 = vmatpush1.msra.mxu0 %v4139
        %4141 = vmatprep.subr.mxu0 0.0
        %v4142 = vand.u32 %v3706, 4294901760
        %4143 = vmatpush1.msra.mxu0 %v4142
        %4144 = vmatprep.subr.mxu0 0.0
        %4145 = vmatpush1.msra.mxu0 0.0
        %4146 = vmatprep.subr.mxu0 0.0
        %4147 = vmatpush1.msra.mxu0 0.0
        %4148 = vmatprep.subr.mxu0 0.0
        %4149 = vmatpush1.msra.mxu0 0.0
        %4150 = vmatprep.subr.mxu0 0.0
        %4151 = vmatpush1.msra.mxu0 0.0
        %4152 = vmatprep.subr.mxu0 0.0
        %4153 = vmatpush1.msra.mxu0 0.0
        %4154 = vmatprep.subr.mxu0 0.0
        %4155 = vmatpush1.msra.mxu0 0.0
        %4156 = vmatprep.subr.mxu0 0.0
        %4157 = vmatpush1.msra.mxu0 0.0
        %4158 = vmatprep.subr.mxu0 0.0
        %4159 = vmatpush1.msra.mxu0 0.0
        %4160 = vmatprep.subr.mxu0 0.0
        %4161 = vmatpush1.msra.mxu0 0.0
        %4162 = vmatprep.subr.mxu0 0.0
        %4163 = vmatpush1.msra.mxu0 0.0
        %4164 = vmatprep.subr.mxu0 0.0
        %4165 = vmatpush1.msra.mxu0 0.0
        %4166 = vmatprep.subr.mxu0 0.0
        %4167 = vmatpush1.msra.mxu0 0.0
        %4168 = vmatprep.subr.mxu0 0.0
        %4169 = vmatpush1.msra.mxu0 0.0
        %4170 = vmatprep.subr.mxu0 0.0
        %4171 = vmatpush1.msra.mxu0 0.0
        %4172 = vmatprep.subr.mxu0 0.0
        %4173 = vmatpush1.msra.mxu0 0.0
        %4174 = vmatprep.subr.mxu0 0.0
        %4175 = vmatpush1.msra.mxu0 0.0
        %4176 = vmatprep.subr.mxu0 0.0
        %4177 = vmatpush1.msra.mxu0 0.0
        %4178 = vmatprep.subr.mxu0 0.0
        %4179 = vmatpush1.msra.mxu0 0.0
        %4180 = vmatprep.subr.mxu0 0.0
        %4181 = vmatpush1.msra.mxu0 0.0
        %4182 = vmatprep.subr.mxu0 0.0
        %4183 = vmatpush1.msra.mxu0 0.0
        %4184 = vmatprep.subr.mxu0 0.0
        %4185 = vmatpush1.msra.mxu0 0.0
        %4186 = vmatprep.subr.mxu0 0.0
        %4187 = vmatpush1.msra.mxu0 0.0
        %4188 = vmatprep.subr.mxu0 0.0
        %4189 = vmatpush1.msra.mxu0 0.0
        %4190 = vmatprep.subr.mxu0 0.0
        %4191 = vmatpush1.msra.mxu0 0.0
        %4192 = vmatprep.subr.mxu0 0.0
        %4193 = vmatpush1.msra.mxu0 0.0
        %4194 = vmatprep.subr.mxu0 0.0
        %4195 = vmatpush1.msra.mxu0 0.0
        %4196 = vmatprep.subr.mxu0 0.0
        %4197 = vmatpush1.msra.mxu0 0.0
        %4198 = vmatprep.subr.mxu0 0.0
        %4199 = vmatpush1.msra.mxu0 0.0
        %4200 = vmatprep.subr.mxu0 0.0
        %4201 = vmatpush1.msra.mxu0 0.0
        %4202 = vmatprep.subr.mxu0 0.0
        %4203 = vmatpush1.msra.mxu0 0.0
        %4204 = vmatprep.mubr.f32.mxu0 0.0
        %v4205 = vand.u32 %v3710, 4294901760
        %4206 = vmatmul.mubr.f32.gmra.mrb[0].mxu0 %v4205
        %v4207 = vpop.f32.mrb[0].mxu0
        %v4208 = vadd.f32 %v4129, %v4207
        %v4209 = vpop.f32.mrb[0].mxu0
        %4210 = vmatprep.mubr.f32.mxu0 0.0
        %v4211 = vand.u32 %v3713, 4294901760
        %4212 = vmatmul.mubr.f32.gmra.mrb[0].mxu0 %v4211
        %v4213 = vpop.f32.mrb[0].mxu0
        %v4214 = vadd.f32 %v4135, %v4213
        %v4215 = vpop.f32.mrb[0].mxu0
        %4216 = vdwg.mxu0
        %v4217 = vlaneseq
        %v4218 = vshrl.u32 %v4217, 7
        %v4219 = vsub.s32 3, %v4218
        %v4220 = vrot.slane %v1098, %v4219
        %4222 = vrot.lane.b32.xlu0 %v4220, 96
        %v4223 = vpop.permute.xlu0 %4222
        %v4225 = vmul.f32 %v1096, %v4223
        %v4226 = vmul.f32 %v1097, %v4223
        %4229 = vrot.lane.b32.xlu0 %v4225, 32
        %v4230 = vpop.permute.xlu0 %4229
        %4231 = vrot.lane.b32.xlu0 %v4226, 32
        %v4232 = vpop.permute.xlu0 %4231
        %v4235 = vsel %vm1106, %v4230, 0.0
        %4236 = vadd.xlane.f32.xlu0 %v4235
        %v4237 = vpop.xlane.xlu0 %4236
        %v4238 = vsel %vm1106, %v4232, 0.0
        %4239 = vadd.xlane.f32.xlu0 %v4238
        %v4240 = vpop.xlane.xlu0 %4239
        %v4241 = vrot.slane %v1099, 3
        %4242 = vrot.lane.b32.xlu0 %v1096, 32
        %v4243 = vpop.permute.xlu0 %4242
        %4244 = vrot.lane.b32.xlu0 %v1097, 32
        %v4245 = vpop.permute.xlu0 %4244
        %v4246 = vsel %vm1106, %v4241, 0
        %v4248 = vsel %vm1106, %v4243, 0
        %v4250 = vsel %vm1106, %v4245, 0
        %4252 = vmatprep.subr.mxu0 0.0
        %v4253 = vand.u32 %v4248, 4294901760
        %4254 = vmatpush1.xpose.msra.mxu0 %v4253
        %4255 = vmatprep.subr.mxu0 0.0
        %v4256 = vand.u32 %v4250, 4294901760
        %4257 = vmatpush1.xpose.msra.mxu0 %v4256
        %4258 = vmatprep.subr.mxu0 0.0
        %4259 = vmatpush1.xpose.msra.mxu0 0.0
        %4260 = vmatprep.subr.mxu0 0.0
        %4261 = vmatpush1.xpose.msra.mxu0 0.0
        %4262 = vmatprep.subr.mxu0 0.0
        %4263 = vmatpush1.xpose.msra.mxu0 0.0
        %4264 = vmatprep.subr.mxu0 0.0
        %4265 = vmatpush1.xpose.msra.mxu0 0.0
        %4266 = vmatprep.subr.mxu0 0.0
        %4267 = vmatpush1.xpose.msra.mxu0 0.0
        %4268 = vmatprep.subr.mxu0 0.0
        %4269 = vmatpush1.xpose.msra.mxu0 0.0
        %4270 = vmatprep.subr.mxu0 0.0
        %4271 = vmatpush1.xpose.msra.mxu0 0.0
        %4272 = vmatprep.subr.mxu0 0.0
        %4273 = vmatpush1.xpose.msra.mxu0 0.0
        %4274 = vmatprep.subr.mxu0 0.0
        %4275 = vmatpush1.xpose.msra.mxu0 0.0
        %4276 = vmatprep.subr.mxu0 0.0
        %4277 = vmatpush1.xpose.msra.mxu0 0.0
        %4278 = vmatprep.subr.mxu0 0.0
        %4279 = vmatpush1.xpose.msra.mxu0 0.0
        %4280 = vmatprep.subr.mxu0 0.0
        %4281 = vmatpush1.xpose.msra.mxu0 0.0
        %4282 = vmatprep.subr.mxu0 0.0
        %4283 = vmatpush1.xpose.msra.mxu0 0.0
        %4284 = vmatprep.subr.mxu0 0.0
        %4285 = vmatpush1.xpose.msra.mxu0 0.0
        %4286 = vmatprep.subr.mxu0 0.0
        %4287 = vmatpush1.xpose.msra.mxu0 0.0
        %4288 = vmatprep.subr.mxu0 0.0
        %4289 = vmatpush1.xpose.msra.mxu0 0.0
        %4290 = vmatprep.subr.mxu0 0.0
        %4291 = vmatpush1.xpose.msra.mxu0 0.0
        %4292 = vmatprep.subr.mxu0 0.0
        %4293 = vmatpush1.xpose.msra.mxu0 0.0
        %4294 = vmatprep.subr.mxu0 0.0
        %4295 = vmatpush1.xpose.msra.mxu0 0.0
        %4296 = vmatprep.subr.mxu0 0.0
        %4297 = vmatpush1.xpose.msra.mxu0 0.0
        %4298 = vmatprep.subr.mxu0 0.0
        %4299 = vmatpush1.xpose.msra.mxu0 0.0
        %4300 = vmatprep.subr.mxu0 0.0
        %4301 = vmatpush1.xpose.msra.mxu0 0.0
        %4302 = vmatprep.subr.mxu0 0.0
        %4303 = vmatpush1.xpose.msra.mxu0 0.0
        %4304 = vmatprep.subr.mxu0 0.0
        %4305 = vmatpush1.xpose.msra.mxu0 0.0
        %4306 = vmatprep.subr.mxu0 0.0
        %4307 = vmatpush1.xpose.msra.mxu0 0.0
        %4308 = vmatprep.subr.mxu0 0.0
        %4309 = vmatpush1.xpose.msra.mxu0 0.0
        %4310 = vmatprep.subr.mxu0 0.0
        %4311 = vmatpush1.xpose.msra.mxu0 0.0
        %4312 = vmatprep.subr.mxu0 0.0
        %4313 = vmatpush1.xpose.msra.mxu0 0.0
        %4314 = vmatprep.subr.mxu0 0.0
        %4315 = vmatpush1.xpose.msra.mxu0 0.0
        %4316 = vmatprep.subr.mxu0 0.0
        %4317 = vmatpush1.xpose.msra.mxu0 0.0
        %4318 = vmatprep.mubr.f32.mxu0 0.0
        %v4319 = vand.u32 %v4246, 4294901760
        %v4320 = vsub.f32 %v4246, %v4319
        %v4321 = vand.u32 %v4320, 4294901760
        %v4322 = vsub.f32 %v4320, %v4321
        %v4323 = vand.u32 %v4322, 4294901760
        %4324 = vmatmul.mubr.f32.gmra.mrb[0].mxu0 %v4323
        %v4325 = vpop.f32.mrb[0].mxu0
        %v4326 = vadd.f32 0.0, %v4325
        %v4327 = vpop.f32.mrb[0].mxu0
        %4328 = vdwg.mxu0
        %4329 = vmatprep.subr.mxu0 0.0
        %v4330 = vand.u32 %v4248, 4294901760
        %v4331 = vsub.f32 %v4248, %v4330
        %v4332 = vand.u32 %v4331, 4294901760
        %v4333 = vsub.f32 %v4331, %v4332
        %v4334 = vand.u32 %v4333, 4294901760
        %4335 = vmatpush1.xpose.msra.mxu0 %v4334
        %4336 = vmatprep.subr.mxu0 0.0
        %v4337 = vand.u32 %v4250, 4294901760
        %v4338 = vsub.f32 %v4250, %v4337
        %v4339 = vand.u32 %v4338, 4294901760
        %v4340 = vsub.f32 %v4338, %v4339
        %v4341 = vand.u32 %v4340, 4294901760
        %4342 = vmatpush1.xpose.msra.mxu0 %v4341
        %4343 = vmatprep.subr.mxu0 0.0
        %4344 = vmatpush1.xpose.msra.mxu0 0.0
        %4345 = vmatprep.subr.mxu0 0.0
        %4346 = vmatpush1.xpose.msra.mxu0 0.0
        %4347 = vmatprep.subr.mxu0 0.0
        %4348 = vmatpush1.xpose.msra.mxu0 0.0
        %4349 = vmatprep.subr.mxu0 0.0
        %4350 = vmatpush1.xpose.msra.mxu0 0.0
        %4351 = vmatprep.subr.mxu0 0.0
        %4352 = vmatpush1.xpose.msra.mxu0 0.0
        %4353 = vmatprep.subr.mxu0 0.0
        %4354 = vmatpush1.xpose.msra.mxu0 0.0
        %4355 = vmatprep.subr.mxu0 0.0
        %4356 = vmatpush1.xpose.msra.mxu0 0.0
        %4357 = vmatprep.subr.mxu0 0.0
        %4358 = vmatpush1.xpose.msra.mxu0 0.0
        %4359 = vmatprep.subr.mxu0 0.0
        %4360 = vmatpush1.xpose.msra.mxu0 0.0
        %4361 = vmatprep.subr.mxu0 0.0
        %4362 = vmatpush1.xpose.msra.mxu0 0.0
        %4363 = vmatprep.subr.mxu0 0.0
        %4364 = vmatpush1.xpose.msra.mxu0 0.0
        %4365 = vmatprep.subr.mxu0 0.0
        %4366 = vmatpush1.xpose.msra.mxu0 0.0
        %4367 = vmatprep.subr.mxu0 0.0
        %4368 = vmatpush1.xpose.msra.mxu0 0.0
        %4369 = vmatprep.subr.mxu0 0.0
        %4370 = vmatpush1.xpose.msra.mxu0 0.0
        %4371 = vmatprep.subr.mxu0 0.0
        %4372 = vmatpush1.xpose.msra.mxu0 0.0
        %4373 = vmatprep.subr.mxu0 0.0
        %4374 = vmatpush1.xpose.msra.mxu0 0.0
        %4375 = vmatprep.subr.mxu0 0.0
        %4376 = vmatpush1.xpose.msra.mxu0 0.0
        %4377 = vmatprep.subr.mxu0 0.0
        %4378 = vmatpush1.xpose.msra.mxu0 0.0
        %4379 = vmatprep.subr.mxu0 0.0
        %4380 = vmatpush1.xpose.msra.mxu0 0.0
        %4381 = vmatprep.subr.mxu0 0.0
        %4382 = vmatpush1.xpose.msra.mxu0 0.0
        %4383 = vmatprep.subr.mxu0 0.0
        %4384 = vmatpush1.xpose.msra.mxu0 0.0
        %4385 = vmatprep.subr.mxu0 0.0
        %4386 = vmatpush1.xpose.msra.mxu0 0.0
        %4387 = vmatprep.subr.mxu0 0.0
        %4388 = vmatpush1.xpose.msra.mxu0 0.0
        %4389 = vmatprep.subr.mxu0 0.0
        %4390 = vmatpush1.xpose.msra.mxu0 0.0
        %4391 = vmatprep.subr.mxu0 0.0
        %4392 = vmatpush1.xpose.msra.mxu0 0.0
        %4393 = vmatprep.subr.mxu0 0.0
        %4394 = vmatpush1.xpose.msra.mxu0 0.0
        %4395 = vmatprep.subr.mxu0 0.0
        %4396 = vmatpush1.xpose.msra.mxu0 0.0
        %4397 = vmatprep.subr.mxu0 0.0
        %4398 = vmatpush1.xpose.msra.mxu0 0.0
        %4399 = vmatprep.subr.mxu0 0.0
        %4400 = vmatpush1.xpose.msra.mxu0 0.0
        %4401 = vmatprep.subr.mxu0 0.0
        %4402 = vmatpush1.xpose.msra.mxu0 0.0
        %4403 = vmatprep.mubr.f32.mxu0 0.0
        %v4404 = vand.u32 %v4246, 4294901760
        %4405 = vmatmul.mubr.f32.gmra.mrb[0].mxu0 %v4404
        %v4406 = vpop.f32.mrb[0].mxu0
        %v4407 = vadd.f32 %v4326, %v4406
        %v4408 = vpop.f32.mrb[0].mxu0
        %4409 = vdwg.mxu0
        %4410 = vmatprep.subr.mxu0 0.0
        %v4411 = vand.u32 %v4248, 4294901760
        %v4412 = vsub.f32 %v4248, %v4411
        %4413 = vmatpush1.xpose.msra.mxu0 %v4412
        %4414 = vmatprep.subr.mxu0 0.0
        %v4415 = vand.u32 %v4250, 4294901760
        %v4416 = vsub.f32 %v4250, %v4415
        %4417 = vmatpush1.xpose.msra.mxu0 %v4416
        %4418 = vmatprep.subr.mxu0 0.0
        %4419 = vmatpush1.xpose.msra.mxu0 0.0
        %4420 = vmatprep.subr.mxu0 0.0
        %4421 = vmatpush1.xpose.msra.mxu0 0.0
        %4422 = vmatprep.subr.mxu0 0.0
        %4423 = vmatpush1.xpose.msra.mxu0 0.0
        %4424 = vmatprep.subr.mxu0 0.0
        %4425 = vmatpush1.xpose.msra.mxu0 0.0
        %4426 = vmatprep.subr.mxu0 0.0
        %4427 = vmatpush1.xpose.msra.mxu0 0.0
        %4428 = vmatprep.subr.mxu0 0.0
        %4429 = vmatpush1.xpose.msra.mxu0 0.0
        %4430 = vmatprep.subr.mxu0 0.0
        %4431 = vmatpush1.xpose.msra.mxu0 0.0
        %4432 = vmatprep.subr.mxu0 0.0
        %4433 = vmatpush1.xpose.msra.mxu0 0.0
        %4434 = vmatprep.subr.mxu0 0.0
        %4435 = vmatpush1.xpose.msra.mxu0 0.0
        %4436 = vmatprep.subr.mxu0 0.0
        %4437 = vmatpush1.xpose.msra.mxu0 0.0
        %4438 = vmatprep.subr.mxu0 0.0
        %4439 = vmatpush1.xpose.msra.mxu0 0.0
        %4440 = vmatprep.subr.mxu0 0.0
        %4441 = vmatpush1.xpose.msra.mxu0 0.0
        %4442 = vmatprep.subr.mxu0 0.0
        %4443 = vmatpush1.xpose.msra.mxu0 0.0
        %4444 = vmatprep.subr.mxu0 0.0
        %4445 = vmatpush1.xpose.msra.mxu0 0.0
        %4446 = vmatprep.subr.mxu0 0.0
        %4447 = vmatpush1.xpose.msra.mxu0 0.0
        %4448 = vmatprep.subr.mxu0 0.0
        %4449 = vmatpush1.xpose.msra.mxu0 0.0
        %4450 = vmatprep.subr.mxu0 0.0
        %4451 = vmatpush1.xpose.msra.mxu0 0.0
        %4452 = vmatprep.subr.mxu0 0.0
        %4453 = vmatpush1.xpose.msra.mxu0 0.0
        %4454 = vmatprep.subr.mxu0 0.0
        %4455 = vmatpush1.xpose.msra.mxu0 0.0
        %4456 = vmatprep.subr.mxu0 0.0
        %4457 = vmatpush1.xpose.msra.mxu0 0.0
        %4458 = vmatprep.subr.mxu0 0.0
        %4459 = vmatpush1.xpose.msra.mxu0 0.0
        %4460 = vmatprep.subr.mxu0 0.0
        %4461 = vmatpush1.xpose.msra.mxu0 0.0
        %4462 = vmatprep.subr.mxu0 0.0
        %4463 = vmatpush1.xpose.msra.mxu0 0.0
        %4464 = vmatprep.subr.mxu0 0.0
        %4465 = vmatpush1.xpose.msra.mxu0 0.0
        %4466 = vmatprep.subr.mxu0 0.0
        %4467 = vmatpush1.xpose.msra.mxu0 0.0
        %4468 = vmatprep.subr.mxu0 0.0
        %4469 = vmatpush1.xpose.msra.mxu0 0.0
        %4470 = vmatprep.subr.mxu0 0.0
        %4471 = vmatpush1.xpose.msra.mxu0 0.0
        %4472 = vmatprep.subr.mxu0 0.0
        %4473 = vmatpush1.xpose.msra.mxu0 0.0
        %4474 = vmatprep.subr.mxu0 0.0
        %4475 = vmatpush1.xpose.msra.mxu0 0.0
        %4476 = vmatprep.subr.mxu0 0.0
        %4477 = vmatpush1.xpose.msra.mxu0 0.0
        %4478 = vmatprep.mubr.f32.mxu0 0.0
        %v4479 = vand.u32 %v4246, 4294901760
        %v4480 = vsub.f32 %v4246, %v4479
        %4481 = vmatmul.mubr.f32.gmra.mrb[0].mxu0 %v4480
        %v4482 = vpop.f32.mrb[0].mxu0
        %v4483 = vadd.f32 %v4407, %v4482
        %v4484 = vpop.f32.mrb[0].mxu0
        %4485 = vdwg.mxu0
        %4486 = vmatprep.subr.mxu0 0.0
        %v4487 = vand.u32 %v4248, 4294901760
        %4488 = vmatpush1.xpose.msra.mxu0 %v4487
        %4489 = vmatprep.subr.mxu0 0.0
        %v4490 = vand.u32 %v4250, 4294901760
        %4491 = vmatpush1.xpose.msra.mxu0 %v4490
        %4492 = vmatprep.subr.mxu0 0.0
        %4493 = vmatpush1.xpose.msra.mxu0 0.0
        %4494 = vmatprep.subr.mxu0 0.0
        %4495 = vmatpush1.xpose.msra.mxu0 0.0
        %4496 = vmatprep.subr.mxu0 0.0
        %4497 = vmatpush1.xpose.msra.mxu0 0.0
        %4498 = vmatprep.subr.mxu0 0.0
        %4499 = vmatpush1.xpose.msra.mxu0 0.0
        %4500 = vmatprep.subr.mxu0 0.0
        %4501 = vmatpush1.xpose.msra.mxu0 0.0
        %4502 = vmatprep.subr.mxu0 0.0
        %4503 = vmatpush1.xpose.msra.mxu0 0.0
        %4504 = vmatprep.subr.mxu0 0.0
        %4505 = vmatpush1.xpose.msra.mxu0 0.0
        %4506 = vmatprep.subr.mxu0 0.0
        %4507 = vmatpush1.xpose.msra.mxu0 0.0
        %4508 = vmatprep.subr.mxu0 0.0
        %4509 = vmatpush1.xpose.msra.mxu0 0.0
        %4510 = vmatprep.subr.mxu0 0.0
        %4511 = vmatpush1.xpose.msra.mxu0 0.0
        %4512 = vmatprep.subr.mxu0 0.0
        %4513 = vmatpush1.xpose.msra.mxu0 0.0
        %4514 = vmatprep.subr.mxu0 0.0
        %4515 = vmatpush1.xpose.msra.mxu0 0.0
        %4516 = vmatprep.subr.mxu0 0.0
        %4517 = vmatpush1.xpose.msra.mxu0 0.0
        %4518 = vmatprep.subr.mxu0 0.0
        %4519 = vmatpush1.xpose.msra.mxu0 0.0
        %4520 = vmatprep.subr.mxu0 0.0
        %4521 = vmatpush1.xpose.msra.mxu0 0.0
        %4522 = vmatprep.subr.mxu0 0.0
        %4523 = vmatpush1.xpose.msra.mxu0 0.0
        %4524 = vmatprep.subr.mxu0 0.0
        %4525 = vmatpush1.xpose.msra.mxu0 0.0
        %4526 = vmatprep.subr.mxu0 0.0
        %4527 = vmatpush1.xpose.msra.mxu0 0.0
        %4528 = vmatprep.subr.mxu0 0.0
        %4529 = vmatpush1.xpose.msra.mxu0 0.0
        %4530 = vmatprep.subr.mxu0 0.0
        %4531 = vmatpush1.xpose.msra.mxu0 0.0
        %4532 = vmatprep.subr.mxu0 0.0
        %4533 = vmatpush1.xpose.msra.mxu0 0.0
        %4534 = vmatprep.subr.mxu0 0.0
        %4535 = vmatpush1.xpose.msra.mxu0 0.0
        %4536 = vmatprep.subr.mxu0 0.0
        %4537 = vmatpush1.xpose.msra.mxu0 0.0
        %4538 = vmatprep.subr.mxu0 0.0
        %4539 = vmatpush1.xpose.msra.mxu0 0.0
        %4540 = vmatprep.subr.mxu0 0.0
        %4541 = vmatpush1.xpose.msra.mxu0 0.0
        %4542 = vmatprep.subr.mxu0 0.0
        %4543 = vmatpush1.xpose.msra.mxu0 0.0
        %4544 = vmatprep.subr.mxu0 0.0
        %4545 = vmatpush1.xpose.msra.mxu0 0.0
        %4546 = vmatprep.subr.mxu0 0.0
        %4547 = vmatpush1.xpose.msra.mxu0 0.0
        %4548 = vmatprep.subr.mxu0 0.0
        %4549 = vmatpush1.xpose.msra.mxu0 0.0
        %4550 = vmatprep.subr.mxu0 0.0
        %4551 = vmatpush1.xpose.msra.mxu0 0.0
        %4552 = vmatprep.mubr.f32.mxu0 0.0
        %v4553 = vand.u32 %v4246, 4294901760
        %v4554 = vsub.f32 %v4246, %v4553
        %v4555 = vand.u32 %v4554, 4294901760
        %4556 = vmatmul.mubr.f32.gmra.mrb[0].mxu0 %v4555
        %v4557 = vpop.f32.mrb[0].mxu0
        %v4558 = vadd.f32 %v4483, %v4557
        %v4559 = vpop.f32.mrb[0].mxu0
        %4560 = vdwg.mxu0
        %4561 = vmatprep.subr.mxu0 0.0
        %v4562 = vand.u32 %v4248, 4294901760
        %v4563 = vsub.f32 %v4248, %v4562
        %v4564 = vand.u32 %v4563, 4294901760
        %4565 = vmatpush1.xpose.msra.mxu0 %v4564
        %4566 = vmatprep.subr.mxu0 0.0
        %v4567 = vand.u32 %v4250, 4294901760
        %v4568 = vsub.f32 %v4250, %v4567
        %v4569 = vand.u32 %v4568, 4294901760
        %4570 = vmatpush1.xpose.msra.mxu0 %v4569
        %4571 = vmatprep.subr.mxu0 0.0
        %4572 = vmatpush1.xpose.msra.mxu0 0.0
        %4573 = vmatprep.subr.mxu0 0.0
        %4574 = vmatpush1.xpose.msra.mxu0 0.0
        %4575 = vmatprep.subr.mxu0 0.0
        %4576 = vmatpush1.xpose.msra.mxu0 0.0
        %4577 = vmatprep.subr.mxu0 0.0
        %4578 = vmatpush1.xpose.msra.mxu0 0.0
        %4579 = vmatprep.subr.mxu0 0.0
        %4580 = vmatpush1.xpose.msra.mxu0 0.0
        %4581 = vmatprep.subr.mxu0 0.0
        %4582 = vmatpush1.xpose.msra.mxu0 0.0
        %4583 = vmatprep.subr.mxu0 0.0
        %4584 = vmatpush1.xpose.msra.mxu0 0.0
        %4585 = vmatprep.subr.mxu0 0.0
        %4586 = vmatpush1.xpose.msra.mxu0 0.0
        %4587 = vmatprep.subr.mxu0 0.0
        %4588 = vmatpush1.xpose.msra.mxu0 0.0
        %4589 = vmatprep.subr.mxu0 0.0
        %4590 = vmatpush1.xpose.msra.mxu0 0.0
        %4591 = vmatprep.subr.mxu0 0.0
        %4592 = vmatpush1.xpose.msra.mxu0 0.0
        %4593 = vmatprep.subr.mxu0 0.0
        %4594 = vmatpush1.xpose.msra.mxu0 0.0
        %4595 = vmatprep.subr.mxu0 0.0
        %4596 = vmatpush1.xpose.msra.mxu0 0.0
        %4597 = vmatprep.subr.mxu0 0.0
        %4598 = vmatpush1.xpose.msra.mxu0 0.0
        %4599 = vmatprep.subr.mxu0 0.0
        %4600 = vmatpush1.xpose.msra.mxu0 0.0
        %4601 = vmatprep.subr.mxu0 0.0
        %4602 = vmatpush1.xpose.msra.mxu0 0.0
        %4603 = vmatprep.subr.mxu0 0.0
        %4604 = vmatpush1.xpose.msra.mxu0 0.0
        %4605 = vmatprep.subr.mxu0 0.0
        %4606 = vmatpush1.xpose.msra.mxu0 0.0
        %4607 = vmatprep.subr.mxu0 0.0
        %4608 = vmatpush1.xpose.msra.mxu0 0.0
        %4609 = vmatprep.subr.mxu0 0.0
        %4610 = vmatpush1.xpose.msra.mxu0 0.0
        %4611 = vmatprep.subr.mxu0 0.0
        %4612 = vmatpush1.xpose.msra.mxu0 0.0
        %4613 = vmatprep.subr.mxu0 0.0
        %4614 = vmatpush1.xpose.msra.mxu0 0.0
        %4615 = vmatprep.subr.mxu0 0.0
        %4616 = vmatpush1.xpose.msra.mxu0 0.0
        %4617 = vmatprep.subr.mxu0 0.0
        %4618 = vmatpush1.xpose.msra.mxu0 0.0
        %4619 = vmatprep.subr.mxu0 0.0
        %4620 = vmatpush1.xpose.msra.mxu0 0.0
        %4621 = vmatprep.subr.mxu0 0.0
        %4622 = vmatpush1.xpose.msra.mxu0 0.0
        %4623 = vmatprep.subr.mxu0 0.0
        %4624 = vmatpush1.xpose.msra.mxu0 0.0
        %4625 = vmatprep.subr.mxu0 0.0
        %4626 = vmatpush1.xpose.msra.mxu0 0.0
        %4627 = vmatprep.subr.mxu0 0.0
        %4628 = vmatpush1.xpose.msra.mxu0 0.0
        %4629 = vmatprep.subr.mxu0 0.0
        %4630 = vmatpush1.xpose.msra.mxu0 0.0
        %4631 = vmatprep.mubr.f32.mxu0 0.0
        %v4632 = vand.u32 %v4246, 4294901760
        %4633 = vmatmul.mubr.f32.gmra.mrb[0].mxu0 %v4632
        %v4634 = vpop.f32.mrb[0].mxu0
        %v4635 = vadd.f32 %v4558, %v4634
        %v4636 = vpop.f32.mrb[0].mxu0
        %4637 = vdwg.mxu0
        %4638 = vmatprep.subr.mxu0 0.0
        %v4639 = vand.u32 %v4248, 4294901760
        %4640 = vmatpush1.xpose.msra.mxu0 %v4639
        %4641 = vmatprep.subr.mxu0 0.0
        %v4642 = vand.u32 %v4250, 4294901760
        %4643 = vmatpush1.xpose.msra.mxu0 %v4642
        %4644 = vmatprep.subr.mxu0 0.0
        %4645 = vmatpush1.xpose.msra.mxu0 0.0
        %4646 = vmatprep.subr.mxu0 0.0
        %4647 = vmatpush1.xpose.msra.mxu0 0.0
        %4648 = vmatprep.subr.mxu0 0.0
        %4649 = vmatpush1.xpose.msra.mxu0 0.0
        %4650 = vmatprep.subr.mxu0 0.0
        %4651 = vmatpush1.xpose.msra.mxu0 0.0
        %4652 = vmatprep.subr.mxu0 0.0
        %4653 = vmatpush1.xpose.msra.mxu0 0.0
        %4654 = vmatprep.subr.mxu0 0.0
        %4655 = vmatpush1.xpose.msra.mxu0 0.0
        %4656 = vmatprep.subr.mxu0 0.0
        %4657 = vmatpush1.xpose.msra.mxu0 0.0
        %4658 = vmatprep.subr.mxu0 0.0
        %4659 = vmatpush1.xpose.msra.mxu0 0.0
        %4660 = vmatprep.subr.mxu0 0.0
        %4661 = vmatpush1.xpose.msra.mxu0 0.0
        %4662 = vmatprep.subr.mxu0 0.0
        %4663 = vmatpush1.xpose.msra.mxu0 0.0
        %4664 = vmatprep.subr.mxu0 0.0
        %4665 = vmatpush1.xpose.msra.mxu0 0.0
        %4666 = vmatprep.subr.mxu0 0.0
        %4667 = vmatpush1.xpose.msra.mxu0 0.0
        %4668 = vmatprep.subr.mxu0 0.0
        %4669 = vmatpush1.xpose.msra.mxu0 0.0
        %4670 = vmatprep.subr.mxu0 0.0
        %4671 = vmatpush1.xpose.msra.mxu0 0.0
        %4672 = vmatprep.subr.mxu0 0.0
        %4673 = vmatpush1.xpose.msra.mxu0 0.0
        %4674 = vmatprep.subr.mxu0 0.0
        %4675 = vmatpush1.xpose.msra.mxu0 0.0
        %4676 = vmatprep.subr.mxu0 0.0
        %4677 = vmatpush1.xpose.msra.mxu0 0.0
        %4678 = vmatprep.subr.mxu0 0.0
        %4679 = vmatpush1.xpose.msra.mxu0 0.0
        %4680 = vmatprep.subr.mxu0 0.0
        %4681 = vmatpush1.xpose.msra.mxu0 0.0
        %4682 = vmatprep.subr.mxu0 0.0
        %4683 = vmatpush1.xpose.msra.mxu0 0.0
        %4684 = vmatprep.subr.mxu0 0.0
        %4685 = vmatpush1.xpose.msra.mxu0 0.0
        %4686 = vmatprep.subr.mxu0 0.0
        %4687 = vmatpush1.xpose.msra.mxu0 0.0
        %4688 = vmatprep.subr.mxu0 0.0
        %4689 = vmatpush1.xpose.msra.mxu0 0.0
        %4690 = vmatprep.subr.mxu0 0.0
        %4691 = vmatpush1.xpose.msra.mxu0 0.0
        %4692 = vmatprep.subr.mxu0 0.0
        %4693 = vmatpush1.xpose.msra.mxu0 0.0
        %4694 = vmatprep.subr.mxu0 0.0
        %4695 = vmatpush1.xpose.msra.mxu0 0.0
        %4696 = vmatprep.subr.mxu0 0.0
        %4697 = vmatpush1.xpose.msra.mxu0 0.0
        %4698 = vmatprep.subr.mxu0 0.0
        %4699 = vmatpush1.xpose.msra.mxu0 0.0
        %4700 = vmatprep.subr.mxu0 0.0
        %4701 = vmatpush1.xpose.msra.mxu0 0.0
        %4702 = vmatprep.subr.mxu0 0.0
        %4703 = vmatpush1.xpose.msra.mxu0 0.0
        %4704 = vmatprep.mubr.f32.mxu0 0.0
        %v4705 = vand.u32 %v4246, 4294901760
        %4706 = vmatmul.mubr.f32.gmra.mrb[0].mxu0 %v4705
        %v4707 = vpop.f32.mrb[0].mxu0
        %v4708 = vadd.f32 %v4635, %v4707
        %v4709 = vpop.f32.mrb[0].mxu0
        %4710 = vdwg.mxu0
        %v4711 = vlaneseq
        %v4712 = vshrl.u32 %v4711, 7
        %v4713 = vsub.s32 0, %v4712
        %v4714 = vrot.slane %v4708, %v4713
        %v4715 = vadd.f32 %v4237, %v4714
        %v4716 = vadd.f32 %v4240, %v4714
        %vm4717 = vcmp.gt.f32.partialorder %v4715, 0.0
        %vm4718 = vcmp.gt.f32.partialorder %v4716, 0.0
        %v4719 = vmul.f32 %v4715, 0.2
        %v4720 = vmul.f32 %v4716, 0.2
        %v4721 = vsel %vm4717, %v4715, %v4719
        %v4722 = vsel %vm4718, %v4716, %v4720
        %v4723 = vsel %vm1593, -1e+12, %v4721
        %v4724 = vsel %vm1594, -1e+12, %v4722
        %v4725 = vsel %vm587, %v4723, -inf
        %4726 = vmax.xlane.f32.xlu0 %v4725
        %v4727 = vpop.xlane.xlu0 %4726
        %v4728 = vsel %vm587, %v4724, -inf
        %4729 = vmax.xlane.f32.xlu0 %v4728
        %v4730 = vpop.xlane.xlu0 %4729
        %v4731 = vsub.f32 %v4723, %v4727
        %v4732 = vsub.f32 %v4724, %v4730
        %v4733 = vmul.f32 %v4731, 1.442695
        %v4734 = vpow.pop %v4733
        %v4735 = vmul.f32 %v4732, 1.442695
        %v4736 = vpow.pop %v4735
        %v4737 = vsel %vm587, %v4734, 0.0
        %4738 = vadd.xlane.f32.xlu0 %v4737
        %v4739 = vpop.xlane.xlu0 %4738
        %v4740 = vsel %vm587, %v4736, 0.0
        %4741 = vadd.xlane.f32.xlu0 %v4740
        %v4742 = vpop.xlane.xlu0 %4741
        %v4743 = vrcp.pop %v4739
        %v4744 = vmul.f32 %v4734, %v4743
        %v4745 = vrcp.pop %v4742
        %v4746 = vmul.f32 %v4736, %v4745
        %4747 = vrot.lane.b32.xlu0 %v1087, 32
        %v4748 = vpop.permute.xlu0 %4747
        %4749 = vrot.lane.b32.xlu0 %v1093, 32
        %v4750 = vpop.permute.xlu0 %4749
        %v4754 = vsel %vm587, %v4744, 0
        %v4757 = vsel %vm587, %v4746, 0
        %4759 = vmatprep.subr.mxu0 0.0
        %v4760 = vand.u32 %v4748, 4294901760
        %4761 = vmatpush1.msra.mxu0 %v4760
        %4762 = vmatprep.subr.mxu0 0.0
        %v4763 = vand.u32 %v4750, 4294901760
        %4764 = vmatpush1.msra.mxu0 %v4763
        %4765 = vmatprep.subr.mxu0 0.0
        %4766 = vmatpush1.msra.mxu0 0.0
        %4767 = vmatprep.subr.mxu0 0.0
        %4768 = vmatpush1.msra.mxu0 0.0
        %4769 = vmatprep.subr.mxu0 0.0
        %4770 = vmatpush1.msra.mxu0 0.0
        %4771 = vmatprep.subr.mxu0 0.0
        %4772 = vmatpush1.msra.mxu0 0.0
        %4773 = vmatprep.subr.mxu0 0.0
        %4774 = vmatpush1.msra.mxu0 0.0
        %4775 = vmatprep.subr.mxu0 0.0
        %4776 = vmatpush1.msra.mxu0 0.0
        %4777 = vmatprep.subr.mxu0 0.0
        %4778 = vmatpush1.msra.mxu0 0.0
        %4779 = vmatprep.subr.mxu0 0.0
        %4780 = vmatpush1.msra.mxu0 0.0
        %4781 = vmatprep.subr.mxu0 0.0
        %4782 = vmatpush1.msra.mxu0 0.0
        %4783 = vmatprep.subr.mxu0 0.0
        %4784 = vmatpush1.msra.mxu0 0.0
        %4785 = vmatprep.subr.mxu0 0.0
        %4786 = vmatpush1.msra.mxu0 0.0
        %4787 = vmatprep.subr.mxu0 0.0
        %4788 = vmatpush1.msra.mxu0 0.0
        %4789 = vmatprep.subr.mxu0 0.0
        %4790 = vmatpush1.msra.mxu0 0.0
        %4791 = vmatprep.subr.mxu0 0.0
        %4792 = vmatpush1.msra.mxu0 0.0
        %4793 = vmatprep.subr.mxu0 0.0
        %4794 = vmatpush1.msra.mxu0 0.0
        %4795 = vmatprep.subr.mxu0 0.0
        %4796 = vmatpush1.msra.mxu0 0.0
        %4797 = vmatprep.subr.mxu0 0.0
        %4798 = vmatpush1.msra.mxu0 0.0
        %4799 = vmatprep.subr.mxu0 0.0
        %4800 = vmatpush1.msra.mxu0 0.0
        %4801 = vmatprep.subr.mxu0 0.0
        %4802 = vmatpush1.msra.mxu0 0.0
        %4803 = vmatprep.subr.mxu0 0.0
        %4804 = vmatpush1.msra.mxu0 0.0
        %4805 = vmatprep.subr.mxu0 0.0
        %4806 = vmatpush1.msra.mxu0 0.0
        %4807 = vmatprep.subr.mxu0 0.0
        %4808 = vmatpush1.msra.mxu0 0.0
        %4809 = vmatprep.subr.mxu0 0.0
        %4810 = vmatpush1.msra.mxu0 0.0
        %4811 = vmatprep.subr.mxu0 0.0
        %4812 = vmatpush1.msra.mxu0 0.0
        %4813 = vmatprep.subr.mxu0 0.0
        %4814 = vmatpush1.msra.mxu0 0.0
        %4815 = vmatprep.subr.mxu0 0.0
        %4816 = vmatpush1.msra.mxu0 0.0
        %4817 = vmatprep.subr.mxu0 0.0
        %4818 = vmatpush1.msra.mxu0 0.0
        %4819 = vmatprep.subr.mxu0 0.0
        %4820 = vmatpush1.msra.mxu0 0.0
        %4821 = vmatprep.subr.mxu0 0.0
        %4822 = vmatpush1.msra.mxu0 0.0
        %4823 = vmatprep.subr.mxu0 0.0
        %4824 = vmatpush1.msra.mxu0 0.0
        %4825 = vmatprep.mubr.f32.mxu0 0.0
        %v4826 = vand.u32 %v4754, 4294901760
        %v4827 = vsub.f32 %v4754, %v4826
        %v4828 = vand.u32 %v4827, 4294901760
        %v4829 = vsub.f32 %v4827, %v4828
        %v4830 = vand.u32 %v4829, 4294901760
        %4831 = vmatmul.mubr.f32.gmra.mrb[0].mxu0 %v4830
        %v4832 = vpop.f32.mrb[0].mxu0
        %v4833 = vadd.f32 0.0, %v4832
        %v4834 = vpop.f32.mrb[0].mxu0
        %4835 = vmatprep.mubr.f32.mxu0 0.0
        %v4836 = vand.u32 %v4757, 4294901760
        %v4837 = vsub.f32 %v4757, %v4836
        %v4838 = vand.u32 %v4837, 4294901760
        %v4839 = vsub.f32 %v4837, %v4838
        %v4840 = vand.u32 %v4839, 4294901760
        %4841 = vmatmul.mubr.f32.gmra.mrb[0].mxu0 %v4840
        %v4842 = vpop.f32.mrb[0].mxu0
        %v4843 = vadd.f32 0.0, %v4842
        %v4844 = vpop.f32.mrb[0].mxu0
        %4845 = vdwg.mxu0
        %4846 = vmatprep.subr.mxu0 0.0
        %v4847 = vand.u32 %v4748, 4294901760
        %v4848 = vsub.f32 %v4748, %v4847
        %v4849 = vand.u32 %v4848, 4294901760
        %v4850 = vsub.f32 %v4848, %v4849
        %v4851 = vand.u32 %v4850, 4294901760
        %4852 = vmatpush1.msra.mxu0 %v4851
        %4853 = vmatprep.subr.mxu0 0.0
        %v4854 = vand.u32 %v4750, 4294901760
        %v4855 = vsub.f32 %v4750, %v4854
        %v4856 = vand.u32 %v4855, 4294901760
        %v4857 = vsub.f32 %v4855, %v4856
        %v4858 = vand.u32 %v4857, 4294901760
        %4859 = vmatpush1.msra.mxu0 %v4858
        %4860 = vmatprep.subr.mxu0 0.0
        %4861 = vmatpush1.msra.mxu0 0.0
        %4862 = vmatprep.subr.mxu0 0.0
        %4863 = vmatpush1.msra.mxu0 0.0
        %4864 = vmatprep.subr.mxu0 0.0
        %4865 = vmatpush1.msra.mxu0 0.0
        %4866 = vmatprep.subr.mxu0 0.0
        %4867 = vmatpush1.msra.mxu0 0.0
        %4868 = vmatprep.subr.mxu0 0.0
        %4869 = vmatpush1.msra.mxu0 0.0
        %4870 = vmatprep.subr.mxu0 0.0
        %4871 = vmatpush1.msra.mxu0 0.0
        %4872 = vmatprep.subr.mxu0 0.0
        %4873 = vmatpush1.msra.mxu0 0.0
        %4874 = vmatprep.subr.mxu0 0.0
        %4875 = vmatpush1.msra.mxu0 0.0
        %4876 = vmatprep.subr.mxu0 0.0
        %4877 = vmatpush1.msra.mxu0 0.0
        %4878 = vmatprep.subr.mxu0 0.0
        %4879 = vmatpush1.msra.mxu0 0.0
        %4880 = vmatprep.subr.mxu0 0.0
        %4881 = vmatpush1.msra.mxu0 0.0
        %4882 = vmatprep.subr.mxu0 0.0
        %4883 = vmatpush1.msra.mxu0 0.0
        %4884 = vmatprep.subr.mxu0 0.0
        %4885 = vmatpush1.msra.mxu0 0.0
        %4886 = vmatprep.subr.mxu0 0.0
        %4887 = vmatpush1.msra.mxu0 0.0
        %4888 = vmatprep.subr.mxu0 0.0
        %4889 = vmatpush1.msra.mxu0 0.0
        %4890 = vmatprep.subr.mxu0 0.0
        %4891 = vmatpush1.msra.mxu0 0.0
        %4892 = vmatprep.subr.mxu0 0.0
        %4893 = vmatpush1.msra.mxu0 0.0
        %4894 = vmatprep.subr.mxu0 0.0
        %4895 = vmatpush1.msra.mxu0 0.0
        %4896 = vmatprep.subr.mxu0 0.0
        %4897 = vmatpush1.msra.mxu0 0.0
        %4898 = vmatprep.subr.mxu0 0.0
        %4899 = vmatpush1.msra.mxu0 0.0
        %4900 = vmatprep.subr.mxu0 0.0
        %4901 = vmatpush1.msra.mxu0 0.0
        %4902 = vmatprep.subr.mxu0 0.0
        %4903 = vmatpush1.msra.mxu0 0.0
        %4904 = vmatprep.subr.mxu0 0.0
        %4905 = vmatpush1.msra.mxu0 0.0
        %4906 = vmatprep.subr.mxu0 0.0
        %4907 = vmatpush1.msra.mxu0 0.0
        %4908 = vmatprep.subr.mxu0 0.0
        %4909 = vmatpush1.msra.mxu0 0.0
        %4910 = vmatprep.subr.mxu0 0.0
        %4911 = vmatpush1.msra.mxu0 0.0
        %4912 = vmatprep.subr.mxu0 0.0
        %4913 = vmatpush1.msra.mxu0 0.0
        %4914 = vmatprep.subr.mxu0 0.0
        %4915 = vmatpush1.msra.mxu0 0.0
        %4916 = vmatprep.subr.mxu0 0.0
        %4917 = vmatpush1.msra.mxu0 0.0
        %4918 = vmatprep.subr.mxu0 0.0
        %4919 = vmatpush1.msra.mxu0 0.0
        %4920 = vmatprep.mubr.f32.mxu0 0.0
        %v4921 = vand.u32 %v4754, 4294901760
        %4922 = vmatmul.mubr.f32.gmra.mrb[0].mxu0 %v4921
        %v4923 = vpop.f32.mrb[0].mxu0
        %v4924 = vadd.f32 %v4833, %v4923
        %v4925 = vpop.f32.mrb[0].mxu0
        %4926 = vmatprep.mubr.f32.mxu0 0.0
        %v4927 = vand.u32 %v4757, 4294901760
        %4928 = vmatmul.mubr.f32.gmra.mrb[0].mxu0 %v4927
        %v4929 = vpop.f32.mrb[0].mxu0
        %v4930 = vadd.f32 %v4843, %v4929
        %v4931 = vpop.f32.mrb[0].mxu0
        %4932 = vdwg.mxu0
        %4933 = vmatprep.subr.mxu0 0.0
        %v4934 = vand.u32 %v4748, 4294901760
        %v4935 = vsub.f32 %v4748, %v4934
        %4936 = vmatpush1.msra.mxu0 %v4935
        %4937 = vmatprep.subr.mxu0 0.0
        %v4938 = vand.u32 %v4750, 4294901760
        %v4939 = vsub.f32 %v4750, %v4938
        %4940 = vmatpush1.msra.mxu0 %v4939
        %4941 = vmatprep.subr.mxu0 0.0
        %4942 = vmatpush1.msra.mxu0 0.0
        %4943 = vmatprep.subr.mxu0 0.0
        %4944 = vmatpush1.msra.mxu0 0.0
        %4945 = vmatprep.subr.mxu0 0.0
        %4946 = vmatpush1.msra.mxu0 0.0
        %4947 = vmatprep.subr.mxu0 0.0
        %4948 = vmatpush1.msra.mxu0 0.0
        %4949 = vmatprep.subr.mxu0 0.0
        %4950 = vmatpush1.msra.mxu0 0.0
        %4951 = vmatprep.subr.mxu0 0.0
        %4952 = vmatpush1.msra.mxu0 0.0
        %4953 = vmatprep.subr.mxu0 0.0
        %4954 = vmatpush1.msra.mxu0 0.0
        %4955 = vmatprep.subr.mxu0 0.0
        %4956 = vmatpush1.msra.mxu0 0.0
        %4957 = vmatprep.subr.mxu0 0.0
        %4958 = vmatpush1.msra.mxu0 0.0
        %4959 = vmatprep.subr.mxu0 0.0
        %4960 = vmatpush1.msra.mxu0 0.0
        %4961 = vmatprep.subr.mxu0 0.0
        %4962 = vmatpush1.msra.mxu0 0.0
        %4963 = vmatprep.subr.mxu0 0.0
        %4964 = vmatpush1.msra.mxu0 0.0
        %4965 = vmatprep.subr.mxu0 0.0
        %4966 = vmatpush1.msra.mxu0 0.0
        %4967 = vmatprep.subr.mxu0 0.0
        %4968 = vmatpush1.msra.mxu0 0.0
        %4969 = vmatprep.subr.mxu0 0.0
        %4970 = vmatpush1.msra.mxu0 0.0
        %4971 = vmatprep.subr.mxu0 0.0
        %4972 = vmatpush1.msra.mxu0 0.0
        %4973 = vmatprep.subr.mxu0 0.0
        %4974 = vmatpush1.msra.mxu0 0.0
        %4975 = vmatprep.subr.mxu0 0.0
        %4976 = vmatpush1.msra.mxu0 0.0
        %4977 = vmatprep.subr.mxu0 0.0
        %4978 = vmatpush1.msra.mxu0 0.0
        %4979 = vmatprep.subr.mxu0 0.0
        %4980 = vmatpush1.msra.mxu0 0.0
        %4981 = vmatprep.subr.mxu0 0.0
        %4982 = vmatpush1.msra.mxu0 0.0
        %4983 = vmatprep.subr.mxu0 0.0
        %4984 = vmatpush1.msra.mxu0 0.0
        %4985 = vmatprep.subr.mxu0 0.0
        %4986 = vmatpush1.msra.mxu0 0.0
        %4987 = vmatprep.subr.mxu0 0.0
        %4988 = vmatpush1.msra.mxu0 0.0
        %4989 = vmatprep.subr.mxu0 0.0
        %4990 = vmatpush1.msra.mxu0 0.0
        %4991 = vmatprep.subr.mxu0 0.0
        %4992 = vmatpush1.msra.mxu0 0.0
        %4993 = vmatprep.subr.mxu0 0.0
        %4994 = vmatpush1.msra.mxu0 0.0
        %4995 = vmatprep.subr.mxu0 0.0
        %4996 = vmatpush1.msra.mxu0 0.0
        %4997 = vmatprep.subr.mxu0 0.0
        %4998 = vmatpush1.msra.mxu0 0.0
        %4999 = vmatprep.subr.mxu0 0.0
        %5000 = vmatpush1.msra.mxu0 0.0
        %5001 = vmatprep.mubr.f32.mxu0 0.0
        %v5002 = vand.u32 %v4754, 4294901760
        %v5003 = vsub.f32 %v4754, %v5002
        %5004 = vmatmul.mubr.f32.gmra.mrb[0].mxu0 %v5003
        %v5005 = vpop.f32.mrb[0].mxu0
        %v5006 = vadd.f32 %v4924, %v5005
        %v5007 = vpop.f32.mrb[0].mxu0
        %5008 = vmatprep.mubr.f32.mxu0 0.0
        %v5009 = vand.u32 %v4757, 4294901760
        %v5010 = vsub.f32 %v4757, %v5009
        %5011 = vmatmul.mubr.f32.gmra.mrb[0].mxu0 %v5010
        %v5012 = vpop.f32.mrb[0].mxu0
        %v5013 = vadd.f32 %v4930, %v5012
        %v5014 = vpop.f32.mrb[0].mxu0
        %5015 = vdwg.mxu0
        %5016 = vmatprep.subr.mxu0 0.0
        %v5017 = vand.u32 %v4748, 4294901760
        %5018 = vmatpush1.msra.mxu0 %v5017
        %5019 = vmatprep.subr.mxu0 0.0
        %v5020 = vand.u32 %v4750, 4294901760
        %5021 = vmatpush1.msra.mxu0 %v5020
        %5022 = vmatprep.subr.mxu0 0.0
        %5023 = vmatpush1.msra.mxu0 0.0
        %5024 = vmatprep.subr.mxu0 0.0
        %5025 = vmatpush1.msra.mxu0 0.0
        %5026 = vmatprep.subr.mxu0 0.0
        %5027 = vmatpush1.msra.mxu0 0.0
        %5028 = vmatprep.subr.mxu0 0.0
        %5029 = vmatpush1.msra.mxu0 0.0
        %5030 = vmatprep.subr.mxu0 0.0
        %5031 = vmatpush1.msra.mxu0 0.0
        %5032 = vmatprep.subr.mxu0 0.0
        %5033 = vmatpush1.msra.mxu0 0.0
        %5034 = vmatprep.subr.mxu0 0.0
        %5035 = vmatpush1.msra.mxu0 0.0
        %5036 = vmatprep.subr.mxu0 0.0
        %5037 = vmatpush1.msra.mxu0 0.0
        %5038 = vmatprep.subr.mxu0 0.0
        %5039 = vmatpush1.msra.mxu0 0.0
        %5040 = vmatprep.subr.mxu0 0.0
        %5041 = vmatpush1.msra.mxu0 0.0
        %5042 = vmatprep.subr.mxu0 0.0
        %5043 = vmatpush1.msra.mxu0 0.0
        %5044 = vmatprep.subr.mxu0 0.0
        %5045 = vmatpush1.msra.mxu0 0.0
        %5046 = vmatprep.subr.mxu0 0.0
        %5047 = vmatpush1.msra.mxu0 0.0
        %5048 = vmatprep.subr.mxu0 0.0
        %5049 = vmatpush1.msra.mxu0 0.0
        %5050 = vmatprep.subr.mxu0 0.0
        %5051 = vmatpush1.msra.mxu0 0.0
        %5052 = vmatprep.subr.mxu0 0.0
        %5053 = vmatpush1.msra.mxu0 0.0
        %5054 = vmatprep.subr.mxu0 0.0
        %5055 = vmatpush1.msra.mxu0 0.0
        %5056 = vmatprep.subr.mxu0 0.0
        %5057 = vmatpush1.msra.mxu0 0.0
        %5058 = vmatprep.subr.mxu0 0.0
        %5059 = vmatpush1.msra.mxu0 0.0
        %5060 = vmatprep.subr.mxu0 0.0
        %5061 = vmatpush1.msra.mxu0 0.0
        %5062 = vmatprep.subr.mxu0 0.0
        %5063 = vmatpush1.msra.mxu0 0.0
        %5064 = vmatprep.subr.mxu0 0.0
        %5065 = vmatpush1.msra.mxu0 0.0
        %5066 = vmatprep.subr.mxu0 0.0
        %5067 = vmatpush1.msra.mxu0 0.0
        %5068 = vmatprep.subr.mxu0 0.0
        %5069 = vmatpush1.msra.mxu0 0.0
        %5070 = vmatprep.subr.mxu0 0.0
        %5071 = vmatpush1.msra.mxu0 0.0
        %5072 = vmatprep.subr.mxu0 0.0
        %5073 = vmatpush1.msra.mxu0 0.0
        %5074 = vmatprep.subr.mxu0 0.0
        %5075 = vmatpush1.msra.mxu0 0.0
        %5076 = vmatprep.subr.mxu0 0.0
        %5077 = vmatpush1.msra.mxu0 0.0
        %5078 = vmatprep.subr.mxu0 0.0
        %5079 = vmatpush1.msra.mxu0 0.0
        %5080 = vmatprep.subr.mxu0 0.0
        %5081 = vmatpush1.msra.mxu0 0.0
        %5082 = vmatprep.mubr.f32.mxu0 0.0
        %v5083 = vand.u32 %v4754, 4294901760
        %v5084 = vsub.f32 %v4754, %v5083
        %v5085 = vand.u32 %v5084, 4294901760
        %5086 = vmatmul.mubr.f32.gmra.mrb[0].mxu0 %v5085
        %v5087 = vpop.f32.mrb[0].mxu0
        %v5088 = vadd.f32 %v5006, %v5087
        %v5089 = vpop.f32.mrb[0].mxu0
        %5090 = vmatprep.mubr.f32.mxu0 0.0
        %v5091 = vand.u32 %v4757, 4294901760
        %v5092 = vsub.f32 %v4757, %v5091
        %v5093 = vand.u32 %v5092, 4294901760
        %5094 = vmatmul.mubr.f32.gmra.mrb[0].mxu0 %v5093
        %v5095 = vpop.f32.mrb[0].mxu0
        %v5096 = vadd.f32 %v5013, %v5095
        %v5097 = vpop.f32.mrb[0].mxu0
        %5098 = vdwg.mxu0
        %5099 = vmatprep.subr.mxu0 0.0
        %v5100 = vand.u32 %v4748, 4294901760
        %v5101 = vsub.f32 %v4748, %v5100
        %v5102 = vand.u32 %v5101, 4294901760
        %5103 = vmatpush1.msra.mxu0 %v5102
        %5104 = vmatprep.subr.mxu0 0.0
        %v5105 = vand.u32 %v4750, 4294901760
        %v5106 = vsub.f32 %v4750, %v5105
        %v5107 = vand.u32 %v5106, 4294901760
        %5108 = vmatpush1.msra.mxu0 %v5107
        %5109 = vmatprep.subr.mxu0 0.0
        %5110 = vmatpush1.msra.mxu0 0.0
        %5111 = vmatprep.subr.mxu0 0.0
        %5112 = vmatpush1.msra.mxu0 0.0
        %5113 = vmatprep.subr.mxu0 0.0
        %5114 = vmatpush1.msra.mxu0 0.0
        %5115 = vmatprep.subr.mxu0 0.0
        %5116 = vmatpush1.msra.mxu0 0.0
        %5117 = vmatprep.subr.mxu0 0.0
        %5118 = vmatpush1.msra.mxu0 0.0
        %5119 = vmatprep.subr.mxu0 0.0
        %5120 = vmatpush1.msra.mxu0 0.0
        %5121 = vmatprep.subr.mxu0 0.0
        %5122 = vmatpush1.msra.mxu0 0.0
        %5123 = vmatprep.subr.mxu0 0.0
        %5124 = vmatpush1.msra.mxu0 0.0
        %5125 = vmatprep.subr.mxu0 0.0
        %5126 = vmatpush1.msra.mxu0 0.0
        %5127 = vmatprep.subr.mxu0 0.0
        %5128 = vmatpush1.msra.mxu0 0.0
        %5129 = vmatprep.subr.mxu0 0.0
        %5130 = vmatpush1.msra.mxu0 0.0
        %5131 = vmatprep.subr.mxu0 0.0
        %5132 = vmatpush1.msra.mxu0 0.0
        %5133 = vmatprep.subr.mxu0 0.0
        %5134 = vmatpush1.msra.mxu0 0.0
        %5135 = vmatprep.subr.mxu0 0.0
        %5136 = vmatpush1.msra.mxu0 0.0
        %5137 = vmatprep.subr.mxu0 0.0
        %5138 = vmatpush1.msra.mxu0 0.0
        %5139 = vmatprep.subr.mxu0 0.0
        %5140 = vmatpush1.msra.mxu0 0.0
        %5141 = vmatprep.subr.mxu0 0.0
        %5142 = vmatpush1.msra.mxu0 0.0
        %5143 = vmatprep.subr.mxu0 0.0
        %5144 = vmatpush1.msra.mxu0 0.0
        %5145 = vmatprep.subr.mxu0 0.0
        %5146 = vmatpush1.msra.mxu0 0.0
        %5147 = vmatprep.subr.mxu0 0.0
        %5148 = vmatpush1.msra.mxu0 0.0
        %5149 = vmatprep.subr.mxu0 0.0
        %5150 = vmatpush1.msra.mxu0 0.0
        %5151 = vmatprep.subr.mxu0 0.0
        %5152 = vmatpush1.msra.mxu0 0.0
        %5153 = vmatprep.subr.mxu0 0.0
        %5154 = vmatpush1.msra.mxu0 0.0
        %5155 = vmatprep.subr.mxu0 0.0
        %5156 = vmatpush1.msra.mxu0 0.0
        %5157 = vmatprep.subr.mxu0 0.0
        %5158 = vmatpush1.msra.mxu0 0.0
        %5159 = vmatprep.subr.mxu0 0.0
        %5160 = vmatpush1.msra.mxu0 0.0
        %5161 = vmatprep.subr.mxu0 0.0
        %5162 = vmatpush1.msra.mxu0 0.0
        %5163 = vmatprep.subr.mxu0 0.0
        %5164 = vmatpush1.msra.mxu0 0.0
        %5165 = vmatprep.subr.mxu0 0.0
        %5166 = vmatpush1.msra.mxu0 0.0
        %5167 = vmatprep.subr.mxu0 0.0
        %5168 = vmatpush1.msra.mxu0 0.0
        %5169 = vmatprep.mubr.f32.mxu0 0.0
        %v5170 = vand.u32 %v4754, 4294901760
        %5171 = vmatmul.mubr.f32.gmra.mrb[0].mxu0 %v5170
        %v5172 = vpop.f32.mrb[0].mxu0
        %v5173 = vadd.f32 %v5088, %v5172
        %v5174 = vpop.f32.mrb[0].mxu0
        %5175 = vmatprep.mubr.f32.mxu0 0.0
        %v5176 = vand.u32 %v4757, 4294901760
        %5177 = vmatmul.mubr.f32.gmra.mrb[0].mxu0 %v5176
        %v5178 = vpop.f32.mrb[0].mxu0
        %v5179 = vadd.f32 %v5096, %v5178
        %v5180 = vpop.f32.mrb[0].mxu0
        %5181 = vdwg.mxu0
        %5182 = vmatprep.subr.mxu0 0.0
        %v5183 = vand.u32 %v4748, 4294901760
        %5184 = vmatpush1.msra.mxu0 %v5183
        %5185 = vmatprep.subr.mxu0 0.0
        %v5186 = vand.u32 %v4750, 4294901760
        %5187 = vmatpush1.msra.mxu0 %v5186
        %5188 = vmatprep.subr.mxu0 0.0
        %5189 = vmatpush1.msra.mxu0 0.0
        %5190 = vmatprep.subr.mxu0 0.0
        %5191 = vmatpush1.msra.mxu0 0.0
        %5192 = vmatprep.subr.mxu0 0.0
        %5193 = vmatpush1.msra.mxu0 0.0
        %5194 = vmatprep.subr.mxu0 0.0
        %5195 = vmatpush1.msra.mxu0 0.0
        %5196 = vmatprep.subr.mxu0 0.0
        %5197 = vmatpush1.msra.mxu0 0.0
        %5198 = vmatprep.subr.mxu0 0.0
        %5199 = vmatpush1.msra.mxu0 0.0
        %5200 = vmatprep.subr.mxu0 0.0
        %5201 = vmatpush1.msra.mxu0 0.0
        %5202 = vmatprep.subr.mxu0 0.0
        %5203 = vmatpush1.msra.mxu0 0.0
        %5204 = vmatprep.subr.mxu0 0.0
        %5205 = vmatpush1.msra.mxu0 0.0
        %5206 = vmatprep.subr.mxu0 0.0
        %5207 = vmatpush1.msra.mxu0 0.0
        %5208 = vmatprep.subr.mxu0 0.0
        %5209 = vmatpush1.msra.mxu0 0.0
        %5210 = vmatprep.subr.mxu0 0.0
        %5211 = vmatpush1.msra.mxu0 0.0
        %5212 = vmatprep.subr.mxu0 0.0
        %5213 = vmatpush1.msra.mxu0 0.0
        %5214 = vmatprep.subr.mxu0 0.0
        %5215 = vmatpush1.msra.mxu0 0.0
        %5216 = vmatprep.subr.mxu0 0.0
        %5217 = vmatpush1.msra.mxu0 0.0
        %5218 = vmatprep.subr.mxu0 0.0
        %5219 = vmatpush1.msra.mxu0 0.0
        %5220 = vmatprep.subr.mxu0 0.0
        %5221 = vmatpush1.msra.mxu0 0.0
        %5222 = vmatprep.subr.mxu0 0.0
        %5223 = vmatpush1.msra.mxu0 0.0
        %5224 = vmatprep.subr.mxu0 0.0
        %5225 = vmatpush1.msra.mxu0 0.0
        %5226 = vmatprep.subr.mxu0 0.0
        %5227 = vmatpush1.msra.mxu0 0.0
        %5228 = vmatprep.subr.mxu0 0.0
        %5229 = vmatpush1.msra.mxu0 0.0
        %5230 = vmatprep.subr.mxu0 0.0
        %5231 = vmatpush1.msra.mxu0 0.0
        %5232 = vmatprep.subr.mxu0 0.0
        %5233 = vmatpush1.msra.mxu0 0.0
        %5234 = vmatprep.subr.mxu0 0.0
        %5235 = vmatpush1.msra.mxu0 0.0
        %5236 = vmatprep.subr.mxu0 0.0
        %5237 = vmatpush1.msra.mxu0 0.0
        %5238 = vmatprep.subr.mxu0 0.0
        %5239 = vmatpush1.msra.mxu0 0.0
        %5240 = vmatprep.subr.mxu0 0.0
        %5241 = vmatpush1.msra.mxu0 0.0
        %5242 = vmatprep.subr.mxu0 0.0
        %5243 = vmatpush1.msra.mxu0 0.0
        %5244 = vmatprep.subr.mxu0 0.0
        %5245 = vmatpush1.msra.mxu0 0.0
        %5246 = vmatprep.subr.mxu0 0.0
        %5247 = vmatpush1.msra.mxu0 0.0
        %5248 = vmatprep.mubr.f32.mxu0 0.0
        %v5249 = vand.u32 %v4754, 4294901760
        %5250 = vmatmul.mubr.f32.gmra.mrb[0].mxu0 %v5249
        %v5251 = vpop.f32.mrb[0].mxu0
        %v5252 = vadd.f32 %v5173, %v5251
        %v5253 = vpop.f32.mrb[0].mxu0
        %5254 = vmatprep.mubr.f32.mxu0 0.0
        %v5255 = vand.u32 %v4757, 4294901760
        %5256 = vmatmul.mubr.f32.gmra.mrb[0].mxu0 %v5255
        %v5257 = vpop.f32.mrb[0].mxu0
        %v5258 = vadd.f32 %v5179, %v5257
        %v5259 = vpop.f32.mrb[0].mxu0
        %5260 = vdwg.mxu0
        %5263 = vrot.lane.b32.xlu0 %v3164, 32
        %v5264 = vpop.permute.xlu0 %5263
        %5265 = vrot.lane.b32.xlu0 %v3170, 32
        %v5266 = vpop.permute.xlu0 %5265
        %5271 = vrot.lane.b32.xlu0 %v4208, 64
        %v5272 = vpop.permute.xlu0 %5271
        %5273 = vrot.lane.b32.xlu0 %v4214, 64
        %v5274 = vpop.permute.xlu0 %5273
        %5279 = vrot.lane.b32.xlu0 %v5252, 96
        %v5280 = vpop.permute.xlu0 %5279
        %5281 = vrot.lane.b32.xlu0 %v5258, 96
        %v5282 = vpop.permute.xlu0 %5281
        %v5285 = vsel %vm1106, %v2118, %v5264
        %v5286 = vsel %vm1106, %v2124, %v5266
        %vm5287 = vcmask 523264
        %v5288 = vsel %vm5287, %v5285, %v5272
        %v5289 = vsel %vm5287, %v5286, %v5274
        %vm5290 = vcmask 785408
        %v5291 = vsel %vm5290, %v5288, %v5280
        %v5292 = vsel %vm5290, %v5289, %v5282
        %vm5293 = vcmp.gt.f32.partialorder %v5291, 0.0
        %vm5294 = vcmp.gt.f32.partialorder %v5292, 0.0
        %v5295 = vmin.f32 %v5291, 0.0
        %v5296 = vmin.f32 %v5292, 0.0
        %v5297 = vmul.f32 %v5295, 1.442695
        %v5298 = vpow.pop %v5297
        %v5299 = vmul.f32 %v5296, 1.442695
        %v5300 = vpow.pop %v5299
        %v5301 = vsub.f32 %v5298, 1.0
        %v5302 = vsub.f32 %v5300, 1.0
        %v5303 = vsel %vm5293, %v5291, %v5301
        %v5304 = vsel %vm5294, %v5292, %v5302
        %v5305 = vld [vmem:[%s501] sm:$0xff]
        %v5306 = vld [vmem:[%s501 + $0x8] sm:$0xff]
        %v5307 = vld [vmem:[%s501 + $0x10] sm:$0xff]
        %v5308 = vld [vmem:[%s501 + $0x18] sm:$0xff]
        %v5309 = vld [vmem:[%s501 + $0x20] sm:$0xff]
        %v5310 = vld [vmem:[%s501 + $0x28] sm:$0xff]
        %v5311 = vld [vmem:[%s501 + $0x30] sm:$0xff]
        %v5312 = vld [vmem:[%s501 + $0x38] sm:$0xff]
        %v5313 = vld [vmem:[%s501 + $0x40] sm:$0xff]
        %v5314 = vld [vmem:[%s501 + $0x48] sm:$0xff]
        %v5315 = vld [vmem:[%s501 + $0x50] sm:$0xff]
        %v5316 = vld [vmem:[%s501 + $0x58] sm:$0xff]
        %v5317 = vld [vmem:[%s501 + $0x60] sm:$0xff]
        %v5318 = vld [vmem:[%s501 + $0x68] sm:$0xff]
        %v5319 = vld [vmem:[%s501 + $0x70] sm:$0xff]
        %v5320 = vld [vmem:[%s501 + $0x78] sm:$0xff]
        %5321 = vmatprep.subr.mxu0 0.0
        %v5322 = vand.u32 %v5305, 4294901760
        %5323 = vmatpush1.msra.mxu0 %v5322
        %5324 = vmatprep.subr.mxu0 0.0
        %v5325 = vand.u32 %v5306, 4294901760
        %5326 = vmatpush1.msra.mxu0 %v5325
        %5327 = vmatprep.subr.mxu0 0.0
        %v5328 = vand.u32 %v5307, 4294901760
        %5329 = vmatpush1.msra.mxu0 %v5328
        %5330 = vmatprep.subr.mxu0 0.0
        %v5331 = vand.u32 %v5308, 4294901760
        %5332 = vmatpush1.msra.mxu0 %v5331
        %5333 = vmatprep.subr.mxu0 0.0
        %v5334 = vand.u32 %v5309, 4294901760
        %5335 = vmatpush1.msra.mxu0 %v5334
        %5336 = vmatprep.subr.mxu0 0.0
        %v5337 = vand.u32 %v5310, 4294901760
        %5338 = vmatpush1.msra.mxu0 %v5337
        %5339 = vmatprep.subr.mxu0 0.0
        %v5340 = vand.u32 %v5311, 4294901760
        %5341 = vmatpush1.msra.mxu0 %v5340
        %5342 = vmatprep.subr.mxu0 0.0
        %v5343 = vand.u32 %v5312, 4294901760
        %5344 = vmatpush1.msra.mxu0 %v5343
        %5345 = vmatprep.subr.mxu0 0.0
        %v5346 = vand.u32 %v5313, 4294901760
        %5347 = vmatpush1.msra.mxu0 %v5346
        %5348 = vmatprep.subr.mxu0 0.0
        %v5349 = vand.u32 %v5314, 4294901760
        %5350 = vmatpush1.msra.mxu0 %v5349
        %5351 = vmatprep.subr.mxu0 0.0
        %v5352 = vand.u32 %v5315, 4294901760
        %5353 = vmatpush1.msra.mxu0 %v5352
        %5354 = vmatprep.subr.mxu0 0.0
        %v5355 = vand.u32 %v5316, 4294901760
        %5356 = vmatpush1.msra.mxu0 %v5355
        %5357 = vmatprep.subr.mxu0 0.0
        %v5358 = vand.u32 %v5317, 4294901760
        %5359 = vmatpush1.msra.mxu0 %v5358
        %5360 = vmatprep.subr.mxu0 0.0
        %v5361 = vand.u32 %v5318, 4294901760
        %5362 = vmatpush1.msra.mxu0 %v5361
        %5363 = vmatprep.subr.mxu0 0.0
        %v5364 = vand.u32 %v5319, 4294901760
        %5365 = vmatpush1.msra.mxu0 %v5364
        %5366 = vmatprep.subr.mxu0 0.0
        %v5367 = vand.u32 %v5320, 4294901760
        %5368 = vmatpush1.msra.mxu0 %v5367
        %5369 = vmatprep.subr.mxu0 0.0
        %5370 = vmatpush1.msra.mxu0 0.0
        %5371 = vmatprep.subr.mxu0 0.0
        %5372 = vmatpush1.msra.mxu0 0.0
        %5373 = vmatprep.subr.mxu0 0.0
        %5374 = vmatpush1.msra.mxu0 0.0
        %5375 = vmatprep.subr.mxu0 0.0
        %5376 = vmatpush1.msra.mxu0 0.0
        %5377 = vmatprep.subr.mxu0 0.0
        %5378 = vmatpush1.msra.mxu0 0.0
        %5379 = vmatprep.subr.mxu0 0.0
        %5380 = vmatpush1.msra.mxu0 0.0
        %5381 = vmatprep.subr.mxu0 0.0
        %5382 = vmatpush1.msra.mxu0 0.0
        %5383 = vmatprep.subr.mxu0 0.0
        %5384 = vmatpush1.msra.mxu0 0.0
        %5385 = vmatprep.subr.mxu0 0.0
        %5386 = vmatpush1.msra.mxu0 0.0
        %5387 = vmatprep.subr.mxu0 0.0
        %5388 = vmatpush1.msra.mxu0 0.0
        %5389 = vmatprep.subr.mxu0 0.0
        %5390 = vmatpush1.msra.mxu0 0.0
        %5391 = vmatprep.subr.mxu0 0.0
        %5392 = vmatpush1.msra.mxu0 0.0
        %5393 = vmatprep.subr.mxu0 0.0
        %5394 = vmatpush1.msra.mxu0 0.0
        %5395 = vmatprep.subr.mxu0 0.0
        %5396 = vmatpush1.msra.mxu0 0.0
        %5397 = vmatprep.subr.mxu0 0.0
        %5398 = vmatpush1.msra.mxu0 0.0
        %5399 = vmatprep.subr.mxu0 0.0
        %5400 = vmatpush1.msra.mxu0 0.0
        %5401 = vmatprep.mubr.f32.mxu0 0.0
        %v5402 = vand.u32 %v5303, 4294901760
        %v5403 = vsub.f32 %v5303, %v5402
        %v5404 = vand.u32 %v5403, 4294901760
        %v5405 = vsub.f32 %v5403, %v5404
        %v5406 = vand.u32 %v5405, 4294901760
        %5407 = vmatmul.mubr.f32.gmra.mrb[0].mxu0 %v5406
        %v5408 = vpop.f32.mrb[0].mxu0
        %v5409 = vadd.f32 0.0, %v5408
        %v5410 = vpop.f32.mrb[0].mxu0
        %5411 = vmatprep.mubr.f32.mxu0 0.0
        %v5412 = vand.u32 %v5304, 4294901760
        %v5413 = vsub.f32 %v5304, %v5412
        %v5414 = vand.u32 %v5413, 4294901760
        %v5415 = vsub.f32 %v5413, %v5414
        %v5416 = vand.u32 %v5415, 4294901760
        %5417 = vmatmul.mubr.f32.gmra.mrb[0].mxu0 %v5416
        %v5418 = vpop.f32.mrb[0].mxu0
        %v5419 = vadd.f32 0.0, %v5418
        %v5420 = vpop.f32.mrb[0].mxu0
        %5421 = vdwg.mxu0
        %5422 = vmatprep.subr.mxu0 0.0
        %v5423 = vand.u32 %v5305, 4294901760
        %v5424 = vsub.f32 %v5305, %v5423
        %v5425 = vand.u32 %v5424, 4294901760
        %v5426 = vsub.f32 %v5424, %v5425
        %v5427 = vand.u32 %v5426, 4294901760
        %5428 = vmatpush1.msra.mxu0 %v5427
        %5429 = vmatprep.subr.mxu0 0.0
        %v5430 = vand.u32 %v5306, 4294901760
        %v5431 = vsub.f32 %v5306, %v5430
        %v5432 = vand.u32 %v5431, 4294901760
        %v5433 = vsub.f32 %v5431, %v5432
        %v5434 = vand.u32 %v5433, 4294901760
        %5435 = vmatpush1.msra.mxu0 %v5434
        %5436 = vmatprep.subr.mxu0 0.0
        %v5437 = vand.u32 %v5307, 4294901760
        %v5438 = vsub.f32 %v5307, %v5437
        %v5439 = vand.u32 %v5438, 4294901760
        %v5440 = vsub.f32 %v5438, %v5439
        %v5441 = vand.u32 %v5440, 4294901760
        %5442 = vmatpush1.msra.mxu0 %v5441
        %5443 = vmatprep.subr.mxu0 0.0
        %v5444 = vand.u32 %v5308, 4294901760
        %v5445 = vsub.f32 %v5308, %v5444
        %v5446 = vand.u32 %v5445, 4294901760
        %v5447 = vsub.f32 %v5445, %v5446
        %v5448 = vand.u32 %v5447, 4294901760
        %5449 = vmatpush1.msra.mxu0 %v5448
        %5450 = vmatprep.subr.mxu0 0.0
        %v5451 = vand.u32 %v5309, 4294901760
        %v5452 = vsub.f32 %v5309, %v5451
        %v5453 = vand.u32 %v5452, 4294901760
        %v5454 = vsub.f32 %v5452, %v5453
        %v5455 = vand.u32 %v5454, 4294901760
        %5456 = vmatpush1.msra.mxu0 %v5455
        %5457 = vmatprep.subr.mxu0 0.0
        %v5458 = vand.u32 %v5310, 4294901760
        %v5459 = vsub.f32 %v5310, %v5458
        %v5460 = vand.u32 %v5459, 4294901760
        %v5461 = vsub.f32 %v5459, %v5460
        %v5462 = vand.u32 %v5461, 4294901760
        %5463 = vmatpush1.msra.mxu0 %v5462
        %5464 = vmatprep.subr.mxu0 0.0
        %v5465 = vand.u32 %v5311, 4294901760
        %v5466 = vsub.f32 %v5311, %v5465
        %v5467 = vand.u32 %v5466, 4294901760
        %v5468 = vsub.f32 %v5466, %v5467
        %v5469 = vand.u32 %v5468, 4294901760
        %5470 = vmatpush1.msra.mxu0 %v5469
        %5471 = vmatprep.subr.mxu0 0.0
        %v5472 = vand.u32 %v5312, 4294901760
        %v5473 = vsub.f32 %v5312, %v5472
        %v5474 = vand.u32 %v5473, 4294901760
        %v5475 = vsub.f32 %v5473, %v5474
        %v5476 = vand.u32 %v5475, 4294901760
        %5477 = vmatpush1.msra.mxu0 %v5476
        %5478 = vmatprep.subr.mxu0 0.0
        %v5479 = vand.u32 %v5313, 4294901760
        %v5480 = vsub.f32 %v5313, %v5479
        %v5481 = vand.u32 %v5480, 4294901760
        %v5482 = vsub.f32 %v5480, %v5481
        %v5483 = vand.u32 %v5482, 4294901760
        %5484 = vmatpush1.msra.mxu0 %v5483
        %5485 = vmatprep.subr.mxu0 0.0
        %v5486 = vand.u32 %v5314, 4294901760
        %v5487 = vsub.f32 %v5314, %v5486
        %v5488 = vand.u32 %v5487, 4294901760
        %v5489 = vsub.f32 %v5487, %v5488
        %v5490 = vand.u32 %v5489, 4294901760
        %5491 = vmatpush1.msra.mxu0 %v5490
        %5492 = vmatprep.subr.mxu0 0.0
        %v5493 = vand.u32 %v5315, 4294901760
        %v5494 = vsub.f32 %v5315, %v5493
        %v5495 = vand.u32 %v5494, 4294901760
        %v5496 = vsub.f32 %v5494, %v5495
        %v5497 = vand.u32 %v5496, 4294901760
        %5498 = vmatpush1.msra.mxu0 %v5497
        %5499 = vmatprep.subr.mxu0 0.0
        %v5500 = vand.u32 %v5316, 4294901760
        %v5501 = vsub.f32 %v5316, %v5500
        %v5502 = vand.u32 %v5501, 4294901760
        %v5503 = vsub.f32 %v5501, %v5502
        %v5504 = vand.u32 %v5503, 4294901760
        %5505 = vmatpush1.msra.mxu0 %v5504
        %5506 = vmatprep.subr.mxu0 0.0
        %v5507 = vand.u32 %v5317, 4294901760
        %v5508 = vsub.f32 %v5317, %v5507
        %v5509 = vand.u32 %v5508, 4294901760
        %v5510 = vsub.f32 %v5508, %v5509
        %v5511 = vand.u32 %v5510, 4294901760
        %5512 = vmatpush1.msra.mxu0 %v5511
        %5513 = vmatprep.subr.mxu0 0.0
        %v5514 = vand.u32 %v5318, 4294901760
        %v5515 = vsub.f32 %v5318, %v5514
        %v5516 = vand.u32 %v5515, 4294901760
        %v5517 = vsub.f32 %v5515, %v5516
        %v5518 = vand.u32 %v5517, 4294901760
        %5519 = vmatpush1.msra.mxu0 %v5518
        %5520 = vmatprep.subr.mxu0 0.0
        %v5521 = vand.u32 %v5319, 4294901760
        %v5522 = vsub.f32 %v5319, %v5521
        %v5523 = vand.u32 %v5522, 4294901760
        %v5524 = vsub.f32 %v5522, %v5523
        %v5525 = vand.u32 %v5524, 4294901760
        %5526 = vmatpush1.msra.mxu0 %v5525
        %5527 = vmatprep.subr.mxu0 0.0
        %v5528 = vand.u32 %v5320, 4294901760
        %v5529 = vsub.f32 %v5320, %v5528
        %v5530 = vand.u32 %v5529, 4294901760
        %v5531 = vsub.f32 %v5529, %v5530
        %v5532 = vand.u32 %v5531, 4294901760
        %5533 = vmatpush1.msra.mxu0 %v5532
        %5534 = vmatprep.subr.mxu0 0.0
        %5535 = vmatpush1.msra.mxu0 0.0
        %5536 = vmatprep.subr.mxu0 0.0
        %5537 = vmatpush1.msra.mxu0 0.0
        %5538 = vmatprep.subr.mxu0 0.0
        %5539 = vmatpush1.msra.mxu0 0.0
        %5540 = vmatprep.subr.mxu0 0.0
        %5541 = vmatpush1.msra.mxu0 0.0
        %5542 = vmatprep.subr.mxu0 0.0
        %5543 = vmatpush1.msra.mxu0 0.0
        %5544 = vmatprep.subr.mxu0 0.0
        %5545 = vmatpush1.msra.mxu0 0.0
        %5546 = vmatprep.subr.mxu0 0.0
        %5547 = vmatpush1.msra.mxu0 0.0
        %5548 = vmatprep.subr.mxu0 0.0
        %5549 = vmatpush1.msra.mxu0 0.0
        %5550 = vmatprep.subr.mxu0 0.0
        %5551 = vmatpush1.msra.mxu0 0.0
        %5552 = vmatprep.subr.mxu0 0.0
        %5553 = vmatpush1.msra.mxu0 0.0
        %5554 = vmatprep.subr.mxu0 0.0
        %5555 = vmatpush1.msra.mxu0 0.0
        %5556 = vmatprep.subr.mxu0 0.0
        %5557 = vmatpush1.msra.mxu0 0.0
        %5558 = vmatprep.subr.mxu0 0.0
        %5559 = vmatpush1.msra.mxu0 0.0
        %5560 = vmatprep.subr.mxu0 0.0
        %5561 = vmatpush1.msra.mxu0 0.0
        %5562 = vmatprep.subr.mxu0 0.0
        %5563 = vmatpush1.msra.mxu0 0.0
        %5564 = vmatprep.subr.mxu0 0.0
        %5565 = vmatpush1.msra.mxu0 0.0
        %5566 = vmatprep.mubr.f32.mxu0 0.0
        %v5567 = vand.u32 %v5303, 4294901760
        %5568 = vmatmul.mubr.f32.gmra.mrb[0].mxu0 %v5567
        %v5569 = vpop.f32.mrb[0].mxu0
        %v5570 = vadd.f32 %v5409, %v5569
        %v5571 = vpop.f32.mrb[0].mxu0
        %5572 = vmatprep.mubr.f32.mxu0 0.0
        %v5573 = vand.u32 %v5304, 4294901760
        %5574 = vmatmul.mubr.f32.gmra.mrb[0].mxu0 %v5573
        %v5575 = vpop.f32.mrb[0].mxu0
        %v5576 = vadd.f32 %v5419, %v5575
        %v5577 = vpop.f32.mrb[0].mxu0
        %5578 = vdwg.mxu0
        %5579 = vmatprep.subr.mxu0 0.0
        %v5580 = vand.u32 %v5305, 4294901760
        %v5581 = vsub.f32 %v5305, %v5580
        %5582 = vmatpush1.msra.mxu0 %v5581
        %5583 = vmatprep.subr.mxu0 0.0
        %v5584 = vand.u32 %v5306, 4294901760
        %v5585 = vsub.f32 %v5306, %v5584
        %5586 = vmatpush1.msra.mxu0 %v5585
        %5587 = vmatprep.subr.mxu0 0.0
        %v5588 = vand.u32 %v5307, 4294901760
        %v5589 = vsub.f32 %v5307, %v5588
        %5590 = vmatpush1.msra.mxu0 %v5589
        %5591 = vmatprep.subr.mxu0 0.0
        %v5592 = vand.u32 %v5308, 4294901760
        %v5593 = vsub.f32 %v5308, %v5592
        %5594 = vmatpush1.msra.mxu0 %v5593
        %5595 = vmatprep.subr.mxu0 0.0
        %v5596 = vand.u32 %v5309, 4294901760
        %v5597 = vsub.f32 %v5309, %v5596
        %5598 = vmatpush1.msra.mxu0 %v5597
        %5599 = vmatprep.subr.mxu0 0.0
        %v5600 = vand.u32 %v5310, 4294901760
        %v5601 = vsub.f32 %v5310, %v5600
        %5602 = vmatpush1.msra.mxu0 %v5601
        %5603 = vmatprep.subr.mxu0 0.0
        %v5604 = vand.u32 %v5311, 4294901760
        %v5605 = vsub.f32 %v5311, %v5604
        %5606 = vmatpush1.msra.mxu0 %v5605
        %5607 = vmatprep.subr.mxu0 0.0
        %v5608 = vand.u32 %v5312, 4294901760
        %v5609 = vsub.f32 %v5312, %v5608
        %5610 = vmatpush1.msra.mxu0 %v5609
        %5611 = vmatprep.subr.mxu0 0.0
        %v5612 = vand.u32 %v5313, 4294901760
        %v5613 = vsub.f32 %v5313, %v5612
        %5614 = vmatpush1.msra.mxu0 %v5613
        %5615 = vmatprep.subr.mxu0 0.0
        %v5616 = vand.u32 %v5314, 4294901760
        %v5617 = vsub.f32 %v5314, %v5616
        %5618 = vmatpush1.msra.mxu0 %v5617
        %5619 = vmatprep.subr.mxu0 0.0
        %v5620 = vand.u32 %v5315, 4294901760
        %v5621 = vsub.f32 %v5315, %v5620
        %5622 = vmatpush1.msra.mxu0 %v5621
        %5623 = vmatprep.subr.mxu0 0.0
        %v5624 = vand.u32 %v5316, 4294901760
        %v5625 = vsub.f32 %v5316, %v5624
        %5626 = vmatpush1.msra.mxu0 %v5625
        %5627 = vmatprep.subr.mxu0 0.0
        %v5628 = vand.u32 %v5317, 4294901760
        %v5629 = vsub.f32 %v5317, %v5628
        %5630 = vmatpush1.msra.mxu0 %v5629
        %5631 = vmatprep.subr.mxu0 0.0
        %v5632 = vand.u32 %v5318, 4294901760
        %v5633 = vsub.f32 %v5318, %v5632
        %5634 = vmatpush1.msra.mxu0 %v5633
        %5635 = vmatprep.subr.mxu0 0.0
        %v5636 = vand.u32 %v5319, 4294901760
        %v5637 = vsub.f32 %v5319, %v5636
        %5638 = vmatpush1.msra.mxu0 %v5637
        %5639 = vmatprep.subr.mxu0 0.0
        %v5640 = vand.u32 %v5320, 4294901760
        %v5641 = vsub.f32 %v5320, %v5640
        %5642 = vmatpush1.msra.mxu0 %v5641
        %5643 = vmatprep.subr.mxu0 0.0
        %5644 = vmatpush1.msra.mxu0 0.0
        %5645 = vmatprep.subr.mxu0 0.0
        %5646 = vmatpush1.msra.mxu0 0.0
        %5647 = vmatprep.subr.mxu0 0.0
        %5648 = vmatpush1.msra.mxu0 0.0
        %5649 = vmatprep.subr.mxu0 0.0
        %5650 = vmatpush1.msra.mxu0 0.0
        %5651 = vmatprep.subr.mxu0 0.0
        %5652 = vmatpush1.msra.mxu0 0.0
        %5653 = vmatprep.subr.mxu0 0.0
        %5654 = vmatpush1.msra.mxu0 0.0
        %5655 = vmatprep.subr.mxu0 0.0
        %5656 = vmatpush1.msra.mxu0 0.0
        %5657 = vmatprep.subr.mxu0 0.0
        %5658 = vmatpush1.msra.mxu0 0.0
        %5659 = vmatprep.subr.mxu0 0.0
        %5660 = vmatpush1.msra.mxu0 0.0
        %5661 = vmatprep.subr.mxu0 0.0
        %5662 = vmatpush1.msra.mxu0 0.0
        %5663 = vmatprep.subr.mxu0 0.0
        %5664 = vmatpush1.msra.mxu0 0.0
        %5665 = vmatprep.subr.mxu0 0.0
        %5666 = vmatpush1.msra.mxu0 0.0
        %5667 = vmatprep.subr.mxu0 0.0
        %5668 = vmatpush1.msra.mxu0 0.0
        %5669 = vmatprep.subr.mxu0 0.0
        %5670 = vmatpush1.msra.mxu0 0.0
        %5671 = vmatprep.subr.mxu0 0.0
        %5672 = vmatpush1.msra.mxu0 0.0
        %5673 = vmatprep.subr.mxu0 0.0
        %5674 = vmatpush1.msra.mxu0 0.0
        %5675 = vmatprep.mubr.f32.mxu0 0.0
        %v5676 = vand.u32 %v5303, 4294901760
        %v5677 = vsub.f32 %v5303, %v5676
        %5678 = vmatmul.mubr.f32.gmra.mrb[0].mxu0 %v5677
        %v5679 = vpop.f32.mrb[0].mxu0
        %v5680 = vadd.f32 %v5570, %v5679
        %v5681 = vpop.f32.mrb[0].mxu0
        %5682 = vmatprep.mubr.f32.mxu0 0.0
        %v5683 = vand.u32 %v5304, 4294901760
        %v5684 = vsub.f32 %v5304, %v5683
        %5685 = vmatmul.mubr.f32.gmra.mrb[0].mxu0 %v5684
        %v5686 = vpop.f32.mrb[0].mxu0
        %v5687 = vadd.f32 %v5576, %v5686
        %v5688 = vpop.f32.mrb[0].mxu0
        %5689 = vdwg.mxu0
        %5690 = vmatprep.subr.mxu0 0.0
        %v5691 = vand.u32 %v5305, 4294901760
        %5692 = vmatpush1.msra.mxu0 %v5691
        %5693 = vmatprep.subr.mxu0 0.0
        %v5694 = vand.u32 %v5306, 4294901760
        %5695 = vmatpush1.msra.mxu0 %v5694
        %5696 = vmatprep.subr.mxu0 0.0
        %v5697 = vand.u32 %v5307, 4294901760
        %5698 = vmatpush1.msra.mxu0 %v5697
        %5699 = vmatprep.subr.mxu0 0.0
        %v5700 = vand.u32 %v5308, 4294901760
        %5701 = vmatpush1.msra.mxu0 %v5700
        %5702 = vmatprep.subr.mxu0 0.0
        %v5703 = vand.u32 %v5309, 4294901760
        %5704 = vmatpush1.msra.mxu0 %v5703
        %5705 = vmatprep.subr.mxu0 0.0
        %v5706 = vand.u32 %v5310, 4294901760
        %5707 = vmatpush1.msra.mxu0 %v5706
        %5708 = vmatprep.subr.mxu0 0.0
        %v5709 = vand.u32 %v5311, 4294901760
        %5710 = vmatpush1.msra.mxu0 %v5709
        %5711 = vmatprep.subr.mxu0 0.0
        %v5712 = vand.u32 %v5312, 4294901760
        %5713 = vmatpush1.msra.mxu0 %v5712
        %5714 = vmatprep.subr.mxu0 0.0
        %v5715 = vand.u32 %v5313, 4294901760
        %5716 = vmatpush1.msra.mxu0 %v5715
        %5717 = vmatprep.subr.mxu0 0.0
        %v5718 = vand.u32 %v5314, 4294901760
        %5719 = vmatpush1.msra.mxu0 %v5718
        %5720 = vmatprep.subr.mxu0 0.0
        %v5721 = vand.u32 %v5315, 4294901760
        %5722 = vmatpush1.msra.mxu0 %v5721
        %5723 = vmatprep.subr.mxu0 0.0
        %v5724 = vand.u32 %v5316, 4294901760
        %5725 = vmatpush1.msra.mxu0 %v5724
        %5726 = vmatprep.subr.mxu0 0.0
        %v5727 = vand.u32 %v5317, 4294901760
        %5728 = vmatpush1.msra.mxu0 %v5727
        %5729 = vmatprep.subr.mxu0 0.0
        %v5730 = vand.u32 %v5318, 4294901760
        %5731 = vmatpush1.msra.mxu0 %v5730
        %5732 = vmatprep.subr.mxu0 0.0
        %v5733 = vand.u32 %v5319, 4294901760
        %5734 = vmatpush1.msra.mxu0 %v5733
        %5735 = vmatprep.subr.mxu0 0.0
        %v5736 = vand.u32 %v5320, 4294901760
        %5737 = vmatpush1.msra.mxu0 %v5736
        %5738 = vmatprep.subr.mxu0 0.0
        %5739 = vmatpush1.msra.mxu0 0.0
        %5740 = vmatprep.subr.mxu0 0.0
        %5741 = vmatpush1.msra.mxu0 0.0
        %5742 = vmatprep.subr.mxu0 0.0
        %5743 = vmatpush1.msra.mxu0 0.0
        %5744 = vmatprep.subr.mxu0 0.0
        %5745 = vmatpush1.msra.mxu0 0.0
        %5746 = vmatprep.subr.mxu0 0.0
        %5747 = vmatpush1.msra.mxu0 0.0
        %5748 = vmatprep.subr.mxu0 0.0
        %5749 = vmatpush1.msra.mxu0 0.0
        %5750 = vmatprep.subr.mxu0 0.0
        %5751 = vmatpush1.msra.mxu0 0.0
        %5752 = vmatprep.subr.mxu0 0.0
        %5753 = vmatpush1.msra.mxu0 0.0
        %5754 = vmatprep.subr.mxu0 0.0
        %5755 = vmatpush1.msra.mxu0 0.0
        %5756 = vmatprep.subr.mxu0 0.0
        %5757 = vmatpush1.msra.mxu0 0.0
        %5758 = vmatprep.subr.mxu0 0.0
        %5759 = vmatpush1.msra.mxu0 0.0
        %5760 = vmatprep.subr.mxu0 0.0
        %5761 = vmatpush1.msra.mxu0 0.0
        %5762 = vmatprep.subr.mxu0 0.0
        %5763 = vmatpush1.msra.mxu0 0.0
        %5764 = vmatprep.subr.mxu0 0.0
        %5765 = vmatpush1.msra.mxu0 0.0
        %5766 = vmatprep.subr.mxu0 0.0
        %5767 = vmatpush1.msra.mxu0 0.0
        %5768 = vmatprep.subr.mxu0 0.0
        %5769 = vmatpush1.msra.mxu0 0.0
        %5770 = vmatprep.mubr.f32.mxu0 0.0
        %v5771 = vand.u32 %v5303, 4294901760
        %v5772 = vsub.f32 %v5303, %v5771
        %v5773 = vand.u32 %v5772, 4294901760
        %5774 = vmatmul.mubr.f32.gmra.mrb[0].mxu0 %v5773
        %v5775 = vpop.f32.mrb[0].mxu0
        %v5776 = vadd.f32 %v5680, %v5775
        %v5777 = vpop.f32.mrb[0].mxu0
        %5778 = vmatprep.mubr.f32.mxu0 0.0
        %v5779 = vand.u32 %v5304, 4294901760
        %v5780 = vsub.f32 %v5304, %v5779
        %v5781 = vand.u32 %v5780, 4294901760
        %5782 = vmatmul.mubr.f32.gmra.mrb[0].mxu0 %v5781
        %v5783 = vpop.f32.mrb[0].mxu0
        %v5784 = vadd.f32 %v5687, %v5783
        %v5785 = vpop.f32.mrb[0].mxu0
        %5786 = vdwg.mxu0
        %5787 = vmatprep.subr.mxu0 0.0
        %v5788 = vand.u32 %v5305, 4294901760
        %v5789 = vsub.f32 %v5305, %v5788
        %v5790 = vand.u32 %v5789, 4294901760
        %5791 = vmatpush1.msra.mxu0 %v5790
        %5792 = vmatprep.subr.mxu0 0.0
        %v5793 = vand.u32 %v5306, 4294901760
        %v5794 = vsub.f32 %v5306, %v5793
        %v5795 = vand.u32 %v5794, 4294901760
        %5796 = vmatpush1.msra.mxu0 %v5795
        %5797 = vmatprep.subr.mxu0 0.0
        %v5798 = vand.u32 %v5307, 4294901760
        %v5799 = vsub.f32 %v5307, %v5798
        %v5800 = vand.u32 %v5799, 4294901760
        %5801 = vmatpush1.msra.mxu0 %v5800
        %5802 = vmatprep.subr.mxu0 0.0
        %v5803 = vand.u32 %v5308, 4294901760
        %v5804 = vsub.f32 %v5308, %v5803
        %v5805 = vand.u32 %v5804, 4294901760
        %5806 = vmatpush1.msra.mxu0 %v5805
        %5807 = vmatprep.subr.mxu0 0.0
        %v5808 = vand.u32 %v5309, 4294901760
        %v5809 = vsub.f32 %v5309, %v5808
        %v5810 = vand.u32 %v5809, 4294901760
        %5811 = vmatpush1.msra.mxu0 %v5810
        %5812 = vmatprep.subr.mxu0 0.0
        %v5813 = vand.u32 %v5310, 4294901760
        %v5814 = vsub.f32 %v5310, %v5813
        %v5815 = vand.u32 %v5814, 4294901760
        %5816 = vmatpush1.msra.mxu0 %v5815
        %5817 = vmatprep.subr.mxu0 0.0
        %v5818 = vand.u32 %v5311, 4294901760
        %v5819 = vsub.f32 %v5311, %v5818
        %v5820 = vand.u32 %v5819, 4294901760
        %5821 = vmatpush1.msra.mxu0 %v5820
        %5822 = vmatprep.subr.mxu0 0.0
        %v5823 = vand.u32 %v5312, 4294901760
        %v5824 = vsub.f32 %v5312, %v5823
        %v5825 = vand.u32 %v5824, 4294901760
        %5826 = vmatpush1.msra.mxu0 %v5825
        %5827 = vmatprep.subr.mxu0 0.0
        %v5828 = vand.u32 %v5313, 4294901760
        %v5829 = vsub.f32 %v5313, %v5828
        %v5830 = vand.u32 %v5829, 4294901760
        %5831 = vmatpush1.msra.mxu0 %v5830
        %5832 = vmatprep.subr.mxu0 0.0
        %v5833 = vand.u32 %v5314, 4294901760
        %v5834 = vsub.f32 %v5314, %v5833
        %v5835 = vand.u32 %v5834, 4294901760
        %5836 = vmatpush1.msra.mxu0 %v5835
        %5837 = vmatprep.subr.mxu0 0.0
        %v5838 = vand.u32 %v5315, 4294901760
        %v5839 = vsub.f32 %v5315, %v5838
        %v5840 = vand.u32 %v5839, 4294901760
        %5841 = vmatpush1.msra.mxu0 %v5840
        %5842 = vmatprep.subr.mxu0 0.0
        %v5843 = vand.u32 %v5316, 4294901760
        %v5844 = vsub.f32 %v5316, %v5843
        %v5845 = vand.u32 %v5844, 4294901760
        %5846 = vmatpush1.msra.mxu0 %v5845
        %5847 = vmatprep.subr.mxu0 0.0
        %v5848 = vand.u32 %v5317, 4294901760
        %v5849 = vsub.f32 %v5317, %v5848
        %v5850 = vand.u32 %v5849, 4294901760
        %5851 = vmatpush1.msra.mxu0 %v5850
        %5852 = vmatprep.subr.mxu0 0.0
        %v5853 = vand.u32 %v5318, 4294901760
        %v5854 = vsub.f32 %v5318, %v5853
        %v5855 = vand.u32 %v5854, 4294901760
        %5856 = vmatpush1.msra.mxu0 %v5855
        %5857 = vmatprep.subr.mxu0 0.0
        %v5858 = vand.u32 %v5319, 4294901760
        %v5859 = vsub.f32 %v5319, %v5858
        %v5860 = vand.u32 %v5859, 4294901760
        %5861 = vmatpush1.msra.mxu0 %v5860
        %5862 = vmatprep.subr.mxu0 0.0
        %v5863 = vand.u32 %v5320, 4294901760
        %v5864 = vsub.f32 %v5320, %v5863
        %v5865 = vand.u32 %v5864, 4294901760
        %5866 = vmatpush1.msra.mxu0 %v5865
        %5867 = vmatprep.subr.mxu0 0.0
        %5868 = vmatpush1.msra.mxu0 0.0
        %5869 = vmatprep.subr.mxu0 0.0
        %5870 = vmatpush1.msra.mxu0 0.0
        %5871 = vmatprep.subr.mxu0 0.0
        %5872 = vmatpush1.msra.mxu0 0.0
        %5873 = vmatprep.subr.mxu0 0.0
        %5874 = vmatpush1.msra.mxu0 0.0
        %5875 = vmatprep.subr.mxu0 0.0
        %5876 = vmatpush1.msra.mxu0 0.0
        %5877 = vmatprep.subr.mxu0 0.0
        %5878 = vmatpush1.msra.mxu0 0.0
        %5879 = vmatprep.subr.mxu0 0.0
        %5880 = vmatpush1.msra.mxu0 0.0
        %5881 = vmatprep.subr.mxu0 0.0
        %5882 = vmatpush1.msra.mxu0 0.0
        %5883 = vmatprep.subr.mxu0 0.0
        %5884 = vmatpush1.msra.mxu0 0.0
        %5885 = vmatprep.subr.mxu0 0.0
        %5886 = vmatpush1.msra.mxu0 0.0
        %5887 = vmatprep.subr.mxu0 0.0
        %5888 = vmatpush1.msra.mxu0 0.0
        %5889 = vmatprep.subr.mxu0 0.0
        %5890 = vmatpush1.msra.mxu0 0.0
        %5891 = vmatprep.subr.mxu0 0.0
        %5892 = vmatpush1.msra.mxu0 0.0
        %5893 = vmatprep.subr.mxu0 0.0
        %5894 = vmatpush1.msra.mxu0 0.0
        %5895 = vmatprep.subr.mxu0 0.0
        %5896 = vmatpush1.msra.mxu0 0.0
        %5897 = vmatprep.subr.mxu0 0.0
        %5898 = vmatpush1.msra.mxu0 0.0
        %5899 = vmatprep.mubr.f32.mxu0 0.0
        %v5900 = vand.u32 %v5303, 4294901760
        %5901 = vmatmul.mubr.f32.gmra.mrb[0].mxu0 %v5900
        %v5902 = vpop.f32.mrb[0].mxu0
        %v5903 = vadd.f32 %v5776, %v5902
        %v5904 = vpop.f32.mrb[0].mxu0
        %5905 = vmatprep.mubr.f32.mxu0 0.0
        %v5906 = vand.u32 %v5304, 4294901760
        %5907 = vmatmul.mubr.f32.gmra.mrb[0].mxu0 %v5906
        %v5908 = vpop.f32.mrb[0].mxu0
        %v5909 = vadd.f32 %v5784, %v5908
        %v5910 = vpop.f32.mrb[0].mxu0
        %5911 = vdwg.mxu0
        %5912 = vmatprep.subr.mxu0 0.0
        %v5913 = vand.u32 %v5305, 4294901760
        %5914 = vmatpush1.msra.mxu0 %v5913
        %5915 = vmatprep.subr.mxu0 0.0
        %v5916 = vand.u32 %v5306, 4294901760
        %5917 = vmatpush1.msra.mxu0 %v5916
        %5918 = vmatprep.subr.mxu0 0.0
        %v5919 = vand.u32 %v5307, 4294901760
        %5920 = vmatpush1.msra.mxu0 %v5919
        %5921 = vmatprep.subr.mxu0 0.0
        %v5922 = vand.u32 %v5308, 4294901760
        %5923 = vmatpush1.msra.mxu0 %v5922
        %5924 = vmatprep.subr.mxu0 0.0
        %v5925 = vand.u32 %v5309, 4294901760
        %5926 = vmatpush1.msra.mxu0 %v5925
        %5927 = vmatprep.subr.mxu0 0.0
        %v5928 = vand.u32 %v5310, 4294901760
        %5929 = vmatpush1.msra.mxu0 %v5928
        %5930 = vmatprep.subr.mxu0 0.0
        %v5931 = vand.u32 %v5311, 4294901760
        %5932 = vmatpush1.msra.mxu0 %v5931
        %5933 = vmatprep.subr.mxu0 0.0
        %v5934 = vand.u32 %v5312, 4294901760
        %5935 = vmatpush1.msra.mxu0 %v5934
        %5936 = vmatprep.subr.mxu0 0.0
        %v5937 = vand.u32 %v5313, 4294901760
        %5938 = vmatpush1.msra.mxu0 %v5937
        %5939 = vmatprep.subr.mxu0 0.0
        %v5940 = vand.u32 %v5314, 4294901760
        %5941 = vmatpush1.msra.mxu0 %v5940
        %5942 = vmatprep.subr.mxu0 0.0
        %v5943 = vand.u32 %v5315, 4294901760
        %5944 = vmatpush1.msra.mxu0 %v5943
        %5945 = vmatprep.subr.mxu0 0.0
        %v5946 = vand.u32 %v5316, 4294901760
        %5947 = vmatpush1.msra.mxu0 %v5946
        %5948 = vmatprep.subr.mxu0 0.0
        %v5949 = vand.u32 %v5317, 4294901760
        %5950 = vmatpush1.msra.mxu0 %v5949
        %5951 = vmatprep.subr.mxu0 0.0
        %v5952 = vand.u32 %v5318, 4294901760
        %5953 = vmatpush1.msra.mxu0 %v5952
        %5954 = vmatprep.subr.mxu0 0.0
        %v5955 = vand.u32 %v5319, 4294901760
        %5956 = vmatpush1.msra.mxu0 %v5955
        %5957 = vmatprep.subr.mxu0 0.0
        %v5958 = vand.u32 %v5320, 4294901760
        %5959 = vmatpush1.msra.mxu0 %v5958
        %5960 = vmatprep.subr.mxu0 0.0
        %5961 = vmatpush1.msra.mxu0 0.0
        %5962 = vmatprep.subr.mxu0 0.0
        %5963 = vmatpush1.msra.mxu0 0.0
        %5964 = vmatprep.subr.mxu0 0.0
        %5965 = vmatpush1.msra.mxu0 0.0
        %5966 = vmatprep.subr.mxu0 0.0
        %5967 = vmatpush1.msra.mxu0 0.0
        %5968 = vmatprep.subr.mxu0 0.0
        %5969 = vmatpush1.msra.mxu0 0.0
        %5970 = vmatprep.subr.mxu0 0.0
        %5971 = vmatpush1.msra.mxu0 0.0
        %5972 = vmatprep.subr.mxu0 0.0
        %5973 = vmatpush1.msra.mxu0 0.0
        %5974 = vmatprep.subr.mxu0 0.0
        %5975 = vmatpush1.msra.mxu0 0.0
        %5976 = vmatprep.subr.mxu0 0.0
        %5977 = vmatpush1.msra.mxu0 0.0
        %5978 = vmatprep.subr.mxu0 0.0
        %5979 = vmatpush1.msra.mxu0 0.0
        %5980 = vmatprep.subr.mxu0 0.0
        %5981 = vmatpush1.msra.mxu0 0.0
        %5982 = vmatprep.subr.mxu0 0.0
        %5983 = vmatpush1.msra.mxu0 0.0
        %5984 = vmatprep.subr.mxu0 0.0
        %5985 = vmatpush1.msra.mxu0 0.0
        %5986 = vmatprep.subr.mxu0 0.0
        %5987 = vmatpush1.msra.mxu0 0.0
        %5988 = vmatprep.subr.mxu0 0.0
        %5989 = vmatpush1.msra.mxu0 0.0
        %5990 = vmatprep.subr.mxu0 0.0
        %5991 = vmatpush1.msra.mxu0 0.0
        %5992 = vmatprep.mubr.f32.mxu0 0.0
        %v5993 = vand.u32 %v5303, 4294901760
        %5994 = vmatmul.mubr.f32.gmra.mrb[0].mxu0 %v5993
        %v5995 = vpop.f32.mrb[0].mxu0
        %v5996 = vadd.f32 %v5903, %v5995
        %v5997 = vpop.f32.mrb[0].mxu0
        %5998 = vmatprep.mubr.f32.mxu0 0.0
        %v5999 = vand.u32 %v5304, 4294901760
        %6000 = vmatmul.mubr.f32.gmra.mrb[0].mxu0 %v5999
        %v6001 = vpop.f32.mrb[0].mxu0
        %v6002 = vadd.f32 %v5909, %v6001
        %v6003 = vpop.f32.mrb[0].mxu0
        %6004 = vdwg.mxu0
        %v6005 = vtanh.pop %v5996
        %v6006 = vtanh.pop %v6002
        %v6007 = vld [vmem:[%s580] sm:$0xf]
        %v6008 = vld [vmem:[%s510] sm:$0xf]
        %v6009 = vlaneseq
        %v6010 = vshrl.u32 %v6009, 7
        %v6011 = vsub.s32 0, %v6010
        %v6012 = vrot.slane %v6007, %v6011
        %v6013 = vmul.f32 %v6005, %v6012
        %v6014 = vmul.f32 %v6006, %v6012
        %v6015 = vsel %vm1106, %v6013, 0.0
        %6016 = vadd.xlane.f32.xlu0 %v6015
        %v6017 = vpop.xlane.xlu0 %6016
        %v6018 = vsel %vm1106, %v6014, 0.0
        %6019 = vadd.xlane.f32.xlu0 %v6018
        %v6020 = vpop.xlane.xlu0 %6019
        %v6022 = vsel %vm1106, %v6008, 0
        %v6025 = vsel %vm1106, %v6005, 0
        %v6028 = vsel %vm1106, %v6006, 0
        %6030 = vmatprep.subr.mxu0 0.0
        %v6031 = vand.u32 %v6025, 4294901760
        %6032 = vmatpush1.xpose.msra.mxu0 %v6031
        %6033 = vmatprep.subr.mxu0 0.0
        %v6034 = vand.u32 %v6028, 4294901760
        %6035 = vmatpush1.xpose.msra.mxu0 %v6034
        %6036 = vmatprep.subr.mxu0 0.0
        %6037 = vmatpush1.xpose.msra.mxu0 0.0
        %6038 = vmatprep.subr.mxu0 0.0
        %6039 = vmatpush1.xpose.msra.mxu0 0.0
        %6040 = vmatprep.subr.mxu0 0.0
        %6041 = vmatpush1.xpose.msra.mxu0 0.0
        %6042 = vmatprep.subr.mxu0 0.0
        %6043 = vmatpush1.xpose.msra.mxu0 0.0
        %6044 = vmatprep.subr.mxu0 0.0
        %6045 = vmatpush1.xpose.msra.mxu0 0.0
        %6046 = vmatprep.subr.mxu0 0.0
        %6047 = vmatpush1.xpose.msra.mxu0 0.0
        %6048 = vmatprep.subr.mxu0 0.0
        %6049 = vmatpush1.xpose.msra.mxu0 0.0
        %6050 = vmatprep.subr.mxu0 0.0
        %6051 = vmatpush1.xpose.msra.mxu0 0.0
        %6052 = vmatprep.subr.mxu0 0.0
        %6053 = vmatpush1.xpose.msra.mxu0 0.0
        %6054 = vmatprep.subr.mxu0 0.0
        %6055 = vmatpush1.xpose.msra.mxu0 0.0
        %6056 = vmatprep.subr.mxu0 0.0
        %6057 = vmatpush1.xpose.msra.mxu0 0.0
        %6058 = vmatprep.subr.mxu0 0.0
        %6059 = vmatpush1.xpose.msra.mxu0 0.0
        %6060 = vmatprep.subr.mxu0 0.0
        %6061 = vmatpush1.xpose.msra.mxu0 0.0
        %6062 = vmatprep.subr.mxu0 0.0
        %6063 = vmatpush1.xpose.msra.mxu0 0.0
        %6064 = vmatprep.subr.mxu0 0.0
        %6065 = vmatpush1.xpose.msra.mxu0 0.0
        %6066 = vmatprep.subr.mxu0 0.0
        %6067 = vmatpush1.xpose.msra.mxu0 0.0
        %6068 = vmatprep.subr.mxu0 0.0
        %6069 = vmatpush1.xpose.msra.mxu0 0.0
        %6070 = vmatprep.subr.mxu0 0.0
        %6071 = vmatpush1.xpose.msra.mxu0 0.0
        %6072 = vmatprep.subr.mxu0 0.0
        %6073 = vmatpush1.xpose.msra.mxu0 0.0
        %6074 = vmatprep.subr.mxu0 0.0
        %6075 = vmatpush1.xpose.msra.mxu0 0.0
        %6076 = vmatprep.subr.mxu0 0.0
        %6077 = vmatpush1.xpose.msra.mxu0 0.0
        %6078 = vmatprep.subr.mxu0 0.0
        %6079 = vmatpush1.xpose.msra.mxu0 0.0
        %6080 = vmatprep.subr.mxu0 0.0
        %6081 = vmatpush1.xpose.msra.mxu0 0.0
        %6082 = vmatprep.subr.mxu0 0.0
        %6083 = vmatpush1.xpose.msra.mxu0 0.0
        %6084 = vmatprep.subr.mxu0 0.0
        %6085 = vmatpush1.xpose.msra.mxu0 0.0
        %6086 = vmatprep.subr.mxu0 0.0
        %6087 = vmatpush1.xpose.msra.mxu0 0.0
        %6088 = vmatprep.subr.mxu0 0.0
        %6089 = vmatpush1.xpose.msra.mxu0 0.0
        %6090 = vmatprep.subr.mxu0 0.0
        %6091 = vmatpush1.xpose.msra.mxu0 0.0
        %6092 = vmatprep.subr.mxu0 0.0
        %6093 = vmatpush1.xpose.msra.mxu0 0.0
        %6094 = vmatprep.subr.mxu0 0.0
        %6095 = vmatpush1.xpose.msra.mxu0 0.0
        %6096 = vmatprep.mubr.f32.mxu0 0.0
        %v6097 = vand.u32 %v6022, 4294901760
        %v6098 = vsub.f32 %v6022, %v6097
        %v6099 = vand.u32 %v6098, 4294901760
        %v6100 = vsub.f32 %v6098, %v6099
        %v6101 = vand.u32 %v6100, 4294901760
        %6102 = vmatmul.mubr.f32.gmra.mrb[0].mxu0 %v6101
        %v6103 = vpop.f32.mrb[0].mxu0
        %v6104 = vadd.f32 0.0, %v6103
        %v6105 = vpop.f32.mrb[0].mxu0
        %6106 = vdwg.mxu0
        %6107 = vmatprep.subr.mxu0 0.0
        %v6108 = vand.u32 %v6025, 4294901760
        %v6109 = vsub.f32 %v6025, %v6108
        %v6110 = vand.u32 %v6109, 4294901760
        %v6111 = vsub.f32 %v6109, %v6110
        %v6112 = vand.u32 %v6111, 4294901760
        %6113 = vmatpush1.xpose.msra.mxu0 %v6112
        %6114 = vmatprep.subr.mxu0 0.0
        %v6115 = vand.u32 %v6028, 4294901760
        %v6116 = vsub.f32 %v6028, %v6115
        %v6117 = vand.u32 %v6116, 4294901760
        %v6118 = vsub.f32 %v6116, %v6117
        %v6119 = vand.u32 %v6118, 4294901760
        %6120 = vmatpush1.xpose.msra.mxu0 %v6119
        %6121 = vmatprep.subr.mxu0 0.0
        %6122 = vmatpush1.xpose.msra.mxu0 0.0
        %6123 = vmatprep.subr.mxu0 0.0
        %6124 = vmatpush1.xpose.msra.mxu0 0.0
        %6125 = vmatprep.subr.mxu0 0.0
        %6126 = vmatpush1.xpose.msra.mxu0 0.0
        %6127 = vmatprep.subr.mxu0 0.0
        %6128 = vmatpush1.xpose.msra.mxu0 0.0
        %6129 = vmatprep.subr.mxu0 0.0
        %6130 = vmatpush1.xpose.msra.mxu0 0.0
        %6131 = vmatprep.subr.mxu0 0.0
        %6132 = vmatpush1.xpose.msra.mxu0 0.0
        %6133 = vmatprep.subr.mxu0 0.0
        %6134 = vmatpush1.xpose.msra.mxu0 0.0
        %6135 = vmatprep.subr.mxu0 0.0
        %6136 = vmatpush1.xpose.msra.mxu0 0.0
        %6137 = vmatprep.subr.mxu0 0.0
        %6138 = vmatpush1.xpose.msra.mxu0 0.0
        %6139 = vmatprep.subr.mxu0 0.0
        %6140 = vmatpush1.xpose.msra.mxu0 0.0
        %6141 = vmatprep.subr.mxu0 0.0
        %6142 = vmatpush1.xpose.msra.mxu0 0.0
        %6143 = vmatprep.subr.mxu0 0.0
        %6144 = vmatpush1.xpose.msra.mxu0 0.0
        %6145 = vmatprep.subr.mxu0 0.0
        %6146 = vmatpush1.xpose.msra.mxu0 0.0
        %6147 = vmatprep.subr.mxu0 0.0
        %6148 = vmatpush1.xpose.msra.mxu0 0.0
        %6149 = vmatprep.subr.mxu0 0.0
        %6150 = vmatpush1.xpose.msra.mxu0 0.0
        %6151 = vmatprep.subr.mxu0 0.0
        %6152 = vmatpush1.xpose.msra.mxu0 0.0
        %6153 = vmatprep.subr.mxu0 0.0
        %6154 = vmatpush1.xpose.msra.mxu0 0.0
        %6155 = vmatprep.subr.mxu0 0.0
        %6156 = vmatpush1.xpose.msra.mxu0 0.0
        %6157 = vmatprep.subr.mxu0 0.0
        %6158 = vmatpush1.xpose.msra.mxu0 0.0
        %6159 = vmatprep.subr.mxu0 0.0
        %6160 = vmatpush1.xpose.msra.mxu0 0.0
        %6161 = vmatprep.subr.mxu0 0.0
        %6162 = vmatpush1.xpose.msra.mxu0 0.0
        %6163 = vmatprep.subr.mxu0 0.0
        %6164 = vmatpush1.xpose.msra.mxu0 0.0
        %6165 = vmatprep.subr.mxu0 0.0
        %6166 = vmatpush1.xpose.msra.mxu0 0.0
        %6167 = vmatprep.subr.mxu0 0.0
        %6168 = vmatpush1.xpose.msra.mxu0 0.0
        %6169 = vmatprep.subr.mxu0 0.0
        %6170 = vmatpush1.xpose.msra.mxu0 0.0
        %6171 = vmatprep.subr.mxu0 0.0
        %6172 = vmatpush1.xpose.msra.mxu0 0.0
        %6173 = vmatprep.subr.mxu0 0.0
        %6174 = vmatpush1.xpose.msra.mxu0 0.0
        %6175 = vmatprep.subr.mxu0 0.0
        %6176 = vmatpush1.xpose.msra.mxu0 0.0
        %6177 = vmatprep.subr.mxu0 0.0
        %6178 = vmatpush1.xpose.msra.mxu0 0.0
        %6179 = vmatprep.subr.mxu0 0.0
        %6180 = vmatpush1.xpose.msra.mxu0 0.0
        %6181 = vmatprep.mubr.f32.mxu0 0.0
        %v6182 = vand.u32 %v6022, 4294901760
        %6183 = vmatmul.mubr.f32.gmra.mrb[0].mxu0 %v6182
        %v6184 = vpop.f32.mrb[0].mxu0
        %v6185 = vadd.f32 %v6104, %v6184
        %v6186 = vpop.f32.mrb[0].mxu0
        %6187 = vdwg.mxu0
        %6188 = vmatprep.subr.mxu0 0.0
        %v6189 = vand.u32 %v6025, 4294901760
        %v6190 = vsub.f32 %v6025, %v6189
        %6191 = vmatpush1.xpose.msra.mxu0 %v6190
        %6192 = vmatprep.subr.mxu0 0.0
        %v6193 = vand.u32 %v6028, 4294901760
        %v6194 = vsub.f32 %v6028, %v6193
        %6195 = vmatpush1.xpose.msra.mxu0 %v6194
        %6196 = vmatprep.subr.mxu0 0.0
        %6197 = vmatpush1.xpose.msra.mxu0 0.0
        %6198 = vmatprep.subr.mxu0 0.0
        %6199 = vmatpush1.xpose.msra.mxu0 0.0
        %6200 = vmatprep.subr.mxu0 0.0
        %6201 = vmatpush1.xpose.msra.mxu0 0.0
        %6202 = vmatprep.subr.mxu0 0.0
        %6203 = vmatpush1.xpose.msra.mxu0 0.0
        %6204 = vmatprep.subr.mxu0 0.0
        %6205 = vmatpush1.xpose.msra.mxu0 0.0
        %6206 = vmatprep.subr.mxu0 0.0
        %6207 = vmatpush1.xpose.msra.mxu0 0.0
        %6208 = vmatprep.subr.mxu0 0.0
        %6209 = vmatpush1.xpose.msra.mxu0 0.0
        %6210 = vmatprep.subr.mxu0 0.0
        %6211 = vmatpush1.xpose.msra.mxu0 0.0
        %6212 = vmatprep.subr.mxu0 0.0
        %6213 = vmatpush1.xpose.msra.mxu0 0.0
        %6214 = vmatprep.subr.mxu0 0.0
        %6215 = vmatpush1.xpose.msra.mxu0 0.0
        %6216 = vmatprep.subr.mxu0 0.0
        %6217 = vmatpush1.xpose.msra.mxu0 0.0
        %6218 = vmatprep.subr.mxu0 0.0
        %6219 = vmatpush1.xpose.msra.mxu0 0.0
        %6220 = vmatprep.subr.mxu0 0.0
        %6221 = vmatpush1.xpose.msra.mxu0 0.0
        %6222 = vmatprep.subr.mxu0 0.0
        %6223 = vmatpush1.xpose.msra.mxu0 0.0
        %6224 = vmatprep.subr.mxu0 0.0
        %6225 = vmatpush1.xpose.msra.mxu0 0.0
        %6226 = vmatprep.subr.mxu0 0.0
        %6227 = vmatpush1.xpose.msra.mxu0 0.0
        %6228 = vmatprep.subr.mxu0 0.0
        %6229 = vmatpush1.xpose.msra.mxu0 0.0
        %6230 = vmatprep.subr.mxu0 0.0
        %6231 = vmatpush1.xpose.msra.mxu0 0.0
        %6232 = vmatprep.subr.mxu0 0.0
        %6233 = vmatpush1.xpose.msra.mxu0 0.0
        %6234 = vmatprep.subr.mxu0 0.0
        %6235 = vmatpush1.xpose.msra.mxu0 0.0
        %6236 = vmatprep.subr.mxu0 0.0
        %6237 = vmatpush1.xpose.msra.mxu0 0.0
        %6238 = vmatprep.subr.mxu0 0.0
        %6239 = vmatpush1.xpose.msra.mxu0 0.0
        %6240 = vmatprep.subr.mxu0 0.0
        %6241 = vmatpush1.xpose.msra.mxu0 0.0
        %6242 = vmatprep.subr.mxu0 0.0
        %6243 = vmatpush1.xpose.msra.mxu0 0.0
        %6244 = vmatprep.subr.mxu0 0.0
        %6245 = vmatpush1.xpose.msra.mxu0 0.0
        %6246 = vmatprep.subr.mxu0 0.0
        %6247 = vmatpush1.xpose.msra.mxu0 0.0
        %6248 = vmatprep.subr.mxu0 0.0
        %6249 = vmatpush1.xpose.msra.mxu0 0.0
        %6250 = vmatprep.subr.mxu0 0.0
        %6251 = vmatpush1.xpose.msra.mxu0 0.0
        %6252 = vmatprep.subr.mxu0 0.0
        %6253 = vmatpush1.xpose.msra.mxu0 0.0
        %6254 = vmatprep.subr.mxu0 0.0
        %6255 = vmatpush1.xpose.msra.mxu0 0.0
        %6256 = vmatprep.mubr.f32.mxu0 0.0
        %v6257 = vand.u32 %v6022, 4294901760
        %v6258 = vsub.f32 %v6022, %v6257
        %6259 = vmatmul.mubr.f32.gmra.mrb[0].mxu0 %v6258
        %v6260 = vpop.f32.mrb[0].mxu0
        %v6261 = vadd.f32 %v6185, %v6260
        %v6262 = vpop.f32.mrb[0].mxu0
        %6263 = vdwg.mxu0
        %6264 = vmatprep.subr.mxu0 0.0
        %v6265 = vand.u32 %v6025, 4294901760
        %6266 = vmatpush1.xpose.msra.mxu0 %v6265
        %6267 = vmatprep.subr.mxu0 0.0
        %v6268 = vand.u32 %v6028, 4294901760
        %6269 = vmatpush1.xpose.msra.mxu0 %v6268
        %6270 = vmatprep.subr.mxu0 0.0
        %6271 = vmatpush1.xpose.msra.mxu0 0.0
        %6272 = vmatprep.subr.mxu0 0.0
        %6273 = vmatpush1.xpose.msra.mxu0 0.0
        %6274 = vmatprep.subr.mxu0 0.0
        %6275 = vmatpush1.xpose.msra.mxu0 0.0
        %6276 = vmatprep.subr.mxu0 0.0
        %6277 = vmatpush1.xpose.msra.mxu0 0.0
        %6278 = vmatprep.subr.mxu0 0.0
        %6279 = vmatpush1.xpose.msra.mxu0 0.0
        %6280 = vmatprep.subr.mxu0 0.0
        %6281 = vmatpush1.xpose.msra.mxu0 0.0
        %6282 = vmatprep.subr.mxu0 0.0
        %6283 = vmatpush1.xpose.msra.mxu0 0.0
        %6284 = vmatprep.subr.mxu0 0.0
        %6285 = vmatpush1.xpose.msra.mxu0 0.0
        %6286 = vmatprep.subr.mxu0 0.0
        %6287 = vmatpush1.xpose.msra.mxu0 0.0
        %6288 = vmatprep.subr.mxu0 0.0
        %6289 = vmatpush1.xpose.msra.mxu0 0.0
        %6290 = vmatprep.subr.mxu0 0.0
        %6291 = vmatpush1.xpose.msra.mxu0 0.0
        %6292 = vmatprep.subr.mxu0 0.0
        %6293 = vmatpush1.xpose.msra.mxu0 0.0
        %6294 = vmatprep.subr.mxu0 0.0
        %6295 = vmatpush1.xpose.msra.mxu0 0.0
        %6296 = vmatprep.subr.mxu0 0.0
        %6297 = vmatpush1.xpose.msra.mxu0 0.0
        %6298 = vmatprep.subr.mxu0 0.0
        %6299 = vmatpush1.xpose.msra.mxu0 0.0
        %6300 = vmatprep.subr.mxu0 0.0
        %6301 = vmatpush1.xpose.msra.mxu0 0.0
        %6302 = vmatprep.subr.mxu0 0.0
        %6303 = vmatpush1.xpose.msra.mxu0 0.0
        %6304 = vmatprep.subr.mxu0 0.0
        %6305 = vmatpush1.xpose.msra.mxu0 0.0
        %6306 = vmatprep.subr.mxu0 0.0
        %6307 = vmatpush1.xpose.msra.mxu0 0.0
        %6308 = vmatprep.subr.mxu0 0.0
        %6309 = vmatpush1.xpose.msra.mxu0 0.0
        %6310 = vmatprep.subr.mxu0 0.0
        %6311 = vmatpush1.xpose.msra.mxu0 0.0
        %6312 = vmatprep.subr.mxu0 0.0
        %6313 = vmatpush1.xpose.msra.mxu0 0.0
        %6314 = vmatprep.subr.mxu0 0.0
        %6315 = vmatpush1.xpose.msra.mxu0 0.0
        %6316 = vmatprep.subr.mxu0 0.0
        %6317 = vmatpush1.xpose.msra.mxu0 0.0
        %6318 = vmatprep.subr.mxu0 0.0
        %6319 = vmatpush1.xpose.msra.mxu0 0.0
        %6320 = vmatprep.subr.mxu0 0.0
        %6321 = vmatpush1.xpose.msra.mxu0 0.0
        %6322 = vmatprep.subr.mxu0 0.0
        %6323 = vmatpush1.xpose.msra.mxu0 0.0
        %6324 = vmatprep.subr.mxu0 0.0
        %6325 = vmatpush1.xpose.msra.mxu0 0.0
        %6326 = vmatprep.subr.mxu0 0.0
        %6327 = vmatpush1.xpose.msra.mxu0 0.0
        %6328 = vmatprep.subr.mxu0 0.0
        %6329 = vmatpush1.xpose.msra.mxu0 0.0
        %6330 = vmatprep.mubr.f32.mxu0 0.0
        %v6331 = vand.u32 %v6022, 4294901760
        %v6332 = vsub.f32 %v6022, %v6331
        %v6333 = vand.u32 %v6332, 4294901760
        %6334 = vmatmul.mubr.f32.gmra.mrb[0].mxu0 %v6333
        %v6335 = vpop.f32.mrb[0].mxu0
        %v6336 = vadd.f32 %v6261, %v6335
        %v6337 = vpop.f32.mrb[0].mxu0
        %6338 = vdwg.mxu0
        %6339 = vmatprep.subr.mxu0 0.0
        %v6340 = vand.u32 %v6025, 4294901760
        %v6341 = vsub.f32 %v6025, %v6340
        %v6342 = vand.u32 %v6341, 4294901760
        %6343 = vmatpush1.xpose.msra.mxu0 %v6342
        %6344 = vmatprep.subr.mxu0 0.0
        %v6345 = vand.u32 %v6028, 4294901760
        %v6346 = vsub.f32 %v6028, %v6345
        %v6347 = vand.u32 %v6346, 4294901760
        %6348 = vmatpush1.xpose.msra.mxu0 %v6347
        %6349 = vmatprep.subr.mxu0 0.0
        %6350 = vmatpush1.xpose.msra.mxu0 0.0
        %6351 = vmatprep.subr.mxu0 0.0
        %6352 = vmatpush1.xpose.msra.mxu0 0.0
        %6353 = vmatprep.subr.mxu0 0.0
        %6354 = vmatpush1.xpose.msra.mxu0 0.0
        %6355 = vmatprep.subr.mxu0 0.0
        %6356 = vmatpush1.xpose.msra.mxu0 0.0
        %6357 = vmatprep.subr.mxu0 0.0
        %6358 = vmatpush1.xpose.msra.mxu0 0.0
        %6359 = vmatprep.subr.mxu0 0.0
        %6360 = vmatpush1.xpose.msra.mxu0 0.0
        %6361 = vmatprep.subr.mxu0 0.0
        %6362 = vmatpush1.xpose.msra.mxu0 0.0
        %6363 = vmatprep.subr.mxu0 0.0
        %6364 = vmatpush1.xpose.msra.mxu0 0.0
        %6365 = vmatprep.subr.mxu0 0.0
        %6366 = vmatpush1.xpose.msra.mxu0 0.0
        %6367 = vmatprep.subr.mxu0 0.0
        %6368 = vmatpush1.xpose.msra.mxu0 0.0
        %6369 = vmatprep.subr.mxu0 0.0
        %6370 = vmatpush1.xpose.msra.mxu0 0.0
        %6371 = vmatprep.subr.mxu0 0.0
        %6372 = vmatpush1.xpose.msra.mxu0 0.0
        %6373 = vmatprep.subr.mxu0 0.0
        %6374 = vmatpush1.xpose.msra.mxu0 0.0
        %6375 = vmatprep.subr.mxu0 0.0
        %6376 = vmatpush1.xpose.msra.mxu0 0.0
        %6377 = vmatprep.subr.mxu0 0.0
        %6378 = vmatpush1.xpose.msra.mxu0 0.0
        %6379 = vmatprep.subr.mxu0 0.0
        %6380 = vmatpush1.xpose.msra.mxu0 0.0
        %6381 = vmatprep.subr.mxu0 0.0
        %6382 = vmatpush1.xpose.msra.mxu0 0.0
        %6383 = vmatprep.subr.mxu0 0.0
        %6384 = vmatpush1.xpose.msra.mxu0 0.0
        %6385 = vmatprep.subr.mxu0 0.0
        %6386 = vmatpush1.xpose.msra.mxu0 0.0
        %6387 = vmatprep.subr.mxu0 0.0
        %6388 = vmatpush1.xpose.msra.mxu0 0.0
        %6389 = vmatprep.subr.mxu0 0.0
        %6390 = vmatpush1.xpose.msra.mxu0 0.0
        %6391 = vmatprep.subr.mxu0 0.0
        %6392 = vmatpush1.xpose.msra.mxu0 0.0
        %6393 = vmatprep.subr.mxu0 0.0
        %6394 = vmatpush1.xpose.msra.mxu0 0.0
        %6395 = vmatprep.subr.mxu0 0.0
        %6396 = vmatpush1.xpose.msra.mxu0 0.0
        %6397 = vmatprep.subr.mxu0 0.0
        %6398 = vmatpush1.xpose.msra.mxu0 0.0
        %6399 = vmatprep.subr.mxu0 0.0
        %6400 = vmatpush1.xpose.msra.mxu0 0.0
        %6401 = vmatprep.subr.mxu0 0.0
        %6402 = vmatpush1.xpose.msra.mxu0 0.0
        %6403 = vmatprep.subr.mxu0 0.0
        %6404 = vmatpush1.xpose.msra.mxu0 0.0
        %6405 = vmatprep.subr.mxu0 0.0
        %6406 = vmatpush1.xpose.msra.mxu0 0.0
        %6407 = vmatprep.subr.mxu0 0.0
        %6408 = vmatpush1.xpose.msra.mxu0 0.0
        %6409 = vmatprep.mubr.f32.mxu0 0.0
        %v6410 = vand.u32 %v6022, 4294901760
        %6411 = vmatmul.mubr.f32.gmra.mrb[0].mxu0 %v6410
        %v6412 = vpop.f32.mrb[0].mxu0
        %v6413 = vadd.f32 %v6336, %v6412
        %v6414 = vpop.f32.mrb[0].mxu0
        %6415 = vdwg.mxu0
        %6416 = vmatprep.subr.mxu0 0.0
        %v6417 = vand.u32 %v6025, 4294901760
        %6418 = vmatpush1.xpose.msra.mxu0 %v6417
        %6419 = vmatprep.subr.mxu0 0.0
        %v6420 = vand.u32 %v6028, 4294901760
        %6421 = vmatpush1.xpose.msra.mxu0 %v6420
        %6422 = vmatprep.subr.mxu0 0.0
        %6423 = vmatpush1.xpose.msra.mxu0 0.0
        %6424 = vmatprep.subr.mxu0 0.0
        %6425 = vmatpush1.xpose.msra.mxu0 0.0
        %6426 = vmatprep.subr.mxu0 0.0
        %6427 = vmatpush1.xpose.msra.mxu0 0.0
        %6428 = vmatprep.subr.mxu0 0.0
        %6429 = vmatpush1.xpose.msra.mxu0 0.0
        %6430 = vmatprep.subr.mxu0 0.0
        %6431 = vmatpush1.xpose.msra.mxu0 0.0
        %6432 = vmatprep.subr.mxu0 0.0
        %6433 = vmatpush1.xpose.msra.mxu0 0.0
        %6434 = vmatprep.subr.mxu0 0.0
        %6435 = vmatpush1.xpose.msra.mxu0 0.0
        %6436 = vmatprep.subr.mxu0 0.0
        %6437 = vmatpush1.xpose.msra.mxu0 0.0
        %6438 = vmatprep.subr.mxu0 0.0
        %6439 = vmatpush1.xpose.msra.mxu0 0.0
        %6440 = vmatprep.subr.mxu0 0.0
        %6441 = vmatpush1.xpose.msra.mxu0 0.0
        %6442 = vmatprep.subr.mxu0 0.0
        %6443 = vmatpush1.xpose.msra.mxu0 0.0
        %6444 = vmatprep.subr.mxu0 0.0
        %6445 = vmatpush1.xpose.msra.mxu0 0.0
        %6446 = vmatprep.subr.mxu0 0.0
        %6447 = vmatpush1.xpose.msra.mxu0 0.0
        %6448 = vmatprep.subr.mxu0 0.0
        %6449 = vmatpush1.xpose.msra.mxu0 0.0
        %6450 = vmatprep.subr.mxu0 0.0
        %6451 = vmatpush1.xpose.msra.mxu0 0.0
        %6452 = vmatprep.subr.mxu0 0.0
        %6453 = vmatpush1.xpose.msra.mxu0 0.0
        %6454 = vmatprep.subr.mxu0 0.0
        %6455 = vmatpush1.xpose.msra.mxu0 0.0
        %6456 = vmatprep.subr.mxu0 0.0
        %6457 = vmatpush1.xpose.msra.mxu0 0.0
        %6458 = vmatprep.subr.mxu0 0.0
        %6459 = vmatpush1.xpose.msra.mxu0 0.0
        %6460 = vmatprep.subr.mxu0 0.0
        %6461 = vmatpush1.xpose.msra.mxu0 0.0
        %6462 = vmatprep.subr.mxu0 0.0
        %6463 = vmatpush1.xpose.msra.mxu0 0.0
        %6464 = vmatprep.subr.mxu0 0.0
        %6465 = vmatpush1.xpose.msra.mxu0 0.0
        %6466 = vmatprep.subr.mxu0 0.0
        %6467 = vmatpush1.xpose.msra.mxu0 0.0
        %6468 = vmatprep.subr.mxu0 0.0
        %6469 = vmatpush1.xpose.msra.mxu0 0.0
        %6470 = vmatprep.subr.mxu0 0.0
        %6471 = vmatpush1.xpose.msra.mxu0 0.0
        %6472 = vmatprep.subr.mxu0 0.0
        %6473 = vmatpush1.xpose.msra.mxu0 0.0
        %6474 = vmatprep.subr.mxu0 0.0
        %6475 = vmatpush1.xpose.msra.mxu0 0.0
        %6476 = vmatprep.subr.mxu0 0.0
        %6477 = vmatpush1.xpose.msra.mxu0 0.0
        %6478 = vmatprep.subr.mxu0 0.0
        %6479 = vmatpush1.xpose.msra.mxu0 0.0
        %6480 = vmatprep.subr.mxu0 0.0
        %6481 = vmatpush1.xpose.msra.mxu0 0.0
        %6482 = vmatprep.mubr.f32.mxu0 0.0
        %v6483 = vand.u32 %v6022, 4294901760
        %6484 = vmatmul.mubr.f32.gmra.mrb[0].mxu0 %v6483
        %v6485 = vpop.f32.mrb[0].mxu0
        %v6486 = vadd.f32 %v6413, %v6485
        %v6487 = vpop.f32.mrb[0].mxu0
        %6488 = vdwg.mxu0
        %v6489 = vlaneseq
        %v6490 = vshrl.u32 %v6489, 7
        %v6491 = vsub.s32 0, %v6490
        %v6492 = vrot.slane %v6486, %v6491
        %v6493 = vadd.f32 %v6017, %v6492
        %v6494 = vadd.f32 %v6020, %v6492
        %vm6495 = vcmp.gt.f32.partialorder %v6493, 0.0
        %vm6496 = vcmp.gt.f32.partialorder %v6494, 0.0
        %v6497 = vmul.f32 %v6493, 0.2
        %v6498 = vmul.f32 %v6494, 0.2
        %v6499 = vsel %vm6495, %v6493, %v6497
        %v6500 = vsel %vm6496, %v6494, %v6498
        %v6501 = vsel %vm1593, -1e+12, %v6499
        %v6502 = vsel %vm1594, -1e+12, %v6500
        %v6503 = vsel %vm587, %v6501, -inf
        %6504 = vmax.xlane.f32.xlu0 %v6503
        %v6505 = vpop.xlane.xlu0 %6504
        %v6506 = vsel %vm587, %v6502, -inf
        %6507 = vmax.xlane.f32.xlu0 %v6506
        %v6508 = vpop.xlane.xlu0 %6507
        %v6509 = vsub.f32 %v6501, %v6505
        %v6510 = vsub.f32 %v6502, %v6508
        %v6511 = vmul.f32 %v6509, 1.442695
        %v6512 = vpow.pop %v6511
        %v6513 = vmul.f32 %v6510, 1.442695
        %v6514 = vpow.pop %v6513
        %v6515 = vsel %vm587, %v6512, 0.0
        %6516 = vadd.xlane.f32.xlu0 %v6515
        %v6517 = vpop.xlane.xlu0 %6516
        %v6518 = vsel %vm587, %v6514, 0.0
        %6519 = vadd.xlane.f32.xlu0 %v6518
        %v6520 = vpop.xlane.xlu0 %6519
        %v6521 = vrcp.pop %v6517
        %v6522 = vmul.f32 %v6512, %v6521
        %v6523 = vrcp.pop %v6520
        %v6524 = vmul.f32 %v6514, %v6523
        %v6525 = vlaneseq
        %v6526 = vshrl.u32 %v6525, 7
        %v6527 = vsub.s32 1, %v6526
        %v6528 = vrot.slane %v6007, %v6527
        %6530 = vrot.lane.b32.xlu0 %v6528, 32
        %v6531 = vpop.permute.xlu0 %6530
        %v6533 = vmul.f32 %v6005, %v6531
        %v6534 = vmul.f32 %v6006, %v6531
        %6537 = vrot.lane.b32.xlu0 %v6533, 96
        %v6538 = vpop.permute.xlu0 %6537
        %6539 = vrot.lane.b32.xlu0 %v6534, 96
        %v6540 = vpop.permute.xlu0 %6539
        %v6543 = vsel %vm1106, %v6538, 0.0
        %6544 = vadd.xlane.f32.xlu0 %v6543
        %v6545 = vpop.xlane.xlu0 %6544
        %v6546 = vsel %vm1106, %v6540, 0.0
        %6547 = vadd.xlane.f32.xlu0 %v6546
        %v6548 = vpop.xlane.xlu0 %6547
        %v6549 = vrot.slane %v6008, 1
        %6550 = vrot.lane.b32.xlu0 %v6005, 96
        %v6551 = vpop.permute.xlu0 %6550
        %6552 = vrot.lane.b32.xlu0 %v6006, 96
        %v6553 = vpop.permute.xlu0 %6552
        %v6554 = vsel %vm1106, %v6549, 0
        %v6556 = vsel %vm1106, %v6551, 0
        %v6558 = vsel %vm1106, %v6553, 0
        %6560 = vmatprep.subr.mxu0 0.0
        %v6561 = vand.u32 %v6556, 4294901760
        %6562 = vmatpush1.xpose.msra.mxu0 %v6561
        %6563 = vmatprep.subr.mxu0 0.0
        %v6564 = vand.u32 %v6558, 4294901760
        %6565 = vmatpush1.xpose.msra.mxu0 %v6564
        %6566 = vmatprep.subr.mxu0 0.0
        %6567 = vmatpush1.xpose.msra.mxu0 0.0
        %6568 = vmatprep.subr.mxu0 0.0
        %6569 = vmatpush1.xpose.msra.mxu0 0.0
        %6570 = vmatprep.subr.mxu0 0.0
        %6571 = vmatpush1.xpose.msra.mxu0 0.0
        %6572 = vmatprep.subr.mxu0 0.0
        %6573 = vmatpush1.xpose.msra.mxu0 0.0
        %6574 = vmatprep.subr.mxu0 0.0
        %6575 = vmatpush1.xpose.msra.mxu0 0.0
        %6576 = vmatprep.subr.mxu0 0.0
        %6577 = vmatpush1.xpose.msra.mxu0 0.0
        %6578 = vmatprep.subr.mxu0 0.0
        %6579 = vmatpush1.xpose.msra.mxu0 0.0
        %6580 = vmatprep.subr.mxu0 0.0
        %6581 = vmatpush1.xpose.msra.mxu0 0.0
        %6582 = vmatprep.subr.mxu0 0.0
        %6583 = vmatpush1.xpose.msra.mxu0 0.0
        %6584 = vmatprep.subr.mxu0 0.0
        %6585 = vmatpush1.xpose.msra.mxu0 0.0
        %6586 = vmatprep.subr.mxu0 0.0
        %6587 = vmatpush1.xpose.msra.mxu0 0.0
        %6588 = vmatprep.subr.mxu0 0.0
        %6589 = vmatpush1.xpose.msra.mxu0 0.0
        %6590 = vmatprep.subr.mxu0 0.0
        %6591 = vmatpush1.xpose.msra.mxu0 0.0
        %6592 = vmatprep.subr.mxu0 0.0
        %6593 = vmatpush1.xpose.msra.mxu0 0.0
        %6594 = vmatprep.subr.mxu0 0.0
        %6595 = vmatpush1.xpose.msra.mxu0 0.0
        %6596 = vmatprep.subr.mxu0 0.0
        %6597 = vmatpush1.xpose.msra.mxu0 0.0
        %6598 = vmatprep.subr.mxu0 0.0
        %6599 = vmatpush1.xpose.msra.mxu0 0.0
        %6600 = vmatprep.subr.mxu0 0.0
        %6601 = vmatpush1.xpose.msra.mxu0 0.0
        %6602 = vmatprep.subr.mxu0 0.0
        %6603 = vmatpush1.xpose.msra.mxu0 0.0
        %6604 = vmatprep.subr.mxu0 0.0
        %6605 = vmatpush1.xpose.msra.mxu0 0.0
        %6606 = vmatprep.subr.mxu0 0.0
        %6607 = vmatpush1.xpose.msra.mxu0 0.0
        %6608 = vmatprep.subr.mxu0 0.0
        %6609 = vmatpush1.xpose.msra.mxu0 0.0
        %6610 = vmatprep.subr.mxu0 0.0
        %6611 = vmatpush1.xpose.msra.mxu0 0.0
        %6612 = vmatprep.subr.mxu0 0.0
        %6613 = vmatpush1.xpose.msra.mxu0 0.0
        %6614 = vmatprep.subr.mxu0 0.0
        %6615 = vmatpush1.xpose.msra.mxu0 0.0
        %6616 = vmatprep.subr.mxu0 0.0
        %6617 = vmatpush1.xpose.msra.mxu0 0.0
        %6618 = vmatprep.subr.mxu0 0.0
        %6619 = vmatpush1.xpose.msra.mxu0 0.0
        %6620 = vmatprep.subr.mxu0 0.0
        %6621 = vmatpush1.xpose.msra.mxu0 0.0
        %6622 = vmatprep.subr.mxu0 0.0
        %6623 = vmatpush1.xpose.msra.mxu0 0.0
        %6624 = vmatprep.subr.mxu0 0.0
        %6625 = vmatpush1.xpose.msra.mxu0 0.0
        %6626 = vmatprep.mubr.f32.mxu0 0.0
        %v6627 = vand.u32 %v6554, 4294901760
        %v6628 = vsub.f32 %v6554, %v6627
        %v6629 = vand.u32 %v6628, 4294901760
        %v6630 = vsub.f32 %v6628, %v6629
        %v6631 = vand.u32 %v6630, 4294901760
        %6632 = vmatmul.mubr.f32.gmra.mrb[0].mxu0 %v6631
        %v6633 = vpop.f32.mrb[0].mxu0
        %v6634 = vadd.f32 0.0, %v6633
        %v6635 = vpop.f32.mrb[0].mxu0
        %6636 = vdwg.mxu0
        %6637 = vmatprep.subr.mxu0 0.0
        %v6638 = vand.u32 %v6556, 4294901760
        %v6639 = vsub.f32 %v6556, %v6638
        %v6640 = vand.u32 %v6639, 4294901760
        %v6641 = vsub.f32 %v6639, %v6640
        %v6642 = vand.u32 %v6641, 4294901760
        %6643 = vmatpush1.xpose.msra.mxu0 %v6642
        %6644 = vmatprep.subr.mxu0 0.0
        %v6645 = vand.u32 %v6558, 4294901760
        %v6646 = vsub.f32 %v6558, %v6645
        %v6647 = vand.u32 %v6646, 4294901760
        %v6648 = vsub.f32 %v6646, %v6647
        %v6649 = vand.u32 %v6648, 4294901760
        %6650 = vmatpush1.xpose.msra.mxu0 %v6649
        %6651 = vmatprep.subr.mxu0 0.0
        %6652 = vmatpush1.xpose.msra.mxu0 0.0
        %6653 = vmatprep.subr.mxu0 0.0
        %6654 = vmatpush1.xpose.msra.mxu0 0.0
        %6655 = vmatprep.subr.mxu0 0.0
        %6656 = vmatpush1.xpose.msra.mxu0 0.0
        %6657 = vmatprep.subr.mxu0 0.0
        %6658 = vmatpush1.xpose.msra.mxu0 0.0
        %6659 = vmatprep.subr.mxu0 0.0
        %6660 = vmatpush1.xpose.msra.mxu0 0.0
        %6661 = vmatprep.subr.mxu0 0.0
        %6662 = vmatpush1.xpose.msra.mxu0 0.0
        %6663 = vmatprep.subr.mxu0 0.0
        %6664 = vmatpush1.xpose.msra.mxu0 0.0
        %6665 = vmatprep.subr.mxu0 0.0
        %6666 = vmatpush1.xpose.msra.mxu0 0.0
        %6667 = vmatprep.subr.mxu0 0.0
        %6668 = vmatpush1.xpose.msra.mxu0 0.0
        %6669 = vmatprep.subr.mxu0 0.0
        %6670 = vmatpush1.xpose.msra.mxu0 0.0
        %6671 = vmatprep.subr.mxu0 0.0
        %6672 = vmatpush1.xpose.msra.mxu0 0.0
        %6673 = vmatprep.subr.mxu0 0.0
        %6674 = vmatpush1.xpose.msra.mxu0 0.0
        %6675 = vmatprep.subr.mxu0 0.0
        %6676 = vmatpush1.xpose.msra.mxu0 0.0
        %6677 = vmatprep.subr.mxu0 0.0
        %6678 = vmatpush1.xpose.msra.mxu0 0.0
        %6679 = vmatprep.subr.mxu0 0.0
        %6680 = vmatpush1.xpose.msra.mxu0 0.0
        %6681 = vmatprep.subr.mxu0 0.0
        %6682 = vmatpush1.xpose.msra.mxu0 0.0
        %6683 = vmatprep.subr.mxu0 0.0
        %6684 = vmatpush1.xpose.msra.mxu0 0.0
        %6685 = vmatprep.subr.mxu0 0.0
        %6686 = vmatpush1.xpose.msra.mxu0 0.0
        %6687 = vmatprep.subr.mxu0 0.0
        %6688 = vmatpush1.xpose.msra.mxu0 0.0
        %6689 = vmatprep.subr.mxu0 0.0
        %6690 = vmatpush1.xpose.msra.mxu0 0.0
        %6691 = vmatprep.subr.mxu0 0.0
        %6692 = vmatpush1.xpose.msra.mxu0 0.0
        %6693 = vmatprep.subr.mxu0 0.0
        %6694 = vmatpush1.xpose.msra.mxu0 0.0
        %6695 = vmatprep.subr.mxu0 0.0
        %6696 = vmatpush1.xpose.msra.mxu0 0.0
        %6697 = vmatprep.subr.mxu0 0.0
        %6698 = vmatpush1.xpose.msra.mxu0 0.0
        %6699 = vmatprep.subr.mxu0 0.0
        %6700 = vmatpush1.xpose.msra.mxu0 0.0
        %6701 = vmatprep.subr.mxu0 0.0
        %6702 = vmatpush1.xpose.msra.mxu0 0.0
        %6703 = vmatprep.subr.mxu0 0.0
        %6704 = vmatpush1.xpose.msra.mxu0 0.0
        %6705 = vmatprep.subr.mxu0 0.0
        %6706 = vmatpush1.xpose.msra.mxu0 0.0
        %6707 = vmatprep.subr.mxu0 0.0
        %6708 = vmatpush1.xpose.msra.mxu0 0.0
        %6709 = vmatprep.subr.mxu0 0.0
        %6710 = vmatpush1.xpose.msra.mxu0 0.0
        %6711 = vmatprep.mubr.f32.mxu0 0.0
        %v6712 = vand.u32 %v6554, 4294901760
        %6713 = vmatmul.mubr.f32.gmra.mrb[0].mxu0 %v6712
        %v6714 = vpop.f32.mrb[0].mxu0
        %v6715 = vadd.f32 %v6634, %v6714
        %v6716 = vpop.f32.mrb[0].mxu0
        %6717 = vdwg.mxu0
        %6718 = vmatprep.subr.mxu0 0.0
        %v6719 = vand.u32 %v6556, 4294901760
        %v6720 = vsub.f32 %v6556, %v6719
        %6721 = vmatpush1.xpose.msra.mxu0 %v6720
        %6722 = vmatprep.subr.mxu0 0.0
        %v6723 = vand.u32 %v6558, 4294901760
        %v6724 = vsub.f32 %v6558, %v6723
        %6725 = vmatpush1.xpose.msra.mxu0 %v6724
        %6726 = vmatprep.subr.mxu0 0.0
        %6727 = vmatpush1.xpose.msra.mxu0 0.0
        %6728 = vmatprep.subr.mxu0 0.0
        %6729 = vmatpush1.xpose.msra.mxu0 0.0
        %6730 = vmatprep.subr.mxu0 0.0
        %6731 = vmatpush1.xpose.msra.mxu0 0.0
        %6732 = vmatprep.subr.mxu0 0.0
        %6733 = vmatpush1.xpose.msra.mxu0 0.0
        %6734 = vmatprep.subr.mxu0 0.0
        %6735 = vmatpush1.xpose.msra.mxu0 0.0
        %6736 = vmatprep.subr.mxu0 0.0
        %6737 = vmatpush1.xpose.msra.mxu0 0.0
        %6738 = vmatprep.subr.mxu0 0.0
        %6739 = vmatpush1.xpose.msra.mxu0 0.0
        %6740 = vmatprep.subr.mxu0 0.0
        %6741 = vmatpush1.xpose.msra.mxu0 0.0
        %6742 = vmatprep.subr.mxu0 0.0
        %6743 = vmatpush1.xpose.msra.mxu0 0.0
        %6744 = vmatprep.subr.mxu0 0.0
        %6745 = vmatpush1.xpose.msra.mxu0 0.0
        %6746 = vmatprep.subr.mxu0 0.0
        %6747 = vmatpush1.xpose.msra.mxu0 0.0
        %6748 = vmatprep.subr.mxu0 0.0
        %6749 = vmatpush1.xpose.msra.mxu0 0.0
        %6750 = vmatprep.subr.mxu0 0.0
        %6751 = vmatpush1.xpose.msra.mxu0 0.0
        %6752 = vmatprep.subr.mxu0 0.0
        %6753 = vmatpush1.xpose.msra.mxu0 0.0
        %6754 = vmatprep.subr.mxu0 0.0
        %6755 = vmatpush1.xpose.msra.mxu0 0.0
        %6756 = vmatprep.subr.mxu0 0.0
        %6757 = vmatpush1.xpose.msra.mxu0 0.0
        %6758 = vmatprep.subr.mxu0 0.0
        %6759 = vmatpush1.xpose.msra.mxu0 0.0
        %6760 = vmatprep.subr.mxu0 0.0
        %6761 = vmatpush1.xpose.msra.mxu0 0.0
        %6762 = vmatprep.subr.mxu0 0.0
        %6763 = vmatpush1.xpose.msra.mxu0 0.0
        %6764 = vmatprep.subr.mxu0 0.0
        %6765 = vmatpush1.xpose.msra.mxu0 0.0
        %6766 = vmatprep.subr.mxu0 0.0
        %6767 = vmatpush1.xpose.msra.mxu0 0.0
        %6768 = vmatprep.subr.mxu0 0.0
        %6769 = vmatpush1.xpose.msra.mxu0 0.0
        %6770 = vmatprep.subr.mxu0 0.0
        %6771 = vmatpush1.xpose.msra.mxu0 0.0
        %6772 = vmatprep.subr.mxu0 0.0
        %6773 = vmatpush1.xpose.msra.mxu0 0.0
        %6774 = vmatprep.subr.mxu0 0.0
        %6775 = vmatpush1.xpose.msra.mxu0 0.0
        %6776 = vmatprep.subr.mxu0 0.0
        %6777 = vmatpush1.xpose.msra.mxu0 0.0
        %6778 = vmatprep.subr.mxu0 0.0
        %6779 = vmatpush1.xpose.msra.mxu0 0.0
        %6780 = vmatprep.subr.mxu0 0.0
        %6781 = vmatpush1.xpose.msra.mxu0 0.0
        %6782 = vmatprep.subr.mxu0 0.0
        %6783 = vmatpush1.xpose.msra.mxu0 0.0
        %6784 = vmatprep.subr.mxu0 0.0
        %6785 = vmatpush1.xpose.msra.mxu0 0.0
        %6786 = vmatprep.mubr.f32.mxu0 0.0
        %v6787 = vand.u32 %v6554, 4294901760
        %v6788 = vsub.f32 %v6554, %v6787
        %6789 = vmatmul.mubr.f32.gmra.mrb[0].mxu0 %v6788
        %v6790 = vpop.f32.mrb[0].mxu0
        %v6791 = vadd.f32 %v6715, %v6790
        %v6792 = vpop.f32.mrb[0].mxu0
        %6793 = vdwg.mxu0
        %6794 = vmatprep.subr.mxu0 0.0
        %v6795 = vand.u32 %v6556, 4294901760
        %6796 = vmatpush1.xpose.msra.mxu0 %v6795
        %6797 = vmatprep.subr.mxu0 0.0
        %v6798 = vand.u32 %v6558, 4294901760
        %6799 = vmatpush1.xpose.msra.mxu0 %v6798
        %6800 = vmatprep.subr.mxu0 0.0
        %6801 = vmatpush1.xpose.msra.mxu0 0.0
        %6802 = vmatprep.subr.mxu0 0.0
        %6803 = vmatpush1.xpose.msra.mxu0 0.0
        %6804 = vmatprep.subr.mxu0 0.0
        %6805 = vmatpush1.xpose.msra.mxu0 0.0
        %6806 = vmatprep.subr.mxu0 0.0
        %6807 = vmatpush1.xpose.msra.mxu0 0.0
        %6808 = vmatprep.subr.mxu0 0.0
        %6809 = vmatpush1.xpose.msra.mxu0 0.0
        %6810 = vmatprep.subr.mxu0 0.0
        %6811 = vmatpush1.xpose.msra.mxu0 0.0
        %6812 = vmatprep.subr.mxu0 0.0
        %6813 = vmatpush1.xpose.msra.mxu0 0.0
        %6814 = vmatprep.subr.mxu0 0.0
        %6815 = vmatpush1.xpose.msra.mxu0 0.0
        %6816 = vmatprep.subr.mxu0 0.0
        %6817 = vmatpush1.xpose.msra.mxu0 0.0
        %6818 = vmatprep.subr.mxu0 0.0
        %6819 = vmatpush1.xpose.msra.mxu0 0.0
        %6820 = vmatprep.subr.mxu0 0.0
        %6821 = vmatpush1.xpose.msra.mxu0 0.0
        %6822 = vmatprep.subr.mxu0 0.0
        %6823 = vmatpush1.xpose.msra.mxu0 0.0
        %6824 = vmatprep.subr.mxu0 0.0
        %6825 = vmatpush1.xpose.msra.mxu0 0.0
        %6826 = vmatprep.subr.mxu0 0.0
        %6827 = vmatpush1.xpose.msra.mxu0 0.0
        %6828 = vmatprep.subr.mxu0 0.0
        %6829 = vmatpush1.xpose.msra.mxu0 0.0
        %6830 = vmatprep.subr.mxu0 0.0
        %6831 = vmatpush1.xpose.msra.mxu0 0.0
        %6832 = vmatprep.subr.mxu0 0.0
        %6833 = vmatpush1.xpose.msra.mxu0 0.0
        %6834 = vmatprep.subr.mxu0 0.0
        %6835 = vmatpush1.xpose.msra.mxu0 0.0
        %6836 = vmatprep.subr.mxu0 0.0
        %6837 = vmatpush1.xpose.msra.mxu0 0.0
        %6838 = vmatprep.subr.mxu0 0.0
        %6839 = vmatpush1.xpose.msra.mxu0 0.0
        %6840 = vmatprep.subr.mxu0 0.0
        %6841 = vmatpush1.xpose.msra.mxu0 0.0
        %6842 = vmatprep.subr.mxu0 0.0
        %6843 = vmatpush1.xpose.msra.mxu0 0.0
        %6844 = vmatprep.subr.mxu0 0.0
        %6845 = vmatpush1.xpose.msra.mxu0 0.0
        %6846 = vmatprep.subr.mxu0 0.0
        %6847 = vmatpush1.xpose.msra.mxu0 0.0
        %6848 = vmatprep.subr.mxu0 0.0
        %6849 = vmatpush1.xpose.msra.mxu0 0.0
        %6850 = vmatprep.subr.mxu0 0.0
        %6851 = vmatpush1.xpose.msra.mxu0 0.0
        %6852 = vmatprep.subr.mxu0 0.0
        %6853 = vmatpush1.xpose.msra.mxu0 0.0
        %6854 = vmatprep.subr.mxu0 0.0
        %6855 = vmatpush1.xpose.msra.mxu0 0.0
        %6856 = vmatprep.subr.mxu0 0.0
        %6857 = vmatpush1.xpose.msra.mxu0 0.0
        %6858 = vmatprep.subr.mxu0 0.0
        %6859 = vmatpush1.xpose.msra.mxu0 0.0
        %6860 = vmatprep.mubr.f32.mxu0 0.0
        %v6861 = vand.u32 %v6554, 4294901760
        %v6862 = vsub.f32 %v6554, %v6861
        %v6863 = vand.u32 %v6862, 4294901760
        %6864 = vmatmul.mubr.f32.gmra.mrb[0].mxu0 %v6863
        %v6865 = vpop.f32.mrb[0].mxu0
        %v6866 = vadd.f32 %v6791, %v6865
        %v6867 = vpop.f32.mrb[0].mxu0
        %6868 = vdwg.mxu0
        %6869 = vmatprep.subr.mxu0 0.0
        %v6870 = vand.u32 %v6556, 4294901760
        %v6871 = vsub.f32 %v6556, %v6870
        %v6872 = vand.u32 %v6871, 4294901760
        %6873 = vmatpush1.xpose.msra.mxu0 %v6872
        %6874 = vmatprep.subr.mxu0 0.0
        %v6875 = vand.u32 %v6558, 4294901760
        %v6876 = vsub.f32 %v6558, %v6875
        %v6877 = vand.u32 %v6876, 4294901760
        %6878 = vmatpush1.xpose.msra.mxu0 %v6877
        %6879 = vmatprep.subr.mxu0 0.0
        %6880 = vmatpush1.xpose.msra.mxu0 0.0
        %6881 = vmatprep.subr.mxu0 0.0
        %6882 = vmatpush1.xpose.msra.mxu0 0.0
        %6883 = vmatprep.subr.mxu0 0.0
        %6884 = vmatpush1.xpose.msra.mxu0 0.0
        %6885 = vmatprep.subr.mxu0 0.0
        %6886 = vmatpush1.xpose.msra.mxu0 0.0
        %6887 = vmatprep.subr.mxu0 0.0
        %6888 = vmatpush1.xpose.msra.mxu0 0.0
        %6889 = vmatprep.subr.mxu0 0.0
        %6890 = vmatpush1.xpose.msra.mxu0 0.0
        %6891 = vmatprep.subr.mxu0 0.0
        %6892 = vmatpush1.xpose.msra.mxu0 0.0
        %6893 = vmatprep.subr.mxu0 0.0
        %6894 = vmatpush1.xpose.msra.mxu0 0.0
        %6895 = vmatprep.subr.mxu0 0.0
        %6896 = vmatpush1.xpose.msra.mxu0 0.0
        %6897 = vmatprep.subr.mxu0 0.0
        %6898 = vmatpush1.xpose.msra.mxu0 0.0
        %6899 = vmatprep.subr.mxu0 0.0
        %6900 = vmatpush1.xpose.msra.mxu0 0.0
        %6901 = vmatprep.subr.mxu0 0.0
        %6902 = vmatpush1.xpose.msra.mxu0 0.0
        %6903 = vmatprep.subr.mxu0 0.0
        %6904 = vmatpush1.xpose.msra.mxu0 0.0
        %6905 = vmatprep.subr.mxu0 0.0
        %6906 = vmatpush1.xpose.msra.mxu0 0.0
        %6907 = vmatprep.subr.mxu0 0.0
        %6908 = vmatpush1.xpose.msra.mxu0 0.0
        %6909 = vmatprep.subr.mxu0 0.0
        %6910 = vmatpush1.xpose.msra.mxu0 0.0
        %6911 = vmatprep.subr.mxu0 0.0
        %6912 = vmatpush1.xpose.msra.mxu0 0.0
        %6913 = vmatprep.subr.mxu0 0.0
        %6914 = vmatpush1.xpose.msra.mxu0 0.0
        %6915 = vmatprep.subr.mxu0 0.0
        %6916 = vmatpush1.xpose.msra.mxu0 0.0
        %6917 = vmatprep.subr.mxu0 0.0
        %6918 = vmatpush1.xpose.msra.mxu0 0.0
        %6919 = vmatprep.subr.mxu0 0.0
        %6920 = vmatpush1.xpose.msra.mxu0 0.0
        %6921 = vmatprep.subr.mxu0 0.0
        %6922 = vmatpush1.xpose.msra.mxu0 0.0
        %6923 = vmatprep.subr.mxu0 0.0
        %6924 = vmatpush1.xpose.msra.mxu0 0.0
        %6925 = vmatprep.subr.mxu0 0.0
        %6926 = vmatpush1.xpose.msra.mxu0 0.0
        %6927 = vmatprep.subr.mxu0 0.0
        %6928 = vmatpush1.xpose.msra.mxu0 0.0
        %6929 = vmatprep.subr.mxu0 0.0
        %6930 = vmatpush1.xpose.msra.mxu0 0.0
        %6931 = vmatprep.subr.mxu0 0.0
        %6932 = vmatpush1.xpose.msra.mxu0 0.0
        %6933 = vmatprep.subr.mxu0 0.0
        %6934 = vmatpush1.xpose.msra.mxu0 0.0
        %6935 = vmatprep.subr.mxu0 0.0
        %6936 = vmatpush1.xpose.msra.mxu0 0.0
        %6937 = vmatprep.subr.mxu0 0.0
        %6938 = vmatpush1.xpose.msra.mxu0 0.0
        %6939 = vmatprep.mubr.f32.mxu0 0.0
        %v6940 = vand.u32 %v6554, 4294901760
        %6941 = vmatmul.mubr.f32.gmra.mrb[0].mxu0 %v6940
        %v6942 = vpop.f32.mrb[0].mxu0
        %v6943 = vadd.f32 %v6866, %v6942
        %v6944 = vpop.f32.mrb[0].mxu0
        %6945 = vdwg.mxu0
        %6946 = vmatprep.subr.mxu0 0.0
        %v6947 = vand.u32 %v6556, 4294901760
        %6948 = vmatpush1.xpose.msra.mxu0 %v6947
        %6949 = vmatprep.subr.mxu0 0.0
        %v6950 = vand.u32 %v6558, 4294901760
        %6951 = vmatpush1.xpose.msra.mxu0 %v6950
        %6952 = vmatprep.subr.mxu0 0.0
        %6953 = vmatpush1.xpose.msra.mxu0 0.0
        %6954 = vmatprep.subr.mxu0 0.0
        %6955 = vmatpush1.xpose.msra.mxu0 0.0
        %6956 = vmatprep.subr.mxu0 0.0
        %6957 = vmatpush1.xpose.msra.mxu0 0.0
        %6958 = vmatprep.subr.mxu0 0.0
        %6959 = vmatpush1.xpose.msra.mxu0 0.0
        %6960 = vmatprep.subr.mxu0 0.0
        %6961 = vmatpush1.xpose.msra.mxu0 0.0
        %6962 = vmatprep.subr.mxu0 0.0
        %6963 = vmatpush1.xpose.msra.mxu0 0.0
        %6964 = vmatprep.subr.mxu0 0.0
        %6965 = vmatpush1.xpose.msra.mxu0 0.0
        %6966 = vmatprep.subr.mxu0 0.0
        %6967 = vmatpush1.xpose.msra.mxu0 0.0
        %6968 = vmatprep.subr.mxu0 0.0
        %6969 = vmatpush1.xpose.msra.mxu0 0.0
        %6970 = vmatprep.subr.mxu0 0.0
        %6971 = vmatpush1.xpose.msra.mxu0 0.0
        %6972 = vmatprep.subr.mxu0 0.0
        %6973 = vmatpush1.xpose.msra.mxu0 0.0
        %6974 = vmatprep.subr.mxu0 0.0
        %6975 = vmatpush1.xpose.msra.mxu0 0.0
        %6976 = vmatprep.subr.mxu0 0.0
        %6977 = vmatpush1.xpose.msra.mxu0 0.0
        %6978 = vmatprep.subr.mxu0 0.0
        %6979 = vmatpush1.xpose.msra.mxu0 0.0
        %6980 = vmatprep.subr.mxu0 0.0
        %6981 = vmatpush1.xpose.msra.mxu0 0.0
        %6982 = vmatprep.subr.mxu0 0.0
        %6983 = vmatpush1.xpose.msra.mxu0 0.0
        %6984 = vmatprep.subr.mxu0 0.0
        %6985 = vmatpush1.xpose.msra.mxu0 0.0
        %6986 = vmatprep.subr.mxu0 0.0
        %6987 = vmatpush1.xpose.msra.mxu0 0.0
        %6988 = vmatprep.subr.mxu0 0.0
        %6989 = vmatpush1.xpose.msra.mxu0 0.0
        %6990 = vmatprep.subr.mxu0 0.0
        %6991 = vmatpush1.xpose.msra.mxu0 0.0
        %6992 = vmatprep.subr.mxu0 0.0
        %6993 = vmatpush1.xpose.msra.mxu0 0.0
        %6994 = vmatprep.subr.mxu0 0.0
        %6995 = vmatpush1.xpose.msra.mxu0 0.0
        %6996 = vmatprep.subr.mxu0 0.0
        %6997 = vmatpush1.xpose.msra.mxu0 0.0
        %6998 = vmatprep.subr.mxu0 0.0
        %6999 = vmatpush1.xpose.msra.mxu0 0.0
        %7000 = vmatprep.subr.mxu0 0.0
        %7001 = vmatpush1.xpose.msra.mxu0 0.0
        %7002 = vmatprep.subr.mxu0 0.0
        %7003 = vmatpush1.xpose.msra.mxu0 0.0
        %7004 = vmatprep.subr.mxu0 0.0
        %7005 = vmatpush1.xpose.msra.mxu0 0.0
        %7006 = vmatprep.subr.mxu0 0.0
        %7007 = vmatpush1.xpose.msra.mxu0 0.0
        %7008 = vmatprep.subr.mxu0 0.0
        %7009 = vmatpush1.xpose.msra.mxu0 0.0
        %7010 = vmatprep.subr.mxu0 0.0
        %7011 = vmatpush1.xpose.msra.mxu0 0.0
        %7012 = vmatprep.mubr.f32.mxu0 0.0
        %v7013 = vand.u32 %v6554, 4294901760
        %7014 = vmatmul.mubr.f32.gmra.mrb[0].mxu0 %v7013
        %v7015 = vpop.f32.mrb[0].mxu0
        %v7016 = vadd.f32 %v6943, %v7015
        %v7017 = vpop.f32.mrb[0].mxu0
        %7018 = vdwg.mxu0
        %v7019 = vlaneseq
        %v7020 = vshrl.u32 %v7019, 7
        %v7021 = vsub.s32 0, %v7020
        %v7022 = vrot.slane %v7016, %v7021
        %v7023 = vadd.f32 %v6545, %v7022
        %v7024 = vadd.f32 %v6548, %v7022
        %vm7025 = vcmp.gt.f32.partialorder %v7023, 0.0
        %vm7026 = vcmp.gt.f32.partialorder %v7024, 0.0
        %v7027 = vmul.f32 %v7023, 0.2
        %v7028 = vmul.f32 %v7024, 0.2
        %v7029 = vsel %vm7025, %v7023, %v7027
        %v7030 = vsel %vm7026, %v7024, %v7028
        %v7031 = vsel %vm1593, -1e+12, %v7029
        %v7032 = vsel %vm1594, -1e+12, %v7030
        %v7033 = vsel %vm587, %v7031, -inf
        %7034 = vmax.xlane.f32.xlu0 %v7033
        %v7035 = vpop.xlane.xlu0 %7034
        %v7036 = vsel %vm587, %v7032, -inf
        %7037 = vmax.xlane.f32.xlu0 %v7036
        %v7038 = vpop.xlane.xlu0 %7037
        %v7039 = vsub.f32 %v7031, %v7035
        %v7040 = vsub.f32 %v7032, %v7038
        %v7041 = vmul.f32 %v7039, 1.442695
        %v7042 = vpow.pop %v7041
        %v7043 = vmul.f32 %v7040, 1.442695
        %v7044 = vpow.pop %v7043
        %v7045 = vsel %vm587, %v7042, 0.0
        %7046 = vadd.xlane.f32.xlu0 %v7045
        %v7047 = vpop.xlane.xlu0 %7046
        %v7048 = vsel %vm587, %v7044, 0.0
        %7049 = vadd.xlane.f32.xlu0 %v7048
        %v7050 = vpop.xlane.xlu0 %7049
        %v7051 = vrcp.pop %v7047
        %v7052 = vmul.f32 %v7042, %v7051
        %v7053 = vrcp.pop %v7050
        %v7054 = vmul.f32 %v7044, %v7053
        %7057 = vrot.lane.b32.xlu0 %v5996, 96
        %v7058 = vpop.permute.xlu0 %7057
        %7059 = vrot.lane.b32.xlu0 %v6002, 96
        %v7060 = vpop.permute.xlu0 %7059
        %v7064 = vsel %vm587, %v7052, 0
        %v7067 = vsel %vm587, %v7054, 0
        %7069 = vmatprep.subr.mxu0 0.0
        %v7070 = vand.u32 %v7058, 4294901760
        %7071 = vmatpush1.msra.mxu0 %v7070
        %7072 = vmatprep.subr.mxu0 0.0
        %v7073 = vand.u32 %v7060, 4294901760
        %7074 = vmatpush1.msra.mxu0 %v7073
        %7075 = vmatprep.subr.mxu0 0.0
        %7076 = vmatpush1.msra.mxu0 0.0
        %7077 = vmatprep.subr.mxu0 0.0
        %7078 = vmatpush1.msra.mxu0 0.0
        %7079 = vmatprep.subr.mxu0 0.0
        %7080 = vmatpush1.msra.mxu0 0.0
        %7081 = vmatprep.subr.mxu0 0.0
        %7082 = vmatpush1.msra.mxu0 0.0
        %7083 = vmatprep.subr.mxu0 0.0
        %7084 = vmatpush1.msra.mxu0 0.0
        %7085 = vmatprep.subr.mxu0 0.0
        %7086 = vmatpush1.msra.mxu0 0.0
        %7087 = vmatprep.subr.mxu0 0.0
        %7088 = vmatpush1.msra.mxu0 0.0
        %7089 = vmatprep.subr.mxu0 0.0
        %7090 = vmatpush1.msra.mxu0 0.0
        %7091 = vmatprep.subr.mxu0 0.0
        %7092 = vmatpush1.msra.mxu0 0.0
        %7093 = vmatprep.subr.mxu0 0.0
        %7094 = vmatpush1.msra.mxu0 0.0
        %7095 = vmatprep.subr.mxu0 0.0
        %7096 = vmatpush1.msra.mxu0 0.0
        %7097 = vmatprep.subr.mxu0 0.0
        %7098 = vmatpush1.msra.mxu0 0.0
        %7099 = vmatprep.subr.mxu0 0.0
        %7100 = vmatpush1.msra.mxu0 0.0
        %7101 = vmatprep.subr.mxu0 0.0
        %7102 = vmatpush1.msra.mxu0 0.0
        %7103 = vmatprep.subr.mxu0 0.0
        %7104 = vmatpush1.msra.mxu0 0.0
        %7105 = vmatprep.subr.mxu0 0.0
        %7106 = vmatpush1.msra.mxu0 0.0
        %7107 = vmatprep.subr.mxu0 0.0
        %7108 = vmatpush1.msra.mxu0 0.0
        %7109 = vmatprep.subr.mxu0 0.0
        %7110 = vmatpush1.msra.mxu0 0.0
        %7111 = vmatprep.subr.mxu0 0.0
        %7112 = vmatpush1.msra.mxu0 0.0
        %7113 = vmatprep.subr.mxu0 0.0
        %7114 = vmatpush1.msra.mxu0 0.0
        %7115 = vmatprep.subr.mxu0 0.0
        %7116 = vmatpush1.msra.mxu0 0.0
        %7117 = vmatprep.subr.mxu0 0.0
        %7118 = vmatpush1.msra.mxu0 0.0
        %7119 = vmatprep.subr.mxu0 0.0
        %7120 = vmatpush1.msra.mxu0 0.0
        %7121 = vmatprep.subr.mxu0 0.0
        %7122 = vmatpush1.msra.mxu0 0.0
        %7123 = vmatprep.subr.mxu0 0.0
        %7124 = vmatpush1.msra.mxu0 0.0
        %7125 = vmatprep.subr.mxu0 0.0
        %7126 = vmatpush1.msra.mxu0 0.0
        %7127 = vmatprep.subr.mxu0 0.0
        %7128 = vmatpush1.msra.mxu0 0.0
        %7129 = vmatprep.subr.mxu0 0.0
        %7130 = vmatpush1.msra.mxu0 0.0
        %7131 = vmatprep.subr.mxu0 0.0
        %7132 = vmatpush1.msra.mxu0 0.0
        %7133 = vmatprep.subr.mxu0 0.0
        %7134 = vmatpush1.msra.mxu0 0.0
        %7135 = vmatprep.mubr.f32.mxu0 0.0
        %v7136 = vand.u32 %v7064, 4294901760
        %v7137 = vsub.f32 %v7064, %v7136
        %v7138 = vand.u32 %v7137, 4294901760
        %v7139 = vsub.f32 %v7137, %v7138
        %v7140 = vand.u32 %v7139, 4294901760
        %7141 = vmatmul.mubr.f32.gmra.mrb[0].mxu0 %v7140
        %v7142 = vpop.f32.mrb[0].mxu0
        %v7143 = vadd.f32 0.0, %v7142
        %v7144 = vpop.f32.mrb[0].mxu0
        %7145 = vmatprep.mubr.f32.mxu0 0.0
        %v7146 = vand.u32 %v7067, 4294901760
        %v7147 = vsub.f32 %v7067, %v7146
        %v7148 = vand.u32 %v7147, 4294901760
        %v7149 = vsub.f32 %v7147, %v7148
        %v7150 = vand.u32 %v7149, 4294901760
        %7151 = vmatmul.mubr.f32.gmra.mrb[0].mxu0 %v7150
        %v7152 = vpop.f32.mrb[0].mxu0
        %v7153 = vadd.f32 0.0, %v7152
        %v7154 = vpop.f32.mrb[0].mxu0
        %7155 = vdwg.mxu0
        %7156 = vmatprep.subr.mxu0 0.0
        %v7157 = vand.u32 %v7058, 4294901760
        %v7158 = vsub.f32 %v7058, %v7157
        %v7159 = vand.u32 %v7158, 4294901760
        %v7160 = vsub.f32 %v7158, %v7159
        %v7161 = vand.u32 %v7160, 4294901760
        %7162 = vmatpush1.msra.mxu0 %v7161
        %7163 = vmatprep.subr.mxu0 0.0
        %v7164 = vand.u32 %v7060, 4294901760
        %v7165 = vsub.f32 %v7060, %v7164
        %v7166 = vand.u32 %v7165, 4294901760
        %v7167 = vsub.f32 %v7165, %v7166
        %v7168 = vand.u32 %v7167, 4294901760
        %7169 = vmatpush1.msra.mxu0 %v7168
        %7170 = vmatprep.subr.mxu0 0.0
        %7171 = vmatpush1.msra.mxu0 0.0
        %7172 = vmatprep.subr.mxu0 0.0
        %7173 = vmatpush1.msra.mxu0 0.0
        %7174 = vmatprep.subr.mxu0 0.0
        %7175 = vmatpush1.msra.mxu0 0.0
        %7176 = vmatprep.subr.mxu0 0.0
        %7177 = vmatpush1.msra.mxu0 0.0
        %7178 = vmatprep.subr.mxu0 0.0
        %7179 = vmatpush1.msra.mxu0 0.0
        %7180 = vmatprep.subr.mxu0 0.0
        %7181 = vmatpush1.msra.mxu0 0.0
        %7182 = vmatprep.subr.mxu0 0.0
        %7183 = vmatpush1.msra.mxu0 0.0
        %7184 = vmatprep.subr.mxu0 0.0
        %7185 = vmatpush1.msra.mxu0 0.0
        %7186 = vmatprep.subr.mxu0 0.0
        %7187 = vmatpush1.msra.mxu0 0.0
        %7188 = vmatprep.subr.mxu0 0.0
        %7189 = vmatpush1.msra.mxu0 0.0
        %7190 = vmatprep.subr.mxu0 0.0
        %7191 = vmatpush1.msra.mxu0 0.0
        %7192 = vmatprep.subr.mxu0 0.0
        %7193 = vmatpush1.msra.mxu0 0.0
        %7194 = vmatprep.subr.mxu0 0.0
        %7195 = vmatpush1.msra.mxu0 0.0
        %7196 = vmatprep.subr.mxu0 0.0
        %7197 = vmatpush1.msra.mxu0 0.0
        %7198 = vmatprep.subr.mxu0 0.0
        %7199 = vmatpush1.msra.mxu0 0.0
        %7200 = vmatprep.subr.mxu0 0.0
        %7201 = vmatpush1.msra.mxu0 0.0
        %7202 = vmatprep.subr.mxu0 0.0
        %7203 = vmatpush1.msra.mxu0 0.0
        %7204 = vmatprep.subr.mxu0 0.0
        %7205 = vmatpush1.msra.mxu0 0.0
        %7206 = vmatprep.subr.mxu0 0.0
        %7207 = vmatpush1.msra.mxu0 0.0
        %7208 = vmatprep.subr.mxu0 0.0
        %7209 = vmatpush1.msra.mxu0 0.0
        %7210 = vmatprep.subr.mxu0 0.0
        %7211 = vmatpush1.msra.mxu0 0.0
        %7212 = vmatprep.subr.mxu0 0.0
        %7213 = vmatpush1.msra.mxu0 0.0
        %7214 = vmatprep.subr.mxu0 0.0
        %7215 = vmatpush1.msra.mxu0 0.0
        %7216 = vmatprep.subr.mxu0 0.0
        %7217 = vmatpush1.msra.mxu0 0.0
        %7218 = vmatprep.subr.mxu0 0.0
        %7219 = vmatpush1.msra.mxu0 0.0
        %7220 = vmatprep.subr.mxu0 0.0
        %7221 = vmatpush1.msra.mxu0 0.0
        %7222 = vmatprep.subr.mxu0 0.0
        %7223 = vmatpush1.msra.mxu0 0.0
        %7224 = vmatprep.subr.mxu0 0.0
        %7225 = vmatpush1.msra.mxu0 0.0
        %7226 = vmatprep.subr.mxu0 0.0
        %7227 = vmatpush1.msra.mxu0 0.0
        %7228 = vmatprep.subr.mxu0 0.0
        %7229 = vmatpush1.msra.mxu0 0.0
        %7230 = vmatprep.mubr.f32.mxu0 0.0
        %v7231 = vand.u32 %v7064, 4294901760
        %7232 = vmatmul.mubr.f32.gmra.mrb[0].mxu0 %v7231
        %v7233 = vpop.f32.mrb[0].mxu0
        %v7234 = vadd.f32 %v7143, %v7233
        %v7235 = vpop.f32.mrb[0].mxu0
        %7236 = vmatprep.mubr.f32.mxu0 0.0
        %v7237 = vand.u32 %v7067, 4294901760
        %7238 = vmatmul.mubr.f32.gmra.mrb[0].mxu0 %v7237
        %v7239 = vpop.f32.mrb[0].mxu0
        %v7240 = vadd.f32 %v7153, %v7239
        %v7241 = vpop.f32.mrb[0].mxu0
        %7242 = vdwg.mxu0
        %7243 = vmatprep.subr.mxu0 0.0
        %v7244 = vand.u32 %v7058, 4294901760
        %v7245 = vsub.f32 %v7058, %v7244
        %7246 = vmatpush1.msra.mxu0 %v7245
        %7247 = vmatprep.subr.mxu0 0.0
        %v7248 = vand.u32 %v7060, 4294901760
        %v7249 = vsub.f32 %v7060, %v7248
        %7250 = vmatpush1.msra.mxu0 %v7249
        %7251 = vmatprep.subr.mxu0 0.0
        %7252 = vmatpush1.msra.mxu0 0.0
        %7253 = vmatprep.subr.mxu0 0.0
        %7254 = vmatpush1.msra.mxu0 0.0
        %7255 = vmatprep.subr.mxu0 0.0
        %7256 = vmatpush1.msra.mxu0 0.0
        %7257 = vmatprep.subr.mxu0 0.0
        %7258 = vmatpush1.msra.mxu0 0.0
        %7259 = vmatprep.subr.mxu0 0.0
        %7260 = vmatpush1.msra.mxu0 0.0
        %7261 = vmatprep.subr.mxu0 0.0
        %7262 = vmatpush1.msra.mxu0 0.0
        %7263 = vmatprep.subr.mxu0 0.0
        %7264 = vmatpush1.msra.mxu0 0.0
        %7265 = vmatprep.subr.mxu0 0.0
        %7266 = vmatpush1.msra.mxu0 0.0
        %7267 = vmatprep.subr.mxu0 0.0
        %7268 = vmatpush1.msra.mxu0 0.0
        %7269 = vmatprep.subr.mxu0 0.0
        %7270 = vmatpush1.msra.mxu0 0.0
        %7271 = vmatprep.subr.mxu0 0.0
        %7272 = vmatpush1.msra.mxu0 0.0
        %7273 = vmatprep.subr.mxu0 0.0
        %7274 = vmatpush1.msra.mxu0 0.0
        %7275 = vmatprep.subr.mxu0 0.0
        %7276 = vmatpush1.msra.mxu0 0.0
        %7277 = vmatprep.subr.mxu0 0.0
        %7278 = vmatpush1.msra.mxu0 0.0
        %7279 = vmatprep.subr.mxu0 0.0
        %7280 = vmatpush1.msra.mxu0 0.0
        %7281 = vmatprep.subr.mxu0 0.0
        %7282 = vmatpush1.msra.mxu0 0.0
        %7283 = vmatprep.subr.mxu0 0.0
        %7284 = vmatpush1.msra.mxu0 0.0
        %7285 = vmatprep.subr.mxu0 0.0
        %7286 = vmatpush1.msra.mxu0 0.0
        %7287 = vmatprep.subr.mxu0 0.0
        %7288 = vmatpush1.msra.mxu0 0.0
        %7289 = vmatprep.subr.mxu0 0.0
        %7290 = vmatpush1.msra.mxu0 0.0
        %7291 = vmatprep.subr.mxu0 0.0
        %7292 = vmatpush1.msra.mxu0 0.0
        %7293 = vmatprep.subr.mxu0 0.0
        %7294 = vmatpush1.msra.mxu0 0.0
        %7295 = vmatprep.subr.mxu0 0.0
        %7296 = vmatpush1.msra.mxu0 0.0
        %7297 = vmatprep.subr.mxu0 0.0
        %7298 = vmatpush1.msra.mxu0 0.0
        %7299 = vmatprep.subr.mxu0 0.0
        %7300 = vmatpush1.msra.mxu0 0.0
        %7301 = vmatprep.subr.mxu0 0.0
        %7302 = vmatpush1.msra.mxu0 0.0
        %7303 = vmatprep.subr.mxu0 0.0
        %7304 = vmatpush1.msra.mxu0 0.0
        %7305 = vmatprep.subr.mxu0 0.0
        %7306 = vmatpush1.msra.mxu0 0.0
        %7307 = vmatprep.subr.mxu0 0.0
        %7308 = vmatpush1.msra.mxu0 0.0
        %7309 = vmatprep.subr.mxu0 0.0
        %7310 = vmatpush1.msra.mxu0 0.0
        %7311 = vmatprep.mubr.f32.mxu0 0.0
        %v7312 = vand.u32 %v7064, 4294901760
        %v7313 = vsub.f32 %v7064, %v7312
        %7314 = vmatmul.mubr.f32.gmra.mrb[0].mxu0 %v7313
        %v7315 = vpop.f32.mrb[0].mxu0
        %v7316 = vadd.f32 %v7234, %v7315
        %v7317 = vpop.f32.mrb[0].mxu0
        %7318 = vmatprep.mubr.f32.mxu0 0.0
        %v7319 = vand.u32 %v7067, 4294901760
        %v7320 = vsub.f32 %v7067, %v7319
        %7321 = vmatmul.mubr.f32.gmra.mrb[0].mxu0 %v7320
        %v7322 = vpop.f32.mrb[0].mxu0
        %v7323 = vadd.f32 %v7240, %v7322
        %v7324 = vpop.f32.mrb[0].mxu0
        %7325 = vdwg.mxu0
        %7326 = vmatprep.subr.mxu0 0.0
        %v7327 = vand.u32 %v7058, 4294901760
        %7328 = vmatpush1.msra.mxu0 %v7327
        %7329 = vmatprep.subr.mxu0 0.0
        %v7330 = vand.u32 %v7060, 4294901760
        %7331 = vmatpush1.msra.mxu0 %v7330
        %7332 = vmatprep.subr.mxu0 0.0
        %7333 = vmatpush1.msra.mxu0 0.0
        %7334 = vmatprep.subr.mxu0 0.0
        %7335 = vmatpush1.msra.mxu0 0.0
        %7336 = vmatprep.subr.mxu0 0.0
        %7337 = vmatpush1.msra.mxu0 0.0
        %7338 = vmatprep.subr.mxu0 0.0
        %7339 = vmatpush1.msra.mxu0 0.0
        %7340 = vmatprep.subr.mxu0 0.0
        %7341 = vmatpush1.msra.mxu0 0.0
        %7342 = vmatprep.subr.mxu0 0.0
        %7343 = vmatpush1.msra.mxu0 0.0
        %7344 = vmatprep.subr.mxu0 0.0
        %7345 = vmatpush1.msra.mxu0 0.0
        %7346 = vmatprep.subr.mxu0 0.0
        %7347 = vmatpush1.msra.mxu0 0.0
        %7348 = vmatprep.subr.mxu0 0.0
        %7349 = vmatpush1.msra.mxu0 0.0
        %7350 = vmatprep.subr.mxu0 0.0
        %7351 = vmatpush1.msra.mxu0 0.0
        %7352 = vmatprep.subr.mxu0 0.0
        %7353 = vmatpush1.msra.mxu0 0.0
        %7354 = vmatprep.subr.mxu0 0.0
        %7355 = vmatpush1.msra.mxu0 0.0
        %7356 = vmatprep.subr.mxu0 0.0
        %7357 = vmatpush1.msra.mxu0 0.0
        %7358 = vmatprep.subr.mxu0 0.0
        %7359 = vmatpush1.msra.mxu0 0.0
        %7360 = vmatprep.subr.mxu0 0.0
        %7361 = vmatpush1.msra.mxu0 0.0
        %7362 = vmatprep.subr.mxu0 0.0
        %7363 = vmatpush1.msra.mxu0 0.0
        %7364 = vmatprep.subr.mxu0 0.0
        %7365 = vmatpush1.msra.mxu0 0.0
        %7366 = vmatprep.subr.mxu0 0.0
        %7367 = vmatpush1.msra.mxu0 0.0
        %7368 = vmatprep.subr.mxu0 0.0
        %7369 = vmatpush1.msra.mxu0 0.0
        %7370 = vmatprep.subr.mxu0 0.0
        %7371 = vmatpush1.msra.mxu0 0.0
        %7372 = vmatprep.subr.mxu0 0.0
        %7373 = vmatpush1.msra.mxu0 0.0
        %7374 = vmatprep.subr.mxu0 0.0
        %7375 = vmatpush1.msra.mxu0 0.0
        %7376 = vmatprep.subr.mxu0 0.0
        %7377 = vmatpush1.msra.mxu0 0.0
        %7378 = vmatprep.subr.mxu0 0.0
        %7379 = vmatpush1.msra.mxu0 0.0
        %7380 = vmatprep.subr.mxu0 0.0
        %7381 = vmatpush1.msra.mxu0 0.0
        %7382 = vmatprep.subr.mxu0 0.0
        %7383 = vmatpush1.msra.mxu0 0.0
        %7384 = vmatprep.subr.mxu0 0.0
        %7385 = vmatpush1.msra.mxu0 0.0
        %7386 = vmatprep.subr.mxu0 0.0
        %7387 = vmatpush1.msra.mxu0 0.0
        %7388 = vmatprep.subr.mxu0 0.0
        %7389 = vmatpush1.msra.mxu0 0.0
        %7390 = vmatprep.subr.mxu0 0.0
        %7391 = vmatpush1.msra.mxu0 0.0
        %7392 = vmatprep.mubr.f32.mxu0 0.0
        %v7393 = vand.u32 %v7064, 4294901760
        %v7394 = vsub.f32 %v7064, %v7393
        %v7395 = vand.u32 %v7394, 4294901760
        %7396 = vmatmul.mubr.f32.gmra.mrb[0].mxu0 %v7395
        %v7397 = vpop.f32.mrb[0].mxu0
        %v7398 = vadd.f32 %v7316, %v7397
        %v7399 = vpop.f32.mrb[0].mxu0
        %7400 = vmatprep.mubr.f32.mxu0 0.0
        %v7401 = vand.u32 %v7067, 4294901760
        %v7402 = vsub.f32 %v7067, %v7401
        %v7403 = vand.u32 %v7402, 4294901760
        %7404 = vmatmul.mubr.f32.gmra.mrb[0].mxu0 %v7403
        %v7405 = vpop.f32.mrb[0].mxu0
        %v7406 = vadd.f32 %v7323, %v7405
        %v7407 = vpop.f32.mrb[0].mxu0
        %7408 = vdwg.mxu0
        %7409 = vmatprep.subr.mxu0 0.0
        %v7410 = vand.u32 %v7058, 4294901760
        %v7411 = vsub.f32 %v7058, %v7410
        %v7412 = vand.u32 %v7411, 4294901760
        %7413 = vmatpush1.msra.mxu0 %v7412
        %7414 = vmatprep.subr.mxu0 0.0
        %v7415 = vand.u32 %v7060, 4294901760
        %v7416 = vsub.f32 %v7060, %v7415
        %v7417 = vand.u32 %v7416, 4294901760
        %7418 = vmatpush1.msra.mxu0 %v7417
        %7419 = vmatprep.subr.mxu0 0.0
        %7420 = vmatpush1.msra.mxu0 0.0
        %7421 = vmatprep.subr.mxu0 0.0
        %7422 = vmatpush1.msra.mxu0 0.0
        %7423 = vmatprep.subr.mxu0 0.0
        %7424 = vmatpush1.msra.mxu0 0.0
        %7425 = vmatprep.subr.mxu0 0.0
        %7426 = vmatpush1.msra.mxu0 0.0
        %7427 = vmatprep.subr.mxu0 0.0
        %7428 = vmatpush1.msra.mxu0 0.0
        %7429 = vmatprep.subr.mxu0 0.0
        %7430 = vmatpush1.msra.mxu0 0.0
        %7431 = vmatprep.subr.mxu0 0.0
        %7432 = vmatpush1.msra.mxu0 0.0
        %7433 = vmatprep.subr.mxu0 0.0
        %7434 = vmatpush1.msra.mxu0 0.0
        %7435 = vmatprep.subr.mxu0 0.0
        %7436 = vmatpush1.msra.mxu0 0.0
        %7437 = vmatprep.subr.mxu0 0.0
        %7438 = vmatpush1.msra.mxu0 0.0
        %7439 = vmatprep.subr.mxu0 0.0
        %7440 = vmatpush1.msra.mxu0 0.0
        %7441 = vmatprep.subr.mxu0 0.0
        %7442 = vmatpush1.msra.mxu0 0.0
        %7443 = vmatprep.subr.mxu0 0.0
        %7444 = vmatpush1.msra.mxu0 0.0
        %7445 = vmatprep.subr.mxu0 0.0
        %7446 = vmatpush1.msra.mxu0 0.0
        %7447 = vmatprep.subr.mxu0 0.0
        %7448 = vmatpush1.msra.mxu0 0.0
        %7449 = vmatprep.subr.mxu0 0.0
        %7450 = vmatpush1.msra.mxu0 0.0
        %7451 = vmatprep.subr.mxu0 0.0
        %7452 = vmatpush1.msra.mxu0 0.0
        %7453 = vmatprep.subr.mxu0 0.0
        %7454 = vmatpush1.msra.mxu0 0.0
        %7455 = vmatprep.subr.mxu0 0.0
        %7456 = vmatpush1.msra.mxu0 0.0
        %7457 = vmatprep.subr.mxu0 0.0
        %7458 = vmatpush1.msra.mxu0 0.0
        %7459 = vmatprep.subr.mxu0 0.0
        %7460 = vmatpush1.msra.mxu0 0.0
        %7461 = vmatprep.subr.mxu0 0.0
        %7462 = vmatpush1.msra.mxu0 0.0
        %7463 = vmatprep.subr.mxu0 0.0
        %7464 = vmatpush1.msra.mxu0 0.0
        %7465 = vmatprep.subr.mxu0 0.0
        %7466 = vmatpush1.msra.mxu0 0.0
        %7467 = vmatprep.subr.mxu0 0.0
        %7468 = vmatpush1.msra.mxu0 0.0
        %7469 = vmatprep.subr.mxu0 0.0
        %7470 = vmatpush1.msra.mxu0 0.0
        %7471 = vmatprep.subr.mxu0 0.0
        %7472 = vmatpush1.msra.mxu0 0.0
        %7473 = vmatprep.subr.mxu0 0.0
        %7474 = vmatpush1.msra.mxu0 0.0
        %7475 = vmatprep.subr.mxu0 0.0
        %7476 = vmatpush1.msra.mxu0 0.0
        %7477 = vmatprep.subr.mxu0 0.0
        %7478 = vmatpush1.msra.mxu0 0.0
        %7479 = vmatprep.mubr.f32.mxu0 0.0
        %v7480 = vand.u32 %v7064, 4294901760
        %7481 = vmatmul.mubr.f32.gmra.mrb[0].mxu0 %v7480
        %v7482 = vpop.f32.mrb[0].mxu0
        %v7483 = vadd.f32 %v7398, %v7482
        %v7484 = vpop.f32.mrb[0].mxu0
        %7485 = vmatprep.mubr.f32.mxu0 0.0
        %v7486 = vand.u32 %v7067, 4294901760
        %7487 = vmatmul.mubr.f32.gmra.mrb[0].mxu0 %v7486
        %v7488 = vpop.f32.mrb[0].mxu0
        %v7489 = vadd.f32 %v7406, %v7488
        %v7490 = vpop.f32.mrb[0].mxu0
        %7491 = vdwg.mxu0
        %7492 = vmatprep.subr.mxu0 0.0
        %v7493 = vand.u32 %v7058, 4294901760
        %7494 = vmatpush1.msra.mxu0 %v7493
        %7495 = vmatprep.subr.mxu0 0.0
        %v7496 = vand.u32 %v7060, 4294901760
        %7497 = vmatpush1.msra.mxu0 %v7496
        %7498 = vmatprep.subr.mxu0 0.0
        %7499 = vmatpush1.msra.mxu0 0.0
        %7500 = vmatprep.subr.mxu0 0.0
        %7501 = vmatpush1.msra.mxu0 0.0
        %7502 = vmatprep.subr.mxu0 0.0
        %7503 = vmatpush1.msra.mxu0 0.0
        %7504 = vmatprep.subr.mxu0 0.0
        %7505 = vmatpush1.msra.mxu0 0.0
        %7506 = vmatprep.subr.mxu0 0.0
        %7507 = vmatpush1.msra.mxu0 0.0
        %7508 = vmatprep.subr.mxu0 0.0
        %7509 = vmatpush1.msra.mxu0 0.0
        %7510 = vmatprep.subr.mxu0 0.0
        %7511 = vmatpush1.msra.mxu0 0.0
        %7512 = vmatprep.subr.mxu0 0.0
        %7513 = vmatpush1.msra.mxu0 0.0
        %7514 = vmatprep.subr.mxu0 0.0
        %7515 = vmatpush1.msra.mxu0 0.0
        %7516 = vmatprep.subr.mxu0 0.0
        %7517 = vmatpush1.msra.mxu0 0.0
        %7518 = vmatprep.subr.mxu0 0.0
        %7519 = vmatpush1.msra.mxu0 0.0
        %7520 = vmatprep.subr.mxu0 0.0
        %7521 = vmatpush1.msra.mxu0 0.0
        %7522 = vmatprep.subr.mxu0 0.0
        %7523 = vmatpush1.msra.mxu0 0.0
        %7524 = vmatprep.subr.mxu0 0.0
        %7525 = vmatpush1.msra.mxu0 0.0
        %7526 = vmatprep.subr.mxu0 0.0
        %7527 = vmatpush1.msra.mxu0 0.0
        %7528 = vmatprep.subr.mxu0 0.0
        %7529 = vmatpush1.msra.mxu0 0.0
        %7530 = vmatprep.subr.mxu0 0.0
        %7531 = vmatpush1.msra.mxu0 0.0
        %7532 = vmatprep.subr.mxu0 0.0
        %7533 = vmatpush1.msra.mxu0 0.0
        %7534 = vmatprep.subr.mxu0 0.0
        %7535 = vmatpush1.msra.mxu0 0.0
        %7536 = vmatprep.subr.mxu0 0.0
        %7537 = vmatpush1.msra.mxu0 0.0
        %7538 = vmatprep.subr.mxu0 0.0
        %7539 = vmatpush1.msra.mxu0 0.0
        %7540 = vmatprep.subr.mxu0 0.0
        %7541 = vmatpush1.msra.mxu0 0.0
        %7542 = vmatprep.subr.mxu0 0.0
        %7543 = vmatpush1.msra.mxu0 0.0
        %7544 = vmatprep.subr.mxu0 0.0
        %7545 = vmatpush1.msra.mxu0 0.0
        %7546 = vmatprep.subr.mxu0 0.0
        %7547 = vmatpush1.msra.mxu0 0.0
        %7548 = vmatprep.subr.mxu0 0.0
        %7549 = vmatpush1.msra.mxu0 0.0
        %7550 = vmatprep.subr.mxu0 0.0
        %7551 = vmatpush1.msra.mxu0 0.0
        %7552 = vmatprep.subr.mxu0 0.0
        %7553 = vmatpush1.msra.mxu0 0.0
        %7554 = vmatprep.subr.mxu0 0.0
        %7555 = vmatpush1.msra.mxu0 0.0
        %7556 = vmatprep.subr.mxu0 0.0
        %7557 = vmatpush1.msra.mxu0 0.0
        %7558 = vmatprep.mubr.f32.mxu0 0.0
        %v7559 = vand.u32 %v7064, 4294901760
        %7560 = vmatmul.mubr.f32.gmra.mrb[0].mxu0 %v7559
        %v7561 = vpop.f32.mrb[0].mxu0
        %v7562 = vadd.f32 %v7483, %v7561
        %v7563 = vpop.f32.mrb[0].mxu0
        %7564 = vmatprep.mubr.f32.mxu0 0.0
        %v7565 = vand.u32 %v7067, 4294901760
        %7566 = vmatmul.mubr.f32.gmra.mrb[0].mxu0 %v7565
        %v7567 = vpop.f32.mrb[0].mxu0
        %v7568 = vadd.f32 %v7489, %v7567
        %v7569 = vpop.f32.mrb[0].mxu0
        %7570 = vdwg.mxu0
        %v7572 = vsel %vm587, %v6522, 0
        %v7575 = vsel %vm587, %v6524, 0
        %7577 = vmatprep.subr.mxu0 0.0
        %v7578 = vand.u32 %v5996, 4294901760
        %7579 = vmatpush1.msra.mxu0 %v7578
        %7580 = vmatprep.subr.mxu0 0.0
        %v7581 = vand.u32 %v6002, 4294901760
        %7582 = vmatpush1.msra.mxu0 %v7581
        %7583 = vmatprep.subr.mxu0 0.0
        %7584 = vmatpush1.msra.mxu0 0.0
        %7585 = vmatprep.subr.mxu0 0.0
        %7586 = vmatpush1.msra.mxu0 0.0
        %7587 = vmatprep.subr.mxu0 0.0
        %7588 = vmatpush1.msra.mxu0 0.0
        %7589 = vmatprep.subr.mxu0 0.0
        %7590 = vmatpush1.msra.mxu0 0.0
        %7591 = vmatprep.subr.mxu0 0.0
        %7592 = vmatpush1.msra.mxu0 0.0
        %7593 = vmatprep.subr.mxu0 0.0
        %7594 = vmatpush1.msra.mxu0 0.0
        %7595 = vmatprep.subr.mxu0 0.0
        %7596 = vmatpush1.msra.mxu0 0.0
        %7597 = vmatprep.subr.mxu0 0.0
        %7598 = vmatpush1.msra.mxu0 0.0
        %7599 = vmatprep.subr.mxu0 0.0
        %7600 = vmatpush1.msra.mxu0 0.0
        %7601 = vmatprep.subr.mxu0 0.0
        %7602 = vmatpush1.msra.mxu0 0.0
        %7603 = vmatprep.subr.mxu0 0.0
        %7604 = vmatpush1.msra.mxu0 0.0
        %7605 = vmatprep.subr.mxu0 0.0
        %7606 = vmatpush1.msra.mxu0 0.0
        %7607 = vmatprep.subr.mxu0 0.0
        %7608 = vmatpush1.msra.mxu0 0.0
        %7609 = vmatprep.subr.mxu0 0.0
        %7610 = vmatpush1.msra.mxu0 0.0
        %7611 = vmatprep.subr.mxu0 0.0
        %7612 = vmatpush1.msra.mxu0 0.0
        %7613 = vmatprep.subr.mxu0 0.0
        %7614 = vmatpush1.msra.mxu0 0.0
        %7615 = vmatprep.subr.mxu0 0.0
        %7616 = vmatpush1.msra.mxu0 0.0
        %7617 = vmatprep.subr.mxu0 0.0
        %7618 = vmatpush1.msra.mxu0 0.0
        %7619 = vmatprep.subr.mxu0 0.0
        %7620 = vmatpush1.msra.mxu0 0.0
        %7621 = vmatprep.subr.mxu0 0.0
        %7622 = vmatpush1.msra.mxu0 0.0
        %7623 = vmatprep.subr.mxu0 0.0
        %7624 = vmatpush1.msra.mxu0 0.0
        %7625 = vmatprep.subr.mxu0 0.0
        %7626 = vmatpush1.msra.mxu0 0.0
        %7627 = vmatprep.subr.mxu0 0.0
        %7628 = vmatpush1.msra.mxu0 0.0
        %7629 = vmatprep.subr.mxu0 0.0
        %7630 = vmatpush1.msra.mxu0 0.0
        %7631 = vmatprep.subr.mxu0 0.0
        %7632 = vmatpush1.msra.mxu0 0.0
        %7633 = vmatprep.subr.mxu0 0.0
        %7634 = vmatpush1.msra.mxu0 0.0
        %7635 = vmatprep.subr.mxu0 0.0
        %7636 = vmatpush1.msra.mxu0 0.0
        %7637 = vmatprep.subr.mxu0 0.0
        %7638 = vmatpush1.msra.mxu0 0.0
        %7639 = vmatprep.subr.mxu0 0.0
        %7640 = vmatpush1.msra.mxu0 0.0
        %7641 = vmatprep.subr.mxu0 0.0
        %7642 = vmatpush1.msra.mxu0 0.0
        %7643 = vmatprep.mubr.f32.mxu0 0.0
        %v7644 = vand.u32 %v7572, 4294901760
        %v7645 = vsub.f32 %v7572, %v7644
        %v7646 = vand.u32 %v7645, 4294901760
        %v7647 = vsub.f32 %v7645, %v7646
        %v7648 = vand.u32 %v7647, 4294901760
        %7649 = vmatmul.mubr.f32.gmra.mrb[0].mxu0 %v7648
        %v7650 = vpop.f32.mrb[0].mxu0
        %v7651 = vadd.f32 %v7562, %v7650
        %v7652 = vpop.f32.mrb[0].mxu0
        %7653 = vmatprep.mubr.f32.mxu0 0.0
        %v7654 = vand.u32 %v7575, 4294901760
        %v7655 = vsub.f32 %v7575, %v7654
        %v7656 = vand.u32 %v7655, 4294901760
        %v7657 = vsub.f32 %v7655, %v7656
        %v7658 = vand.u32 %v7657, 4294901760
        %7659 = vmatmul.mubr.f32.gmra.mrb[0].mxu0 %v7658
        %v7660 = vpop.f32.mrb[0].mxu0
        %v7661 = vadd.f32 %v7568, %v7660
        %v7662 = vpop.f32.mrb[0].mxu0
        %7663 = vdwg.mxu0
        %7664 = vmatprep.subr.mxu0 0.0
        %v7665 = vand.u32 %v5996, 4294901760
        %v7666 = vsub.f32 %v5996, %v7665
        %v7667 = vand.u32 %v7666, 4294901760
        %v7668 = vsub.f32 %v7666, %v7667
        %v7669 = vand.u32 %v7668, 4294901760
        %7670 = vmatpush1.msra.mxu0 %v7669
        %7671 = vmatprep.subr.mxu0 0.0
        %v7672 = vand.u32 %v6002, 4294901760
        %v7673 = vsub.f32 %v6002, %v7672
        %v7674 = vand.u32 %v7673, 4294901760
        %v7675 = vsub.f32 %v7673, %v7674
        %v7676 = vand.u32 %v7675, 4294901760
        %7677 = vmatpush1.msra.mxu0 %v7676
        %7678 = vmatprep.subr.mxu0 0.0
        %7679 = vmatpush1.msra.mxu0 0.0
        %7680 = vmatprep.subr.mxu0 0.0
        %7681 = vmatpush1.msra.mxu0 0.0
        %7682 = vmatprep.subr.mxu0 0.0
        %7683 = vmatpush1.msra.mxu0 0.0
        %7684 = vmatprep.subr.mxu0 0.0
        %7685 = vmatpush1.msra.mxu0 0.0
        %7686 = vmatprep.subr.mxu0 0.0
        %7687 = vmatpush1.msra.mxu0 0.0
        %7688 = vmatprep.subr.mxu0 0.0
        %7689 = vmatpush1.msra.mxu0 0.0
        %7690 = vmatprep.subr.mxu0 0.0
        %7691 = vmatpush1.msra.mxu0 0.0
        %7692 = vmatprep.subr.mxu0 0.0
        %7693 = vmatpush1.msra.mxu0 0.0
        %7694 = vmatprep.subr.mxu0 0.0
        %7695 = vmatpush1.msra.mxu0 0.0
        %7696 = vmatprep.subr.mxu0 0.0
        %7697 = vmatpush1.msra.mxu0 0.0
        %7698 = vmatprep.subr.mxu0 0.0
        %7699 = vmatpush1.msra.mxu0 0.0
        %7700 = vmatprep.subr.mxu0 0.0
        %7701 = vmatpush1.msra.mxu0 0.0
        %7702 = vmatprep.subr.mxu0 0.0
        %7703 = vmatpush1.msra.mxu0 0.0
        %7704 = vmatprep.subr.mxu0 0.0
        %7705 = vmatpush1.msra.mxu0 0.0
        %7706 = vmatprep.subr.mxu0 0.0
        %7707 = vmatpush1.msra.mxu0 0.0
        %7708 = vmatprep.subr.mxu0 0.0
        %7709 = vmatpush1.msra.mxu0 0.0
        %7710 = vmatprep.subr.mxu0 0.0
        %7711 = vmatpush1.msra.mxu0 0.0
        %7712 = vmatprep.subr.mxu0 0.0
        %7713 = vmatpush1.msra.mxu0 0.0
        %7714 = vmatprep.subr.mxu0 0.0
        %7715 = vmatpush1.msra.mxu0 0.0
        %7716 = vmatprep.subr.mxu0 0.0
        %7717 = vmatpush1.msra.mxu0 0.0
        %7718 = vmatprep.subr.mxu0 0.0
        %7719 = vmatpush1.msra.mxu0 0.0
        %7720 = vmatprep.subr.mxu0 0.0
        %7721 = vmatpush1.msra.mxu0 0.0
        %7722 = vmatprep.subr.mxu0 0.0
        %7723 = vmatpush1.msra.mxu0 0.0
        %7724 = vmatprep.subr.mxu0 0.0
        %7725 = vmatpush1.msra.mxu0 0.0
        %7726 = vmatprep.subr.mxu0 0.0
        %7727 = vmatpush1.msra.mxu0 0.0
        %7728 = vmatprep.subr.mxu0 0.0
        %7729 = vmatpush1.msra.mxu0 0.0
        %7730 = vmatprep.subr.mxu0 0.0
        %7731 = vmatpush1.msra.mxu0 0.0
        %7732 = vmatprep.subr.mxu0 0.0
        %7733 = vmatpush1.msra.mxu0 0.0
        %7734 = vmatprep.subr.mxu0 0.0
        %7735 = vmatpush1.msra.mxu0 0.0
        %7736 = vmatprep.subr.mxu0 0.0
        %7737 = vmatpush1.msra.mxu0 0.0
        %7738 = vmatprep.mubr.f32.mxu0 0.0
        %v7739 = vand.u32 %v7572, 4294901760
        %7740 = vmatmul.mubr.f32.gmra.mrb[0].mxu0 %v7739
        %v7741 = vpop.f32.mrb[0].mxu0
        %v7742 = vadd.f32 %v7651, %v7741
        %v7743 = vpop.f32.mrb[0].mxu0
        %7744 = vmatprep.mubr.f32.mxu0 0.0
        %v7745 = vand.u32 %v7575, 4294901760
        %7746 = vmatmul.mubr.f32.gmra.mrb[0].mxu0 %v7745
        %v7747 = vpop.f32.mrb[0].mxu0
        %v7748 = vadd.f32 %v7661, %v7747
        %v7749 = vpop.f32.mrb[0].mxu0
        %7750 = vdwg.mxu0
        %7751 = vmatprep.subr.mxu0 0.0
        %v7752 = vand.u32 %v5996, 4294901760
        %v7753 = vsub.f32 %v5996, %v7752
        %7754 = vmatpush1.msra.mxu0 %v7753
        %7755 = vmatprep.subr.mxu0 0.0
        %v7756 = vand.u32 %v6002, 4294901760
        %v7757 = vsub.f32 %v6002, %v7756
        %7758 = vmatpush1.msra.mxu0 %v7757
        %7759 = vmatprep.subr.mxu0 0.0
        %7760 = vmatpush1.msra.mxu0 0.0
        %7761 = vmatprep.subr.mxu0 0.0
        %7762 = vmatpush1.msra.mxu0 0.0
        %7763 = vmatprep.subr.mxu0 0.0
        %7764 = vmatpush1.msra.mxu0 0.0
        %7765 = vmatprep.subr.mxu0 0.0
        %7766 = vmatpush1.msra.mxu0 0.0
        %7767 = vmatprep.subr.mxu0 0.0
        %7768 = vmatpush1.msra.mxu0 0.0
        %7769 = vmatprep.subr.mxu0 0.0
        %7770 = vmatpush1.msra.mxu0 0.0
        %7771 = vmatprep.subr.mxu0 0.0
        %7772 = vmatpush1.msra.mxu0 0.0
        %7773 = vmatprep.subr.mxu0 0.0
        %7774 = vmatpush1.msra.mxu0 0.0
        %7775 = vmatprep.subr.mxu0 0.0
        %7776 = vmatpush1.msra.mxu0 0.0
        %7777 = vmatprep.subr.mxu0 0.0
        %7778 = vmatpush1.msra.mxu0 0.0
        %7779 = vmatprep.subr.mxu0 0.0
        %7780 = vmatpush1.msra.mxu0 0.0
        %7781 = vmatprep.subr.mxu0 0.0
        %7782 = vmatpush1.msra.mxu0 0.0
        %7783 = vmatprep.subr.mxu0 0.0
        %7784 = vmatpush1.msra.mxu0 0.0
        %7785 = vmatprep.subr.mxu0 0.0
        %7786 = vmatpush1.msra.mxu0 0.0
        %7787 = vmatprep.subr.mxu0 0.0
        %7788 = vmatpush1.msra.mxu0 0.0
        %7789 = vmatprep.subr.mxu0 0.0
        %7790 = vmatpush1.msra.mxu0 0.0
        %7791 = vmatprep.subr.mxu0 0.0
        %7792 = vmatpush1.msra.mxu0 0.0
        %7793 = vmatprep.subr.mxu0 0.0
        %7794 = vmatpush1.msra.mxu0 0.0
        %7795 = vmatprep.subr.mxu0 0.0
        %7796 = vmatpush1.msra.mxu0 0.0
        %7797 = vmatprep.subr.mxu0 0.0
        %7798 = vmatpush1.msra.mxu0 0.0
        %7799 = vmatprep.subr.mxu0 0.0
        %7800 = vmatpush1.msra.mxu0 0.0
        %7801 = vmatprep.subr.mxu0 0.0
        %7802 = vmatpush1.msra.mxu0 0.0
        %7803 = vmatprep.subr.mxu0 0.0
        %7804 = vmatpush1.msra.mxu0 0.0
        %7805 = vmatprep.subr.mxu0 0.0
        %7806 = vmatpush1.msra.mxu0 0.0
        %7807 = vmatprep.subr.mxu0 0.0
        %7808 = vmatpush1.msra.mxu0 0.0
        %7809 = vmatprep.subr.mxu0 0.0
        %7810 = vmatpush1.msra.mxu0 0.0
        %7811 = vmatprep.subr.mxu0 0.0
        %7812 = vmatpush1.msra.mxu0 0.0
        %7813 = vmatprep.subr.mxu0 0.0
        %7814 = vmatpush1.msra.mxu0 0.0
        %7815 = vmatprep.subr.mxu0 0.0
        %7816 = vmatpush1.msra.mxu0 0.0
        %7817 = vmatprep.subr.mxu0 0.0
        %7818 = vmatpush1.msra.mxu0 0.0
        %7819 = vmatprep.mubr.f32.mxu0 0.0
        %v7820 = vand.u32 %v7572, 4294901760
        %v7821 = vsub.f32 %v7572, %v7820
        %7822 = vmatmul.mubr.f32.gmra.mrb[0].mxu0 %v7821
        %v7823 = vpop.f32.mrb[0].mxu0
        %v7824 = vadd.f32 %v7742, %v7823
        %v7825 = vpop.f32.mrb[0].mxu0
        %7826 = vmatprep.mubr.f32.mxu0 0.0
        %v7827 = vand.u32 %v7575, 4294901760
        %v7828 = vsub.f32 %v7575, %v7827
        %7829 = vmatmul.mubr.f32.gmra.mrb[0].mxu0 %v7828
        %v7830 = vpop.f32.mrb[0].mxu0
        %v7831 = vadd.f32 %v7748, %v7830
        %v7832 = vpop.f32.mrb[0].mxu0
        %7833 = vdwg.mxu0
        %7834 = vmatprep.subr.mxu0 0.0
        %v7835 = vand.u32 %v5996, 4294901760
        %7836 = vmatpush1.msra.mxu0 %v7835
        %7837 = vmatprep.subr.mxu0 0.0
        %v7838 = vand.u32 %v6002, 4294901760
        %7839 = vmatpush1.msra.mxu0 %v7838
        %7840 = vmatprep.subr.mxu0 0.0
        %7841 = vmatpush1.msra.mxu0 0.0
        %7842 = vmatprep.subr.mxu0 0.0
        %7843 = vmatpush1.msra.mxu0 0.0
        %7844 = vmatprep.subr.mxu0 0.0
        %7845 = vmatpush1.msra.mxu0 0.0
        %7846 = vmatprep.subr.mxu0 0.0
        %7847 = vmatpush1.msra.mxu0 0.0
        %7848 = vmatprep.subr.mxu0 0.0
        %7849 = vmatpush1.msra.mxu0 0.0
        %7850 = vmatprep.subr.mxu0 0.0
        %7851 = vmatpush1.msra.mxu0 0.0
        %7852 = vmatprep.subr.mxu0 0.0
        %7853 = vmatpush1.msra.mxu0 0.0
        %7854 = vmatprep.subr.mxu0 0.0
        %7855 = vmatpush1.msra.mxu0 0.0
        %7856 = vmatprep.subr.mxu0 0.0
        %7857 = vmatpush1.msra.mxu0 0.0
        %7858 = vmatprep.subr.mxu0 0.0
        %7859 = vmatpush1.msra.mxu0 0.0
        %7860 = vmatprep.subr.mxu0 0.0
        %7861 = vmatpush1.msra.mxu0 0.0
        %7862 = vmatprep.subr.mxu0 0.0
        %7863 = vmatpush1.msra.mxu0 0.0
        %7864 = vmatprep.subr.mxu0 0.0
        %7865 = vmatpush1.msra.mxu0 0.0
        %7866 = vmatprep.subr.mxu0 0.0
        %7867 = vmatpush1.msra.mxu0 0.0
        %7868 = vmatprep.subr.mxu0 0.0
        %7869 = vmatpush1.msra.mxu0 0.0
        %7870 = vmatprep.subr.mxu0 0.0
        %7871 = vmatpush1.msra.mxu0 0.0
        %7872 = vmatprep.subr.mxu0 0.0
        %7873 = vmatpush1.msra.mxu0 0.0
        %7874 = vmatprep.subr.mxu0 0.0
        %7875 = vmatpush1.msra.mxu0 0.0
        %7876 = vmatprep.subr.mxu0 0.0
        %7877 = vmatpush1.msra.mxu0 0.0
        %7878 = vmatprep.subr.mxu0 0.0
        %7879 = vmatpush1.msra.mxu0 0.0
        %7880 = vmatprep.subr.mxu0 0.0
        %7881 = vmatpush1.msra.mxu0 0.0
        %7882 = vmatprep.subr.mxu0 0.0
        %7883 = vmatpush1.msra.mxu0 0.0
        %7884 = vmatprep.subr.mxu0 0.0
        %7885 = vmatpush1.msra.mxu0 0.0
        %7886 = vmatprep.subr.mxu0 0.0
        %7887 = vmatpush1.msra.mxu0 0.0
        %7888 = vmatprep.subr.mxu0 0.0
        %7889 = vmatpush1.msra.mxu0 0.0
        %7890 = vmatprep.subr.mxu0 0.0
        %7891 = vmatpush1.msra.mxu0 0.0
        %7892 = vmatprep.subr.mxu0 0.0
        %7893 = vmatpush1.msra.mxu0 0.0
        %7894 = vmatprep.subr.mxu0 0.0
        %7895 = vmatpush1.msra.mxu0 0.0
        %7896 = vmatprep.subr.mxu0 0.0
        %7897 = vmatpush1.msra.mxu0 0.0
        %7898 = vmatprep.subr.mxu0 0.0
        %7899 = vmatpush1.msra.mxu0 0.0
        %7900 = vmatprep.mubr.f32.mxu0 0.0
        %v7901 = vand.u32 %v7572, 4294901760
        %v7902 = vsub.f32 %v7572, %v7901
        %v7903 = vand.u32 %v7902, 4294901760
        %7904 = vmatmul.mubr.f32.gmra.mrb[0].mxu0 %v7903
        %v7905 = vpop.f32.mrb[0].mxu0
        %v7906 = vadd.f32 %v7824, %v7905
        %v7907 = vpop.f32.mrb[0].mxu0
        %7908 = vmatprep.mubr.f32.mxu0 0.0
        %v7909 = vand.u32 %v7575, 4294901760
        %v7910 = vsub.f32 %v7575, %v7909
        %v7911 = vand.u32 %v7910, 4294901760
        %7912 = vmatmul.mubr.f32.gmra.mrb[0].mxu0 %v7911
        %v7913 = vpop.f32.mrb[0].mxu0
        %v7914 = vadd.f32 %v7831, %v7913
        %v7915 = vpop.f32.mrb[0].mxu0
        %7916 = vdwg.mxu0
        %7917 = vmatprep.subr.mxu0 0.0
        %v7918 = vand.u32 %v5996, 4294901760
        %v7919 = vsub.f32 %v5996, %v7918
        %v7920 = vand.u32 %v7919, 4294901760
        %7921 = vmatpush1.msra.mxu0 %v7920
        %7922 = vmatprep.subr.mxu0 0.0
        %v7923 = vand.u32 %v6002, 4294901760
        %v7924 = vsub.f32 %v6002, %v7923
        %v7925 = vand.u32 %v7924, 4294901760
        %7926 = vmatpush1.msra.mxu0 %v7925
        %7927 = vmatprep.subr.mxu0 0.0
        %7928 = vmatpush1.msra.mxu0 0.0
        %7929 = vmatprep.subr.mxu0 0.0
        %7930 = vmatpush1.msra.mxu0 0.0
        %7931 = vmatprep.subr.mxu0 0.0
        %7932 = vmatpush1.msra.mxu0 0.0
        %7933 = vmatprep.subr.mxu0 0.0
        %7934 = vmatpush1.msra.mxu0 0.0
        %7935 = vmatprep.subr.mxu0 0.0
        %7936 = vmatpush1.msra.mxu0 0.0
        %7937 = vmatprep.subr.mxu0 0.0
        %7938 = vmatpush1.msra.mxu0 0.0
        %7939 = vmatprep.subr.mxu0 0.0
        %7940 = vmatpush1.msra.mxu0 0.0
        %7941 = vmatprep.subr.mxu0 0.0
        %7942 = vmatpush1.msra.mxu0 0.0
        %7943 = vmatprep.subr.mxu0 0.0
        %7944 = vmatpush1.msra.mxu0 0.0
        %7945 = vmatprep.subr.mxu0 0.0
        %7946 = vmatpush1.msra.mxu0 0.0
        %7947 = vmatprep.subr.mxu0 0.0
        %7948 = vmatpush1.msra.mxu0 0.0
        %7949 = vmatprep.subr.mxu0 0.0
        %7950 = vmatpush1.msra.mxu0 0.0
        %7951 = vmatprep.subr.mxu0 0.0
        %7952 = vmatpush1.msra.mxu0 0.0
        %7953 = vmatprep.subr.mxu0 0.0
        %7954 = vmatpush1.msra.mxu0 0.0
        %7955 = vmatprep.subr.mxu0 0.0
        %7956 = vmatpush1.msra.mxu0 0.0
        %7957 = vmatprep.subr.mxu0 0.0
        %7958 = vmatpush1.msra.mxu0 0.0
        %7959 = vmatprep.subr.mxu0 0.0
        %7960 = vmatpush1.msra.mxu0 0.0
        %7961 = vmatprep.subr.mxu0 0.0
        %7962 = vmatpush1.msra.mxu0 0.0
        %7963 = vmatprep.subr.mxu0 0.0
        %7964 = vmatpush1.msra.mxu0 0.0
        %7965 = vmatprep.subr.mxu0 0.0
        %7966 = vmatpush1.msra.mxu0 0.0
        %7967 = vmatprep.subr.mxu0 0.0
        %7968 = vmatpush1.msra.mxu0 0.0
        %7969 = vmatprep.subr.mxu0 0.0
        %7970 = vmatpush1.msra.mxu0 0.0
        %7971 = vmatprep.subr.mxu0 0.0
        %7972 = vmatpush1.msra.mxu0 0.0
        %7973 = vmatprep.subr.mxu0 0.0
        %7974 = vmatpush1.msra.mxu0 0.0
        %7975 = vmatprep.subr.mxu0 0.0
        %7976 = vmatpush1.msra.mxu0 0.0
        %7977 = vmatprep.subr.mxu0 0.0
        %7978 = vmatpush1.msra.mxu0 0.0
        %7979 = vmatprep.subr.mxu0 0.0
        %7980 = vmatpush1.msra.mxu0 0.0
        %7981 = vmatprep.subr.mxu0 0.0
        %7982 = vmatpush1.msra.mxu0 0.0
        %7983 = vmatprep.subr.mxu0 0.0
        %7984 = vmatpush1.msra.mxu0 0.0
        %7985 = vmatprep.subr.mxu0 0.0
        %7986 = vmatpush1.msra.mxu0 0.0
        %7987 = vmatprep.mubr.f32.mxu0 0.0
        %v7988 = vand.u32 %v7572, 4294901760
        %7989 = vmatmul.mubr.f32.gmra.mrb[0].mxu0 %v7988
        %v7990 = vpop.f32.mrb[0].mxu0
        %v7991 = vadd.f32 %v7906, %v7990
        %v7992 = vpop.f32.mrb[0].mxu0
        %7993 = vmatprep.mubr.f32.mxu0 0.0
        %v7994 = vand.u32 %v7575, 4294901760
        %7995 = vmatmul.mubr.f32.gmra.mrb[0].mxu0 %v7994
        %v7996 = vpop.f32.mrb[0].mxu0
        %v7997 = vadd.f32 %v7914, %v7996
        %v7998 = vpop.f32.mrb[0].mxu0
        %7999 = vdwg.mxu0
        %8000 = vmatprep.subr.mxu0 0.0
        %v8001 = vand.u32 %v5996, 4294901760
        %8002 = vmatpush1.msra.mxu0 %v8001
        %8003 = vmatprep.subr.mxu0 0.0
        %v8004 = vand.u32 %v6002, 4294901760
        %8005 = vmatpush1.msra.mxu0 %v8004
        %8006 = vmatprep.subr.mxu0 0.0
        %8007 = vmatpush1.msra.mxu0 0.0
        %8008 = vmatprep.subr.mxu0 0.0
        %8009 = vmatpush1.msra.mxu0 0.0
        %8010 = vmatprep.subr.mxu0 0.0
        %8011 = vmatpush1.msra.mxu0 0.0
        %8012 = vmatprep.subr.mxu0 0.0
        %8013 = vmatpush1.msra.mxu0 0.0
        %8014 = vmatprep.subr.mxu0 0.0
        %8015 = vmatpush1.msra.mxu0 0.0
        %8016 = vmatprep.subr.mxu0 0.0
        %8017 = vmatpush1.msra.mxu0 0.0
        %8018 = vmatprep.subr.mxu0 0.0
        %8019 = vmatpush1.msra.mxu0 0.0
        %8020 = vmatprep.subr.mxu0 0.0
        %8021 = vmatpush1.msra.mxu0 0.0
        %8022 = vmatprep.subr.mxu0 0.0
        %8023 = vmatpush1.msra.mxu0 0.0
        %8024 = vmatprep.subr.mxu0 0.0
        %8025 = vmatpush1.msra.mxu0 0.0
        %8026 = vmatprep.subr.mxu0 0.0
        %8027 = vmatpush1.msra.mxu0 0.0
        %8028 = vmatprep.subr.mxu0 0.0
        %8029 = vmatpush1.msra.mxu0 0.0
        %8030 = vmatprep.subr.mxu0 0.0
        %8031 = vmatpush1.msra.mxu0 0.0
        %8032 = vmatprep.subr.mxu0 0.0
        %8033 = vmatpush1.msra.mxu0 0.0
        %8034 = vmatprep.subr.mxu0 0.0
        %8035 = vmatpush1.msra.mxu0 0.0
        %8036 = vmatprep.subr.mxu0 0.0
        %8037 = vmatpush1.msra.mxu0 0.0
        %8038 = vmatprep.subr.mxu0 0.0
        %8039 = vmatpush1.msra.mxu0 0.0
        %8040 = vmatprep.subr.mxu0 0.0
        %8041 = vmatpush1.msra.mxu0 0.0
        %8042 = vmatprep.subr.mxu0 0.0
        %8043 = vmatpush1.msra.mxu0 0.0
        %8044 = vmatprep.subr.mxu0 0.0
        %8045 = vmatpush1.msra.mxu0 0.0
        %8046 = vmatprep.subr.mxu0 0.0
        %8047 = vmatpush1.msra.mxu0 0.0
        %8048 = vmatprep.subr.mxu0 0.0
        %8049 = vmatpush1.msra.mxu0 0.0
        %8050 = vmatprep.subr.mxu0 0.0
        %8051 = vmatpush1.msra.mxu0 0.0
        %8052 = vmatprep.subr.mxu0 0.0
        %8053 = vmatpush1.msra.mxu0 0.0
        %8054 = vmatprep.subr.mxu0 0.0
        %8055 = vmatpush1.msra.mxu0 0.0
        %8056 = vmatprep.subr.mxu0 0.0
        %8057 = vmatpush1.msra.mxu0 0.0
        %8058 = vmatprep.subr.mxu0 0.0
        %8059 = vmatpush1.msra.mxu0 0.0
        %8060 = vmatprep.subr.mxu0 0.0
        %8061 = vmatpush1.msra.mxu0 0.0
        %8062 = vmatprep.subr.mxu0 0.0
        %8063 = vmatpush1.msra.mxu0 0.0
        %8064 = vmatprep.subr.mxu0 0.0
        %8065 = vmatpush1.msra.mxu0 0.0
        %8066 = vmatprep.mubr.f32.mxu0 0.0
        %v8067 = vand.u32 %v7572, 4294901760
        %8068 = vmatmul.mubr.f32.gmra.mrb[0].mxu0 %v8067
        %v8069 = vpop.f32.mrb[0].mxu0
        %v8070 = vadd.f32 %v7991, %v8069
        %v8071 = vpop.f32.mrb[0].mxu0
        %8072 = vmatprep.mubr.f32.mxu0 0.0
        %v8073 = vand.u32 %v7575, 4294901760
        %8074 = vmatmul.mubr.f32.gmra.mrb[0].mxu0 %v8073
        %v8075 = vpop.f32.mrb[0].mxu0
        %v8076 = vadd.f32 %v7997, %v8075
        %v8077 = vpop.f32.mrb[0].mxu0
        %8078 = vdwg.mxu0
        %v8079 = vlaneseq
        %v8080 = vshrl.u32 %v8079, 7
        %v8081 = vsub.s32 2, %v8080
        %v8082 = vrot.slane %v6007, %v8081
        %8084 = vrot.lane.b32.xlu0 %v8082, 64
        %v8085 = vpop.permute.xlu0 %8084
        %v8087 = vmul.f32 %v6005, %v8085
        %v8088 = vmul.f32 %v6006, %v8085
        %8091 = vrot.lane.b32.xlu0 %v8087, 64
        %v8092 = vpop.permute.xlu0 %8091
        %8093 = vrot.lane.b32.xlu0 %v8088, 64
        %v8094 = vpop.permute.xlu0 %8093
        %v8097 = vsel %vm1106, %v8092, 0.0
        %8098 = vadd.xlane.f32.xlu0 %v8097
        %v8099 = vpop.xlane.xlu0 %8098
        %v8100 = vsel %vm1106, %v8094, 0.0
        %8101 = vadd.xlane.f32.xlu0 %v8100
        %v8102 = vpop.xlane.xlu0 %8101
        %v8103 = vrot.slane %v6008, 2
        %8104 = vrot.lane.b32.xlu0 %v6005, 64
        %v8105 = vpop.permute.xlu0 %8104
        %8106 = vrot.lane.b32.xlu0 %v6006, 64
        %v8107 = vpop.permute.xlu0 %8106
        %v8108 = vsel %vm1106, %v8103, 0
        %v8110 = vsel %vm1106, %v8105, 0
        %v8112 = vsel %vm1106, %v8107, 0
        %8114 = vmatprep.subr.mxu0 0.0
        %v8115 = vand.u32 %v8110, 4294901760
        %8116 = vmatpush1.xpose.msra.mxu0 %v8115
        %8117 = vmatprep.subr.mxu0 0.0
        %v8118 = vand.u32 %v8112, 4294901760
        %8119 = vmatpush1.xpose.msra.mxu0 %v8118
        %8120 = vmatprep.subr.mxu0 0.0
        %8121 = vmatpush1.xpose.msra.mxu0 0.0
        %8122 = vmatprep.subr.mxu0 0.0
        %8123 = vmatpush1.xpose.msra.mxu0 0.0
        %8124 = vmatprep.subr.mxu0 0.0
        %8125 = vmatpush1.xpose.msra.mxu0 0.0
        %8126 = vmatprep.subr.mxu0 0.0
        %8127 = vmatpush1.xpose.msra.mxu0 0.0
        %8128 = vmatprep.subr.mxu0 0.0
        %8129 = vmatpush1.xpose.msra.mxu0 0.0
        %8130 = vmatprep.subr.mxu0 0.0
        %8131 = vmatpush1.xpose.msra.mxu0 0.0
        %8132 = vmatprep.subr.mxu0 0.0
        %8133 = vmatpush1.xpose.msra.mxu0 0.0
        %8134 = vmatprep.subr.mxu0 0.0
        %8135 = vmatpush1.xpose.msra.mxu0 0.0
        %8136 = vmatprep.subr.mxu0 0.0
        %8137 = vmatpush1.xpose.msra.mxu0 0.0
        %8138 = vmatprep.subr.mxu0 0.0
        %8139 = vmatpush1.xpose.msra.mxu0 0.0
        %8140 = vmatprep.subr.mxu0 0.0
        %8141 = vmatpush1.xpose.msra.mxu0 0.0
        %8142 = vmatprep.subr.mxu0 0.0
        %8143 = vmatpush1.xpose.msra.mxu0 0.0
        %8144 = vmatprep.subr.mxu0 0.0
        %8145 = vmatpush1.xpose.msra.mxu0 0.0
        %8146 = vmatprep.subr.mxu0 0.0
        %8147 = vmatpush1.xpose.msra.mxu0 0.0
        %8148 = vmatprep.subr.mxu0 0.0
        %8149 = vmatpush1.xpose.msra.mxu0 0.0
        %8150 = vmatprep.subr.mxu0 0.0
        %8151 = vmatpush1.xpose.msra.mxu0 0.0
        %8152 = vmatprep.subr.mxu0 0.0
        %8153 = vmatpush1.xpose.msra.mxu0 0.0
        %8154 = vmatprep.subr.mxu0 0.0
        %8155 = vmatpush1.xpose.msra.mxu0 0.0
        %8156 = vmatprep.subr.mxu0 0.0
        %8157 = vmatpush1.xpose.msra.mxu0 0.0
        %8158 = vmatprep.subr.mxu0 0.0
        %8159 = vmatpush1.xpose.msra.mxu0 0.0
        %8160 = vmatprep.subr.mxu0 0.0
        %8161 = vmatpush1.xpose.msra.mxu0 0.0
        %8162 = vmatprep.subr.mxu0 0.0
        %8163 = vmatpush1.xpose.msra.mxu0 0.0
        %8164 = vmatprep.subr.mxu0 0.0
        %8165 = vmatpush1.xpose.msra.mxu0 0.0
        %8166 = vmatprep.subr.mxu0 0.0
        %8167 = vmatpush1.xpose.msra.mxu0 0.0
        %8168 = vmatprep.subr.mxu0 0.0
        %8169 = vmatpush1.xpose.msra.mxu0 0.0
        %8170 = vmatprep.subr.mxu0 0.0
        %8171 = vmatpush1.xpose.msra.mxu0 0.0
        %8172 = vmatprep.subr.mxu0 0.0
        %8173 = vmatpush1.xpose.msra.mxu0 0.0
        %8174 = vmatprep.subr.mxu0 0.0
        %8175 = vmatpush1.xpose.msra.mxu0 0.0
        %8176 = vmatprep.subr.mxu0 0.0
        %8177 = vmatpush1.xpose.msra.mxu0 0.0
        %8178 = vmatprep.subr.mxu0 0.0
        %8179 = vmatpush1.xpose.msra.mxu0 0.0
        %8180 = vmatprep.mubr.f32.mxu0 0.0
        %v8181 = vand.u32 %v8108, 4294901760
        %v8182 = vsub.f32 %v8108, %v8181
        %v8183 = vand.u32 %v8182, 4294901760
        %v8184 = vsub.f32 %v8182, %v8183
        %v8185 = vand.u32 %v8184, 4294901760
        %8186 = vmatmul.mubr.f32.gmra.mrb[0].mxu0 %v8185
        %v8187 = vpop.f32.mrb[0].mxu0
        %v8188 = vadd.f32 0.0, %v8187
        %v8189 = vpop.f32.mrb[0].mxu0
        %8190 = vdwg.mxu0
        %8191 = vmatprep.subr.mxu0 0.0
        %v8192 = vand.u32 %v8110, 4294901760
        %v8193 = vsub.f32 %v8110, %v8192
        %v8194 = vand.u32 %v8193, 4294901760
        %v8195 = vsub.f32 %v8193, %v8194
        %v8196 = vand.u32 %v8195, 4294901760
        %8197 = vmatpush1.xpose.msra.mxu0 %v8196
        %8198 = vmatprep.subr.mxu0 0.0
        %v8199 = vand.u32 %v8112, 4294901760
        %v8200 = vsub.f32 %v8112, %v8199
        %v8201 = vand.u32 %v8200, 4294901760
        %v8202 = vsub.f32 %v8200, %v8201
        %v8203 = vand.u32 %v8202, 4294901760
        %8204 = vmatpush1.xpose.msra.mxu0 %v8203
        %8205 = vmatprep.subr.mxu0 0.0
        %8206 = vmatpush1.xpose.msra.mxu0 0.0
        %8207 = vmatprep.subr.mxu0 0.0
        %8208 = vmatpush1.xpose.msra.mxu0 0.0
        %8209 = vmatprep.subr.mxu0 0.0
        %8210 = vmatpush1.xpose.msra.mxu0 0.0
        %8211 = vmatprep.subr.mxu0 0.0
        %8212 = vmatpush1.xpose.msra.mxu0 0.0
        %8213 = vmatprep.subr.mxu0 0.0
        %8214 = vmatpush1.xpose.msra.mxu0 0.0
        %8215 = vmatprep.subr.mxu0 0.0
        %8216 = vmatpush1.xpose.msra.mxu0 0.0
        %8217 = vmatprep.subr.mxu0 0.0
        %8218 = vmatpush1.xpose.msra.mxu0 0.0
        %8219 = vmatprep.subr.mxu0 0.0
        %8220 = vmatpush1.xpose.msra.mxu0 0.0
        %8221 = vmatprep.subr.mxu0 0.0
        %8222 = vmatpush1.xpose.msra.mxu0 0.0
        %8223 = vmatprep.subr.mxu0 0.0
        %8224 = vmatpush1.xpose.msra.mxu0 0.0
        %8225 = vmatprep.subr.mxu0 0.0
        %8226 = vmatpush1.xpose.msra.mxu0 0.0
        %8227 = vmatprep.subr.mxu0 0.0
        %8228 = vmatpush1.xpose.msra.mxu0 0.0
        %8229 = vmatprep.subr.mxu0 0.0
        %8230 = vmatpush1.xpose.msra.mxu0 0.0
        %8231 = vmatprep.subr.mxu0 0.0
        %8232 = vmatpush1.xpose.msra.mxu0 0.0
        %8233 = vmatprep.subr.mxu0 0.0
        %8234 = vmatpush1.xpose.msra.mxu0 0.0
        %8235 = vmatprep.subr.mxu0 0.0
        %8236 = vmatpush1.xpose.msra.mxu0 0.0
        %8237 = vmatprep.subr.mxu0 0.0
        %8238 = vmatpush1.xpose.msra.mxu0 0.0
        %8239 = vmatprep.subr.mxu0 0.0
        %8240 = vmatpush1.xpose.msra.mxu0 0.0
        %8241 = vmatprep.subr.mxu0 0.0
        %8242 = vmatpush1.xpose.msra.mxu0 0.0
        %8243 = vmatprep.subr.mxu0 0.0
        %8244 = vmatpush1.xpose.msra.mxu0 0.0
        %8245 = vmatprep.subr.mxu0 0.0
        %8246 = vmatpush1.xpose.msra.mxu0 0.0
        %8247 = vmatprep.subr.mxu0 0.0
        %8248 = vmatpush1.xpose.msra.mxu0 0.0
        %8249 = vmatprep.subr.mxu0 0.0
        %8250 = vmatpush1.xpose.msra.mxu0 0.0
        %8251 = vmatprep.subr.mxu0 0.0
        %8252 = vmatpush1.xpose.msra.mxu0 0.0
        %8253 = vmatprep.subr.mxu0 0.0
        %8254 = vmatpush1.xpose.msra.mxu0 0.0
        %8255 = vmatprep.subr.mxu0 0.0
        %8256 = vmatpush1.xpose.msra.mxu0 0.0
        %8257 = vmatprep.subr.mxu0 0.0
        %8258 = vmatpush1.xpose.msra.mxu0 0.0
        %8259 = vmatprep.subr.mxu0 0.0
        %8260 = vmatpush1.xpose.msra.mxu0 0.0
        %8261 = vmatprep.subr.mxu0 0.0
        %8262 = vmatpush1.xpose.msra.mxu0 0.0
        %8263 = vmatprep.subr.mxu0 0.0
        %8264 = vmatpush1.xpose.msra.mxu0 0.0
        %8265 = vmatprep.mubr.f32.mxu0 0.0
        %v8266 = vand.u32 %v8108, 4294901760
        %8267 = vmatmul.mubr.f32.gmra.mrb[0].mxu0 %v8266
        %v8268 = vpop.f32.mrb[0].mxu0
        %v8269 = vadd.f32 %v8188, %v8268
        %v8270 = vpop.f32.mrb[0].mxu0
        %8271 = vdwg.mxu0
        %8272 = vmatprep.subr.mxu0 0.0
        %v8273 = vand.u32 %v8110, 4294901760
        %v8274 = vsub.f32 %v8110, %v8273
        %8275 = vmatpush1.xpose.msra.mxu0 %v8274
        %8276 = vmatprep.subr.mxu0 0.0
        %v8277 = vand.u32 %v8112, 4294901760
        %v8278 = vsub.f32 %v8112, %v8277
        %8279 = vmatpush1.xpose.msra.mxu0 %v8278
        %8280 = vmatprep.subr.mxu0 0.0
        %8281 = vmatpush1.xpose.msra.mxu0 0.0
        %8282 = vmatprep.subr.mxu0 0.0
        %8283 = vmatpush1.xpose.msra.mxu0 0.0
        %8284 = vmatprep.subr.mxu0 0.0
        %8285 = vmatpush1.xpose.msra.mxu0 0.0
        %8286 = vmatprep.subr.mxu0 0.0
        %8287 = vmatpush1.xpose.msra.mxu0 0.0
        %8288 = vmatprep.subr.mxu0 0.0
        %8289 = vmatpush1.xpose.msra.mxu0 0.0
        %8290 = vmatprep.subr.mxu0 0.0
        %8291 = vmatpush1.xpose.msra.mxu0 0.0
        %8292 = vmatprep.subr.mxu0 0.0
        %8293 = vmatpush1.xpose.msra.mxu0 0.0
        %8294 = vmatprep.subr.mxu0 0.0
        %8295 = vmatpush1.xpose.msra.mxu0 0.0
        %8296 = vmatprep.subr.mxu0 0.0
        %8297 = vmatpush1.xpose.msra.mxu0 0.0
        %8298 = vmatprep.subr.mxu0 0.0
        %8299 = vmatpush1.xpose.msra.mxu0 0.0
        %8300 = vmatprep.subr.mxu0 0.0
        %8301 = vmatpush1.xpose.msra.mxu0 0.0
        %8302 = vmatprep.subr.mxu0 0.0
        %8303 = vmatpush1.xpose.msra.mxu0 0.0
        %8304 = vmatprep.subr.mxu0 0.0
        %8305 = vmatpush1.xpose.msra.mxu0 0.0
        %8306 = vmatprep.subr.mxu0 0.0
        %8307 = vmatpush1.xpose.msra.mxu0 0.0
        %8308 = vmatprep.subr.mxu0 0.0
        %8309 = vmatpush1.xpose.msra.mxu0 0.0
        %8310 = vmatprep.subr.mxu0 0.0
        %8311 = vmatpush1.xpose.msra.mxu0 0.0
        %8312 = vmatprep.subr.mxu0 0.0
        %8313 = vmatpush1.xpose.msra.mxu0 0.0
        %8314 = vmatprep.subr.mxu0 0.0
        %8315 = vmatpush1.xpose.msra.mxu0 0.0
        %8316 = vmatprep.subr.mxu0 0.0
        %8317 = vmatpush1.xpose.msra.mxu0 0.0
        %8318 = vmatprep.subr.mxu0 0.0
        %8319 = vmatpush1.xpose.msra.mxu0 0.0
        %8320 = vmatprep.subr.mxu0 0.0
        %8321 = vmatpush1.xpose.msra.mxu0 0.0
        %8322 = vmatprep.subr.mxu0 0.0
        %8323 = vmatpush1.xpose.msra.mxu0 0.0
        %8324 = vmatprep.subr.mxu0 0.0
        %8325 = vmatpush1.xpose.msra.mxu0 0.0
        %8326 = vmatprep.subr.mxu0 0.0
        %8327 = vmatpush1.xpose.msra.mxu0 0.0
        %8328 = vmatprep.subr.mxu0 0.0
        %8329 = vmatpush1.xpose.msra.mxu0 0.0
        %8330 = vmatprep.subr.mxu0 0.0
        %8331 = vmatpush1.xpose.msra.mxu0 0.0
        %8332 = vmatprep.subr.mxu0 0.0
        %8333 = vmatpush1.xpose.msra.mxu0 0.0
        %8334 = vmatprep.subr.mxu0 0.0
        %8335 = vmatpush1.xpose.msra.mxu0 0.0
        %8336 = vmatprep.subr.mxu0 0.0
        %8337 = vmatpush1.xpose.msra.mxu0 0.0
        %8338 = vmatprep.subr.mxu0 0.0
        %8339 = vmatpush1.xpose.msra.mxu0 0.0
        %8340 = vmatprep.mubr.f32.mxu0 0.0
        %v8341 = vand.u32 %v8108, 4294901760
        %v8342 = vsub.f32 %v8108, %v8341
        %8343 = vmatmul.mubr.f32.gmra.mrb[0].mxu0 %v8342
        %v8344 = vpop.f32.mrb[0].mxu0
        %v8345 = vadd.f32 %v8269, %v8344
        %v8346 = vpop.f32.mrb[0].mxu0
        %8347 = vdwg.mxu0
        %8348 = vmatprep.subr.mxu0 0.0
        %v8349 = vand.u32 %v8110, 4294901760
        %8350 = vmatpush1.xpose.msra.mxu0 %v8349
        %8351 = vmatprep.subr.mxu0 0.0
        %v8352 = vand.u32 %v8112, 4294901760
        %8353 = vmatpush1.xpose.msra.mxu0 %v8352
        %8354 = vmatprep.subr.mxu0 0.0
        %8355 = vmatpush1.xpose.msra.mxu0 0.0
        %8356 = vmatprep.subr.mxu0 0.0
        %8357 = vmatpush1.xpose.msra.mxu0 0.0
        %8358 = vmatprep.subr.mxu0 0.0
        %8359 = vmatpush1.xpose.msra.mxu0 0.0
        %8360 = vmatprep.subr.mxu0 0.0
        %8361 = vmatpush1.xpose.msra.mxu0 0.0
        %8362 = vmatprep.subr.mxu0 0.0
        %8363 = vmatpush1.xpose.msra.mxu0 0.0
        %8364 = vmatprep.subr.mxu0 0.0
        %8365 = vmatpush1.xpose.msra.mxu0 0.0
        %8366 = vmatprep.subr.mxu0 0.0
        %8367 = vmatpush1.xpose.msra.mxu0 0.0
        %8368 = vmatprep.subr.mxu0 0.0
        %8369 = vmatpush1.xpose.msra.mxu0 0.0
        %8370 = vmatprep.subr.mxu0 0.0
        %8371 = vmatpush1.xpose.msra.mxu0 0.0
        %8372 = vmatprep.subr.mxu0 0.0
        %8373 = vmatpush1.xpose.msra.mxu0 0.0
        %8374 = vmatprep.subr.mxu0 0.0
        %8375 = vmatpush1.xpose.msra.mxu0 0.0
        %8376 = vmatprep.subr.mxu0 0.0
        %8377 = vmatpush1.xpose.msra.mxu0 0.0
        %8378 = vmatprep.subr.mxu0 0.0
        %8379 = vmatpush1.xpose.msra.mxu0 0.0
        %8380 = vmatprep.subr.mxu0 0.0
        %8381 = vmatpush1.xpose.msra.mxu0 0.0
        %8382 = vmatprep.subr.mxu0 0.0
        %8383 = vmatpush1.xpose.msra.mxu0 0.0
        %8384 = vmatprep.subr.mxu0 0.0
        %8385 = vmatpush1.xpose.msra.mxu0 0.0
        %8386 = vmatprep.subr.mxu0 0.0
        %8387 = vmatpush1.xpose.msra.mxu0 0.0
        %8388 = vmatprep.subr.mxu0 0.0
        %8389 = vmatpush1.xpose.msra.mxu0 0.0
        %8390 = vmatprep.subr.mxu0 0.0
        %8391 = vmatpush1.xpose.msra.mxu0 0.0
        %8392 = vmatprep.subr.mxu0 0.0
        %8393 = vmatpush1.xpose.msra.mxu0 0.0
        %8394 = vmatprep.subr.mxu0 0.0
        %8395 = vmatpush1.xpose.msra.mxu0 0.0
        %8396 = vmatprep.subr.mxu0 0.0
        %8397 = vmatpush1.xpose.msra.mxu0 0.0
        %8398 = vmatprep.subr.mxu0 0.0
        %8399 = vmatpush1.xpose.msra.mxu0 0.0
        %8400 = vmatprep.subr.mxu0 0.0
        %8401 = vmatpush1.xpose.msra.mxu0 0.0
        %8402 = vmatprep.subr.mxu0 0.0
        %8403 = vmatpush1.xpose.msra.mxu0 0.0
        %8404 = vmatprep.subr.mxu0 0.0
        %8405 = vmatpush1.xpose.msra.mxu0 0.0
        %8406 = vmatprep.subr.mxu0 0.0
        %8407 = vmatpush1.xpose.msra.mxu0 0.0
        %8408 = vmatprep.subr.mxu0 0.0
        %8409 = vmatpush1.xpose.msra.mxu0 0.0
        %8410 = vmatprep.subr.mxu0 0.0
        %8411 = vmatpush1.xpose.msra.mxu0 0.0
        %8412 = vmatprep.subr.mxu0 0.0
        %8413 = vmatpush1.xpose.msra.mxu0 0.0
        %8414 = vmatprep.mubr.f32.mxu0 0.0
        %v8415 = vand.u32 %v8108, 4294901760
        %v8416 = vsub.f32 %v8108, %v8415
        %v8417 = vand.u32 %v8416, 4294901760
        %8418 = vmatmul.mubr.f32.gmra.mrb[0].mxu0 %v8417
        %v8419 = vpop.f32.mrb[0].mxu0
        %v8420 = vadd.f32 %v8345, %v8419
        %v8421 = vpop.f32.mrb[0].mxu0
        %8422 = vdwg.mxu0
        %8423 = vmatprep.subr.mxu0 0.0
        %v8424 = vand.u32 %v8110, 4294901760
        %v8425 = vsub.f32 %v8110, %v8424
        %v8426 = vand.u32 %v8425, 4294901760
        %8427 = vmatpush1.xpose.msra.mxu0 %v8426
        %8428 = vmatprep.subr.mxu0 0.0
        %v8429 = vand.u32 %v8112, 4294901760
        %v8430 = vsub.f32 %v8112, %v8429
        %v8431 = vand.u32 %v8430, 4294901760
        %8432 = vmatpush1.xpose.msra.mxu0 %v8431
        %8433 = vmatprep.subr.mxu0 0.0
        %8434 = vmatpush1.xpose.msra.mxu0 0.0
        %8435 = vmatprep.subr.mxu0 0.0
        %8436 = vmatpush1.xpose.msra.mxu0 0.0
        %8437 = vmatprep.subr.mxu0 0.0
        %8438 = vmatpush1.xpose.msra.mxu0 0.0
        %8439 = vmatprep.subr.mxu0 0.0
        %8440 = vmatpush1.xpose.msra.mxu0 0.0
        %8441 = vmatprep.subr.mxu0 0.0
        %8442 = vmatpush1.xpose.msra.mxu0 0.0
        %8443 = vmatprep.subr.mxu0 0.0
        %8444 = vmatpush1.xpose.msra.mxu0 0.0
        %8445 = vmatprep.subr.mxu0 0.0
        %8446 = vmatpush1.xpose.msra.mxu0 0.0
        %8447 = vmatprep.subr.mxu0 0.0
        %8448 = vmatpush1.xpose.msra.mxu0 0.0
        %8449 = vmatprep.subr.mxu0 0.0
        %8450 = vmatpush1.xpose.msra.mxu0 0.0
        %8451 = vmatprep.subr.mxu0 0.0
        %8452 = vmatpush1.xpose.msra.mxu0 0.0
        %8453 = vmatprep.subr.mxu0 0.0
        %8454 = vmatpush1.xpose.msra.mxu0 0.0
        %8455 = vmatprep.subr.mxu0 0.0
        %8456 = vmatpush1.xpose.msra.mxu0 0.0
        %8457 = vmatprep.subr.mxu0 0.0
        %8458 = vmatpush1.xpose.msra.mxu0 0.0
        %8459 = vmatprep.subr.mxu0 0.0
        %8460 = vmatpush1.xpose.msra.mxu0 0.0
        %8461 = vmatprep.subr.mxu0 0.0
        %8462 = vmatpush1.xpose.msra.mxu0 0.0
        %8463 = vmatprep.subr.mxu0 0.0
        %8464 = vmatpush1.xpose.msra.mxu0 0.0
        %8465 = vmatprep.subr.mxu0 0.0
        %8466 = vmatpush1.xpose.msra.mxu0 0.0
        %8467 = vmatprep.subr.mxu0 0.0
        %8468 = vmatpush1.xpose.msra.mxu0 0.0
        %8469 = vmatprep.subr.mxu0 0.0
        %8470 = vmatpush1.xpose.msra.mxu0 0.0
        %8471 = vmatprep.subr.mxu0 0.0
        %8472 = vmatpush1.xpose.msra.mxu0 0.0
        %8473 = vmatprep.subr.mxu0 0.0
        %8474 = vmatpush1.xpose.msra.mxu0 0.0
        %8475 = vmatprep.subr.mxu0 0.0
        %8476 = vmatpush1.xpose.msra.mxu0 0.0
        %8477 = vmatprep.subr.mxu0 0.0
        %8478 = vmatpush1.xpose.msra.mxu0 0.0
        %8479 = vmatprep.subr.mxu0 0.0
        %8480 = vmatpush1.xpose.msra.mxu0 0.0
        %8481 = vmatprep.subr.mxu0 0.0
        %8482 = vmatpush1.xpose.msra.mxu0 0.0
        %8483 = vmatprep.subr.mxu0 0.0
        %8484 = vmatpush1.xpose.msra.mxu0 0.0
        %8485 = vmatprep.subr.mxu0 0.0
        %8486 = vmatpush1.xpose.msra.mxu0 0.0
        %8487 = vmatprep.subr.mxu0 0.0
        %8488 = vmatpush1.xpose.msra.mxu0 0.0
        %8489 = vmatprep.subr.mxu0 0.0
        %8490 = vmatpush1.xpose.msra.mxu0 0.0
        %8491 = vmatprep.subr.mxu0 0.0
        %8492 = vmatpush1.xpose.msra.mxu0 0.0
        %8493 = vmatprep.mubr.f32.mxu0 0.0
        %v8494 = vand.u32 %v8108, 4294901760
        %8495 = vmatmul.mubr.f32.gmra.mrb[0].mxu0 %v8494
        %v8496 = vpop.f32.mrb[0].mxu0
        %v8497 = vadd.f32 %v8420, %v8496
        %v8498 = vpop.f32.mrb[0].mxu0
        %8499 = vdwg.mxu0
        %8500 = vmatprep.subr.mxu0 0.0
        %v8501 = vand.u32 %v8110, 4294901760
        %8502 = vmatpush1.xpose.msra.mxu0 %v8501
        %8503 = vmatprep.subr.mxu0 0.0
        %v8504 = vand.u32 %v8112, 4294901760
        %8505 = vmatpush1.xpose.msra.mxu0 %v8504
        %8506 = vmatprep.subr.mxu0 0.0
        %8507 = vmatpush1.xpose.msra.mxu0 0.0
        %8508 = vmatprep.subr.mxu0 0.0
        %8509 = vmatpush1.xpose.msra.mxu0 0.0
        %8510 = vmatprep.subr.mxu0 0.0
        %8511 = vmatpush1.xpose.msra.mxu0 0.0
        %8512 = vmatprep.subr.mxu0 0.0
        %8513 = vmatpush1.xpose.msra.mxu0 0.0
        %8514 = vmatprep.subr.mxu0 0.0
        %8515 = vmatpush1.xpose.msra.mxu0 0.0
        %8516 = vmatprep.subr.mxu0 0.0
        %8517 = vmatpush1.xpose.msra.mxu0 0.0
        %8518 = vmatprep.subr.mxu0 0.0
        %8519 = vmatpush1.xpose.msra.mxu0 0.0
        %8520 = vmatprep.subr.mxu0 0.0
        %8521 = vmatpush1.xpose.msra.mxu0 0.0
        %8522 = vmatprep.subr.mxu0 0.0
        %8523 = vmatpush1.xpose.msra.mxu0 0.0
        %8524 = vmatprep.subr.mxu0 0.0
        %8525 = vmatpush1.xpose.msra.mxu0 0.0
        %8526 = vmatprep.subr.mxu0 0.0
        %8527 = vmatpush1.xpose.msra.mxu0 0.0
        %8528 = vmatprep.subr.mxu0 0.0
        %8529 = vmatpush1.xpose.msra.mxu0 0.0
        %8530 = vmatprep.subr.mxu0 0.0
        %8531 = vmatpush1.xpose.msra.mxu0 0.0
        %8532 = vmatprep.subr.mxu0 0.0
        %8533 = vmatpush1.xpose.msra.mxu0 0.0
        %8534 = vmatprep.subr.mxu0 0.0
        %8535 = vmatpush1.xpose.msra.mxu0 0.0
        %8536 = vmatprep.subr.mxu0 0.0
        %8537 = vmatpush1.xpose.msra.mxu0 0.0
        %8538 = vmatprep.subr.mxu0 0.0
        %8539 = vmatpush1.xpose.msra.mxu0 0.0
        %8540 = vmatprep.subr.mxu0 0.0
        %8541 = vmatpush1.xpose.msra.mxu0 0.0
        %8542 = vmatprep.subr.mxu0 0.0
        %8543 = vmatpush1.xpose.msra.mxu0 0.0
        %8544 = vmatprep.subr.mxu0 0.0
        %8545 = vmatpush1.xpose.msra.mxu0 0.0
        %8546 = vmatprep.subr.mxu0 0.0
        %8547 = vmatpush1.xpose.msra.mxu0 0.0
        %8548 = vmatprep.subr.mxu0 0.0
        %8549 = vmatpush1.xpose.msra.mxu0 0.0
        %8550 = vmatprep.subr.mxu0 0.0
        %8551 = vmatpush1.xpose.msra.mxu0 0.0
        %8552 = vmatprep.subr.mxu0 0.0
        %8553 = vmatpush1.xpose.msra.mxu0 0.0
        %8554 = vmatprep.subr.mxu0 0.0
        %8555 = vmatpush1.xpose.msra.mxu0 0.0
        %8556 = vmatprep.subr.mxu0 0.0
        %8557 = vmatpush1.xpose.msra.mxu0 0.0
        %8558 = vmatprep.subr.mxu0 0.0
        %8559 = vmatpush1.xpose.msra.mxu0 0.0
        %8560 = vmatprep.subr.mxu0 0.0
        %8561 = vmatpush1.xpose.msra.mxu0 0.0
        %8562 = vmatprep.subr.mxu0 0.0
        %8563 = vmatpush1.xpose.msra.mxu0 0.0
        %8564 = vmatprep.subr.mxu0 0.0
        %8565 = vmatpush1.xpose.msra.mxu0 0.0
        %8566 = vmatprep.mubr.f32.mxu0 0.0
        %v8567 = vand.u32 %v8108, 4294901760
        %8568 = vmatmul.mubr.f32.gmra.mrb[0].mxu0 %v8567
        %v8569 = vpop.f32.mrb[0].mxu0
        %v8570 = vadd.f32 %v8497, %v8569
        %v8571 = vpop.f32.mrb[0].mxu0
        %8572 = vdwg.mxu0
        %v8573 = vlaneseq
        %v8574 = vshrl.u32 %v8573, 7
        %v8575 = vsub.s32 0, %v8574
        %v8576 = vrot.slane %v8570, %v8575
        %v8577 = vadd.f32 %v8099, %v8576
        %v8578 = vadd.f32 %v8102, %v8576
        %vm8579 = vcmp.gt.f32.partialorder %v8577, 0.0
        %vm8580 = vcmp.gt.f32.partialorder %v8578, 0.0
        %v8581 = vmul.f32 %v8577, 0.2
        %v8582 = vmul.f32 %v8578, 0.2
        %v8583 = vsel %vm8579, %v8577, %v8581
        %v8584 = vsel %vm8580, %v8578, %v8582
        %v8585 = vsel %vm1593, -1e+12, %v8583
        %v8586 = vsel %vm1594, -1e+12, %v8584
        %v8587 = vsel %vm587, %v8585, -inf
        %8588 = vmax.xlane.f32.xlu0 %v8587
        %v8589 = vpop.xlane.xlu0 %8588
        %v8590 = vsel %vm587, %v8586, -inf
        %8591 = vmax.xlane.f32.xlu0 %v8590
        %v8592 = vpop.xlane.xlu0 %8591
        %v8593 = vsub.f32 %v8585, %v8589
        %v8594 = vsub.f32 %v8586, %v8592
        %v8595 = vmul.f32 %v8593, 1.442695
        %v8596 = vpow.pop %v8595
        %v8597 = vmul.f32 %v8594, 1.442695
        %v8598 = vpow.pop %v8597
        %v8599 = vsel %vm587, %v8596, 0.0
        %8600 = vadd.xlane.f32.xlu0 %v8599
        %v8601 = vpop.xlane.xlu0 %8600
        %v8602 = vsel %vm587, %v8598, 0.0
        %8603 = vadd.xlane.f32.xlu0 %v8602
        %v8604 = vpop.xlane.xlu0 %8603
        %v8605 = vrcp.pop %v8601
        %v8606 = vmul.f32 %v8596, %v8605
        %v8607 = vrcp.pop %v8604
        %v8608 = vmul.f32 %v8598, %v8607
        %8609 = vrot.lane.b32.xlu0 %v5996, 64
        %v8610 = vpop.permute.xlu0 %8609
        %8611 = vrot.lane.b32.xlu0 %v6002, 64
        %v8612 = vpop.permute.xlu0 %8611
        %v8616 = vsel %vm587, %v8606, 0
        %v8619 = vsel %vm587, %v8608, 0
        %8621 = vmatprep.subr.mxu0 0.0
        %v8622 = vand.u32 %v8610, 4294901760
        %8623 = vmatpush1.msra.mxu0 %v8622
        %8624 = vmatprep.subr.mxu0 0.0
        %v8625 = vand.u32 %v8612, 4294901760
        %8626 = vmatpush1.msra.mxu0 %v8625
        %8627 = vmatprep.subr.mxu0 0.0
        %8628 = vmatpush1.msra.mxu0 0.0
        %8629 = vmatprep.subr.mxu0 0.0
        %8630 = vmatpush1.msra.mxu0 0.0
        %8631 = vmatprep.subr.mxu0 0.0
        %8632 = vmatpush1.msra.mxu0 0.0
        %8633 = vmatprep.subr.mxu0 0.0
        %8634 = vmatpush1.msra.mxu0 0.0
        %8635 = vmatprep.subr.mxu0 0.0
        %8636 = vmatpush1.msra.mxu0 0.0
        %8637 = vmatprep.subr.mxu0 0.0
        %8638 = vmatpush1.msra.mxu0 0.0
        %8639 = vmatprep.subr.mxu0 0.0
        %8640 = vmatpush1.msra.mxu0 0.0
        %8641 = vmatprep.subr.mxu0 0.0
        %8642 = vmatpush1.msra.mxu0 0.0
        %8643 = vmatprep.subr.mxu0 0.0
        %8644 = vmatpush1.msra.mxu0 0.0
        %8645 = vmatprep.subr.mxu0 0.0
        %8646 = vmatpush1.msra.mxu0 0.0
        %8647 = vmatprep.subr.mxu0 0.0
        %8648 = vmatpush1.msra.mxu0 0.0
        %8649 = vmatprep.subr.mxu0 0.0
        %8650 = vmatpush1.msra.mxu0 0.0
        %8651 = vmatprep.subr.mxu0 0.0
        %8652 = vmatpush1.msra.mxu0 0.0
        %8653 = vmatprep.subr.mxu0 0.0
        %8654 = vmatpush1.msra.mxu0 0.0
        %8655 = vmatprep.subr.mxu0 0.0
        %8656 = vmatpush1.msra.mxu0 0.0
        %8657 = vmatprep.subr.mxu0 0.0
        %8658 = vmatpush1.msra.mxu0 0.0
        %8659 = vmatprep.subr.mxu0 0.0
        %8660 = vmatpush1.msra.mxu0 0.0
        %8661 = vmatprep.subr.mxu0 0.0
        %8662 = vmatpush1.msra.mxu0 0.0
        %8663 = vmatprep.subr.mxu0 0.0
        %8664 = vmatpush1.msra.mxu0 0.0
        %8665 = vmatprep.subr.mxu0 0.0
        %8666 = vmatpush1.msra.mxu0 0.0
        %8667 = vmatprep.subr.mxu0 0.0
        %8668 = vmatpush1.msra.mxu0 0.0
        %8669 = vmatprep.subr.mxu0 0.0
        %8670 = vmatpush1.msra.mxu0 0.0
        %8671 = vmatprep.subr.mxu0 0.0
        %8672 = vmatpush1.msra.mxu0 0.0
        %8673 = vmatprep.subr.mxu0 0.0
        %8674 = vmatpush1.msra.mxu0 0.0
        %8675 = vmatprep.subr.mxu0 0.0
        %8676 = vmatpush1.msra.mxu0 0.0
        %8677 = vmatprep.subr.mxu0 0.0
        %8678 = vmatpush1.msra.mxu0 0.0
        %8679 = vmatprep.subr.mxu0 0.0
        %8680 = vmatpush1.msra.mxu0 0.0
        %8681 = vmatprep.subr.mxu0 0.0
        %8682 = vmatpush1.msra.mxu0 0.0
        %8683 = vmatprep.subr.mxu0 0.0
        %8684 = vmatpush1.msra.mxu0 0.0
        %8685 = vmatprep.subr.mxu0 0.0
        %8686 = vmatpush1.msra.mxu0 0.0
        %8687 = vmatprep.mubr.f32.mxu0 0.0
        %v8688 = vand.u32 %v8616, 4294901760
        %v8689 = vsub.f32 %v8616, %v8688
        %v8690 = vand.u32 %v8689, 4294901760
        %v8691 = vsub.f32 %v8689, %v8690
        %v8692 = vand.u32 %v8691, 4294901760
        %8693 = vmatmul.mubr.f32.gmra.mrb[0].mxu0 %v8692
        %v8694 = vpop.f32.mrb[0].mxu0
        %v8695 = vadd.f32 0.0, %v8694
        %v8696 = vpop.f32.mrb[0].mxu0
        %8697 = vmatprep.mubr.f32.mxu0 0.0
        %v8698 = vand.u32 %v8619, 4294901760
        %v8699 = vsub.f32 %v8619, %v8698
        %v8700 = vand.u32 %v8699, 4294901760
        %v8701 = vsub.f32 %v8699, %v8700
        %v8702 = vand.u32 %v8701, 4294901760
        %8703 = vmatmul.mubr.f32.gmra.mrb[0].mxu0 %v8702
        %v8704 = vpop.f32.mrb[0].mxu0
        %v8705 = vadd.f32 0.0, %v8704
        %v8706 = vpop.f32.mrb[0].mxu0
        %8707 = vdwg.mxu0
        %8708 = vmatprep.subr.mxu0 0.0
        %v8709 = vand.u32 %v8610, 4294901760
        %v8710 = vsub.f32 %v8610, %v8709
        %v8711 = vand.u32 %v8710, 4294901760
        %v8712 = vsub.f32 %v8710, %v8711
        %v8713 = vand.u32 %v8712, 4294901760
        %8714 = vmatpush1.msra.mxu0 %v8713
        %8715 = vmatprep.subr.mxu0 0.0
        %v8716 = vand.u32 %v8612, 4294901760
        %v8717 = vsub.f32 %v8612, %v8716
        %v8718 = vand.u32 %v8717, 4294901760
        %v8719 = vsub.f32 %v8717, %v8718
        %v8720 = vand.u32 %v8719, 4294901760
        %8721 = vmatpush1.msra.mxu0 %v8720
        %8722 = vmatprep.subr.mxu0 0.0
        %8723 = vmatpush1.msra.mxu0 0.0
        %8724 = vmatprep.subr.mxu0 0.0
        %8725 = vmatpush1.msra.mxu0 0.0
        %8726 = vmatprep.subr.mxu0 0.0
        %8727 = vmatpush1.msra.mxu0 0.0
        %8728 = vmatprep.subr.mxu0 0.0
        %8729 = vmatpush1.msra.mxu0 0.0
        %8730 = vmatprep.subr.mxu0 0.0
        %8731 = vmatpush1.msra.mxu0 0.0
        %8732 = vmatprep.subr.mxu0 0.0
        %8733 = vmatpush1.msra.mxu0 0.0
        %8734 = vmatprep.subr.mxu0 0.0
        %8735 = vmatpush1.msra.mxu0 0.0
        %8736 = vmatprep.subr.mxu0 0.0
        %8737 = vmatpush1.msra.mxu0 0.0
        %8738 = vmatprep.subr.mxu0 0.0
        %8739 = vmatpush1.msra.mxu0 0.0
        %8740 = vmatprep.subr.mxu0 0.0
        %8741 = vmatpush1.msra.mxu0 0.0
        %8742 = vmatprep.subr.mxu0 0.0
        %8743 = vmatpush1.msra.mxu0 0.0
        %8744 = vmatprep.subr.mxu0 0.0
        %8745 = vmatpush1.msra.mxu0 0.0
        %8746 = vmatprep.subr.mxu0 0.0
        %8747 = vmatpush1.msra.mxu0 0.0
        %8748 = vmatprep.subr.mxu0 0.0
        %8749 = vmatpush1.msra.mxu0 0.0
        %8750 = vmatprep.subr.mxu0 0.0
        %8751 = vmatpush1.msra.mxu0 0.0
        %8752 = vmatprep.subr.mxu0 0.0
        %8753 = vmatpush1.msra.mxu0 0.0
        %8754 = vmatprep.subr.mxu0 0.0
        %8755 = vmatpush1.msra.mxu0 0.0
        %8756 = vmatprep.subr.mxu0 0.0
        %8757 = vmatpush1.msra.mxu0 0.0
        %8758 = vmatprep.subr.mxu0 0.0
        %8759 = vmatpush1.msra.mxu0 0.0
        %8760 = vmatprep.subr.mxu0 0.0
        %8761 = vmatpush1.msra.mxu0 0.0
        %8762 = vmatprep.subr.mxu0 0.0
        %8763 = vmatpush1.msra.mxu0 0.0
        %8764 = vmatprep.subr.mxu0 0.0
        %8765 = vmatpush1.msra.mxu0 0.0
        %8766 = vmatprep.subr.mxu0 0.0
        %8767 = vmatpush1.msra.mxu0 0.0
        %8768 = vmatprep.subr.mxu0 0.0
        %8769 = vmatpush1.msra.mxu0 0.0
        %8770 = vmatprep.subr.mxu0 0.0
        %8771 = vmatpush1.msra.mxu0 0.0
        %8772 = vmatprep.subr.mxu0 0.0
        %8773 = vmatpush1.msra.mxu0 0.0
        %8774 = vmatprep.subr.mxu0 0.0
        %8775 = vmatpush1.msra.mxu0 0.0
        %8776 = vmatprep.subr.mxu0 0.0
        %8777 = vmatpush1.msra.mxu0 0.0
        %8778 = vmatprep.subr.mxu0 0.0
        %8779 = vmatpush1.msra.mxu0 0.0
        %8780 = vmatprep.subr.mxu0 0.0
        %8781 = vmatpush1.msra.mxu0 0.0
        %8782 = vmatprep.mubr.f32.mxu0 0.0
        %v8783 = vand.u32 %v8616, 4294901760
        %8784 = vmatmul.mubr.f32.gmra.mrb[0].mxu0 %v8783
        %v8785 = vpop.f32.mrb[0].mxu0
        %v8786 = vadd.f32 %v8695, %v8785
        %v8787 = vpop.f32.mrb[0].mxu0
        %8788 = vmatprep.mubr.f32.mxu0 0.0
        %v8789 = vand.u32 %v8619, 4294901760
        %8790 = vmatmul.mubr.f32.gmra.mrb[0].mxu0 %v8789
        %v8791 = vpop.f32.mrb[0].mxu0
        %v8792 = vadd.f32 %v8705, %v8791
        %v8793 = vpop.f32.mrb[0].mxu0
        %8794 = vdwg.mxu0
        %8795 = vmatprep.subr.mxu0 0.0
        %v8796 = vand.u32 %v8610, 4294901760
        %v8797 = vsub.f32 %v8610, %v8796
        %8798 = vmatpush1.msra.mxu0 %v8797
        %8799 = vmatprep.subr.mxu0 0.0
        %v8800 = vand.u32 %v8612, 4294901760
        %v8801 = vsub.f32 %v8612, %v8800
        %8802 = vmatpush1.msra.mxu0 %v8801
        %8803 = vmatprep.subr.mxu0 0.0
        %8804 = vmatpush1.msra.mxu0 0.0
        %8805 = vmatprep.subr.mxu0 0.0
        %8806 = vmatpush1.msra.mxu0 0.0
        %8807 = vmatprep.subr.mxu0 0.0
        %8808 = vmatpush1.msra.mxu0 0.0
        %8809 = vmatprep.subr.mxu0 0.0
        %8810 = vmatpush1.msra.mxu0 0.0
        %8811 = vmatprep.subr.mxu0 0.0
        %8812 = vmatpush1.msra.mxu0 0.0
        %8813 = vmatprep.subr.mxu0 0.0
        %8814 = vmatpush1.msra.mxu0 0.0
        %8815 = vmatprep.subr.mxu0 0.0
        %8816 = vmatpush1.msra.mxu0 0.0
        %8817 = vmatprep.subr.mxu0 0.0
        %8818 = vmatpush1.msra.mxu0 0.0
        %8819 = vmatprep.subr.mxu0 0.0
        %8820 = vmatpush1.msra.mxu0 0.0
        %8821 = vmatprep.subr.mxu0 0.0
        %8822 = vmatpush1.msra.mxu0 0.0
        %8823 = vmatprep.subr.mxu0 0.0
        %8824 = vmatpush1.msra.mxu0 0.0
        %8825 = vmatprep.subr.mxu0 0.0
        %8826 = vmatpush1.msra.mxu0 0.0
        %8827 = vmatprep.subr.mxu0 0.0
        %8828 = vmatpush1.msra.mxu0 0.0
        %8829 = vmatprep.subr.mxu0 0.0
        %8830 = vmatpush1.msra.mxu0 0.0
        %8831 = vmatprep.subr.mxu0 0.0
        %8832 = vmatpush1.msra.mxu0 0.0
        %8833 = vmatprep.subr.mxu0 0.0
        %8834 = vmatpush1.msra.mxu0 0.0
        %8835 = vmatprep.subr.mxu0 0.0
        %8836 = vmatpush1.msra.mxu0 0.0
        %8837 = vmatprep.subr.mxu0 0.0
        %8838 = vmatpush1.msra.mxu0 0.0
        %8839 = vmatprep.subr.mxu0 0.0
        %8840 = vmatpush1.msra.mxu0 0.0
        %8841 = vmatprep.subr.mxu0 0.0
        %8842 = vmatpush1.msra.mxu0 0.0
        %8843 = vmatprep.subr.mxu0 0.0
        %8844 = vmatpush1.msra.mxu0 0.0
        %8845 = vmatprep.subr.mxu0 0.0
        %8846 = vmatpush1.msra.mxu0 0.0
        %8847 = vmatprep.subr.mxu0 0.0
        %8848 = vmatpush1.msra.mxu0 0.0
        %8849 = vmatprep.subr.mxu0 0.0
        %8850 = vmatpush1.msra.mxu0 0.0
        %8851 = vmatprep.subr.mxu0 0.0
        %8852 = vmatpush1.msra.mxu0 0.0
        %8853 = vmatprep.subr.mxu0 0.0
        %8854 = vmatpush1.msra.mxu0 0.0
        %8855 = vmatprep.subr.mxu0 0.0
        %8856 = vmatpush1.msra.mxu0 0.0
        %8857 = vmatprep.subr.mxu0 0.0
        %8858 = vmatpush1.msra.mxu0 0.0
        %8859 = vmatprep.subr.mxu0 0.0
        %8860 = vmatpush1.msra.mxu0 0.0
        %8861 = vmatprep.subr.mxu0 0.0
        %8862 = vmatpush1.msra.mxu0 0.0
        %8863 = vmatprep.mubr.f32.mxu0 0.0
        %v8864 = vand.u32 %v8616, 4294901760
        %v8865 = vsub.f32 %v8616, %v8864
        %8866 = vmatmul.mubr.f32.gmra.mrb[0].mxu0 %v8865
        %v8867 = vpop.f32.mrb[0].mxu0
        %v8868 = vadd.f32 %v8786, %v8867
        %v8869 = vpop.f32.mrb[0].mxu0
        %8870 = vmatprep.mubr.f32.mxu0 0.0
        %v8871 = vand.u32 %v8619, 4294901760
        %v8872 = vsub.f32 %v8619, %v8871
        %8873 = vmatmul.mubr.f32.gmra.mrb[0].mxu0 %v8872
        %v8874 = vpop.f32.mrb[0].mxu0
        %v8875 = vadd.f32 %v8792, %v8874
        %v8876 = vpop.f32.mrb[0].mxu0
        %8877 = vdwg.mxu0
        %8878 = vmatprep.subr.mxu0 0.0
        %v8879 = vand.u32 %v8610, 4294901760
        %8880 = vmatpush1.msra.mxu0 %v8879
        %8881 = vmatprep.subr.mxu0 0.0
        %v8882 = vand.u32 %v8612, 4294901760
        %8883 = vmatpush1.msra.mxu0 %v8882
        %8884 = vmatprep.subr.mxu0 0.0
        %8885 = vmatpush1.msra.mxu0 0.0
        %8886 = vmatprep.subr.mxu0 0.0
        %8887 = vmatpush1.msra.mxu0 0.0
        %8888 = vmatprep.subr.mxu0 0.0
        %8889 = vmatpush1.msra.mxu0 0.0
        %8890 = vmatprep.subr.mxu0 0.0
        %8891 = vmatpush1.msra.mxu0 0.0
        %8892 = vmatprep.subr.mxu0 0.0
        %8893 = vmatpush1.msra.mxu0 0.0
        %8894 = vmatprep.subr.mxu0 0.0
        %8895 = vmatpush1.msra.mxu0 0.0
        %8896 = vmatprep.subr.mxu0 0.0
        %8897 = vmatpush1.msra.mxu0 0.0
        %8898 = vmatprep.subr.mxu0 0.0
        %8899 = vmatpush1.msra.mxu0 0.0
        %8900 = vmatprep.subr.mxu0 0.0
        %8901 = vmatpush1.msra.mxu0 0.0
        %8902 = vmatprep.subr.mxu0 0.0
        %8903 = vmatpush1.msra.mxu0 0.0
        %8904 = vmatprep.subr.mxu0 0.0
        %8905 = vmatpush1.msra.mxu0 0.0
        %8906 = vmatprep.subr.mxu0 0.0
        %8907 = vmatpush1.msra.mxu0 0.0
        %8908 = vmatprep.subr.mxu0 0.0
        %8909 = vmatpush1.msra.mxu0 0.0
        %8910 = vmatprep.subr.mxu0 0.0
        %8911 = vmatpush1.msra.mxu0 0.0
        %8912 = vmatprep.subr.mxu0 0.0
        %8913 = vmatpush1.msra.mxu0 0.0
        %8914 = vmatprep.subr.mxu0 0.0
        %8915 = vmatpush1.msra.mxu0 0.0
        %8916 = vmatprep.subr.mxu0 0.0
        %8917 = vmatpush1.msra.mxu0 0.0
        %8918 = vmatprep.subr.mxu0 0.0
        %8919 = vmatpush1.msra.mxu0 0.0
        %8920 = vmatprep.subr.mxu0 0.0
        %8921 = vmatpush1.msra.mxu0 0.0
        %8922 = vmatprep.subr.mxu0 0.0
        %8923 = vmatpush1.msra.mxu0 0.0
        %8924 = vmatprep.subr.mxu0 0.0
        %8925 = vmatpush1.msra.mxu0 0.0
        %8926 = vmatprep.subr.mxu0 0.0
        %8927 = vmatpush1.msra.mxu0 0.0
        %8928 = vmatprep.subr.mxu0 0.0
        %8929 = vmatpush1.msra.mxu0 0.0
        %8930 = vmatprep.subr.mxu0 0.0
        %8931 = vmatpush1.msra.mxu0 0.0
        %8932 = vmatprep.subr.mxu0 0.0
        %8933 = vmatpush1.msra.mxu0 0.0
        %8934 = vmatprep.subr.mxu0 0.0
        %8935 = vmatpush1.msra.mxu0 0.0
        %8936 = vmatprep.subr.mxu0 0.0
        %8937 = vmatpush1.msra.mxu0 0.0
        %8938 = vmatprep.subr.mxu0 0.0
        %8939 = vmatpush1.msra.mxu0 0.0
        %8940 = vmatprep.subr.mxu0 0.0
        %8941 = vmatpush1.msra.mxu0 0.0
        %8942 = vmatprep.subr.mxu0 0.0
        %8943 = vmatpush1.msra.mxu0 0.0
        %8944 = vmatprep.mubr.f32.mxu0 0.0
        %v8945 = vand.u32 %v8616, 4294901760
        %v8946 = vsub.f32 %v8616, %v8945
        %v8947 = vand.u32 %v8946, 4294901760
        %8948 = vmatmul.mubr.f32.gmra.mrb[0].mxu0 %v8947
        %v8949 = vpop.f32.mrb[0].mxu0
        %v8950 = vadd.f32 %v8868, %v8949
        %v8951 = vpop.f32.mrb[0].mxu0
        %8952 = vmatprep.mubr.f32.mxu0 0.0
        %v8953 = vand.u32 %v8619, 4294901760
        %v8954 = vsub.f32 %v8619, %v8953
        %v8955 = vand.u32 %v8954, 4294901760
        %8956 = vmatmul.mubr.f32.gmra.mrb[0].mxu0 %v8955
        %v8957 = vpop.f32.mrb[0].mxu0
        %v8958 = vadd.f32 %v8875, %v8957
        %v8959 = vpop.f32.mrb[0].mxu0
        %8960 = vdwg.mxu0
        %8961 = vmatprep.subr.mxu0 0.0
        %v8962 = vand.u32 %v8610, 4294901760
        %v8963 = vsub.f32 %v8610, %v8962
        %v8964 = vand.u32 %v8963, 4294901760
        %8965 = vmatpush1.msra.mxu0 %v8964
        %8966 = vmatprep.subr.mxu0 0.0
        %v8967 = vand.u32 %v8612, 4294901760
        %v8968 = vsub.f32 %v8612, %v8967
        %v8969 = vand.u32 %v8968, 4294901760
        %8970 = vmatpush1.msra.mxu0 %v8969
        %8971 = vmatprep.subr.mxu0 0.0
        %8972 = vmatpush1.msra.mxu0 0.0
        %8973 = vmatprep.subr.mxu0 0.0
        %8974 = vmatpush1.msra.mxu0 0.0
        %8975 = vmatprep.subr.mxu0 0.0
        %8976 = vmatpush1.msra.mxu0 0.0
        %8977 = vmatprep.subr.mxu0 0.0
        %8978 = vmatpush1.msra.mxu0 0.0
        %8979 = vmatprep.subr.mxu0 0.0
        %8980 = vmatpush1.msra.mxu0 0.0
        %8981 = vmatprep.subr.mxu0 0.0
        %8982 = vmatpush1.msra.mxu0 0.0
        %8983 = vmatprep.subr.mxu0 0.0
        %8984 = vmatpush1.msra.mxu0 0.0
        %8985 = vmatprep.subr.mxu0 0.0
        %8986 = vmatpush1.msra.mxu0 0.0
        %8987 = vmatprep.subr.mxu0 0.0
        %8988 = vmatpush1.msra.mxu0 0.0
        %8989 = vmatprep.subr.mxu0 0.0
        %8990 = vmatpush1.msra.mxu0 0.0
        %8991 = vmatprep.subr.mxu0 0.0
        %8992 = vmatpush1.msra.mxu0 0.0
        %8993 = vmatprep.subr.mxu0 0.0
        %8994 = vmatpush1.msra.mxu0 0.0
        %8995 = vmatprep.subr.mxu0 0.0
        %8996 = vmatpush1.msra.mxu0 0.0
        %8997 = vmatprep.subr.mxu0 0.0
        %8998 = vmatpush1.msra.mxu0 0.0
        %8999 = vmatprep.subr.mxu0 0.0
        %9000 = vmatpush1.msra.mxu0 0.0
        %9001 = vmatprep.subr.mxu0 0.0
        %9002 = vmatpush1.msra.mxu0 0.0
        %9003 = vmatprep.subr.mxu0 0.0
        %9004 = vmatpush1.msra.mxu0 0.0
        %9005 = vmatprep.subr.mxu0 0.0
        %9006 = vmatpush1.msra.mxu0 0.0
        %9007 = vmatprep.subr.mxu0 0.0
        %9008 = vmatpush1.msra.mxu0 0.0
        %9009 = vmatprep.subr.mxu0 0.0
        %9010 = vmatpush1.msra.mxu0 0.0
        %9011 = vmatprep.subr.mxu0 0.0
        %9012 = vmatpush1.msra.mxu0 0.0
        %9013 = vmatprep.subr.mxu0 0.0
        %9014 = vmatpush1.msra.mxu0 0.0
        %9015 = vmatprep.subr.mxu0 0.0
        %9016 = vmatpush1.msra.mxu0 0.0
        %9017 = vmatprep.subr.mxu0 0.0
        %9018 = vmatpush1.msra.mxu0 0.0
        %9019 = vmatprep.subr.mxu0 0.0
        %9020 = vmatpush1.msra.mxu0 0.0
        %9021 = vmatprep.subr.mxu0 0.0
        %9022 = vmatpush1.msra.mxu0 0.0
        %9023 = vmatprep.subr.mxu0 0.0
        %9024 = vmatpush1.msra.mxu0 0.0
        %9025 = vmatprep.subr.mxu0 0.0
        %9026 = vmatpush1.msra.mxu0 0.0
        %9027 = vmatprep.subr.mxu0 0.0
        %9028 = vmatpush1.msra.mxu0 0.0
        %9029 = vmatprep.subr.mxu0 0.0
        %9030 = vmatpush1.msra.mxu0 0.0
        %9031 = vmatprep.mubr.f32.mxu0 0.0
        %v9032 = vand.u32 %v8616, 4294901760
        %9033 = vmatmul.mubr.f32.gmra.mrb[0].mxu0 %v9032
        %v9034 = vpop.f32.mrb[0].mxu0
        %v9035 = vadd.f32 %v8950, %v9034
        %v9036 = vpop.f32.mrb[0].mxu0
        %9037 = vmatprep.mubr.f32.mxu0 0.0
        %v9038 = vand.u32 %v8619, 4294901760
        %9039 = vmatmul.mubr.f32.gmra.mrb[0].mxu0 %v9038
        %v9040 = vpop.f32.mrb[0].mxu0
        %v9041 = vadd.f32 %v8958, %v9040
        %v9042 = vpop.f32.mrb[0].mxu0
        %9043 = vdwg.mxu0
        %9044 = vmatprep.subr.mxu0 0.0
        %v9045 = vand.u32 %v8610, 4294901760
        %9046 = vmatpush1.msra.mxu0 %v9045
        %9047 = vmatprep.subr.mxu0 0.0
        %v9048 = vand.u32 %v8612, 4294901760
        %9049 = vmatpush1.msra.mxu0 %v9048
        %9050 = vmatprep.subr.mxu0 0.0
        %9051 = vmatpush1.msra.mxu0 0.0
        %9052 = vmatprep.subr.mxu0 0.0
        %9053 = vmatpush1.msra.mxu0 0.0
        %9054 = vmatprep.subr.mxu0 0.0
        %9055 = vmatpush1.msra.mxu0 0.0
        %9056 = vmatprep.subr.mxu0 0.0
        %9057 = vmatpush1.msra.mxu0 0.0
        %9058 = vmatprep.subr.mxu0 0.0
        %9059 = vmatpush1.msra.mxu0 0.0
        %9060 = vmatprep.subr.mxu0 0.0
        %9061 = vmatpush1.msra.mxu0 0.0
        %9062 = vmatprep.subr.mxu0 0.0
        %9063 = vmatpush1.msra.mxu0 0.0
        %9064 = vmatprep.subr.mxu0 0.0
        %9065 = vmatpush1.msra.mxu0 0.0
        %9066 = vmatprep.subr.mxu0 0.0
        %9067 = vmatpush1.msra.mxu0 0.0
        %9068 = vmatprep.subr.mxu0 0.0
        %9069 = vmatpush1.msra.mxu0 0.0
        %9070 = vmatprep.subr.mxu0 0.0
        %9071 = vmatpush1.msra.mxu0 0.0
        %9072 = vmatprep.subr.mxu0 0.0
        %9073 = vmatpush1.msra.mxu0 0.0
        %9074 = vmatprep.subr.mxu0 0.0
        %9075 = vmatpush1.msra.mxu0 0.0
        %9076 = vmatprep.subr.mxu0 0.0
        %9077 = vmatpush1.msra.mxu0 0.0
        %9078 = vmatprep.subr.mxu0 0.0
        %9079 = vmatpush1.msra.mxu0 0.0
        %9080 = vmatprep.subr.mxu0 0.0
        %9081 = vmatpush1.msra.mxu0 0.0
        %9082 = vmatprep.subr.mxu0 0.0
        %9083 = vmatpush1.msra.mxu0 0.0
        %9084 = vmatprep.subr.mxu0 0.0
        %9085 = vmatpush1.msra.mxu0 0.0
        %9086 = vmatprep.subr.mxu0 0.0
        %9087 = vmatpush1.msra.mxu0 0.0
        %9088 = vmatprep.subr.mxu0 0.0
        %9089 = vmatpush1.msra.mxu0 0.0
        %9090 = vmatprep.subr.mxu0 0.0
        %9091 = vmatpush1.msra.mxu0 0.0
        %9092 = vmatprep.subr.mxu0 0.0
        %9093 = vmatpush1.msra.mxu0 0.0
        %9094 = vmatprep.subr.mxu0 0.0
        %9095 = vmatpush1.msra.mxu0 0.0
        %9096 = vmatprep.subr.mxu0 0.0
        %9097 = vmatpush1.msra.mxu0 0.0
        %9098 = vmatprep.subr.mxu0 0.0
        %9099 = vmatpush1.msra.mxu0 0.0
        %9100 = vmatprep.subr.mxu0 0.0
        %9101 = vmatpush1.msra.mxu0 0.0
        %9102 = vmatprep.subr.mxu0 0.0
        %9103 = vmatpush1.msra.mxu0 0.0
        %9104 = vmatprep.subr.mxu0 0.0
        %9105 = vmatpush1.msra.mxu0 0.0
        %9106 = vmatprep.subr.mxu0 0.0
        %9107 = vmatpush1.msra.mxu0 0.0
        %9108 = vmatprep.subr.mxu0 0.0
        %9109 = vmatpush1.msra.mxu0 0.0
        %9110 = vmatprep.mubr.f32.mxu0 0.0
        %v9111 = vand.u32 %v8616, 4294901760
        %9112 = vmatmul.mubr.f32.gmra.mrb[0].mxu0 %v9111
        %v9113 = vpop.f32.mrb[0].mxu0
        %v9114 = vadd.f32 %v9035, %v9113
        %v9115 = vpop.f32.mrb[0].mxu0
        %9116 = vmatprep.mubr.f32.mxu0 0.0
        %v9117 = vand.u32 %v8619, 4294901760
        %9118 = vmatmul.mubr.f32.gmra.mrb[0].mxu0 %v9117
        %v9119 = vpop.f32.mrb[0].mxu0
        %v9120 = vadd.f32 %v9041, %v9119
        %v9121 = vpop.f32.mrb[0].mxu0
        %9122 = vdwg.mxu0
        %v9123 = vadd.f32 %v8070, %v9114
        %v9124 = vadd.f32 %v8076, %v9120
        %v9125 = vlaneseq
        %v9126 = vshrl.u32 %v9125, 7
        %v9127 = vsub.s32 3, %v9126
        %v9128 = vrot.slane %v6007, %v9127
        %9130 = vrot.lane.b32.xlu0 %v9128, 96
        %v9131 = vpop.permute.xlu0 %9130
        %v9133 = vmul.f32 %v6005, %v9131
        %v9134 = vmul.f32 %v6006, %v9131
        %9137 = vrot.lane.b32.xlu0 %v9133, 32
        %v9138 = vpop.permute.xlu0 %9137
        %9139 = vrot.lane.b32.xlu0 %v9134, 32
        %v9140 = vpop.permute.xlu0 %9139
        %v9143 = vsel %vm1106, %v9138, 0.0
        %9144 = vadd.xlane.f32.xlu0 %v9143
        %v9145 = vpop.xlane.xlu0 %9144
        %v9146 = vsel %vm1106, %v9140, 0.0
        %9147 = vadd.xlane.f32.xlu0 %v9146
        %v9148 = vpop.xlane.xlu0 %9147
        %v9149 = vrot.slane %v6008, 3
        %9150 = vrot.lane.b32.xlu0 %v6005, 32
        %v9151 = vpop.permute.xlu0 %9150
        %9152 = vrot.lane.b32.xlu0 %v6006, 32
        %v9153 = vpop.permute.xlu0 %9152
        %v9154 = vsel %vm1106, %v9149, 0
        %v9156 = vsel %vm1106, %v9151, 0
        %v9158 = vsel %vm1106, %v9153, 0
        %9160 = vmatprep.subr.mxu0 0.0
        %v9161 = vand.u32 %v9156, 4294901760
        %9162 = vmatpush1.xpose.msra.mxu0 %v9161
        %9163 = vmatprep.subr.mxu0 0.0
        %v9164 = vand.u32 %v9158, 4294901760
        %9165 = vmatpush1.xpose.msra.mxu0 %v9164
        %9166 = vmatprep.subr.mxu0 0.0
        %9167 = vmatpush1.xpose.msra.mxu0 0.0
        %9168 = vmatprep.subr.mxu0 0.0
        %9169 = vmatpush1.xpose.msra.mxu0 0.0
        %9170 = vmatprep.subr.mxu0 0.0
        %9171 = vmatpush1.xpose.msra.mxu0 0.0
        %9172 = vmatprep.subr.mxu0 0.0
        %9173 = vmatpush1.xpose.msra.mxu0 0.0
        %9174 = vmatprep.subr.mxu0 0.0
        %9175 = vmatpush1.xpose.msra.mxu0 0.0
        %9176 = vmatprep.subr.mxu0 0.0
        %9177 = vmatpush1.xpose.msra.mxu0 0.0
        %9178 = vmatprep.subr.mxu0 0.0
        %9179 = vmatpush1.xpose.msra.mxu0 0.0
        %9180 = vmatprep.subr.mxu0 0.0
        %9181 = vmatpush1.xpose.msra.mxu0 0.0
        %9182 = vmatprep.subr.mxu0 0.0
        %9183 = vmatpush1.xpose.msra.mxu0 0.0
        %9184 = vmatprep.subr.mxu0 0.0
        %9185 = vmatpush1.xpose.msra.mxu0 0.0
        %9186 = vmatprep.subr.mxu0 0.0
        %9187 = vmatpush1.xpose.msra.mxu0 0.0
        %9188 = vmatprep.subr.mxu0 0.0
        %9189 = vmatpush1.xpose.msra.mxu0 0.0
        %9190 = vmatprep.subr.mxu0 0.0
        %9191 = vmatpush1.xpose.msra.mxu0 0.0
        %9192 = vmatprep.subr.mxu0 0.0
        %9193 = vmatpush1.xpose.msra.mxu0 0.0
        %9194 = vmatprep.subr.mxu0 0.0
        %9195 = vmatpush1.xpose.msra.mxu0 0.0
        %9196 = vmatprep.subr.mxu0 0.0
        %9197 = vmatpush1.xpose.msra.mxu0 0.0
        %9198 = vmatprep.subr.mxu0 0.0
        %9199 = vmatpush1.xpose.msra.mxu0 0.0
        %9200 = vmatprep.subr.mxu0 0.0
        %9201 = vmatpush1.xpose.msra.mxu0 0.0
        %9202 = vmatprep.subr.mxu0 0.0
        %9203 = vmatpush1.xpose.msra.mxu0 0.0
        %9204 = vmatprep.subr.mxu0 0.0
        %9205 = vmatpush1.xpose.msra.mxu0 0.0
        %9206 = vmatprep.subr.mxu0 0.0
        %9207 = vmatpush1.xpose.msra.mxu0 0.0
        %9208 = vmatprep.subr.mxu0 0.0
        %9209 = vmatpush1.xpose.msra.mxu0 0.0
        %9210 = vmatprep.subr.mxu0 0.0
        %9211 = vmatpush1.xpose.msra.mxu0 0.0
        %9212 = vmatprep.subr.mxu0 0.0
        %9213 = vmatpush1.xpose.msra.mxu0 0.0
        %9214 = vmatprep.subr.mxu0 0.0
        %9215 = vmatpush1.xpose.msra.mxu0 0.0
        %9216 = vmatprep.subr.mxu0 0.0
        %9217 = vmatpush1.xpose.msra.mxu0 0.0
        %9218 = vmatprep.subr.mxu0 0.0
        %9219 = vmatpush1.xpose.msra.mxu0 0.0
        %9220 = vmatprep.subr.mxu0 0.0
        %9221 = vmatpush1.xpose.msra.mxu0 0.0
        %9222 = vmatprep.subr.mxu0 0.0
        %9223 = vmatpush1.xpose.msra.mxu0 0.0
        %9224 = vmatprep.subr.mxu0 0.0
        %9225 = vmatpush1.xpose.msra.mxu0 0.0
        %9226 = vmatprep.mubr.f32.mxu0 0.0
        %v9227 = vand.u32 %v9154, 4294901760
        %v9228 = vsub.f32 %v9154, %v9227
        %v9229 = vand.u32 %v9228, 4294901760
        %v9230 = vsub.f32 %v9228, %v9229
        %v9231 = vand.u32 %v9230, 4294901760
        %9232 = vmatmul.mubr.f32.gmra.mrb[0].mxu0 %v9231
        %v9233 = vpop.f32.mrb[0].mxu0
        %v9234 = vadd.f32 0.0, %v9233
        %v9235 = vpop.f32.mrb[0].mxu0
        %9236 = vdwg.mxu0
        %9237 = vmatprep.subr.mxu0 0.0
        %v9238 = vand.u32 %v9156, 4294901760
        %v9239 = vsub.f32 %v9156, %v9238
        %v9240 = vand.u32 %v9239, 4294901760
        %v9241 = vsub.f32 %v9239, %v9240
        %v9242 = vand.u32 %v9241, 4294901760
        %9243 = vmatpush1.xpose.msra.mxu0 %v9242
        %9244 = vmatprep.subr.mxu0 0.0
        %v9245 = vand.u32 %v9158, 4294901760
        %v9246 = vsub.f32 %v9158, %v9245
        %v9247 = vand.u32 %v9246, 4294901760
        %v9248 = vsub.f32 %v9246, %v9247
        %v9249 = vand.u32 %v9248, 4294901760
        %9250 = vmatpush1.xpose.msra.mxu0 %v9249
        %9251 = vmatprep.subr.mxu0 0.0
        %9252 = vmatpush1.xpose.msra.mxu0 0.0
        %9253 = vmatprep.subr.mxu0 0.0
        %9254 = vmatpush1.xpose.msra.mxu0 0.0
        %9255 = vmatprep.subr.mxu0 0.0
        %9256 = vmatpush1.xpose.msra.mxu0 0.0
        %9257 = vmatprep.subr.mxu0 0.0
        %9258 = vmatpush1.xpose.msra.mxu0 0.0
        %9259 = vmatprep.subr.mxu0 0.0
        %9260 = vmatpush1.xpose.msra.mxu0 0.0
        %9261 = vmatprep.subr.mxu0 0.0
        %9262 = vmatpush1.xpose.msra.mxu0 0.0
        %9263 = vmatprep.subr.mxu0 0.0
        %9264 = vmatpush1.xpose.msra.mxu0 0.0
        %9265 = vmatprep.subr.mxu0 0.0
        %9266 = vmatpush1.xpose.msra.mxu0 0.0
        %9267 = vmatprep.subr.mxu0 0.0
        %9268 = vmatpush1.xpose.msra.mxu0 0.0
        %9269 = vmatprep.subr.mxu0 0.0
        %9270 = vmatpush1.xpose.msra.mxu0 0.0
        %9271 = vmatprep.subr.mxu0 0.0
        %9272 = vmatpush1.xpose.msra.mxu0 0.0
        %9273 = vmatprep.subr.mxu0 0.0
        %9274 = vmatpush1.xpose.msra.mxu0 0.0
        %9275 = vmatprep.subr.mxu0 0.0
        %9276 = vmatpush1.xpose.msra.mxu0 0.0
        %9277 = vmatprep.subr.mxu0 0.0
        %9278 = vmatpush1.xpose.msra.mxu0 0.0
        %9279 = vmatprep.subr.mxu0 0.0
        %9280 = vmatpush1.xpose.msra.mxu0 0.0
        %9281 = vmatprep.subr.mxu0 0.0
        %9282 = vmatpush1.xpose.msra.mxu0 0.0
        %9283 = vmatprep.subr.mxu0 0.0
        %9284 = vmatpush1.xpose.msra.mxu0 0.0
        %9285 = vmatprep.subr.mxu0 0.0
        %9286 = vmatpush1.xpose.msra.mxu0 0.0
        %9287 = vmatprep.subr.mxu0 0.0
        %9288 = vmatpush1.xpose.msra.mxu0 0.0
        %9289 = vmatprep.subr.mxu0 0.0
        %9290 = vmatpush1.xpose.msra.mxu0 0.0
        %9291 = vmatprep.subr.mxu0 0.0
        %9292 = vmatpush1.xpose.msra.mxu0 0.0
        %9293 = vmatprep.subr.mxu0 0.0
        %9294 = vmatpush1.xpose.msra.mxu0 0.0
        %9295 = vmatprep.subr.mxu0 0.0
        %9296 = vmatpush1.xpose.msra.mxu0 0.0
        %9297 = vmatprep.subr.mxu0 0.0
        %9298 = vmatpush1.xpose.msra.mxu0 0.0
        %9299 = vmatprep.subr.mxu0 0.0
        %9300 = vmatpush1.xpose.msra.mxu0 0.0
        %9301 = vmatprep.subr.mxu0 0.0
        %9302 = vmatpush1.xpose.msra.mxu0 0.0
        %9303 = vmatprep.subr.mxu0 0.0
        %9304 = vmatpush1.xpose.msra.mxu0 0.0
        %9305 = vmatprep.subr.mxu0 0.0
        %9306 = vmatpush1.xpose.msra.mxu0 0.0
        %9307 = vmatprep.subr.mxu0 0.0
        %9308 = vmatpush1.xpose.msra.mxu0 0.0
        %9309 = vmatprep.subr.mxu0 0.0
        %9310 = vmatpush1.xpose.msra.mxu0 0.0
        %9311 = vmatprep.mubr.f32.mxu0 0.0
        %v9312 = vand.u32 %v9154, 4294901760
        %9313 = vmatmul.mubr.f32.gmra.mrb[0].mxu0 %v9312
        %v9314 = vpop.f32.mrb[0].mxu0
        %v9315 = vadd.f32 %v9234, %v9314
        %v9316 = vpop.f32.mrb[0].mxu0
        %9317 = vdwg.mxu0
        %9318 = vmatprep.subr.mxu0 0.0
        %v9319 = vand.u32 %v9156, 4294901760
        %v9320 = vsub.f32 %v9156, %v9319
        %9321 = vmatpush1.xpose.msra.mxu0 %v9320
        %9322 = vmatprep.subr.mxu0 0.0
        %v9323 = vand.u32 %v9158, 4294901760
        %v9324 = vsub.f32 %v9158, %v9323
        %9325 = vmatpush1.xpose.msra.mxu0 %v9324
        %9326 = vmatprep.subr.mxu0 0.0
        %9327 = vmatpush1.xpose.msra.mxu0 0.0
        %9328 = vmatprep.subr.mxu0 0.0
        %9329 = vmatpush1.xpose.msra.mxu0 0.0
        %9330 = vmatprep.subr.mxu0 0.0
        %9331 = vmatpush1.xpose.msra.mxu0 0.0
        %9332 = vmatprep.subr.mxu0 0.0
        %9333 = vmatpush1.xpose.msra.mxu0 0.0
        %9334 = vmatprep.subr.mxu0 0.0
        %9335 = vmatpush1.xpose.msra.mxu0 0.0
        %9336 = vmatprep.subr.mxu0 0.0
        %9337 = vmatpush1.xpose.msra.mxu0 0.0
        %9338 = vmatprep.subr.mxu0 0.0
        %9339 = vmatpush1.xpose.msra.mxu0 0.0
        %9340 = vmatprep.subr.mxu0 0.0
        %9341 = vmatpush1.xpose.msra.mxu0 0.0
        %9342 = vmatprep.subr.mxu0 0.0
        %9343 = vmatpush1.xpose.msra.mxu0 0.0
        %9344 = vmatprep.subr.mxu0 0.0
        %9345 = vmatpush1.xpose.msra.mxu0 0.0
        %9346 = vmatprep.subr.mxu0 0.0
        %9347 = vmatpush1.xpose.msra.mxu0 0.0
        %9348 = vmatprep.subr.mxu0 0.0
        %9349 = vmatpush1.xpose.msra.mxu0 0.0
        %9350 = vmatprep.subr.mxu0 0.0
        %9351 = vmatpush1.xpose.msra.mxu0 0.0
        %9352 = vmatprep.subr.mxu0 0.0
        %9353 = vmatpush1.xpose.msra.mxu0 0.0
        %9354 = vmatprep.subr.mxu0 0.0
        %9355 = vmatpush1.xpose.msra.mxu0 0.0
        %9356 = vmatprep.subr.mxu0 0.0
        %9357 = vmatpush1.xpose.msra.mxu0 0.0
        %9358 = vmatprep.subr.mxu0 0.0
        %9359 = vmatpush1.xpose.msra.mxu0 0.0
        %9360 = vmatprep.subr.mxu0 0.0
        %9361 = vmatpush1.xpose.msra.mxu0 0.0
        %9362 = vmatprep.subr.mxu0 0.0
        %9363 = vmatpush1.xpose.msra.mxu0 0.0
        %9364 = vmatprep.subr.mxu0 0.0
        %9365 = vmatpush1.xpose.msra.mxu0 0.0
        %9366 = vmatprep.subr.mxu0 0.0
        %9367 = vmatpush1.xpose.msra.mxu0 0.0
        %9368 = vmatprep.subr.mxu0 0.0
        %9369 = vmatpush1.xpose.msra.mxu0 0.0
        %9370 = vmatprep.subr.mxu0 0.0
        %9371 = vmatpush1.xpose.msra.mxu0 0.0
        %9372 = vmatprep.subr.mxu0 0.0
        %9373 = vmatpush1.xpose.msra.mxu0 0.0
        %9374 = vmatprep.subr.mxu0 0.0
        %9375 = vmatpush1.xpose.msra.mxu0 0.0
        %9376 = vmatprep.subr.mxu0 0.0
        %9377 = vmatpush1.xpose.msra.mxu0 0.0
        %9378 = vmatprep.subr.mxu0 0.0
        %9379 = vmatpush1.xpose.msra.mxu0 0.0
        %9380 = vmatprep.subr.mxu0 0.0
        %9381 = vmatpush1.xpose.msra.mxu0 0.0
        %9382 = vmatprep.subr.mxu0 0.0
        %9383 = vmatpush1.xpose.msra.mxu0 0.0
        %9384 = vmatprep.subr.mxu0 0.0
        %9385 = vmatpush1.xpose.msra.mxu0 0.0
        %9386 = vmatprep.mubr.f32.mxu0 0.0
        %v9387 = vand.u32 %v9154, 4294901760
        %v9388 = vsub.f32 %v9154, %v9387
        %9389 = vmatmul.mubr.f32.gmra.mrb[0].mxu0 %v9388
        %v9390 = vpop.f32.mrb[0].mxu0
        %v9391 = vadd.f32 %v9315, %v9390
        %v9392 = vpop.f32.mrb[0].mxu0
        %9393 = vdwg.mxu0
        %9394 = vmatprep.subr.mxu0 0.0
        %v9395 = vand.u32 %v9156, 4294901760
        %9396 = vmatpush1.xpose.msra.mxu0 %v9395
        %9397 = vmatprep.subr.mxu0 0.0
        %v9398 = vand.u32 %v9158, 4294901760
        %9399 = vmatpush1.xpose.msra.mxu0 %v9398
        %9400 = vmatprep.subr.mxu0 0.0
        %9401 = vmatpush1.xpose.msra.mxu0 0.0
        %9402 = vmatprep.subr.mxu0 0.0
        %9403 = vmatpush1.xpose.msra.mxu0 0.0
        %9404 = vmatprep.subr.mxu0 0.0
        %9405 = vmatpush1.xpose.msra.mxu0 0.0
        %9406 = vmatprep.subr.mxu0 0.0
        %9407 = vmatpush1.xpose.msra.mxu0 0.0
        %9408 = vmatprep.subr.mxu0 0.0
        %9409 = vmatpush1.xpose.msra.mxu0 0.0
        %9410 = vmatprep.subr.mxu0 0.0
        %9411 = vmatpush1.xpose.msra.mxu0 0.0
        %9412 = vmatprep.subr.mxu0 0.0
        %9413 = vmatpush1.xpose.msra.mxu0 0.0
        %9414 = vmatprep.subr.mxu0 0.0
        %9415 = vmatpush1.xpose.msra.mxu0 0.0
        %9416 = vmatprep.subr.mxu0 0.0
        %9417 = vmatpush1.xpose.msra.mxu0 0.0
        %9418 = vmatprep.subr.mxu0 0.0
        %9419 = vmatpush1.xpose.msra.mxu0 0.0
        %9420 = vmatprep.subr.mxu0 0.0
        %9421 = vmatpush1.xpose.msra.mxu0 0.0
        %9422 = vmatprep.subr.mxu0 0.0
        %9423 = vmatpush1.xpose.msra.mxu0 0.0
        %9424 = vmatprep.subr.mxu0 0.0
        %9425 = vmatpush1.xpose.msra.mxu0 0.0
        %9426 = vmatprep.subr.mxu0 0.0
        %9427 = vmatpush1.xpose.msra.mxu0 0.0
        %9428 = vmatprep.subr.mxu0 0.0
        %9429 = vmatpush1.xpose.msra.mxu0 0.0
        %9430 = vmatprep.subr.mxu0 0.0
        %9431 = vmatpush1.xpose.msra.mxu0 0.0
        %9432 = vmatprep.subr.mxu0 0.0
        %9433 = vmatpush1.xpose.msra.mxu0 0.0
        %9434 = vmatprep.subr.mxu0 0.0
        %9435 = vmatpush1.xpose.msra.mxu0 0.0
        %9436 = vmatprep.subr.mxu0 0.0
        %9437 = vmatpush1.xpose.msra.mxu0 0.0
        %9438 = vmatprep.subr.mxu0 0.0
        %9439 = vmatpush1.xpose.msra.mxu0 0.0
        %9440 = vmatprep.subr.mxu0 0.0
        %9441 = vmatpush1.xpose.msra.mxu0 0.0
        %9442 = vmatprep.subr.mxu0 0.0
        %9443 = vmatpush1.xpose.msra.mxu0 0.0
        %9444 = vmatprep.subr.mxu0 0.0
        %9445 = vmatpush1.xpose.msra.mxu0 0.0
        %9446 = vmatprep.subr.mxu0 0.0
        %9447 = vmatpush1.xpose.msra.mxu0 0.0
        %9448 = vmatprep.subr.mxu0 0.0
        %9449 = vmatpush1.xpose.msra.mxu0 0.0
        %9450 = vmatprep.subr.mxu0 0.0
        %9451 = vmatpush1.xpose.msra.mxu0 0.0
        %9452 = vmatprep.subr.mxu0 0.0
        %9453 = vmatpush1.xpose.msra.mxu0 0.0
        %9454 = vmatprep.subr.mxu0 0.0
        %9455 = vmatpush1.xpose.msra.mxu0 0.0
        %9456 = vmatprep.subr.mxu0 0.0
        %9457 = vmatpush1.xpose.msra.mxu0 0.0
        %9458 = vmatprep.subr.mxu0 0.0
        %9459 = vmatpush1.xpose.msra.mxu0 0.0
        %9460 = vmatprep.mubr.f32.mxu0 0.0
        %v9461 = vand.u32 %v9154, 4294901760
        %v9462 = vsub.f32 %v9154, %v9461
        %v9463 = vand.u32 %v9462, 4294901760
        %9464 = vmatmul.mubr.f32.gmra.mrb[0].mxu0 %v9463
        %v9465 = vpop.f32.mrb[0].mxu0
        %v9466 = vadd.f32 %v9391, %v9465
        %v9467 = vpop.f32.mrb[0].mxu0
        %9468 = vdwg.mxu0
        %9469 = vmatprep.subr.mxu0 0.0
        %v9470 = vand.u32 %v9156, 4294901760
        %v9471 = vsub.f32 %v9156, %v9470
        %v9472 = vand.u32 %v9471, 4294901760
        %9473 = vmatpush1.xpose.msra.mxu0 %v9472
        %9474 = vmatprep.subr.mxu0 0.0
        %v9475 = vand.u32 %v9158, 4294901760
        %v9476 = vsub.f32 %v9158, %v9475
        %v9477 = vand.u32 %v9476, 4294901760
        %9478 = vmatpush1.xpose.msra.mxu0 %v9477
        %9479 = vmatprep.subr.mxu0 0.0
        %9480 = vmatpush1.xpose.msra.mxu0 0.0
        %9481 = vmatprep.subr.mxu0 0.0
        %9482 = vmatpush1.xpose.msra.mxu0 0.0
        %9483 = vmatprep.subr.mxu0 0.0
        %9484 = vmatpush1.xpose.msra.mxu0 0.0
        %9485 = vmatprep.subr.mxu0 0.0
        %9486 = vmatpush1.xpose.msra.mxu0 0.0
        %9487 = vmatprep.subr.mxu0 0.0
        %9488 = vmatpush1.xpose.msra.mxu0 0.0
        %9489 = vmatprep.subr.mxu0 0.0
        %9490 = vmatpush1.xpose.msra.mxu0 0.0
        %9491 = vmatprep.subr.mxu0 0.0
        %9492 = vmatpush1.xpose.msra.mxu0 0.0
        %9493 = vmatprep.subr.mxu0 0.0
        %9494 = vmatpush1.xpose.msra.mxu0 0.0
        %9495 = vmatprep.subr.mxu0 0.0
        %9496 = vmatpush1.xpose.msra.mxu0 0.0
        %9497 = vmatprep.subr.mxu0 0.0
        %9498 = vmatpush1.xpose.msra.mxu0 0.0
        %9499 = vmatprep.subr.mxu0 0.0
        %9500 = vmatpush1.xpose.msra.mxu0 0.0
        %9501 = vmatprep.subr.mxu0 0.0
        %9502 = vmatpush1.xpose.msra.mxu0 0.0
        %9503 = vmatprep.subr.mxu0 0.0
        %9504 = vmatpush1.xpose.msra.mxu0 0.0
        %9505 = vmatprep.subr.mxu0 0.0
        %9506 = vmatpush1.xpose.msra.mxu0 0.0
        %9507 = vmatprep.subr.mxu0 0.0
        %9508 = vmatpush1.xpose.msra.mxu0 0.0
        %9509 = vmatprep.subr.mxu0 0.0
        %9510 = vmatpush1.xpose.msra.mxu0 0.0
        %9511 = vmatprep.subr.mxu0 0.0
        %9512 = vmatpush1.xpose.msra.mxu0 0.0
        %9513 = vmatprep.subr.mxu0 0.0
        %9514 = vmatpush1.xpose.msra.mxu0 0.0
        %9515 = vmatprep.subr.mxu0 0.0
        %9516 = vmatpush1.xpose.msra.mxu0 0.0
        %9517 = vmatprep.subr.mxu0 0.0
        %9518 = vmatpush1.xpose.msra.mxu0 0.0
        %9519 = vmatprep.subr.mxu0 0.0
        %9520 = vmatpush1.xpose.msra.mxu0 0.0
        %9521 = vmatprep.subr.mxu0 0.0
        %9522 = vmatpush1.xpose.msra.mxu0 0.0
        %9523 = vmatprep.subr.mxu0 0.0
        %9524 = vmatpush1.xpose.msra.mxu0 0.0
        %9525 = vmatprep.subr.mxu0 0.0
        %9526 = vmatpush1.xpose.msra.mxu0 0.0
        %9527 = vmatprep.subr.mxu0 0.0
        %9528 = vmatpush1.xpose.msra.mxu0 0.0
        %9529 = vmatprep.subr.mxu0 0.0
        %9530 = vmatpush1.xpose.msra.mxu0 0.0
        %9531 = vmatprep.subr.mxu0 0.0
        %9532 = vmatpush1.xpose.msra.mxu0 0.0
        %9533 = vmatprep.subr.mxu0 0.0
        %9534 = vmatpush1.xpose.msra.mxu0 0.0
        %9535 = vmatprep.subr.mxu0 0.0
        %9536 = vmatpush1.xpose.msra.mxu0 0.0
        %9537 = vmatprep.subr.mxu0 0.0
        %9538 = vmatpush1.xpose.msra.mxu0 0.0
        %9539 = vmatprep.mubr.f32.mxu0 0.0
        %v9540 = vand.u32 %v9154, 4294901760
        %9541 = vmatmul.mubr.f32.gmra.mrb[0].mxu0 %v9540
        %v9542 = vpop.f32.mrb[0].mxu0
        %v9543 = vadd.f32 %v9466, %v9542
        %v9544 = vpop.f32.mrb[0].mxu0
        %9545 = vdwg.mxu0
        %9546 = vmatprep.subr.mxu0 0.0
        %v9547 = vand.u32 %v9156, 4294901760
        %9548 = vmatpush1.xpose.msra.mxu0 %v9547
        %9549 = vmatprep.subr.mxu0 0.0
        %v9550 = vand.u32 %v9158, 4294901760
        %9551 = vmatpush1.xpose.msra.mxu0 %v9550
        %9552 = vmatprep.subr.mxu0 0.0
        %9553 = vmatpush1.xpose.msra.mxu0 0.0
        %9554 = vmatprep.subr.mxu0 0.0
        %9555 = vmatpush1.xpose.msra.mxu0 0.0
        %9556 = vmatprep.subr.mxu0 0.0
        %9557 = vmatpush1.xpose.msra.mxu0 0.0
        %9558 = vmatprep.subr.mxu0 0.0
        %9559 = vmatpush1.xpose.msra.mxu0 0.0
        %9560 = vmatprep.subr.mxu0 0.0
        %9561 = vmatpush1.xpose.msra.mxu0 0.0
        %9562 = vmatprep.subr.mxu0 0.0
        %9563 = vmatpush1.xpose.msra.mxu0 0.0
        %9564 = vmatprep.subr.mxu0 0.0
        %9565 = vmatpush1.xpose.msra.mxu0 0.0
        %9566 = vmatprep.subr.mxu0 0.0
        %9567 = vmatpush1.xpose.msra.mxu0 0.0
        %9568 = vmatprep.subr.mxu0 0.0
        %9569 = vmatpush1.xpose.msra.mxu0 0.0
        %9570 = vmatprep.subr.mxu0 0.0
        %9571 = vmatpush1.xpose.msra.mxu0 0.0
        %9572 = vmatprep.subr.mxu0 0.0
        %9573 = vmatpush1.xpose.msra.mxu0 0.0
        %9574 = vmatprep.subr.mxu0 0.0
        %9575 = vmatpush1.xpose.msra.mxu0 0.0
        %9576 = vmatprep.subr.mxu0 0.0
        %9577 = vmatpush1.xpose.msra.mxu0 0.0
        %9578 = vmatprep.subr.mxu0 0.0
        %9579 = vmatpush1.xpose.msra.mxu0 0.0
        %9580 = vmatprep.subr.mxu0 0.0
        %9581 = vmatpush1.xpose.msra.mxu0 0.0
        %9582 = vmatprep.subr.mxu0 0.0
        %9583 = vmatpush1.xpose.msra.mxu0 0.0
        %9584 = vmatprep.subr.mxu0 0.0
        %9585 = vmatpush1.xpose.msra.mxu0 0.0
        %9586 = vmatprep.subr.mxu0 0.0
        %9587 = vmatpush1.xpose.msra.mxu0 0.0
        %9588 = vmatprep.subr.mxu0 0.0
        %9589 = vmatpush1.xpose.msra.mxu0 0.0
        %9590 = vmatprep.subr.mxu0 0.0
        %9591 = vmatpush1.xpose.msra.mxu0 0.0
        %9592 = vmatprep.subr.mxu0 0.0
        %9593 = vmatpush1.xpose.msra.mxu0 0.0
        %9594 = vmatprep.subr.mxu0 0.0
        %9595 = vmatpush1.xpose.msra.mxu0 0.0
        %9596 = vmatprep.subr.mxu0 0.0
        %9597 = vmatpush1.xpose.msra.mxu0 0.0
        %9598 = vmatprep.subr.mxu0 0.0
        %9599 = vmatpush1.xpose.msra.mxu0 0.0
        %9600 = vmatprep.subr.mxu0 0.0
        %9601 = vmatpush1.xpose.msra.mxu0 0.0
        %9602 = vmatprep.subr.mxu0 0.0
        %9603 = vmatpush1.xpose.msra.mxu0 0.0
        %9604 = vmatprep.subr.mxu0 0.0
        %9605 = vmatpush1.xpose.msra.mxu0 0.0
        %9606 = vmatprep.subr.mxu0 0.0
        %9607 = vmatpush1.xpose.msra.mxu0 0.0
        %9608 = vmatprep.subr.mxu0 0.0
        %9609 = vmatpush1.xpose.msra.mxu0 0.0
        %9610 = vmatprep.subr.mxu0 0.0
        %9611 = vmatpush1.xpose.msra.mxu0 0.0
        %9612 = vmatprep.mubr.f32.mxu0 0.0
        %v9613 = vand.u32 %v9154, 4294901760
        %9614 = vmatmul.mubr.f32.gmra.mrb[0].mxu0 %v9613
        %v9615 = vpop.f32.mrb[0].mxu0
        %v9616 = vadd.f32 %v9543, %v9615
        %v9617 = vpop.f32.mrb[0].mxu0
        %9618 = vdwg.mxu0
        %v9619 = vlaneseq
        %v9620 = vshrl.u32 %v9619, 7
        %v9621 = vsub.s32 0, %v9620
        %v9622 = vrot.slane %v9616, %v9621
        %v9623 = vadd.f32 %v9145, %v9622
        %v9624 = vadd.f32 %v9148, %v9622
        %vm9625 = vcmp.gt.f32.partialorder %v9623, 0.0
        %vm9626 = vcmp.gt.f32.partialorder %v9624, 0.0
        %v9627 = vmul.f32 %v9623, 0.2
        %v9628 = vmul.f32 %v9624, 0.2
        %v9629 = vsel %vm9625, %v9623, %v9627
        %v9630 = vsel %vm9626, %v9624, %v9628
        %v9631 = vsel %vm1593, -1e+12, %v9629
        %v9632 = vsel %vm1594, -1e+12, %v9630
        %v9633 = vsel %vm587, %v9631, -inf
        %9634 = vmax.xlane.f32.xlu0 %v9633
        %v9635 = vpop.xlane.xlu0 %9634
        %v9636 = vsel %vm587, %v9632, -inf
        %9637 = vmax.xlane.f32.xlu0 %v9636
        %v9638 = vpop.xlane.xlu0 %9637
        %v9639 = vsub.f32 %v9631, %v9635
        %v9640 = vsub.f32 %v9632, %v9638
        %v9641 = vmul.f32 %v9639, 1.442695
        %v9642 = vpow.pop %v9641
        %v9643 = vmul.f32 %v9640, 1.442695
        %v9644 = vpow.pop %v9643
        %v9645 = vsel %vm587, %v9642, 0.0
        %9646 = vadd.xlane.f32.xlu0 %v9645
        %v9647 = vpop.xlane.xlu0 %9646
        %v9648 = vsel %vm587, %v9644, 0.0
        %9649 = vadd.xlane.f32.xlu0 %v9648
        %v9650 = vpop.xlane.xlu0 %9649
        %v9651 = vrcp.pop %v9647
        %v9652 = vmul.f32 %v9642, %v9651
        %v9653 = vrcp.pop %v9650
        %v9654 = vmul.f32 %v9644, %v9653
        %9655 = vrot.lane.b32.xlu0 %v5996, 32
        %v9656 = vpop.permute.xlu0 %9655
        %9657 = vrot.lane.b32.xlu0 %v6002, 32
        %v9658 = vpop.permute.xlu0 %9657
        %v9662 = vsel %vm587, %v9652, 0
        %v9665 = vsel %vm587, %v9654, 0
        %9667 = vmatprep.subr.mxu0 0.0
        %v9668 = vand.u32 %v9656, 4294901760
        %9669 = vmatpush1.msra.mxu0 %v9668
        %9670 = vmatprep.subr.mxu0 0.0
        %v9671 = vand.u32 %v9658, 4294901760
        %9672 = vmatpush1.msra.mxu0 %v9671
        %9673 = vmatprep.subr.mxu0 0.0
        %9674 = vmatpush1.msra.mxu0 0.0
        %9675 = vmatprep.subr.mxu0 0.0
        %9676 = vmatpush1.msra.mxu0 0.0
        %9677 = vmatprep.subr.mxu0 0.0
        %9678 = vmatpush1.msra.mxu0 0.0
        %9679 = vmatprep.subr.mxu0 0.0
        %9680 = vmatpush1.msra.mxu0 0.0
        %9681 = vmatprep.subr.mxu0 0.0
        %9682 = vmatpush1.msra.mxu0 0.0
        %9683 = vmatprep.subr.mxu0 0.0
        %9684 = vmatpush1.msra.mxu0 0.0
        %9685 = vmatprep.subr.mxu0 0.0
        %9686 = vmatpush1.msra.mxu0 0.0
        %9687 = vmatprep.subr.mxu0 0.0
        %9688 = vmatpush1.msra.mxu0 0.0
        %9689 = vmatprep.subr.mxu0 0.0
        %9690 = vmatpush1.msra.mxu0 0.0
        %9691 = vmatprep.subr.mxu0 0.0
        %9692 = vmatpush1.msra.mxu0 0.0
        %9693 = vmatprep.subr.mxu0 0.0
        %9694 = vmatpush1.msra.mxu0 0.0
        %9695 = vmatprep.subr.mxu0 0.0
        %9696 = vmatpush1.msra.mxu0 0.0
        %9697 = vmatprep.subr.mxu0 0.0
        %9698 = vmatpush1.msra.mxu0 0.0
        %9699 = vmatprep.subr.mxu0 0.0
        %9700 = vmatpush1.msra.mxu0 0.0
        %9701 = vmatprep.subr.mxu0 0.0
        %9702 = vmatpush1.msra.mxu0 0.0
        %9703 = vmatprep.subr.mxu0 0.0
        %9704 = vmatpush1.msra.mxu0 0.0
        %9705 = vmatprep.subr.mxu0 0.0
        %9706 = vmatpush1.msra.mxu0 0.0
        %9707 = vmatprep.subr.mxu0 0.0
        %9708 = vmatpush1.msra.mxu0 0.0
        %9709 = vmatprep.subr.mxu0 0.0
        %9710 = vmatpush1.msra.mxu0 0.0
        %9711 = vmatprep.subr.mxu0 0.0
        %9712 = vmatpush1.msra.mxu0 0.0
        %9713 = vmatprep.subr.mxu0 0.0
        %9714 = vmatpush1.msra.mxu0 0.0
        %9715 = vmatprep.subr.mxu0 0.0
        %9716 = vmatpush1.msra.mxu0 0.0
        %9717 = vmatprep.subr.mxu0 0.0
        %9718 = vmatpush1.msra.mxu0 0.0
        %9719 = vmatprep.subr.mxu0 0.0
        %9720 = vmatpush1.msra.mxu0 0.0
        %9721 = vmatprep.subr.mxu0 0.0
        %9722 = vmatpush1.msra.mxu0 0.0
        %9723 = vmatprep.subr.mxu0 0.0
        %9724 = vmatpush1.msra.mxu0 0.0
        %9725 = vmatprep.subr.mxu0 0.0
        %9726 = vmatpush1.msra.mxu0 0.0
        %9727 = vmatprep.subr.mxu0 0.0
        %9728 = vmatpush1.msra.mxu0 0.0
        %9729 = vmatprep.subr.mxu0 0.0
        %9730 = vmatpush1.msra.mxu0 0.0
        %9731 = vmatprep.subr.mxu0 0.0
        %9732 = vmatpush1.msra.mxu0 0.0
        %9733 = vmatprep.mubr.f32.mxu0 0.0
        %v9734 = vand.u32 %v9662, 4294901760
        %v9735 = vsub.f32 %v9662, %v9734
        %v9736 = vand.u32 %v9735, 4294901760
        %v9737 = vsub.f32 %v9735, %v9736
        %v9738 = vand.u32 %v9737, 4294901760
        %9739 = vmatmul.mubr.f32.gmra.mrb[0].mxu0 %v9738
        %v9740 = vpop.f32.mrb[0].mxu0
        %v9741 = vadd.f32 0.0, %v9740
        %v9742 = vpop.f32.mrb[0].mxu0
        %9743 = vmatprep.mubr.f32.mxu0 0.0
        %v9744 = vand.u32 %v9665, 4294901760
        %v9745 = vsub.f32 %v9665, %v9744
        %v9746 = vand.u32 %v9745, 4294901760
        %v9747 = vsub.f32 %v9745, %v9746
        %v9748 = vand.u32 %v9747, 4294901760
        %9749 = vmatmul.mubr.f32.gmra.mrb[0].mxu0 %v9748
        %v9750 = vpop.f32.mrb[0].mxu0
        %v9751 = vadd.f32 0.0, %v9750
        %v9752 = vpop.f32.mrb[0].mxu0
        %9753 = vdwg.mxu0
        %9754 = vmatprep.subr.mxu0 0.0
        %v9755 = vand.u32 %v9656, 4294901760
        %v9756 = vsub.f32 %v9656, %v9755
        %v9757 = vand.u32 %v9756, 4294901760
        %v9758 = vsub.f32 %v9756, %v9757
        %v9759 = vand.u32 %v9758, 4294901760
        %9760 = vmatpush1.msra.mxu0 %v9759
        %9761 = vmatprep.subr.mxu0 0.0
        %v9762 = vand.u32 %v9658, 4294901760
        %v9763 = vsub.f32 %v9658, %v9762
        %v9764 = vand.u32 %v9763, 4294901760
        %v9765 = vsub.f32 %v9763, %v9764
        %v9766 = vand.u32 %v9765, 4294901760
        %9767 = vmatpush1.msra.mxu0 %v9766
        %9768 = vmatprep.subr.mxu0 0.0
        %9769 = vmatpush1.msra.mxu0 0.0
        %9770 = vmatprep.subr.mxu0 0.0
        %9771 = vmatpush1.msra.mxu0 0.0
        %9772 = vmatprep.subr.mxu0 0.0
        %9773 = vmatpush1.msra.mxu0 0.0
        %9774 = vmatprep.subr.mxu0 0.0
        %9775 = vmatpush1.msra.mxu0 0.0
        %9776 = vmatprep.subr.mxu0 0.0
        %9777 = vmatpush1.msra.mxu0 0.0
        %9778 = vmatprep.subr.mxu0 0.0
        %9779 = vmatpush1.msra.mxu0 0.0
        %9780 = vmatprep.subr.mxu0 0.0
        %9781 = vmatpush1.msra.mxu0 0.0
        %9782 = vmatprep.subr.mxu0 0.0
        %9783 = vmatpush1.msra.mxu0 0.0
        %9784 = vmatprep.subr.mxu0 0.0
        %9785 = vmatpush1.msra.mxu0 0.0
        %9786 = vmatprep.subr.mxu0 0.0
        %9787 = vmatpush1.msra.mxu0 0.0
        %9788 = vmatprep.subr.mxu0 0.0
        %9789 = vmatpush1.msra.mxu0 0.0
        %9790 = vmatprep.subr.mxu0 0.0
        %9791 = vmatpush1.msra.mxu0 0.0
        %9792 = vmatprep.subr.mxu0 0.0
        %9793 = vmatpush1.msra.mxu0 0.0
        %9794 = vmatprep.subr.mxu0 0.0
        %9795 = vmatpush1.msra.mxu0 0.0
        %9796 = vmatprep.subr.mxu0 0.0
        %9797 = vmatpush1.msra.mxu0 0.0
        %9798 = vmatprep.subr.mxu0 0.0
        %9799 = vmatpush1.msra.mxu0 0.0
        %9800 = vmatprep.subr.mxu0 0.0
        %9801 = vmatpush1.msra.mxu0 0.0
        %9802 = vmatprep.subr.mxu0 0.0
        %9803 = vmatpush1.msra.mxu0 0.0
        %9804 = vmatprep.subr.mxu0 0.0
        %9805 = vmatpush1.msra.mxu0 0.0
        %9806 = vmatprep.subr.mxu0 0.0
        %9807 = vmatpush1.msra.mxu0 0.0
        %9808 = vmatprep.subr.mxu0 0.0
        %9809 = vmatpush1.msra.mxu0 0.0
        %9810 = vmatprep.subr.mxu0 0.0
        %9811 = vmatpush1.msra.mxu0 0.0
        %9812 = vmatprep.subr.mxu0 0.0
        %9813 = vmatpush1.msra.mxu0 0.0
        %9814 = vmatprep.subr.mxu0 0.0
        %9815 = vmatpush1.msra.mxu0 0.0
        %9816 = vmatprep.subr.mxu0 0.0
        %9817 = vmatpush1.msra.mxu0 0.0
        %9818 = vmatprep.subr.mxu0 0.0
        %9819 = vmatpush1.msra.mxu0 0.0
        %9820 = vmatprep.subr.mxu0 0.0
        %9821 = vmatpush1.msra.mxu0 0.0
        %9822 = vmatprep.subr.mxu0 0.0
        %9823 = vmatpush1.msra.mxu0 0.0
        %9824 = vmatprep.subr.mxu0 0.0
        %9825 = vmatpush1.msra.mxu0 0.0
        %9826 = vmatprep.subr.mxu0 0.0
        %9827 = vmatpush1.msra.mxu0 0.0
        %9828 = vmatprep.mubr.f32.mxu0 0.0
        %v9829 = vand.u32 %v9662, 4294901760
        %9830 = vmatmul.mubr.f32.gmra.mrb[0].mxu0 %v9829
        %v9831 = vpop.f32.mrb[0].mxu0
        %v9832 = vadd.f32 %v9741, %v9831
        %v9833 = vpop.f32.mrb[0].mxu0
        %9834 = vmatprep.mubr.f32.mxu0 0.0
        %v9835 = vand.u32 %v9665, 4294901760
        %9836 = vmatmul.mubr.f32.gmra.mrb[0].mxu0 %v9835
        %v9837 = vpop.f32.mrb[0].mxu0
        %v9838 = vadd.f32 %v9751, %v9837
        %v9839 = vpop.f32.mrb[0].mxu0
        %9840 = vdwg.mxu0
        %9841 = vmatprep.subr.mxu0 0.0
        %v9842 = vand.u32 %v9656, 4294901760
        %v9843 = vsub.f32 %v9656, %v9842
        %9844 = vmatpush1.msra.mxu0 %v9843
        %9845 = vmatprep.subr.mxu0 0.0
        %v9846 = vand.u32 %v9658, 4294901760
        %v9847 = vsub.f32 %v9658, %v9846
        %9848 = vmatpush1.msra.mxu0 %v9847
        %9849 = vmatprep.subr.mxu0 0.0
        %9850 = vmatpush1.msra.mxu0 0.0
        %9851 = vmatprep.subr.mxu0 0.0
        %9852 = vmatpush1.msra.mxu0 0.0
        %9853 = vmatprep.subr.mxu0 0.0
        %9854 = vmatpush1.msra.mxu0 0.0
        %9855 = vmatprep.subr.mxu0 0.0
        %9856 = vmatpush1.msra.mxu0 0.0
        %9857 = vmatprep.subr.mxu0 0.0
        %9858 = vmatpush1.msra.mxu0 0.0
        %9859 = vmatprep.subr.mxu0 0.0
        %9860 = vmatpush1.msra.mxu0 0.0
        %9861 = vmatprep.subr.mxu0 0.0
        %9862 = vmatpush1.msra.mxu0 0.0
        %9863 = vmatprep.subr.mxu0 0.0
        %9864 = vmatpush1.msra.mxu0 0.0
        %9865 = vmatprep.subr.mxu0 0.0
        %9866 = vmatpush1.msra.mxu0 0.0
        %9867 = vmatprep.subr.mxu0 0.0
        %9868 = vmatpush1.msra.mxu0 0.0
        %9869 = vmatprep.subr.mxu0 0.0
        %9870 = vmatpush1.msra.mxu0 0.0
        %9871 = vmatprep.subr.mxu0 0.0
        %9872 = vmatpush1.msra.mxu0 0.0
        %9873 = vmatprep.subr.mxu0 0.0
        %9874 = vmatpush1.msra.mxu0 0.0
        %9875 = vmatprep.subr.mxu0 0.0
        %9876 = vmatpush1.msra.mxu0 0.0
        %9877 = vmatprep.subr.mxu0 0.0
        %9878 = vmatpush1.msra.mxu0 0.0
        %9879 = vmatprep.subr.mxu0 0.0
        %9880 = vmatpush1.msra.mxu0 0.0
        %9881 = vmatprep.subr.mxu0 0.0
        %9882 = vmatpush1.msra.mxu0 0.0
        %9883 = vmatprep.subr.mxu0 0.0
        %9884 = vmatpush1.msra.mxu0 0.0
        %9885 = vmatprep.subr.mxu0 0.0
        %9886 = vmatpush1.msra.mxu0 0.0
        %9887 = vmatprep.subr.mxu0 0.0
        %9888 = vmatpush1.msra.mxu0 0.0
        %9889 = vmatprep.subr.mxu0 0.0
        %9890 = vmatpush1.msra.mxu0 0.0
        %9891 = vmatprep.subr.mxu0 0.0
        %9892 = vmatpush1.msra.mxu0 0.0
        %9893 = vmatprep.subr.mxu0 0.0
        %9894 = vmatpush1.msra.mxu0 0.0
        %9895 = vmatprep.subr.mxu0 0.0
        %9896 = vmatpush1.msra.mxu0 0.0
        %9897 = vmatprep.subr.mxu0 0.0
        %9898 = vmatpush1.msra.mxu0 0.0
        %9899 = vmatprep.subr.mxu0 0.0
        %9900 = vmatpush1.msra.mxu0 0.0
        %9901 = vmatprep.subr.mxu0 0.0
        %9902 = vmatpush1.msra.mxu0 0.0
        %9903 = vmatprep.subr.mxu0 0.0
        %9904 = vmatpush1.msra.mxu0 0.0
        %9905 = vmatprep.subr.mxu0 0.0
        %9906 = vmatpush1.msra.mxu0 0.0
        %9907 = vmatprep.subr.mxu0 0.0
        %9908 = vmatpush1.msra.mxu0 0.0
        %9909 = vmatprep.mubr.f32.mxu0 0.0
        %v9910 = vand.u32 %v9662, 4294901760
        %v9911 = vsub.f32 %v9662, %v9910
        %9912 = vmatmul.mubr.f32.gmra.mrb[0].mxu0 %v9911
        %v9913 = vpop.f32.mrb[0].mxu0
        %v9914 = vadd.f32 %v9832, %v9913
        %v9915 = vpop.f32.mrb[0].mxu0
        %9916 = vmatprep.mubr.f32.mxu0 0.0
        %v9917 = vand.u32 %v9665, 4294901760
        %v9918 = vsub.f32 %v9665, %v9917
        %9919 = vmatmul.mubr.f32.gmra.mrb[0].mxu0 %v9918
        %v9920 = vpop.f32.mrb[0].mxu0
        %v9921 = vadd.f32 %v9838, %v9920
        %v9922 = vpop.f32.mrb[0].mxu0
        %9923 = vdwg.mxu0
        %9924 = vmatprep.subr.mxu0 0.0
        %v9925 = vand.u32 %v9656, 4294901760
        %9926 = vmatpush1.msra.mxu0 %v9925
        %9927 = vmatprep.subr.mxu0 0.0
        %v9928 = vand.u32 %v9658, 4294901760
        %9929 = vmatpush1.msra.mxu0 %v9928
        %9930 = vmatprep.subr.mxu0 0.0
        %9931 = vmatpush1.msra.mxu0 0.0
        %9932 = vmatprep.subr.mxu0 0.0
        %9933 = vmatpush1.msra.mxu0 0.0
        %9934 = vmatprep.subr.mxu0 0.0
        %9935 = vmatpush1.msra.mxu0 0.0
        %9936 = vmatprep.subr.mxu0 0.0
        %9937 = vmatpush1.msra.mxu0 0.0
        %9938 = vmatprep.subr.mxu0 0.0
        %9939 = vmatpush1.msra.mxu0 0.0
        %9940 = vmatprep.subr.mxu0 0.0
        %9941 = vmatpush1.msra.mxu0 0.0
        %9942 = vmatprep.subr.mxu0 0.0
        %9943 = vmatpush1.msra.mxu0 0.0
        %9944 = vmatprep.subr.mxu0 0.0
        %9945 = vmatpush1.msra.mxu0 0.0
        %9946 = vmatprep.subr.mxu0 0.0
        %9947 = vmatpush1.msra.mxu0 0.0
        %9948 = vmatprep.subr.mxu0 0.0
        %9949 = vmatpush1.msra.mxu0 0.0
        %9950 = vmatprep.subr.mxu0 0.0
        %9951 = vmatpush1.msra.mxu0 0.0
        %9952 = vmatprep.subr.mxu0 0.0
        %9953 = vmatpush1.msra.mxu0 0.0
        %9954 = vmatprep.subr.mxu0 0.0
        %9955 = vmatpush1.msra.mxu0 0.0
        %9956 = vmatprep.subr.mxu0 0.0
        %9957 = vmatpush1.msra.mxu0 0.0
        %9958 = vmatprep.subr.mxu0 0.0
        %9959 = vmatpush1.msra.mxu0 0.0
        %9960 = vmatprep.subr.mxu0 0.0
        %9961 = vmatpush1.msra.mxu0 0.0
        %9962 = vmatprep.subr.mxu0 0.0
        %9963 = vmatpush1.msra.mxu0 0.0
        %9964 = vmatprep.subr.mxu0 0.0
        %9965 = vmatpush1.msra.mxu0 0.0
        %9966 = vmatprep.subr.mxu0 0.0
        %9967 = vmatpush1.msra.mxu0 0.0
        %9968 = vmatprep.subr.mxu0 0.0
        %9969 = vmatpush1.msra.mxu0 0.0
        %9970 = vmatprep.subr.mxu0 0.0
        %9971 = vmatpush1.msra.mxu0 0.0
        %9972 = vmatprep.subr.mxu0 0.0
        %9973 = vmatpush1.msra.mxu0 0.0
        %9974 = vmatprep.subr.mxu0 0.0
        %9975 = vmatpush1.msra.mxu0 0.0
        %9976 = vmatprep.subr.mxu0 0.0
        %9977 = vmatpush1.msra.mxu0 0.0
        %9978 = vmatprep.subr.mxu0 0.0
        %9979 = vmatpush1.msra.mxu0 0.0
        %9980 = vmatprep.subr.mxu0 0.0
        %9981 = vmatpush1.msra.mxu0 0.0
        %9982 = vmatprep.subr.mxu0 0.0
        %9983 = vmatpush1.msra.mxu0 0.0
        %9984 = vmatprep.subr.mxu0 0.0
        %9985 = vmatpush1.msra.mxu0 0.0
        %9986 = vmatprep.subr.mxu0 0.0
        %9987 = vmatpush1.msra.mxu0 0.0
        %9988 = vmatprep.subr.mxu0 0.0
        %9989 = vmatpush1.msra.mxu0 0.0
        %9990 = vmatprep.mubr.f32.mxu0 0.0
        %v9991 = vand.u32 %v9662, 4294901760
        %v9992 = vsub.f32 %v9662, %v9991
        %v9993 = vand.u32 %v9992, 4294901760
        %9994 = vmatmul.mubr.f32.gmra.mrb[0].mxu0 %v9993
        %v9995 = vpop.f32.mrb[0].mxu0
        %v9996 = vadd.f32 %v9914, %v9995
        %v9997 = vpop.f32.mrb[0].mxu0
        %9998 = vmatprep.mubr.f32.mxu0 0.0
        %v9999 = vand.u32 %v9665, 4294901760
        %v10000 = vsub.f32 %v9665, %v9999
        %v10001 = vand.u32 %v10000, 4294901760
        %10002 = vmatmul.mubr.f32.gmra.mrb[0].mxu0 %v10001
        %v10003 = vpop.f32.mrb[0].mxu0
        %v10004 = vadd.f32 %v9921, %v10003
        %v10005 = vpop.f32.mrb[0].mxu0
        %10006 = vdwg.mxu0
        %10007 = vmatprep.subr.mxu0 0.0
        %v10008 = vand.u32 %v9656, 4294901760
        %v10009 = vsub.f32 %v9656, %v10008
        %v10010 = vand.u32 %v10009, 4294901760
        %10011 = vmatpush1.msra.mxu0 %v10010
        %10012 = vmatprep.subr.mxu0 0.0
        %v10013 = vand.u32 %v9658, 4294901760
        %v10014 = vsub.f32 %v9658, %v10013
        %v10015 = vand.u32 %v10014, 4294901760
        %10016 = vmatpush1.msra.mxu0 %v10015
        %10017 = vmatprep.subr.mxu0 0.0
        %10018 = vmatpush1.msra.mxu0 0.0
        %10019 = vmatprep.subr.mxu0 0.0
        %10020 = vmatpush1.msra.mxu0 0.0
        %10021 = vmatprep.subr.mxu0 0.0
        %10022 = vmatpush1.msra.mxu0 0.0
        %10023 = vmatprep.subr.mxu0 0.0
        %10024 = vmatpush1.msra.mxu0 0.0
        %10025 = vmatprep.subr.mxu0 0.0
        %10026 = vmatpush1.msra.mxu0 0.0
        %10027 = vmatprep.subr.mxu0 0.0
        %10028 = vmatpush1.msra.mxu0 0.0
        %10029 = vmatprep.subr.mxu0 0.0
        %10030 = vmatpush1.msra.mxu0 0.0
        %10031 = vmatprep.subr.mxu0 0.0
        %10032 = vmatpush1.msra.mxu0 0.0
        %10033 = vmatprep.subr.mxu0 0.0
        %10034 = vmatpush1.msra.mxu0 0.0
        %10035 = vmatprep.subr.mxu0 0.0
        %10036 = vmatpush1.msra.mxu0 0.0
        %10037 = vmatprep.subr.mxu0 0.0
        %10038 = vmatpush1.msra.mxu0 0.0
        %10039 = vmatprep.subr.mxu0 0.0
        %10040 = vmatpush1.msra.mxu0 0.0
        %10041 = vmatprep.subr.mxu0 0.0
        %10042 = vmatpush1.msra.mxu0 0.0
        %10043 = vmatprep.subr.mxu0 0.0
        %10044 = vmatpush1.msra.mxu0 0.0
        %10045 = vmatprep.subr.mxu0 0.0
        %10046 = vmatpush1.msra.mxu0 0.0
        %10047 = vmatprep.subr.mxu0 0.0
        %10048 = vmatpush1.msra.mxu0 0.0
        %10049 = vmatprep.subr.mxu0 0.0
        %10050 = vmatpush1.msra.mxu0 0.0
        %10051 = vmatprep.subr.mxu0 0.0
        %10052 = vmatpush1.msra.mxu0 0.0
        %10053 = vmatprep.subr.mxu0 0.0
        %10054 = vmatpush1.msra.mxu0 0.0
        %10055 = vmatprep.subr.mxu0 0.0
        %10056 = vmatpush1.msra.mxu0 0.0
        %10057 = vmatprep.subr.mxu0 0.0
        %10058 = vmatpush1.msra.mxu0 0.0
        %10059 = vmatprep.subr.mxu0 0.0
        %10060 = vmatpush1.msra.mxu0 0.0
        %10061 = vmatprep.subr.mxu0 0.0
        %10062 = vmatpush1.msra.mxu0 0.0
        %10063 = vmatprep.subr.mxu0 0.0
        %10064 = vmatpush1.msra.mxu0 0.0
        %10065 = vmatprep.subr.mxu0 0.0
        %10066 = vmatpush1.msra.mxu0 0.0
        %10067 = vmatprep.subr.mxu0 0.0
        %10068 = vmatpush1.msra.mxu0 0.0
        %10069 = vmatprep.subr.mxu0 0.0
        %10070 = vmatpush1.msra.mxu0 0.0
        %10071 = vmatprep.subr.mxu0 0.0
        %10072 = vmatpush1.msra.mxu0 0.0
        %10073 = vmatprep.subr.mxu0 0.0
        %10074 = vmatpush1.msra.mxu0 0.0
        %10075 = vmatprep.subr.mxu0 0.0
        %10076 = vmatpush1.msra.mxu0 0.0
        %10077 = vmatprep.mubr.f32.mxu0 0.0
        %v10078 = vand.u32 %v9662, 4294901760
        %10079 = vmatmul.mubr.f32.gmra.mrb[0].mxu0 %v10078
        %v10080 = vpop.f32.mrb[0].mxu0
        %v10081 = vadd.f32 %v9996, %v10080
        %v10082 = vpop.f32.mrb[0].mxu0
        %10083 = vmatprep.mubr.f32.mxu0 0.0
        %v10084 = vand.u32 %v9665, 4294901760
        %10085 = vmatmul.mubr.f32.gmra.mrb[0].mxu0 %v10084
        %v10086 = vpop.f32.mrb[0].mxu0
        %v10087 = vadd.f32 %v10004, %v10086
        %v10088 = vpop.f32.mrb[0].mxu0
        %10089 = vdwg.mxu0
        %10090 = vmatprep.subr.mxu0 0.0
        %v10091 = vand.u32 %v9656, 4294901760
        %10092 = vmatpush1.msra.mxu0 %v10091
        %10093 = vmatprep.subr.mxu0 0.0
        %v10094 = vand.u32 %v9658, 4294901760
        %10095 = vmatpush1.msra.mxu0 %v10094
        %10096 = vmatprep.subr.mxu0 0.0
        %10097 = vmatpush1.msra.mxu0 0.0
        %10098 = vmatprep.subr.mxu0 0.0
        %10099 = vmatpush1.msra.mxu0 0.0
        %10100 = vmatprep.subr.mxu0 0.0
        %10101 = vmatpush1.msra.mxu0 0.0
        %10102 = vmatprep.subr.mxu0 0.0
        %10103 = vmatpush1.msra.mxu0 0.0
        %10104 = vmatprep.subr.mxu0 0.0
        %10105 = vmatpush1.msra.mxu0 0.0
        %10106 = vmatprep.subr.mxu0 0.0
        %10107 = vmatpush1.msra.mxu0 0.0
        %10108 = vmatprep.subr.mxu0 0.0
        %10109 = vmatpush1.msra.mxu0 0.0
        %10110 = vmatprep.subr.mxu0 0.0
        %10111 = vmatpush1.msra.mxu0 0.0
        %10112 = vmatprep.subr.mxu0 0.0
        %10113 = vmatpush1.msra.mxu0 0.0
        %10114 = vmatprep.subr.mxu0 0.0
        %10115 = vmatpush1.msra.mxu0 0.0
        %10116 = vmatprep.subr.mxu0 0.0
        %10117 = vmatpush1.msra.mxu0 0.0
        %10118 = vmatprep.subr.mxu0 0.0
        %10119 = vmatpush1.msra.mxu0 0.0
        %10120 = vmatprep.subr.mxu0 0.0
        %10121 = vmatpush1.msra.mxu0 0.0
        %10122 = vmatprep.subr.mxu0 0.0
        %10123 = vmatpush1.msra.mxu0 0.0
        %10124 = vmatprep.subr.mxu0 0.0
        %10125 = vmatpush1.msra.mxu0 0.0
        %10126 = vmatprep.subr.mxu0 0.0
        %10127 = vmatpush1.msra.mxu0 0.0
        %10128 = vmatprep.subr.mxu0 0.0
        %10129 = vmatpush1.msra.mxu0 0.0
        %10130 = vmatprep.subr.mxu0 0.0
        %10131 = vmatpush1.msra.mxu0 0.0
        %10132 = vmatprep.subr.mxu0 0.0
        %10133 = vmatpush1.msra.mxu0 0.0
        %10134 = vmatprep.subr.mxu0 0.0
        %10135 = vmatpush1.msra.mxu0 0.0
        %10136 = vmatprep.subr.mxu0 0.0
        %10137 = vmatpush1.msra.mxu0 0.0
        %10138 = vmatprep.subr.mxu0 0.0
        %10139 = vmatpush1.msra.mxu0 0.0
        %10140 = vmatprep.subr.mxu0 0.0
        %10141 = vmatpush1.msra.mxu0 0.0
        %10142 = vmatprep.subr.mxu0 0.0
        %10143 = vmatpush1.msra.mxu0 0.0
        %10144 = vmatprep.subr.mxu0 0.0
        %10145 = vmatpush1.msra.mxu0 0.0
        %10146 = vmatprep.subr.mxu0 0.0
        %10147 = vmatpush1.msra.mxu0 0.0
        %10148 = vmatprep.subr.mxu0 0.0
        %10149 = vmatpush1.msra.mxu0 0.0
        %10150 = vmatprep.subr.mxu0 0.0
        %10151 = vmatpush1.msra.mxu0 0.0
        %10152 = vmatprep.subr.mxu0 0.0
        %10153 = vmatpush1.msra.mxu0 0.0
        %10154 = vmatprep.subr.mxu0 0.0
        %10155 = vmatpush1.msra.mxu0 0.0
        %10156 = vmatprep.mubr.f32.mxu0 0.0
        %v10157 = vand.u32 %v9662, 4294901760
        %10158 = vmatmul.mubr.f32.gmra.mrb[0].mxu0 %v10157
        %v10159 = vpop.f32.mrb[0].mxu0
        %v10160 = vadd.f32 %v10081, %v10159
        %v10161 = vpop.f32.mrb[0].mxu0
        %10162 = vmatprep.mubr.f32.mxu0 0.0
        %v10163 = vand.u32 %v9665, 4294901760
        %10164 = vmatmul.mubr.f32.gmra.mrb[0].mxu0 %v10163
        %v10165 = vpop.f32.mrb[0].mxu0
        %v10166 = vadd.f32 %v10087, %v10165
        %v10167 = vpop.f32.mrb[0].mxu0
        %10168 = vdwg.mxu0
        %v10169 = vadd.f32 %v9123, %v10160
        %v10170 = vadd.f32 %v9124, %v10166
        %v10171 = vmul.f32 %v10169, 0.25
        %v10172 = vmul.f32 %v10170, 0.25
        %10173 = vst.msk [vmem:[%s576] sm:$0xff] %vm1106, %v10171
        %10174 = vst.msk [vmem:[%s576 + $0x8] sm:$0xff] %vm1106, %v10172
        %s10175 = sand.u32 %s266, 1
        %s10176 = scalar_lea.sflag [#allocation4], %s10175
        %s10177 = sand.u32 %s266, 1
        %s10178 = smul.addr %s10177, 16
        %s10179 = scalar_lea.vmem [#allocation14], %s10178
        // Predicated region
        $region81: #{tpu_custom_call.1} parent=51 // pred_check
          %p10180 = pneg %p276
        $region82: #{tpu_custom_call.1} parent=51 // pred_check_branch
          %10182 = sbr.rel (%p10180) target = $region84
        $region83: #{tpu_custom_call.1} parent=51 // pred_region
          %s10184 = ssub.s32 256, 256
          %10185 = vsyncadd %s10176, %s10184
          %s10186 = smul.addr %s39, 2
          %s10187 = smul.addr %s38, 8
          %s10188 = sadd.s32 %s10186, %s10187
          %s10189 = smul.addr %s10188, 128
          %s10190 = scalar_lea.hbm %s8, %s10189
          %s10191 = sshll.u32 %s10179, 4
          %s10192 = int_to_ptr.vmem [resolvable:$true] %s10191
          %10197 = dma.vmem_to_hbm [thread:$0]  %s10192, 256, %s10190, %s10176, 128, 128, 8
        $region84: #{tpu_custom_call.1} parent=51 // pred_fallthru
          _
      $region52: #{tpu_custom_call.1} parent=5 // pred_fallthru
        _
      %p10198 = scmp.le.s32.totalorder 2, %s29
      // Predicated region
      $region85: #{tpu_custom_call.1} parent=5 // pred_check
        %p10199 = pneg %p10198
      $region86: #{tpu_custom_call.1} parent=5 // pred_check_branch
        %10201 = sbr.rel (%p10199) target = $region88
      $region87: #{tpu_custom_call.1} parent=5 // pred_region
        %s10202 = ssub.s32 %s29, 2
        // Predicated region
        $region89: #{tpu_custom_call.1} parent=87 // pred_check
          %p10203 = pneg %p282
        $region90: #{tpu_custom_call.1} parent=87 // pred_check_branch
          %10205 = sbr.rel (%p10203) target = $region92
        $region91: #{tpu_custom_call.1} parent=87 // pred_region
          %s10206 = sand.u32 %s267, 1
          %s10207 = scalar_lea.sflag [#allocation4], %s10206
          %s10208 = sand.u32 %s267, 1
          %s10209 = smul.addr %s10208, 16
          %s10210 = scalar_lea.vmem [#allocation14], %s10209
          %10211 = dma.done %s10207, 256
        $region92: #{tpu_custom_call.1} parent=87 // pred_fallthru
          _
      $region88: #{tpu_custom_call.1} parent=5 // pred_fallthru
        _
    $region6: #{tpu_custom_call.1} parent=1 // loop_footer
      %s33 = sadd.s32 1, %s29
    $region7: #{tpu_custom_call.1} parent=1 // loop_footer_branch
      %28 = sbr.rel target = $region3
    $region8: #{tpu_custom_call.1} parent=1 // loop_exit
      _
    %10212 = vsyncpa [#allocation3], 1
    %s10213 = scalar_lea.sflag [#allocation3], 1
    %10214 = vsyncpa %s10213, 1
    %10215 = vsyncpa [#allocation6], 1
    %s10216 = scalar_lea.sflag [#allocation6], 1
    %10217 = vsyncpa %s10216, 1
    %10218 = vsyncpa [#allocation9], 1
    %s10219 = scalar_lea.sflag [#allocation9], 1
    %10220 = vsyncpa %s10219, 1
    %10221 = vsyncpa [#allocation12], 1
    %s10222 = scalar_lea.sflag [#allocation12], 1
    %10223 = vsyncpa %s10222, 1
    %10224 = vsyncpa [#allocation4], 1
    %s10225 = scalar_lea.sflag [#allocation4], 1
    %10226 = vsyncpa %s10225, 1

</llo_original>
